<compile_context>
chip_gen: v6e
topology: v6e:2x2x1
jax: 0.10.0
libtpu: 0.0.40
codegen_flags: <defaults>
</compile_context>

<pallas_src>
import functools
import math

import jax
import jax.numpy as jnp
from jax.experimental import pallas as pl
from jax.experimental.pallas import tpu as pltpu

EMBED_DIM = 256
NUM_HEADS = 4
NUM_LAYERS = 2
FFN_DIM = 2048            # nn.TransformerEncoderLayer default dim_feedforward
HEAD_DIM = EMBED_DIM // NUM_HEADS
LN_EPS = 1e-5             # nn.LayerNorm default
FF_CHUNKS = 4             # FFN hidden dim processed in 2048/4 = 512-wide chunks


def _round_up(x, m):
    return (x + m - 1) // m * m


def _layer_norm(x, gamma, beta, eps=LN_EPS):
    mean = jnp.mean(x, axis=-1, keepdims=True)
    var = jnp.mean(jnp.square(x - mean), axis=-1, keepdims=True)
    return (x - mean) * jax.lax.rsqrt(var + eps) * gamma + beta


# ------------------------------ fused kernel -------------------------------

def _encoder_layer_kernel(x_ref,
                          w_qkv_ref, b_qkv_ref,
                          w_o_ref, b_o_ref, ln1_g_ref, ln1_b_ref,
                          w_ff1_ref, b_ff1_ref, w_ff2_ref, b_ff2_ref,
                          ln2_g_ref, ln2_b_ref,
                          o_ref,
                          *, batch, seq_pad, seq_len, num_heads, ff_chunks):
    layer = pl.program_id(0)
    embed = x_ref.shape[-1]
    head_dim = embed // num_heads
    scale = 1.0 / math.sqrt(head_dim)

    # Layer 0 seeds the VMEM-resident residual stream.  The output BlockSpec
    # index is constant across the layer axis, so o_ref lives in VMEM for the
    # whole grid and is written back to HBM only after the last layer.
    @pl.when(layer == 0)
    def _():
        o_ref[...] = x_ref[...]

    h = o_ref[...]                                    # (M, E) f32 residual stream
    hb = h.astype(jnp.bfloat16)

    # ---- fused Q/K/V projection: one lane-dense (E, 3E) MXU matmul ----
    qkv = jnp.dot(hb, w_qkv_ref[0], preferred_element_type=jnp.float32)
    qkv = (qkv + b_qkv_ref[0]).astype(jnp.bfloat16)   # (M, 3E)

    # ---- multi-head self-attention (per batch element; heads unrolled in a
    #      single kernel body so Mosaic pipelines the small matmuls; padded
    #      key positions masked out) ----
    col = jax.lax.broadcasted_iota(jnp.int32, (seq_pad, seq_pad), 1)
    key_mask = col < seq_len
    per_batch = []
    for b in range(batch):
        qkv_b = qkv[b * seq_pad:(b + 1) * seq_pad]    # (Sp, 3E) bf16
        heads = []
        for hd in range(num_heads):
            q = qkv_b[:, hd * head_dim:(hd + 1) * head_dim]
            k = qkv_b[:, embed + hd * head_dim:embed + (hd + 1) * head_dim]
            v = qkv_b[:, 2 * embed + hd * head_dim:2 * embed + (hd + 1) * head_dim]
            s = jax.lax.dot_general(q, k, (((1,), (1,)), ((), ())),
                                    preferred_element_type=jnp.float32) * scale
            s = jnp.where(key_mask, s, -1e30)
            s = s - jnp.max(s, axis=-1, keepdims=True)
            p = jnp.exp(s)
            p = p / jnp.sum(p, axis=-1, keepdims=True)        # exact softmax
            heads.append(jnp.dot(p.astype(jnp.bfloat16), v,
                                 preferred_element_type=jnp.float32))
        # concat heads along lanes -> lane-dense (Sp, E) attention output
        per_batch.append(jnp.concatenate(heads, axis=-1))
    attn = jnp.concatenate(per_batch, axis=0).astype(jnp.bfloat16)    # (M, E)

    # ---- out projection + residual add + LayerNorm1 (post-norm) ----
    y = jnp.dot(attn, w_o_ref[0], preferred_element_type=jnp.float32)
    y = y + b_o_ref[0] + h
    h1 = _layer_norm(y, ln1_g_ref[0], ln1_b_ref[0])                   # (M, E) f32

    # ---- FFN: linear(2048) -> ReLU -> linear(256), chunked along the hidden
    #      dim so the live intermediate stays small; residual + bias folded
    #      into the f32 accumulator, LayerNorm2 fused in the epilogue ----
    h1b = h1.astype(jnp.bfloat16)
    ffn_dim = w_ff1_ref.shape[-1]
    ck = ffn_dim // ff_chunks
    acc = h1 + b_ff2_ref[0]
    for c in range(ff_chunks):
        w1c = w_ff1_ref[0, :, pl.ds(c * ck, ck)]                      # (E, ck) bf16
        b1c = b_ff1_ref[0, :, pl.ds(c * ck, ck)]                      # (1, ck) f32
        f = jnp.dot(h1b, w1c, preferred_element_type=jnp.float32) + b1c
        f = jnp.maximum(f, 0.0).astype(jnp.bfloat16)                  # ReLU
        w2c = w_ff2_ref[0, pl.ds(c * ck, ck), :]                      # (ck, E) bf16
        acc = acc + jnp.dot(f, w2c, preferred_element_type=jnp.float32)
    h2 = _layer_norm(acc, ln2_g_ref[0], ln2_b_ref[0])

    o_ref[...] = h2        # stays in VMEM; HBM writeback only after last layer


# ------------------------------- parameters --------------------------------

def init_params(key):
    """Synthetic deterministic weights (nn.TransformerEncoderLayer shapes),
    stacked along a leading layer axis and pre-cast to bf16 once."""
    d, ff, L = EMBED_DIM, FFN_DIM, NUM_LAYERS
    keys = jax.random.split(key, 4 * L)

    def nrm(k, shape, scl):
        return (jax.random.normal(k, shape, jnp.float32) * scl).astype(jnp.bfloat16)

    zeros = lambda n: jnp.zeros((L, 1, n), jnp.float32)
    ones = lambda n: jnp.ones((L, 1, n), jnp.float32)
    return {
        # NOTE: w_qkv rows follow torch in_proj_weight Q/K/V block order but are
        # stored transposed (in_features, out_features); real torch weights must
        # be transposed when loaded.
        "w_qkv": jnp.stack([nrm(keys[4 * l + 0], (d, 3 * d), d ** -0.5) for l in range(L)]),
        "b_qkv": zeros(3 * d),
        "w_o": jnp.stack([nrm(keys[4 * l + 1], (d, d), d ** -0.5) for l in range(L)]),
        "b_o": zeros(d),
        "ln1_g": ones(d), "ln1_b": zeros(d),
        "w_ff1": jnp.stack([nrm(keys[4 * l + 2], (d, ff), (2.0 / d) ** 0.5) for l in range(L)]),
        "b_ff1": zeros(ff),
        "w_ff2": jnp.stack([nrm(keys[4 * l + 3], (ff, d), ff ** -0.5) for l in range(L)]),
        "b_ff2": zeros(d),
        "ln2_g": ones(d), "ln2_b": zeros(d),
    }


# --------------------------------- forward ---------------------------------

def transformer_encoder_forward(params, x):
    """x: (B, S, E) batch-first -> (B, S, E).  Post-norm encoder, eval mode."""
    B, S, E = x.shape
    assert E == EMBED_DIM
    # Pad sequence 49 -> 64 (tile-friendly rows); padded key positions are
    # masked inside the kernel and padded rows sliced off at the end.
    Sp = _round_up(S, 64)
    xp = x
    if Sp != S:
        xp = jnp.pad(xp, ((0, 0), (0, Sp - S), (0, 0)))
    M = B * Sp
    x2 = xp.reshape(M, E).astype(jnp.float32)

    F = FFN_DIM
    kernel = functools.partial(
        _encoder_layer_kernel, batch=B, seq_pad=Sp, seq_len=S,
        num_heads=NUM_HEADS, ff_chunks=FF_CHUNKS)

    full = lambda l: (0, 0)       # activation / output: resident across layers
    per_layer = lambda l: (l, 0, 0)

    # TODO(synk): dropout (p=0.1) inside nn.TransformerEncoderLayer is
    # train-only; eval-mode forward treats it as identity.
    out = pl.pallas_call(
        kernel,
        out_shape=jax.ShapeDtypeStruct((M, E), jnp.float32),
        grid=(NUM_LAYERS,),
        in_specs=[
            pl.BlockSpec((M, E), full),              # x (read only at layer 0)
            pl.BlockSpec((1, E, 3 * E), per_layer),  # w_qkv
            pl.BlockSpec((1, 1, 3 * E), per_layer),  # b_qkv
            pl.BlockSpec((1, E, E), per_layer),      # w_o
            pl.BlockSpec((1, 1, E), per_layer),      # b_o
            pl.BlockSpec((1, 1, E), per_layer),      # ln1_g
            pl.BlockSpec((1, 1, E), per_layer),      # ln1_b
            pl.BlockSpec((1, E, F), per_layer),      # w_ff1
            pl.BlockSpec((1, 1, F), per_layer),      # b_ff1
            pl.BlockSpec((1, F, E), per_layer),      # w_ff2
            pl.BlockSpec((1, 1, E), per_layer),      # b_ff2
            pl.BlockSpec((1, 1, E), per_layer),      # ln2_g
            pl.BlockSpec((1, 1, E), per_layer),      # ln2_b
        ],
        out_specs=pl.BlockSpec((M, E), full),
        compiler_params=pltpu.CompilerParams(
            # Layer axis carries the residual stream in VMEM -> not parallel.
            dimension_semantics=("arbitrary",)),
    )(x2,
      params["w_qkv"], params["b_qkv"],
      params["w_o"], params["b_o"], params["ln1_g"], params["ln1_b"],
      params["w_ff1"], params["b_ff1"], params["w_ff2"], params["b_ff2"],
      params["ln2_g"], params["ln2_b"])

    return out.reshape(B, Sp, E)[:, :S, :]


if __name__ == "__main__":
    key = jax.random.PRNGKey(0)
    pkey, xkey = jax.random.split(key)
    params = init_params(pkey)
    # batch_first input (B, S, E); E fixed at 256 by the module, S=49 (7x7 patches).
    x = jax.random.normal(xkey, (2, 49, EMBED_DIM), jnp.float32)

    fwd = jax.jit(transformer_encoder_forward)
    out = jax.block_until_ready(fwd(params, x))

    assert out.shape == (2, 49, EMBED_DIM), out.shape
    assert bool(jnp.all(jnp.isfinite(out)))
    print("KERNEL_OK")
</pallas_src>

<mosaic_0001>
module attributes {stable_mosaic.version = 11 : i64} {
  func.func @_encoder_layer_kernel(%arg0: i32, %arg1: memref<128x256xf32, #tpu.memory_space<vmem>>, %arg2: memref<1x256x768xbf16, #tpu.memory_space<vmem>>, %arg3: memref<1x1x768xf32, #tpu.memory_space<vmem>>, %arg4: memref<1x256x256xbf16, #tpu.memory_space<vmem>>, %arg5: memref<1x1x256xf32, #tpu.memory_space<vmem>>, %arg6: memref<1x1x256xf32, #tpu.memory_space<vmem>>, %arg7: memref<1x1x256xf32, #tpu.memory_space<vmem>>, %arg8: memref<1x256x2048xbf16, #tpu.memory_space<vmem>>, %arg9: memref<1x1x2048xf32, #tpu.memory_space<vmem>>, %arg10: memref<1x2048x256xbf16, #tpu.memory_space<vmem>>, %arg11: memref<1x1x256xf32, #tpu.memory_space<vmem>>, %arg12: memref<1x1x256xf32, #tpu.memory_space<vmem>>, %arg13: memref<1x1x256xf32, #tpu.memory_space<vmem>>, %arg14: memref<128x256xf32, #tpu.memory_space<vmem>>) attributes {dimension_semantics = [#tpu.dimension_semantics<arbitrary>], iteration_bounds = array<i64: 2>, scalar_prefetch = 0 : i64, scratch_operands = 0 : i64, tpu.core_type = #tpu.core_type<tc>, window_params = [{pipeline_mode = #tpu.pipeline_mode<synchronous>, transform_indices = @transform_0, window_bounds = array<i64: 128, 256>}, {transform_indices = @transform_1, window_bounds = array<i64: 1, 256, 768>}, {transform_indices = @transform_2, window_bounds = array<i64: 1, 1, 768>}, {transform_indices = @transform_3, window_bounds = array<i64: 1, 256, 256>}, {transform_indices = @transform_4, window_bounds = array<i64: 1, 1, 256>}, {transform_indices = @transform_5, window_bounds = array<i64: 1, 1, 256>}, {transform_indices = @transform_6, window_bounds = array<i64: 1, 1, 256>}, {transform_indices = @transform_7, window_bounds = array<i64: 1, 256, 2048>}, {transform_indices = @transform_8, window_bounds = array<i64: 1, 1, 2048>}, {transform_indices = @transform_9, window_bounds = array<i64: 1, 2048, 256>}, {transform_indices = @transform_10, window_bounds = array<i64: 1, 1, 256>}, {transform_indices = @transform_11, window_bounds = array<i64: 1, 1, 256>}, {transform_indices = @transform_12, window_bounds = array<i64: 1, 1, 256>}, {pipeline_mode = #tpu.pipeline_mode<synchronous>, transform_indices = @transform_13, window_bounds = array<i64: 128, 256>}]} {
    %c0_i32 = arith.constant 0 : i32
    %0 = arith.cmpi eq, %arg0, %c0_i32 : i32
    %1 = arith.extui %0 : i1 to i32
    %c0_i32_0 = arith.constant 0 : i32
    %2 = arith.cmpi ne, %1, %c0_i32_0 : i32
    scf.if %2 {
      %c0_135 = arith.constant 0 : index
      %c0_136 = arith.constant 0 : index
      %296 = vector.load %arg1[%c0_135, %c0_136] : memref<128x256xf32, #tpu.memory_space<vmem>>, vector<128x256xf32>
      %c0_137 = arith.constant 0 : index
      %c0_138 = arith.constant 0 : index
      %297 = vector.load %arg14[%c0_137, %c0_138] : memref<128x256xf32, #tpu.memory_space<vmem>>, vector<128x256xf32>
      tpu.vector_store %arg14[%c0_137, %c0_138], %296 {strides = array<i32>} : memref<128x256xf32, #tpu.memory_space<vmem>>, vector<128x256xf32>,
    } else {
    }
    %c0 = arith.constant 0 : index
    %c0_1 = arith.constant 0 : index
    %3 = vector.load %arg14[%c0, %c0_1] : memref<128x256xf32, #tpu.memory_space<vmem>>, vector<128x256xf32>
    %4 = arith.truncf %3 : vector<128x256xf32> to vector<128x256xbf16>
    %c0_2 = arith.constant 0 : index
    %c0_3 = arith.constant 0 : index
    %c0_4 = arith.constant 0 : index
    %5 = vector.load %arg2[%c0_2, %c0_3, %c0_4] : memref<1x256x768xbf16, #tpu.memory_space<vmem>>, vector<1x256x768xbf16>
    %6 = vector.shape_cast %5 : vector<1x256x768xbf16> to vector<256x768xbf16>
    %cst = arith.constant dense<0.000000e+00> : vector<128x768xf32>
    %7 = tpu.matmul %4, %6, %cst {dimension_numbers = #tpu.dot_dimension_numbers<[1], [0], [0], [1], [0, 0, 1, 1], [], []>} : vector<128x256xbf16>, vector<256x768xbf16>, vector<128x768xf32> -> vector<128x768xf32>
    %c0_5 = arith.constant 0 : index
    %c0_6 = arith.constant 0 : index
    %c0_7 = arith.constant 0 : index
    %8 = vector.load %arg3[%c0_5, %c0_6, %c0_7] : memref<1x1x768xf32, #tpu.memory_space<vmem>>, vector<1x1x768xf32>
    %9 = vector.shape_cast %8 : vector<1x1x768xf32> to vector<1x768xf32>
    %10 = vector.broadcast %9 : vector<1x768xf32> to vector<128x768xf32>
    %11 = arith.addf %7, %10 : vector<128x768xf32>
    %12 = arith.truncf %11 : vector<128x768xf32> to vector<128x768xbf16>
    %13 = tpu.iota {dimensions = array<i32: 1>} : vector<64x64xi32>
    %c49_i32 = arith.constant 49 : i32
    %14 = vector.broadcast %c49_i32 : i32 to vector<64x64xi32>
    %15 = arith.cmpi slt, %13, %14 : vector<64x64xi32>
    %16 = vector.extract_strided_slice %12 {offsets = [0, 0], sizes = [64, 768], strides = [1, 1]} : vector<128x768xbf16> to vector<64x768xbf16>
    %17 = vector.extract_strided_slice %16 {offsets = [0, 0], sizes = [64, 64], strides = [1, 1]} : vector<64x768xbf16> to vector<64x64xbf16>
    %18 = vector.extract_strided_slice %16 {offsets = [0, 256], sizes = [64, 64], strides = [1, 1]} : vector<64x768xbf16> to vector<64x64xbf16>
    %19 = vector.extract_strided_slice %16 {offsets = [0, 512], sizes = [64, 64], strides = [1, 1]} : vector<64x768xbf16> to vector<64x64xbf16>
    %cst_8 = arith.constant dense<0.000000e+00> : vector<64x64xf32>
    %20 = tpu.matmul %17, %18, %cst_8 {dimension_numbers = #tpu.dot_dimension_numbers<[1], [1], [0], [0], [0, 0, 1, 0], [], []>} : vector<64x64xbf16>, vector<64x64xbf16>, vector<64x64xf32> -> vector<64x64xf32>
    %cst_9 = arith.constant 1.250000e-01 : f32
    %21 = vector.broadcast %cst_9 : f32 to vector<64x64xf32>
    %22 = arith.mulf %20, %21 : vector<64x64xf32>
    %cst_10 = arith.constant -1.000000e+30 : f32
    %23 = vector.broadcast %cst_10 : f32 to vector<64x64xf32>
    %24 = arith.select %15, %22, %23 : vector<64x64xi1>, vector<64x64xf32>
    %cst_11 = arith.constant dense<0xFF800000> : vector<64xf32>
    %25 = vector.multi_reduction <maximumf>, %24, %cst_11 [1] : vector<64x64xf32> to vector<64xf32>
    %26 = vector.shape_cast %25 : vector<64xf32> to vector<64x1xf32>
    %27 = vector.broadcast %26 : vector<64x1xf32> to vector<64x64xf32>
    %28 = arith.subf %24, %27 : vector<64x64xf32>
    %29 = math.exp %28 : vector<64x64xf32>
    %cst_12 = arith.constant dense<0.000000e+00> : vector<64xf32>
    %30 = vector.multi_reduction <add>, %29, %cst_12 [1] : vector<64x64xf32> to vector<64xf32>
    %31 = vector.shape_cast %30 : vector<64xf32> to vector<64x1xf32>
    %32 = vector.broadcast %31 : vector<64x1xf32> to vector<64x64xf32>
    %33 = arith.divf %29, %32 : vector<64x64xf32>
    %34 = arith.truncf %33 : vector<64x64xf32> to vector<64x64xbf16>
    %cst_13 = arith.constant dense<0.000000e+00> : vector<64x64xf32>
    %35 = tpu.matmul %34, %19, %cst_13 {dimension_numbers = #tpu.dot_dimension_numbers<[1], [0], [0], [1], [0, 0, 1, 1], [], []>} : vector<64x64xbf16>, vector<64x64xbf16>, vector<64x64xf32> -> vector<64x64xf32>
    %36 = vector.extract_strided_slice %16 {offsets = [0, 64], sizes = [64, 64], strides = [1, 1]} : vector<64x768xbf16> to vector<64x64xbf16>
    %37 = vector.extract_strided_slice %16 {offsets = [0, 320], sizes = [64, 64], strides = [1, 1]} : vector<64x768xbf16> to vector<64x64xbf16>
    %38 = vector.extract_strided_slice %16 {offsets = [0, 576], sizes = [64, 64], strides = [1, 1]} : vector<64x768xbf16> to vector<64x64xbf16>
    %cst_14 = arith.constant dense<0.000000e+00> : vector<64x64xf32>
    %39 = tpu.matmul %36, %37, %cst_14 {dimension_numbers = #tpu.dot_dimension_numbers<[1], [1], [0], [0], [0, 0, 1, 0], [], []>} : vector<64x64xbf16>, vector<64x64xbf16>, vector<64x64xf32> -> vector<64x64xf32>
    %cst_15 = arith.constant 1.250000e-01 : f32
    %40 = vector.broadcast %cst_15 : f32 to vector<64x64xf32>
    %41 = arith.mulf %39, %40 : vector<64x64xf32>
    %cst_16 = arith.constant -1.000000e+30 : f32
    %42 = vector.broadcast %cst_16 : f32 to vector<64x64xf32>
    %43 = arith.select %15, %41, %42 : vector<64x64xi1>, vector<64x64xf32>
    %cst_17 = arith.constant dense<0xFF800000> : vector<64xf32>
    %44 = vector.multi_reduction <maximumf>, %43, %cst_17 [1] : vector<64x64xf32> to vector<64xf32>
    %45 = vector.shape_cast %44 : vector<64xf32> to vector<64x1xf32>
    %46 = vector.broadcast %45 : vector<64x1xf32> to vector<64x64xf32>
    %47 = arith.subf %43, %46 : vector<64x64xf32>
    %48 = math.exp %47 : vector<64x64xf32>
    %cst_18 = arith.constant dense<0.000000e+00> : vector<64xf32>
    %49 = vector.multi_reduction <add>, %48, %cst_18 [1] : vector<64x64xf32> to vector<64xf32>
    %50 = vector.shape_cast %49 : vector<64xf32> to vector<64x1xf32>
    %51 = vector.broadcast %50 : vector<64x1xf32> to vector<64x64xf32>
    %52 = arith.divf %48, %51 : vector<64x64xf32>
    %53 = arith.truncf %52 : vector<64x64xf32> to vector<64x64xbf16>
    %cst_19 = arith.constant dense<0.000000e+00> : vector<64x64xf32>
    %54 = tpu.matmul %53, %38, %cst_19 {dimension_numbers = #tpu.dot_dimension_numbers<[1], [0], [0], [1], [0, 0, 1, 1], [], []>} : vector<64x64xbf16>, vector<64x64xbf16>, vector<64x64xf32> -> vector<64x64xf32>
    %55 = vector.extract_strided_slice %16 {offsets = [0, 128], sizes = [64, 64], strides = [1, 1]} : vector<64x768xbf16> to vector<64x64xbf16>
    %56 = vector.extract_strided_slice %16 {offsets = [0, 384], sizes = [64, 64], strides = [1, 1]} : vector<64x768xbf16> to vector<64x64xbf16>
    %57 = vector.extract_strided_slice %16 {offsets = [0, 640], sizes = [64, 64], strides = [1, 1]} : vector<64x768xbf16> to vector<64x64xbf16>
    %cst_20 = arith.constant dense<0.000000e+00> : vector<64x64xf32>
    %58 = tpu.matmul %55, %56, %cst_20 {dimension_numbers = #tpu.dot_dimension_numbers<[1], [1], [0], [0], [0, 0, 1, 0], [], []>} : vector<64x64xbf16>, vector<64x64xbf16>, vector<64x64xf32> -> vector<64x64xf32>
    %cst_21 = arith.constant 1.250000e-01 : f32
    %59 = vector.broadcast %cst_21 : f32 to vector<64x64xf32>
    %60 = arith.mulf %58, %59 : vector<64x64xf32>
    %cst_22 = arith.constant -1.000000e+30 : f32
    %61 = vector.broadcast %cst_22 : f32 to vector<64x64xf32>
    %62 = arith.select %15, %60, %61 : vector<64x64xi1>, vector<64x64xf32>
    %cst_23 = arith.constant dense<0xFF800000> : vector<64xf32>
    %63 = vector.multi_reduction <maximumf>, %62, %cst_23 [1] : vector<64x64xf32> to vector<64xf32>
    %64 = vector.shape_cast %63 : vector<64xf32> to vector<64x1xf32>
    %65 = vector.broadcast %64 : vector<64x1xf32> to vector<64x64xf32>
    %66 = arith.subf %62, %65 : vector<64x64xf32>
    %67 = math.exp %66 : vector<64x64xf32>
    %cst_24 = arith.constant dense<0.000000e+00> : vector<64xf32>
    %68 = vector.multi_reduction <add>, %67, %cst_24 [1] : vector<64x64xf32> to vector<64xf32>
    %69 = vector.shape_cast %68 : vector<64xf32> to vector<64x1xf32>
    %70 = vector.broadcast %69 : vector<64x1xf32> to vector<64x64xf32>
    %71 = arith.divf %67, %70 : vector<64x64xf32>
    %72 = arith.truncf %71 : vector<64x64xf32> to vector<64x64xbf16>
    %cst_25 = arith.constant dense<0.000000e+00> : vector<64x64xf32>
    %73 = tpu.matmul %72, %57, %cst_25 {dimension_numbers = #tpu.dot_dimension_numbers<[1], [0], [0], [1], [0, 0, 1, 1], [], []>} : vector<64x64xbf16>, vector<64x64xbf16>, vector<64x64xf32> -> vector<64x64xf32>
    %74 = vector.extract_strided_slice %16 {offsets = [0, 192], sizes = [64, 64], strides = [1, 1]} : vector<64x768xbf16> to vector<64x64xbf16>
    %75 = vector.extract_strided_slice %16 {offsets = [0, 448], sizes = [64, 64], strides = [1, 1]} : vector<64x768xbf16> to vector<64x64xbf16>
    %76 = vector.extract_strided_slice %16 {offsets = [0, 704], sizes = [64, 64], strides = [1, 1]} : vector<64x768xbf16> to vector<64x64xbf16>
    %cst_26 = arith.constant dense<0.000000e+00> : vector<64x64xf32>
    %77 = tpu.matmul %74, %75, %cst_26 {dimension_numbers = #tpu.dot_dimension_numbers<[1], [1], [0], [0], [0, 0, 1, 0], [], []>} : vector<64x64xbf16>, vector<64x64xbf16>, vector<64x64xf32> -> vector<64x64xf32>
    %cst_27 = arith.constant 1.250000e-01 : f32
    %78 = vector.broadcast %cst_27 : f32 to vector<64x64xf32>
    %79 = arith.mulf %77, %78 : vector<64x64xf32>
    %cst_28 = arith.constant -1.000000e+30 : f32
    %80 = vector.broadcast %cst_28 : f32 to vector<64x64xf32>
    %81 = arith.select %15, %79, %80 : vector<64x64xi1>, vector<64x64xf32>
    %cst_29 = arith.constant dense<0xFF800000> : vector<64xf32>
    %82 = vector.multi_reduction <maximumf>, %81, %cst_29 [1] : vector<64x64xf32> to vector<64xf32>
    %83 = vector.shape_cast %82 : vector<64xf32> to vector<64x1xf32>
    %84 = vector.broadcast %83 : vector<64x1xf32> to vector<64x64xf32>
    %85 = arith.subf %81, %84 : vector<64x64xf32>
    %86 = math.exp %85 : vector<64x64xf32>
    %cst_30 = arith.constant dense<0.000000e+00> : vector<64xf32>
    %87 = vector.multi_reduction <add>, %86, %cst_30 [1] : vector<64x64xf32> to vector<64xf32>
    %88 = vector.shape_cast %87 : vector<64xf32> to vector<64x1xf32>
    %89 = vector.broadcast %88 : vector<64x1xf32> to vector<64x64xf32>
    %90 = arith.divf %86, %89 : vector<64x64xf32>
    %91 = arith.truncf %90 : vector<64x64xf32> to vector<64x64xbf16>
    %cst_31 = arith.constant dense<0.000000e+00> : vector<64x64xf32>
    %92 = tpu.matmul %91, %76, %cst_31 {dimension_numbers = #tpu.dot_dimension_numbers<[1], [0], [0], [1], [0, 0, 1, 1], [], []>} : vector<64x64xbf16>, vector<64x64xbf16>, vector<64x64xf32> -> vector<64x64xf32>
    %93 = tpu.concatenate %35, %54, %73, %92 in 1 : vector<64x64xf32>, vector<64x64xf32>, vector<64x64xf32>, vector<64x64xf32> -> vector<64x256xf32>
    %94 = vector.extract_strided_slice %12 {offsets = [64, 0], sizes = [64, 768], strides = [1, 1]} : vector<128x768xbf16> to vector<64x768xbf16>
    %95 = vector.extract_strided_slice %94 {offsets = [0, 0], sizes = [64, 64], strides = [1, 1]} : vector<64x768xbf16> to vector<64x64xbf16>
    %96 = vector.extract_strided_slice %94 {offsets = [0, 256], sizes = [64, 64], strides = [1, 1]} : vector<64x768xbf16> to vector<64x64xbf16>
    %97 = vector.extract_strided_slice %94 {offsets = [0, 512], sizes = [64, 64], strides = [1, 1]} : vector<64x768xbf16> to vector<64x64xbf16>
    %cst_32 = arith.constant dense<0.000000e+00> : vector<64x64xf32>
    %98 = tpu.matmul %95, %96, %cst_32 {dimension_numbers = #tpu.dot_dimension_numbers<[1], [1], [0], [0], [0, 0, 1, 0], [], []>} : vector<64x64xbf16>, vector<64x64xbf16>, vector<64x64xf32> -> vector<64x64xf32>
    %cst_33 = arith.constant 1.250000e-01 : f32
    %99 = vector.broadcast %cst_33 : f32 to vector<64x64xf32>
    %100 = arith.mulf %98, %99 : vector<64x64xf32>
    %cst_34 = arith.constant -1.000000e+30 : f32
    %101 = vector.broadcast %cst_34 : f32 to vector<64x64xf32>
    %102 = arith.select %15, %100, %101 : vector<64x64xi1>, vector<64x64xf32>
    %cst_35 = arith.constant dense<0xFF800000> : vector<64xf32>
    %103 = vector.multi_reduction <maximumf>, %102, %cst_35 [1] : vector<64x64xf32> to vector<64xf32>
    %104 = vector.shape_cast %103 : vector<64xf32> to vector<64x1xf32>
    %105 = vector.broadcast %104 : vector<64x1xf32> to vector<64x64xf32>
    %106 = arith.subf %102, %105 : vector<64x64xf32>
    %107 = math.exp %106 : vector<64x64xf32>
    %cst_36 = arith.constant dense<0.000000e+00> : vector<64xf32>
    %108 = vector.multi_reduction <add>, %107, %cst_36 [1] : vector<64x64xf32> to vector<64xf32>
    %109 = vector.shape_cast %108 : vector<64xf32> to vector<64x1xf32>
    %110 = vector.broadcast %109 : vector<64x1xf32> to vector<64x64xf32>
    %111 = arith.divf %107, %110 : vector<64x64xf32>
    %112 = arith.truncf %111 : vector<64x64xf32> to vector<64x64xbf16>
    %cst_37 = arith.constant dense<0.000000e+00> : vector<64x64xf32>
    %113 = tpu.matmul %112, %97, %cst_37 {dimension_numbers = #tpu.dot_dimension_numbers<[1], [0], [0], [1], [0, 0, 1, 1], [], []>} : vector<64x64xbf16>, vector<64x64xbf16>, vector<64x64xf32> -> vector<64x64xf32>
    %114 = vector.extract_strided_slice %94 {offsets = [0, 64], sizes = [64, 64], strides = [1, 1]} : vector<64x768xbf16> to vector<64x64xbf16>
    %115 = vector.extract_strided_slice %94 {offsets = [0, 320], sizes = [64, 64], strides = [1, 1]} : vector<64x768xbf16> to vector<64x64xbf16>
    %116 = vector.extract_strided_slice %94 {offsets = [0, 576], sizes = [64, 64], strides = [1, 1]} : vector<64x768xbf16> to vector<64x64xbf16>
    %cst_38 = arith.constant dense<0.000000e+00> : vector<64x64xf32>
    %117 = tpu.matmul %114, %115, %cst_38 {dimension_numbers = #tpu.dot_dimension_numbers<[1], [1], [0], [0], [0, 0, 1, 0], [], []>} : vector<64x64xbf16>, vector<64x64xbf16>, vector<64x64xf32> -> vector<64x64xf32>
    %cst_39 = arith.constant 1.250000e-01 : f32
    %118 = vector.broadcast %cst_39 : f32 to vector<64x64xf32>
    %119 = arith.mulf %117, %118 : vector<64x64xf32>
    %cst_40 = arith.constant -1.000000e+30 : f32
    %120 = vector.broadcast %cst_40 : f32 to vector<64x64xf32>
    %121 = arith.select %15, %119, %120 : vector<64x64xi1>, vector<64x64xf32>
    %cst_41 = arith.constant dense<0xFF800000> : vector<64xf32>
    %122 = vector.multi_reduction <maximumf>, %121, %cst_41 [1] : vector<64x64xf32> to vector<64xf32>
    %123 = vector.shape_cast %122 : vector<64xf32> to vector<64x1xf32>
    %124 = vector.broadcast %123 : vector<64x1xf32> to vector<64x64xf32>
    %125 = arith.subf %121, %124 : vector<64x64xf32>
    %126 = math.exp %125 : vector<64x64xf32>
    %cst_42 = arith.constant dense<0.000000e+00> : vector<64xf32>
    %127 = vector.multi_reduction <add>, %126, %cst_42 [1] : vector<64x64xf32> to vector<64xf32>
    %128 = vector.shape_cast %127 : vector<64xf32> to vector<64x1xf32>
    %129 = vector.broadcast %128 : vector<64x1xf32> to vector<64x64xf32>
    %130 = arith.divf %126, %129 : vector<64x64xf32>
    %131 = arith.truncf %130 : vector<64x64xf32> to vector<64x64xbf16>
    %cst_43 = arith.constant dense<0.000000e+00> : vector<64x64xf32>
    %132 = tpu.matmul %131, %116, %cst_43 {dimension_numbers = #tpu.dot_dimension_numbers<[1], [0], [0], [1], [0, 0, 1, 1], [], []>} : vector<64x64xbf16>, vector<64x64xbf16>, vector<64x64xf32> -> vector<64x64xf32>
    %133 = vector.extract_strided_slice %94 {offsets = [0, 128], sizes = [64, 64], strides = [1, 1]} : vector<64x768xbf16> to vector<64x64xbf16>
    %134 = vector.extract_strided_slice %94 {offsets = [0, 384], sizes = [64, 64], strides = [1, 1]} : vector<64x768xbf16> to vector<64x64xbf16>
    %135 = vector.extract_strided_slice %94 {offsets = [0, 640], sizes = [64, 64], strides = [1, 1]} : vector<64x768xbf16> to vector<64x64xbf16>
    %cst_44 = arith.constant dense<0.000000e+00> : vector<64x64xf32>
    %136 = tpu.matmul %133, %134, %cst_44 {dimension_numbers = #tpu.dot_dimension_numbers<[1], [1], [0], [0], [0, 0, 1, 0], [], []>} : vector<64x64xbf16>, vector<64x64xbf16>, vector<64x64xf32> -> vector<64x64xf32>
    %cst_45 = arith.constant 1.250000e-01 : f32
    %137 = vector.broadcast %cst_45 : f32 to vector<64x64xf32>
    %138 = arith.mulf %136, %137 : vector<64x64xf32>
    %cst_46 = arith.constant -1.000000e+30 : f32
    %139 = vector.broadcast %cst_46 : f32 to vector<64x64xf32>
    %140 = arith.select %15, %138, %139 : vector<64x64xi1>, vector<64x64xf32>
    %cst_47 = arith.constant dense<0xFF800000> : vector<64xf32>
    %141 = vector.multi_reduction <maximumf>, %140, %cst_47 [1] : vector<64x64xf32> to vector<64xf32>
    %142 = vector.shape_cast %141 : vector<64xf32> to vector<64x1xf32>
    %143 = vector.broadcast %142 : vector<64x1xf32> to vector<64x64xf32>
    %144 = arith.subf %140, %143 : vector<64x64xf32>
    %145 = math.exp %144 : vector<64x64xf32>
    %cst_48 = arith.constant dense<0.000000e+00> : vector<64xf32>
    %146 = vector.multi_reduction <add>, %145, %cst_48 [1] : vector<64x64xf32> to vector<64xf32>
    %147 = vector.shape_cast %146 : vector<64xf32> to vector<64x1xf32>
    %148 = vector.broadcast %147 : vector<64x1xf32> to vector<64x64xf32>
    %149 = arith.divf %145, %148 : vector<64x64xf32>
    %150 = arith.truncf %149 : vector<64x64xf32> to vector<64x64xbf16>
    %cst_49 = arith.constant dense<0.000000e+00> : vector<64x64xf32>
    %151 = tpu.matmul %150, %135, %cst_49 {dimension_numbers = #tpu.dot_dimension_numbers<[1], [0], [0], [1], [0, 0, 1, 1], [], []>} : vector<64x64xbf16>, vector<64x64xbf16>, vector<64x64xf32> -> vector<64x64xf32>
    %152 = vector.extract_strided_slice %94 {offsets = [0, 192], sizes = [64, 64], strides = [1, 1]} : vector<64x768xbf16> to vector<64x64xbf16>
    %153 = vector.extract_strided_slice %94 {offsets = [0, 448], sizes = [64, 64], strides = [1, 1]} : vector<64x768xbf16> to vector<64x64xbf16>
    %154 = vector.extract_strided_slice %94 {offsets = [0, 704], sizes = [64, 64], strides = [1, 1]} : vector<64x768xbf16> to vector<64x64xbf16>
    %cst_50 = arith.constant dense<0.000000e+00> : vector<64x64xf32>
    %155 = tpu.matmul %152, %153, %cst_50 {dimension_numbers = #tpu.dot_dimension_numbers<[1], [1], [0], [0], [0, 0, 1, 0], [], []>} : vector<64x64xbf16>, vector<64x64xbf16>, vector<64x64xf32> -> vector<64x64xf32>
    %cst_51 = arith.constant 1.250000e-01 : f32
    %156 = vector.broadcast %cst_51 : f32 to vector<64x64xf32>
    %157 = arith.mulf %155, %156 : vector<64x64xf32>
    %cst_52 = arith.constant -1.000000e+30 : f32
    %158 = vector.broadcast %cst_52 : f32 to vector<64x64xf32>
    %159 = arith.select %15, %157, %158 : vector<64x64xi1>, vector<64x64xf32>
    %cst_53 = arith.constant dense<0xFF800000> : vector<64xf32>
    %160 = vector.multi_reduction <maximumf>, %159, %cst_53 [1] : vector<64x64xf32> to vector<64xf32>
    %161 = vector.shape_cast %160 : vector<64xf32> to vector<64x1xf32>
    %162 = vector.broadcast %161 : vector<64x1xf32> to vector<64x64xf32>
    %163 = arith.subf %159, %162 : vector<64x64xf32>
    %164 = math.exp %163 : vector<64x64xf32>
    %cst_54 = arith.constant dense<0.000000e+00> : vector<64xf32>
    %165 = vector.multi_reduction <add>, %164, %cst_54 [1] : vector<64x64xf32> to vector<64xf32>
    %166 = vector.shape_cast %165 : vector<64xf32> to vector<64x1xf32>
    %167 = vector.broadcast %166 : vector<64x1xf32> to vector<64x64xf32>
    %168 = arith.divf %164, %167 : vector<64x64xf32>
    %169 = arith.truncf %168 : vector<64x64xf32> to vector<64x64xbf16>
    %cst_55 = arith.constant dense<0.000000e+00> : vector<64x64xf32>
    %170 = tpu.matmul %169, %154, %cst_55 {dimension_numbers = #tpu.dot_dimension_numbers<[1], [0], [0], [1], [0, 0, 1, 1], [], []>} : vector<64x64xbf16>, vector<64x64xbf16>, vector<64x64xf32> -> vector<64x64xf32>
    %171 = tpu.concatenate %113, %132, %151, %170 in 1 : vector<64x64xf32>, vector<64x64xf32>, vector<64x64xf32>, vector<64x64xf32> -> vector<64x256xf32>
    %172 = tpu.concatenate %93, %171 in 0 : vector<64x256xf32>, vector<64x256xf32> -> vector<128x256xf32>
    %173 = arith.truncf %172 : vector<128x256xf32> to vector<128x256xbf16>
    %c0_56 = arith.constant 0 : index
    %c0_57 = arith.constant 0 : index
    %c0_58 = arith.constant 0 : index
    %174 = vector.load %arg4[%c0_56, %c0_57, %c0_58] : memref<1x256x256xbf16, #tpu.memory_space<vmem>>, vector<1x256x256xbf16>
    %175 = vector.shape_cast %174 : vector<1x256x256xbf16> to vector<256x256xbf16>
    %cst_59 = arith.constant dense<0.000000e+00> : vector<128x256xf32>
    %176 = tpu.matmul %173, %175, %cst_59 {dimension_numbers = #tpu.dot_dimension_numbers<[1], [0], [0], [1], [0, 0, 1, 1], [], []>} : vector<128x256xbf16>, vector<256x256xbf16>, vector<128x256xf32> -> vector<128x256xf32>
    %c0_60 = arith.constant 0 : index
    %c0_61 = arith.constant 0 : index
    %c0_62 = arith.constant 0 : index
    %177 = vector.load %arg5[%c0_60, %c0_61, %c0_62] : memref<1x1x256xf32, #tpu.memory_space<vmem>>, vector<1x1x256xf32>
    %178 = vector.shape_cast %177 : vector<1x1x256xf32> to vector<1x256xf32>
    %179 = vector.broadcast %178 : vector<1x256xf32> to vector<128x256xf32>
    %180 = arith.addf %176, %179 : vector<128x256xf32>
    %181 = arith.addf %180, %3 : vector<128x256xf32>
    %c0_63 = arith.constant 0 : index
    %c0_64 = arith.constant 0 : index
    %c0_65 = arith.constant 0 : index
    %182 = vector.load %arg6[%c0_63, %c0_64, %c0_65] : memref<1x1x256xf32, #tpu.memory_space<vmem>>, vector<1x1x256xf32>
    %183 = vector.shape_cast %182 : vector<1x1x256xf32> to vector<1x256xf32>
    %c0_66 = arith.constant 0 : index
    %c0_67 = arith.constant 0 : index
    %c0_68 = arith.constant 0 : index
    %184 = vector.load %arg7[%c0_66, %c0_67, %c0_68] : memref<1x1x256xf32, #tpu.memory_space<vmem>>, vector<1x1x256xf32>
    %185 = vector.shape_cast %184 : vector<1x1x256xf32> to vector<1x256xf32>
    %cst_69 = arith.constant dense<0.000000e+00> : vector<128xf32>
    %186 = vector.multi_reduction <add>, %181, %cst_69 [1] : vector<128x256xf32> to vector<128xf32>
    %187 = vector.shape_cast %186 : vector<128xf32> to vector<128x1xf32>
    %cst_70 = arith.constant 2.560000e+02 : f32
    %188 = vector.broadcast %cst_70 : f32 to vector<128x1xf32>
    %189 = arith.divf %187, %188 : vector<128x1xf32>
    %190 = vector.broadcast %189 : vector<128x1xf32> to vector<128x256xf32>
    %191 = arith.subf %181, %190 : vector<128x256xf32>
    %192 = arith.mulf %191, %191 : vector<128x256xf32>
    %cst_71 = arith.constant dense<0.000000e+00> : vector<128xf32>
    %193 = vector.multi_reduction <add>, %192, %cst_71 [1] : vector<128x256xf32> to vector<128xf32>
    %194 = vector.shape_cast %193 : vector<128xf32> to vector<128x1xf32>
    %cst_72 = arith.constant 2.560000e+02 : f32
    %195 = vector.broadcast %cst_72 : f32 to vector<128x1xf32>
    %196 = arith.divf %194, %195 : vector<128x1xf32>
    %197 = vector.broadcast %189 : vector<128x1xf32> to vector<128x256xf32>
    %198 = arith.subf %181, %197 : vector<128x256xf32>
    %cst_73 = arith.constant 9.99999974E-6 : f32
    %199 = vector.broadcast %cst_73 : f32 to vector<128x1xf32>
    %200 = arith.addf %196, %199 : vector<128x1xf32>
    %201 = math.rsqrt %200 : vector<128x1xf32>
    %202 = vector.broadcast %201 : vector<128x1xf32> to vector<128x256xf32>
    %203 = arith.mulf %198, %202 : vector<128x256xf32>
    %204 = vector.broadcast %183 : vector<1x256xf32> to vector<128x256xf32>
    %205 = arith.mulf %203, %204 : vector<128x256xf32>
    %206 = vector.broadcast %185 : vector<1x256xf32> to vector<128x256xf32>
    %207 = arith.addf %205, %206 : vector<128x256xf32>
    %208 = arith.truncf %207 : vector<128x256xf32> to vector<128x256xbf16>
    %c0_74 = arith.constant 0 : index
    %c0_75 = arith.constant 0 : index
    %c0_76 = arith.constant 0 : index
    %209 = vector.load %arg11[%c0_74, %c0_75, %c0_76] : memref<1x1x256xf32, #tpu.memory_space<vmem>>, vector<1x1x256xf32>
    %210 = vector.shape_cast %209 : vector<1x1x256xf32> to vector<1x256xf32>
    %211 = vector.broadcast %210 : vector<1x256xf32> to vector<128x256xf32>
    %212 = arith.addf %207, %211 : vector<128x256xf32>
    %c0_77 = arith.constant 0 : index
    %c0_78 = arith.constant 0 : index
    %c0_79 = arith.constant 0 : index
    %213 = vector.load %arg8[%c0_77, %c0_78, %c0_79] : memref<1x256x2048xbf16, #tpu.memory_space<vmem>>, vector<1x256x512xbf16>
    %214 = vector.shape_cast %213 : vector<1x256x512xbf16> to vector<256x512xbf16>
    %c0_80 = arith.constant 0 : index
    %c0_81 = arith.constant 0 : index
    %c0_82 = arith.constant 0 : index
    %215 = vector.load %arg9[%c0_80, %c0_81, %c0_82] : memref<1x1x2048xf32, #tpu.memory_space<vmem>>, vector<1x1x512xf32>
    %216 = vector.shape_cast %215 : vector<1x1x512xf32> to vector<1x512xf32>
    %cst_83 = arith.constant dense<0.000000e+00> : vector<128x512xf32>
    %217 = tpu.matmul %208, %214, %cst_83 {dimension_numbers = #tpu.dot_dimension_numbers<[1], [0], [0], [1], [0, 0, 1, 1], [], []>} : vector<128x256xbf16>, vector<256x512xbf16>, vector<128x512xf32> -> vector<128x512xf32>
    %218 = vector.broadcast %216 : vector<1x512xf32> to vector<128x512xf32>
    %219 = arith.addf %217, %218 : vector<128x512xf32>
    %cst_84 = arith.constant 0.000000e+00 : f32
    %220 = vector.broadcast %cst_84 : f32 to vector<128x512xf32>
    %221 = arith.maximumf %219, %220 : vector<128x512xf32>
    %222 = arith.truncf %221 : vector<128x512xf32> to vector<128x512xbf16>
    %c0_85 = arith.constant 0 : index
    %c0_86 = arith.constant 0 : index
    %c0_87 = arith.constant 0 : index
    %223 = vector.load %arg10[%c0_85, %c0_86, %c0_87] : memref<1x2048x256xbf16, #tpu.memory_space<vmem>>, vector<1x512x256xbf16>
    %224 = vector.shape_cast %223 : vector<1x512x256xbf16> to vector<512x256xbf16>
    %cst_88 = arith.constant dense<0.000000e+00> : vector<128x256xf32>
    %225 = tpu.matmul %222, %224, %cst_88 {dimension_numbers = #tpu.dot_dimension_numbers<[1], [0], [0], [1], [0, 0, 1, 1], [], []>} : vector<128x512xbf16>, vector<512x256xbf16>, vector<128x256xf32> -> vector<128x256xf32>
    %226 = arith.addf %212, %225 : vector<128x256xf32>
    %c0_89 = arith.constant 0 : index
    %c0_90 = arith.constant 0 : index
    %c512 = arith.constant 512 : index
    %227 = vector.load %arg8[%c0_89, %c0_90, %c512] : memref<1x256x2048xbf16, #tpu.memory_space<vmem>>, vector<1x256x512xbf16>
    %228 = vector.shape_cast %227 : vector<1x256x512xbf16> to vector<256x512xbf16>
    %c0_91 = arith.constant 0 : index
    %c0_92 = arith.constant 0 : index
    %c512_93 = arith.constant 512 : index
    %229 = vector.load %arg9[%c0_91, %c0_92, %c512_93] : memref<1x1x2048xf32, #tpu.memory_space<vmem>>, vector<1x1x512xf32>
    %230 = vector.shape_cast %229 : vector<1x1x512xf32> to vector<1x512xf32>
    %cst_94 = arith.constant dense<0.000000e+00> : vector<128x512xf32>
    %231 = tpu.matmul %208, %228, %cst_94 {dimension_numbers = #tpu.dot_dimension_numbers<[1], [0], [0], [1], [0, 0, 1, 1], [], []>} : vector<128x256xbf16>, vector<256x512xbf16>, vector<128x512xf32> -> vector<128x512xf32>
    %232 = vector.broadcast %230 : vector<1x512xf32> to vector<128x512xf32>
    %233 = arith.addf %231, %232 : vector<128x512xf32>
    %cst_95 = arith.constant 0.000000e+00 : f32
    %234 = vector.broadcast %cst_95 : f32 to vector<128x512xf32>
    %235 = arith.maximumf %233, %234 : vector<128x512xf32>
    %236 = arith.truncf %235 : vector<128x512xf32> to vector<128x512xbf16>
    %c0_96 = arith.constant 0 : index
    %c512_97 = arith.constant 512 : index
    %c0_98 = arith.constant 0 : index
    %237 = vector.load %arg10[%c0_96, %c512_97, %c0_98] : memref<1x2048x256xbf16, #tpu.memory_space<vmem>>, vector<1x512x256xbf16>
    %238 = vector.shape_cast %237 : vector<1x512x256xbf16> to vector<512x256xbf16>
    %cst_99 = arith.constant dense<0.000000e+00> : vector<128x256xf32>
    %239 = tpu.matmul %236, %238, %cst_99 {dimension_numbers = #tpu.dot_dimension_numbers<[1], [0], [0], [1], [0, 0, 1, 1], [], []>} : vector<128x512xbf16>, vector<512x256xbf16>, vector<128x256xf32> -> vector<128x256xf32>
    %240 = arith.addf %226, %239 : vector<128x256xf32>
    %c0_100 = arith.constant 0 : index
    %c0_101 = arith.constant 0 : index
    %c1024 = arith.constant 1024 : index
    %241 = vector.load %arg8[%c0_100, %c0_101, %c1024] : memref<1x256x2048xbf16, #tpu.memory_space<vmem>>, vector<1x256x512xbf16>
    %242 = vector.shape_cast %241 : vector<1x256x512xbf16> to vector<256x512xbf16>
    %c0_102 = arith.constant 0 : index
    %c0_103 = arith.constant 0 : index
    %c1024_104 = arith.constant 1024 : index
    %243 = vector.load %arg9[%c0_102, %c0_103, %c1024_104] : memref<1x1x2048xf32, #tpu.memory_space<vmem>>, vector<1x1x512xf32>
    %244 = vector.shape_cast %243 : vector<1x1x512xf32> to vector<1x512xf32>
    %cst_105 = arith.constant dense<0.000000e+00> : vector<128x512xf32>
    %245 = tpu.matmul %208, %242, %cst_105 {dimension_numbers = #tpu.dot_dimension_numbers<[1], [0], [0], [1], [0, 0, 1, 1], [], []>} : vector<128x256xbf16>, vector<256x512xbf16>, vector<128x512xf32> -> vector<128x512xf32>
    %246 = vector.broadcast %244 : vector<1x512xf32> to vector<128x512xf32>
    %247 = arith.addf %245, %246 : vector<128x512xf32>
    %cst_106 = arith.constant 0.000000e+00 : f32
    %248 = vector.broadcast %cst_106 : f32 to vector<128x512xf32>
    %249 = arith.maximumf %247, %248 : vector<128x512xf32>
    %250 = arith.truncf %249 : vector<128x512xf32> to vector<128x512xbf16>
    %c0_107 = arith.constant 0 : index
    %c1024_108 = arith.constant 1024 : index
    %c0_109 = arith.constant 0 : index
    %251 = vector.load %arg10[%c0_107, %c1024_108, %c0_109] : memref<1x2048x256xbf16, #tpu.memory_space<vmem>>, vector<1x512x256xbf16>
    %252 = vector.shape_cast %251 : vector<1x512x256xbf16> to vector<512x256xbf16>
    %cst_110 = arith.constant dense<0.000000e+00> : vector<128x256xf32>
    %253 = tpu.matmul %250, %252, %cst_110 {dimension_numbers = #tpu.dot_dimension_numbers<[1], [0], [0], [1], [0, 0, 1, 1], [], []>} : vector<128x512xbf16>, vector<512x256xbf16>, vector<128x256xf32> -> vector<128x256xf32>
    %254 = arith.addf %240, %253 : vector<128x256xf32>
    %c0_111 = arith.constant 0 : index
    %c0_112 = arith.constant 0 : index
    %c1536 = arith.constant 1536 : index
    %255 = vector.load %arg8[%c0_111, %c0_112, %c1536] : memref<1x256x2048xbf16, #tpu.memory_space<vmem>>, vector<1x256x512xbf16>
    %256 = vector.shape_cast %255 : vector<1x256x512xbf16> to vector<256x512xbf16>
    %c0_113 = arith.constant 0 : index
    %c0_114 = arith.constant 0 : index
    %c1536_115 = arith.constant 1536 : index
    %257 = vector.load %arg9[%c0_113, %c0_114, %c1536_115] : memref<1x1x2048xf32, #tpu.memory_space<vmem>>, vector<1x1x512xf32>
    %258 = vector.shape_cast %257 : vector<1x1x512xf32> to vector<1x512xf32>
    %cst_116 = arith.constant dense<0.000000e+00> : vector<128x512xf32>
    %259 = tpu.matmul %208, %256, %cst_116 {dimension_numbers = #tpu.dot_dimension_numbers<[1], [0], [0], [1], [0, 0, 1, 1], [], []>} : vector<128x256xbf16>, vector<256x512xbf16>, vector<128x512xf32> -> vector<128x512xf32>
    %260 = vector.broadcast %258 : vector<1x512xf32> to vector<128x512xf32>
    %261 = arith.addf %259, %260 : vector<128x512xf32>
    %cst_117 = arith.constant 0.000000e+00 : f32
    %262 = vector.broadcast %cst_117 : f32 to vector<128x512xf32>
    %263 = arith.maximumf %261, %262 : vector<128x512xf32>
    %264 = arith.truncf %263 : vector<128x512xf32> to vector<128x512xbf16>
    %c0_118 = arith.constant 0 : index
    %c1536_119 = arith.constant 1536 : index
    %c0_120 = arith.constant 0 : index
    %265 = vector.load %arg10[%c0_118, %c1536_119, %c0_120] : memref<1x2048x256xbf16, #tpu.memory_space<vmem>>, vector<1x512x256xbf16>
    %266 = vector.shape_cast %265 : vector<1x512x256xbf16> to vector<512x256xbf16>
    %cst_121 = arith.constant dense<0.000000e+00> : vector<128x256xf32>
    %267 = tpu.matmul %264, %266, %cst_121 {dimension_numbers = #tpu.dot_dimension_numbers<[1], [0], [0], [1], [0, 0, 1, 1], [], []>} : vector<128x512xbf16>, vector<512x256xbf16>, vector<128x256xf32> -> vector<128x256xf32>
    %268 = arith.addf %254, %267 : vector<128x256xf32>
    %c0_122 = arith.constant 0 : index
    %c0_123 = arith.constant 0 : index
    %c0_124 = arith.constant 0 : index
    %269 = vector.load %arg12[%c0_122, %c0_123, %c0_124] : memref<1x1x256xf32, #tpu.memory_space<vmem>>, vector<1x1x256xf32>
    %270 = vector.shape_cast %269 : vector<1x1x256xf32> to vector<1x256xf32>
    %c0_125 = arith.constant 0 : index
    %c0_126 = arith.constant 0 : index
    %c0_127 = arith.constant 0 : index
    %271 = vector.load %arg13[%c0_125, %c0_126, %c0_127] : memref<1x1x256xf32, #tpu.memory_space<vmem>>, vector<1x1x256xf32>
    %272 = vector.shape_cast %271 : vector<1x1x256xf32> to vector<1x256xf32>
    %cst_128 = arith.constant dense<0.000000e+00> : vector<128xf32>
    %273 = vector.multi_reduction <add>, %268, %cst_128 [1] : vector<128x256xf32> to vector<128xf32>
    %274 = vector.shape_cast %273 : vector<128xf32> to vector<128x1xf32>
    %cst_129 = arith.constant 2.560000e+02 : f32
    %275 = vector.broadcast %cst_129 : f32 to vector<128x1xf32>
    %276 = arith.divf %274, %275 : vector<128x1xf32>
    %277 = vector.broadcast %276 : vector<128x1xf32> to vector<128x256xf32>
    %278 = arith.subf %268, %277 : vector<128x256xf32>
    %279 = arith.mulf %278, %278 : vector<128x256xf32>
    %cst_130 = arith.constant dense<0.000000e+00> : vector<128xf32>
    %280 = vector.multi_reduction <add>, %279, %cst_130 [1] : vector<128x256xf32> to vector<128xf32>
    %281 = vector.shape_cast %280 : vector<128xf32> to vector<128x1xf32>
    %cst_131 = arith.constant 2.560000e+02 : f32
    %282 = vector.broadcast %cst_131 : f32 to vector<128x1xf32>
    %283 = arith.divf %281, %282 : vector<128x1xf32>
    %284 = vector.broadcast %276 : vector<128x1xf32> to vector<128x256xf32>
    %285 = arith.subf %268, %284 : vector<128x256xf32>
    %cst_132 = arith.constant 9.99999974E-6 : f32
    %286 = vector.broadcast %cst_132 : f32 to vector<128x1xf32>
    %287 = arith.addf %283, %286 : vector<128x1xf32>
    %288 = math.rsqrt %287 : vector<128x1xf32>
    %289 = vector.broadcast %288 : vector<128x1xf32> to vector<128x256xf32>
    %290 = arith.mulf %285, %289 : vector<128x256xf32>
    %291 = vector.broadcast %270 : vector<1x256xf32> to vector<128x256xf32>
    %292 = arith.mulf %290, %291 : vector<128x256xf32>
    %293 = vector.broadcast %272 : vector<1x256xf32> to vector<128x256xf32>
    %294 = arith.addf %292, %293 : vector<128x256xf32>
    %c0_133 = arith.constant 0 : index
    %c0_134 = arith.constant 0 : index
    %295 = vector.load %arg14[%c0_133, %c0_134] : memref<128x256xf32, #tpu.memory_space<vmem>>, vector<128x256xf32>
    tpu.vector_store %arg14[%c0_133, %c0_134], %294 {strides = array<i32>} : memref<128x256xf32, #tpu.memory_space<vmem>>, vector<128x256xf32>,
    return
  }
  func.func @transform_0(%arg0: i32) -> (i32, i32) {
    %c0_i32 = arith.constant 0 : i32
    %c0_i32_0 = arith.constant 0 : i32
    %c0_i32_1 = arith.constant 0 : i32
    return %c0_i32, %c0_i32_0 : i32, i32
  }
  func.func @transform_1(%arg0: i32) -> (i32, i32, i32) {
    %c0_i32 = arith.constant 0 : i32
    %c0_i32_0 = arith.constant 0 : i32
    %c0_i32_1 = arith.constant 0 : i32
    return %arg0, %c0_i32, %c0_i32_0 : i32, i32, i32
  }
  func.func @transform_2(%arg0: i32) -> (i32, i32, i32) {
    %c0_i32 = arith.constant 0 : i32
    %c0_i32_0 = arith.constant 0 : i32
    %c0_i32_1 = arith.constant 0 : i32
    return %arg0, %c0_i32, %c0_i32_0 : i32, i32, i32
  }
  func.func @transform_3(%arg0: i32) -> (i32, i32, i32) {
    %c0_i32 = arith.constant 0 : i32
    %c0_i32_0 = arith.constant 0 : i32
    %c0_i32_1 = arith.constant 0 : i32
    return %arg0, %c0_i32, %c0_i32_0 : i32, i32, i32
  }
  func.func @transform_4(%arg0: i32) -> (i32, i32, i32) {
    %c0_i32 = arith.constant 0 : i32
    %c0_i32_0 = arith.constant 0 : i32
    %c0_i32_1 = arith.constant 0 : i32
    return %arg0, %c0_i32, %c0_i32_0 : i32, i32, i32
  }
  func.func @transform_5(%arg0: i32) -> (i32, i32, i32) {
    %c0_i32 = arith.constant 0 : i32
    %c0_i32_0 = arith.constant 0 : i32
    %c0_i32_1 = arith.constant 0 : i32
    return %arg0, %c0_i32, %c0_i32_0 : i32, i32, i32
  }
  func.func @transform_6(%arg0: i32) -> (i32, i32, i32) {
    %c0_i32 = arith.constant 0 : i32
    %c0_i32_0 = arith.constant 0 : i32
    %c0_i32_1 = arith.constant 0 : i32
    return %arg0, %c0_i32, %c0_i32_0 : i32, i32, i32
  }
  func.func @transform_7(%arg0: i32) -> (i32, i32, i32) {
    %c0_i32 = arith.constant 0 : i32
    %c0_i32_0 = arith.constant 0 : i32
    %c0_i32_1 = arith.constant 0 : i32
    return %arg0, %c0_i32, %c0_i32_0 : i32, i32, i32
  }
  func.func @transform_8(%arg0: i32) -> (i32, i32, i32) {
    %c0_i32 = arith.constant 0 : i32
    %c0_i32_0 = arith.constant 0 : i32
    %c0_i32_1 = arith.constant 0 : i32
    return %arg0, %c0_i32, %c0_i32_0 : i32, i32, i32
  }
  func.func @transform_9(%arg0: i32) -> (i32, i32, i32) {
    %c0_i32 = arith.constant 0 : i32
    %c0_i32_0 = arith.constant 0 : i32
    %c0_i32_1 = arith.constant 0 : i32
    return %arg0, %c0_i32, %c0_i32_0 : i32, i32, i32
  }
  func.func @transform_10(%arg0: i32) -> (i32, i32, i32) {
    %c0_i32 = arith.constant 0 : i32
    %c0_i32_0 = arith.constant 0 : i32
    %c0_i32_1 = arith.constant 0 : i32
    return %arg0, %c0_i32, %c0_i32_0 : i32, i32, i32
  }
  func.func @transform_11(%arg0: i32) -> (i32, i32, i32) {
    %c0_i32 = arith.constant 0 : i32
    %c0_i32_0 = arith.constant 0 : i32
    %c0_i32_1 = arith.constant 0 : i32
    return %arg0, %c0_i32, %c0_i32_0 : i32, i32, i32
  }
  func.func @transform_12(%arg0: i32) -> (i32, i32, i32) {
    %c0_i32 = arith.constant 0 : i32
    %c0_i32_0 = arith.constant 0 : i32
    %c0_i32_1 = arith.constant 0 : i32
    return %arg0, %c0_i32, %c0_i32_0 : i32, i32, i32
  }
  func.func @transform_13(%arg0: i32) -> (i32, i32) {
    %c0_i32 = arith.constant 0 : i32
    %c0_i32_0 = arith.constant 0 : i32
    %c0_i32_1 = arith.constant 0 : i32
    return %c0_i32, %c0_i32_0 : i32, i32
  }
}

</mosaic_0001>

<llo_original>
// kernel: transformer_encoder_forward.1
$region0: #{transformer_encoder_forward.1}
  #allocation0 [shape = 'u32[]', space=smem, size = 0x4, offset = 0x4, fixed_abs, tag = 'smem constant byte address 0x4 - core index']
  #allocation1 [shape = 'u32[144,128]{1,0:T(1,128)}', space=vmem, size = 0x12000, scoped, tag = 'internal scratch']
  %s0 = inlined_call_operand.vmem [shape: f32[128,256], index: 0, kind: input, shape index: {}]
  %s1 = inlined_call_operand.hbm [shape: bf16[2,256,768], index: 1, kind: input, shape index: {}]
  %s2 = inlined_call_operand.hbm [shape: f32[2,1,768], index: 2, kind: input, shape index: {}]
  %s3 = inlined_call_operand.hbm [shape: bf16[2,256,256], index: 3, kind: input, shape index: {}]
  %s4 = inlined_call_operand.hbm [shape: f32[2,1,256], index: 4, kind: input, shape index: {}]
  %s5 = inlined_call_operand.hbm [shape: f32[2,1,256], index: 5, kind: input, shape index: {}]
  %s6 = inlined_call_operand.hbm [shape: f32[2,1,256], index: 6, kind: input, shape index: {}]
  %s7 = inlined_call_operand.hbm [shape: bf16[2,256,2048], index: 7, kind: input, shape index: {}]
  %s8 = inlined_call_operand.hbm [shape: f32[2,1,2048], index: 8, kind: input, shape index: {}]
  %s9 = inlined_call_operand.hbm [shape: bf16[2,2048,256], index: 9, kind: input, shape index: {}]
  %s10 = inlined_call_operand.hbm [shape: f32[2,1,256], index: 10, kind: input, shape index: {}]
  %s11 = inlined_call_operand.hbm [shape: f32[2,1,256], index: 11, kind: input, shape index: {}]
  %s12 = inlined_call_operand.hbm [shape: f32[2,1,256], index: 12, kind: input, shape index: {}]
  %s13 = inlined_call_operand.vmem [shape: f32[128,256], index: 13, kind: output, shape index: {}]
  %s14 = sld [smem:[#allocation0]]
  $region137: #{transformer_encoder_forward.1} parent=0
    _
  %s16 = ssub.s32 1, %s14
  %s17 = scalar_select 0, %s16, %s14
  $region1: #{transformer_encoder_forward.1} parent=0
    #allocation2 [shape = 'u8[786432]{0}', space=vmem, size = 0xc0000, scoped, tag = 'input window, operand 1']
    #allocation3 [shape = 's32[2]{0}', space=sflag, size = 0x8, scoped, tag = 'scoped memory for transformer_encoder_forward.1']
    #allocation4 [shape = 'u8[6144]{0}', space=vmem, size = 0x1800, scoped, tag = 'input window, operand 2']
    #allocation5 [shape = 's32[2]{0}', space=sflag, size = 0x8, scoped, tag = 'scoped memory for transformer_encoder_forward.1']
    #allocation6 [shape = 'u8[262144]{0}', space=vmem, size = 0x40000, scoped, tag = 'input window, operand 3']
    #allocation7 [shape = 'u8[2048]{0}', space=vmem, size = 0x800, scoped, tag = 'input window, operand 4']
    #allocation8 [shape = 's32[2]{0}', space=sflag, size = 0x8, scoped, tag = 'scoped memory for transformer_encoder_forward.1']
    #allocation9 [shape = 'u8[2048]{0}', space=vmem, size = 0x800, scoped, tag = 'input window, operand 5']
    #allocation10 [shape = 'u8[2048]{0}', space=vmem, size = 0x800, scoped, tag = 'input window, operand 6']
    #allocation11 [shape = 's32[2]{0}', space=sflag, size = 0x8, scoped, tag = 'scoped memory for transformer_encoder_forward.1']
    #allocation12 [shape = 'u8[2097152]{0}', space=vmem, size = 0x200000, scoped, tag = 'input window, operand 7']
    #allocation13 [shape = 'u8[16384]{0}', space=vmem, size = 0x4000, scoped, tag = 'input window, operand 8']
    #allocation14 [shape = 's32[2]{0}', space=sflag, size = 0x8, scoped, tag = 'scoped memory for transformer_encoder_forward.1']
    #allocation15 [shape = 'u8[2097152]{0}', space=vmem, size = 0x200000, scoped, tag = 'input window, operand 9']
    #allocation16 [shape = 'u8[2048]{0}', space=vmem, size = 0x800, scoped, tag = 'input window, operand 10']
    #allocation17 [shape = 's32[2]{0}', space=sflag, size = 0x8, scoped, tag = 'scoped memory for transformer_encoder_forward.1']
    #allocation18 [shape = 'u8[2048]{0}', space=vmem, size = 0x800, scoped, tag = 'input window, operand 11']
    #allocation19 [shape = 'u8[2048]{0}', space=vmem, size = 0x800, scoped, tag = 'input window, operand 12']
    #allocation20 [shape = 's32[2]{0}', space=sflag, size = 0x8, scoped, tag = 'scoped memory for transformer_encoder_forward.1']
    %18 = vsyncpa [#allocation3], 0
    %s19 = scalar_lea.sflag [#allocation3], 1
    %20 = vsyncpa %s19, 0
    %21 = vsyncpa [#allocation5], 0
    %s22 = scalar_lea.sflag [#allocation5], 1
    %23 = vsyncpa %s22, 0
    %24 = vsyncpa [#allocation8], 0
    %s25 = scalar_lea.sflag [#allocation8], 1
    %26 = vsyncpa %s25, 0
    %27 = vsyncpa [#allocation11], 0
    %s28 = scalar_lea.sflag [#allocation11], 1
    %29 = vsyncpa %s28, 0
    %30 = vsyncpa [#allocation14], 0
    %s31 = scalar_lea.sflag [#allocation14], 1
    %32 = vsyncpa %s31, 0
    %33 = vsyncpa [#allocation17], 0
    %s34 = scalar_lea.sflag [#allocation17], 1
    %35 = vsyncpa %s34, 0
    %36 = vsyncpa [#allocation20], 0
    %s37 = scalar_lea.sflag [#allocation20], 1
    %38 = vsyncpa %s37, 0
    loop: start=0, step=1, limit=4
    $region2: #{transformer_encoder_forward.1} parent=1 // loop_pre_header
      _
    $region3: #{transformer_encoder_forward.1} parent=1 // loop_header
      %s40 = sphi 0, %s44
      %p41 = scmp.ge.s32.totalorder %s40, 4
      %s48 = sphi 0, %s48
      %s50 = sphi 0, %s48
      %s51 = sphi 0, %s50
      %s65 = sphi 0, %s51
      %s71 = sphi 0, %s73
      %s74 = sphi 0, %s71
      %s75 = sphi 0, %s74
      %s91 = sphi 0, %s75
      %s97 = sphi 0, %s99
      %s100 = sphi 0, %s97
      %s101 = sphi 0, %s100
      %s117 = sphi 0, %s101
      %s123 = sphi 0, %s125
      %s126 = sphi 0, %s123
      %s127 = sphi 0, %s126
      %s143 = sphi 0, %s127
      %s149 = sphi 0, %s151
      %s152 = sphi 0, %s149
      %s153 = sphi 0, %s152
      %s169 = sphi 0, %s153
      %s175 = sphi 0, %s177
      %s178 = sphi 0, %s175
      %s179 = sphi 0, %s178
      %s195 = sphi 0, %s179
      %s201 = sphi 0, %s203
      %s204 = sphi 0, %s201
      %s205 = sphi 0, %s204
      %s221 = sphi 0, %s205
      %s227 = sphi 0, %s229
      %s230 = sphi 0, %s227
      %s231 = sphi 0, %s230
      %s247 = sphi 0, %s231
      %s253 = sphi 0, %s255
      %s256 = sphi 0, %s253
      %s257 = sphi 0, %s256
      %s273 = sphi 0, %s257
      %s279 = sphi 0, %s281
      %s282 = sphi 0, %s279
      %s283 = sphi 0, %s282
      %s299 = sphi 0, %s283
      %s305 = sphi 0, %s307
      %s308 = sphi 0, %s305
      %s309 = sphi 0, %s308
      %s325 = sphi 0, %s309
      %s331 = sphi 0, %s333
      %s334 = sphi 0, %s331
      %s335 = sphi 0, %s334
      %s351 = sphi 0, %s335
      %s357 = sphi 0, %s359
      %s360 = sphi 0, %s357
      %s361 = sphi 0, %s360
      %s377 = sphi 0, %s361
      %s381 = sphi 0, %s381
      %s383 = sphi 0, %s381
      %s384 = sphi 0, %s383
      %s398 = sphi 0, %s384
    $region4: #{transformer_encoder_forward.1} parent=1 // loop_header_branch
      %43 = sbr.rel (%p41) target = $region8
    $region5: #{transformer_encoder_forward.1} parent=1 // loop_body
      %s45 = ssub.s32 %s40, 1
      %s46 = ssub.s32 %s40, 2
      %s47 = sadd.s32 %s40, 1
      %s49 = sadd.s32 %s48, 1
      %p52 = scmp.eq.s32.totalorder %s40, 1
      %p53 = scmp.ne.s32.totalorder %s48, %s50
      %p54 = scmp.eq.s32.totalorder %s40, 0
      %p55 = por %p53, %p54
      %p56 = scmp.ne.s32.totalorder %s48, %s50
      %p57 = scmp.eq.s32.totalorder %s45, 1
      %p58 = por %p56, %p57
      %p59 = scmp.ne.s32.totalorder %s50, %s51
      %p60 = scmp.eq.s32.totalorder %s45, 0
      %p61 = por %p59, %p60
      %p62 = scmp.ne.s32.totalorder %s50, %s51
      %p63 = scmp.eq.s32.totalorder %s46, 1
      %p64 = por %p62, %p63
      %p66 = scmp.ne.s32.totalorder %s51, %s65
      %p67 = scmp.eq.s32.totalorder %s46, 0
      %p68 = por %p66, %p67
      %s69 = ssub.s32 %s40, %s47
      %p70 = scmp.eq.s32.totalorder %s69, 0
      %s72 = sadd.s32 %s71, 1
      %s73 = scalar_select %p70, %s71, %s72
      %p76 = pneg %p70
      %p77 = scmp.eq.s32.totalorder %s40, 1
      %p78 = por %p76, %p77
      %p79 = scmp.ne.s32.totalorder %s71, %s74
      %p80 = scmp.eq.s32.totalorder %s40, 0
      %p81 = por %p79, %p80
      %p82 = scmp.ne.s32.totalorder %s71, %s74
      %p83 = scmp.eq.s32.totalorder %s45, 1
      %p84 = por %p82, %p83
      %p85 = scmp.ne.s32.totalorder %s74, %s75
      %p86 = scmp.eq.s32.totalorder %s45, 0
      %p87 = por %p85, %p86
      %p88 = scmp.ne.s32.totalorder %s74, %s75
      %p89 = scmp.eq.s32.totalorder %s46, 1
      %p90 = por %p88, %p89
      %p92 = scmp.ne.s32.totalorder %s75, %s91
      %p93 = scmp.eq.s32.totalorder %s46, 0
      %p94 = por %p92, %p93
      %s95 = ssub.s32 %s40, %s47
      %p96 = scmp.eq.s32.totalorder %s95, 0
      %s98 = sadd.s32 %s97, 1
      %s99 = scalar_select %p96, %s97, %s98
      %p102 = pneg %p96
      %p103 = scmp.eq.s32.totalorder %s40, 1
      %p104 = por %p102, %p103
      %p105 = scmp.ne.s32.totalorder %s97, %s100
      %p106 = scmp.eq.s32.totalorder %s40, 0
      %p107 = por %p105, %p106
      %p108 = scmp.ne.s32.totalorder %s97, %s100
      %p109 = scmp.eq.s32.totalorder %s45, 1
      %p110 = por %p108, %p109
      %p111 = scmp.ne.s32.totalorder %s100, %s101
      %p112 = scmp.eq.s32.totalorder %s45, 0
      %p113 = por %p111, %p112
      %p114 = scmp.ne.s32.totalorder %s100, %s101
      %p115 = scmp.eq.s32.totalorder %s46, 1
      %p116 = por %p114, %p115
      %p118 = scmp.ne.s32.totalorder %s101, %s117
      %p119 = scmp.eq.s32.totalorder %s46, 0
      %p120 = por %p118, %p119
      %s121 = ssub.s32 %s40, %s47
      %p122 = scmp.eq.s32.totalorder %s121, 0
      %s124 = sadd.s32 %s123, 1
      %s125 = scalar_select %p122, %s123, %s124
      %p128 = pneg %p122
      %p129 = scmp.eq.s32.totalorder %s40, 1
      %p130 = por %p128, %p129
      %p131 = scmp.ne.s32.totalorder %s123, %s126
      %p132 = scmp.eq.s32.totalorder %s40, 0
      %p133 = por %p131, %p132
      %p134 = scmp.ne.s32.totalorder %s123, %s126
      %p135 = scmp.eq.s32.totalorder %s45, 1
      %p136 = por %p134, %p135
      %p137 = scmp.ne.s32.totalorder %s126, %s127
      %p138 = scmp.eq.s32.totalorder %s45, 0
      %p139 = por %p137, %p138
      %p140 = scmp.ne.s32.totalorder %s126, %s127
      %p141 = scmp.eq.s32.totalorder %s46, 1
      %p142 = por %p140, %p141
      %p144 = scmp.ne.s32.totalorder %s127, %s143
      %p145 = scmp.eq.s32.totalorder %s46, 0
      %p146 = por %p144, %p145
      %s147 = ssub.s32 %s40, %s47
      %p148 = scmp.eq.s32.totalorder %s147, 0
      %s150 = sadd.s32 %s149, 1
      %s151 = scalar_select %p148, %s149, %s150
      %p154 = pneg %p148
      %p155 = scmp.eq.s32.totalorder %s40, 1
      %p156 = por %p154, %p155
      %p157 = scmp.ne.s32.totalorder %s149, %s152
      %p158 = scmp.eq.s32.totalorder %s40, 0
      %p159 = por %p157, %p158
      %p160 = scmp.ne.s32.totalorder %s149, %s152
      %p161 = scmp.eq.s32.totalorder %s45, 1
      %p162 = por %p160, %p161
      %p163 = scmp.ne.s32.totalorder %s152, %s153
      %p164 = scmp.eq.s32.totalorder %s45, 0
      %p165 = por %p163, %p164
      %p166 = scmp.ne.s32.totalorder %s152, %s153
      %p167 = scmp.eq.s32.totalorder %s46, 1
      %p168 = por %p166, %p167
      %p170 = scmp.ne.s32.totalorder %s153, %s169
      %p171 = scmp.eq.s32.totalorder %s46, 0
      %p172 = por %p170, %p171
      %s173 = ssub.s32 %s40, %s47
      %p174 = scmp.eq.s32.totalorder %s173, 0
      %s176 = sadd.s32 %s175, 1
      %s177 = scalar_select %p174, %s175, %s176
      %p180 = pneg %p174
      %p181 = scmp.eq.s32.totalorder %s40, 1
      %p182 = por %p180, %p181
      %p183 = scmp.ne.s32.totalorder %s175, %s178
      %p184 = scmp.eq.s32.totalorder %s40, 0
      %p185 = por %p183, %p184
      %p186 = scmp.ne.s32.totalorder %s175, %s178
      %p187 = scmp.eq.s32.totalorder %s45, 1
      %p188 = por %p186, %p187
      %p189 = scmp.ne.s32.totalorder %s178, %s179
      %p190 = scmp.eq.s32.totalorder %s45, 0
      %p191 = por %p189, %p190
      %p192 = scmp.ne.s32.totalorder %s178, %s179
      %p193 = scmp.eq.s32.totalorder %s46, 1
      %p194 = por %p192, %p193
      %p196 = scmp.ne.s32.totalorder %s179, %s195
      %p197 = scmp.eq.s32.totalorder %s46, 0
      %p198 = por %p196, %p197
      %s199 = ssub.s32 %s40, %s47
      %p200 = scmp.eq.s32.totalorder %s199, 0
      %s202 = sadd.s32 %s201, 1
      %s203 = scalar_select %p200, %s201, %s202
      %p206 = pneg %p200
      %p207 = scmp.eq.s32.totalorder %s40, 1
      %p208 = por %p206, %p207
      %p209 = scmp.ne.s32.totalorder %s201, %s204
      %p210 = scmp.eq.s32.totalorder %s40, 0
      %p211 = por %p209, %p210
      %p212 = scmp.ne.s32.totalorder %s201, %s204
      %p213 = scmp.eq.s32.totalorder %s45, 1
      %p214 = por %p212, %p213
      %p215 = scmp.ne.s32.totalorder %s204, %s205
      %p216 = scmp.eq.s32.totalorder %s45, 0
      %p217 = por %p215, %p216
      %p218 = scmp.ne.s32.totalorder %s204, %s205
      %p219 = scmp.eq.s32.totalorder %s46, 1
      %p220 = por %p218, %p219
      %p222 = scmp.ne.s32.totalorder %s205, %s221
      %p223 = scmp.eq.s32.totalorder %s46, 0
      %p224 = por %p222, %p223
      %s225 = ssub.s32 %s40, %s47
      %p226 = scmp.eq.s32.totalorder %s225, 0
      %s228 = sadd.s32 %s227, 1
      %s229 = scalar_select %p226, %s227, %s228
      %p232 = pneg %p226
      %p233 = scmp.eq.s32.totalorder %s40, 1
      %p234 = por %p232, %p233
      %p235 = scmp.ne.s32.totalorder %s227, %s230
      %p236 = scmp.eq.s32.totalorder %s40, 0
      %p237 = por %p235, %p236
      %p238 = scmp.ne.s32.totalorder %s227, %s230
      %p239 = scmp.eq.s32.totalorder %s45, 1
      %p240 = por %p238, %p239
      %p241 = scmp.ne.s32.totalorder %s230, %s231
      %p242 = scmp.eq.s32.totalorder %s45, 0
      %p243 = por %p241, %p242
      %p244 = scmp.ne.s32.totalorder %s230, %s231
      %p245 = scmp.eq.s32.totalorder %s46, 1
      %p246 = por %p244, %p245
      %p248 = scmp.ne.s32.totalorder %s231, %s247
      %p249 = scmp.eq.s32.totalorder %s46, 0
      %p250 = por %p248, %p249
      %s251 = ssub.s32 %s40, %s47
      %p252 = scmp.eq.s32.totalorder %s251, 0
      %s254 = sadd.s32 %s253, 1
      %s255 = scalar_select %p252, %s253, %s254
      %p258 = pneg %p252
      %p259 = scmp.eq.s32.totalorder %s40, 1
      %p260 = por %p258, %p259
      %p261 = scmp.ne.s32.totalorder %s253, %s256
      %p262 = scmp.eq.s32.totalorder %s40, 0
      %p263 = por %p261, %p262
      %p264 = scmp.ne.s32.totalorder %s253, %s256
      %p265 = scmp.eq.s32.totalorder %s45, 1
      %p266 = por %p264, %p265
      %p267 = scmp.ne.s32.totalorder %s256, %s257
      %p268 = scmp.eq.s32.totalorder %s45, 0
      %p269 = por %p267, %p268
      %p270 = scmp.ne.s32.totalorder %s256, %s257
      %p271 = scmp.eq.s32.totalorder %s46, 1
      %p272 = por %p270, %p271
      %p274 = scmp.ne.s32.totalorder %s257, %s273
      %p275 = scmp.eq.s32.totalorder %s46, 0
      %p276 = por %p274, %p275
      %s277 = ssub.s32 %s40, %s47
      %p278 = scmp.eq.s32.totalorder %s277, 0
      %s280 = sadd.s32 %s279, 1
      %s281 = scalar_select %p278, %s279, %s280
      %p284 = pneg %p278
      %p285 = scmp.eq.s32.totalorder %s40, 1
      %p286 = por %p284, %p285
      %p287 = scmp.ne.s32.totalorder %s279, %s282
      %p288 = scmp.eq.s32.totalorder %s40, 0
      %p289 = por %p287, %p288
      %p290 = scmp.ne.s32.totalorder %s279, %s282
      %p291 = scmp.eq.s32.totalorder %s45, 1
      %p292 = por %p290, %p291
      %p293 = scmp.ne.s32.totalorder %s282, %s283
      %p294 = scmp.eq.s32.totalorder %s45, 0
      %p295 = por %p293, %p294
      %p296 = scmp.ne.s32.totalorder %s282, %s283
      %p297 = scmp.eq.s32.totalorder %s46, 1
      %p298 = por %p296, %p297
      %p300 = scmp.ne.s32.totalorder %s283, %s299
      %p301 = scmp.eq.s32.totalorder %s46, 0
      %p302 = por %p300, %p301
      %s303 = ssub.s32 %s40, %s47
      %p304 = scmp.eq.s32.totalorder %s303, 0
      %s306 = sadd.s32 %s305, 1
      %s307 = scalar_select %p304, %s305, %s306
      %p310 = pneg %p304
      %p311 = scmp.eq.s32.totalorder %s40, 1
      %p312 = por %p310, %p311
      %p313 = scmp.ne.s32.totalorder %s305, %s308
      %p314 = scmp.eq.s32.totalorder %s40, 0
      %p315 = por %p313, %p314
      %p316 = scmp.ne.s32.totalorder %s305, %s308
      %p317 = scmp.eq.s32.totalorder %s45, 1
      %p318 = por %p316, %p317
      %p319 = scmp.ne.s32.totalorder %s308, %s309
      %p320 = scmp.eq.s32.totalorder %s45, 0
      %p321 = por %p319, %p320
      %p322 = scmp.ne.s32.totalorder %s308, %s309
      %p323 = scmp.eq.s32.totalorder %s46, 1
      %p324 = por %p322, %p323
      %p326 = scmp.ne.s32.totalorder %s309, %s325
      %p327 = scmp.eq.s32.totalorder %s46, 0
      %p328 = por %p326, %p327
      %s329 = ssub.s32 %s40, %s47
      %p330 = scmp.eq.s32.totalorder %s329, 0
      %s332 = sadd.s32 %s331, 1
      %s333 = scalar_select %p330, %s331, %s332
      %p336 = pneg %p330
      %p337 = scmp.eq.s32.totalorder %s40, 1
      %p338 = por %p336, %p337
      %p339 = scmp.ne.s32.totalorder %s331, %s334
      %p340 = scmp.eq.s32.totalorder %s40, 0
      %p341 = por %p339, %p340
      %p342 = scmp.ne.s32.totalorder %s331, %s334
      %p343 = scmp.eq.s32.totalorder %s45, 1
      %p344 = por %p342, %p343
      %p345 = scmp.ne.s32.totalorder %s334, %s335
      %p346 = scmp.eq.s32.totalorder %s45, 0
      %p347 = por %p345, %p346
      %p348 = scmp.ne.s32.totalorder %s334, %s335
      %p349 = scmp.eq.s32.totalorder %s46, 1
      %p350 = por %p348, %p349
      %p352 = scmp.ne.s32.totalorder %s335, %s351
      %p353 = scmp.eq.s32.totalorder %s46, 0
      %p354 = por %p352, %p353
      %s355 = ssub.s32 %s40, %s47
      %p356 = scmp.eq.s32.totalorder %s355, 0
      %s358 = sadd.s32 %s357, 1
      %s359 = scalar_select %p356, %s357, %s358
      %p362 = pneg %p356
      %p363 = scmp.eq.s32.totalorder %s40, 1
      %p364 = por %p362, %p363
      %p365 = scmp.ne.s32.totalorder %s357, %s360
      %p366 = scmp.eq.s32.totalorder %s40, 0
      %p367 = por %p365, %p366
      %p368 = scmp.ne.s32.totalorder %s357, %s360
      %p369 = scmp.eq.s32.totalorder %s45, 1
      %p370 = por %p368, %p369
      %p371 = scmp.ne.s32.totalorder %s360, %s361
      %p372 = scmp.eq.s32.totalorder %s45, 0
      %p373 = por %p371, %p372
      %p374 = scmp.ne.s32.totalorder %s360, %s361
      %p375 = scmp.eq.s32.totalorder %s46, 1
      %p376 = por %p374, %p375
      %p378 = scmp.ne.s32.totalorder %s361, %s377
      %p379 = scmp.eq.s32.totalorder %s46, 0
      %p380 = por %p378, %p379
      %s382 = sadd.s32 %s381, 1
      %p385 = scmp.eq.s32.totalorder %s40, 1
      %p386 = scmp.ne.s32.totalorder %s381, %s383
      %p387 = scmp.eq.s32.totalorder %s40, 0
      %p388 = por %p386, %p387
      %p389 = scmp.ne.s32.totalorder %s381, %s383
      %p390 = scmp.eq.s32.totalorder %s45, 1
      %p391 = por %p389, %p390
      %p392 = scmp.ne.s32.totalorder %s383, %s384
      %p393 = scmp.eq.s32.totalorder %s45, 0
      %p394 = por %p392, %p393
      %p395 = scmp.ne.s32.totalorder %s383, %s384
      %p396 = scmp.eq.s32.totalorder %s46, 1
      %p397 = por %p395, %p396
      %p399 = scmp.ne.s32.totalorder %s384, %s398
      %p400 = scmp.eq.s32.totalorder %s46, 0
      %p401 = por %p399, %p400
      %p402 = scmp.le.s32.totalorder 1, %s40
      %p403 = scmp.lt.s32.totalorder %s40, 3
      %p404 = pnand %p402, %p403
      %p405 = pneg %p404
      // Predicated region
      $region9: #{transformer_encoder_forward.1} parent=5 // pred_check
        _
      $region10: #{transformer_encoder_forward.1} parent=5 // pred_check_branch
        %407 = sbr.rel (%p404) target = $region12
      $region11: #{transformer_encoder_forward.1} parent=5 // pred_region
        %s408 = ssub.s32 %s40, 1
        // Predicated region
        $region13: #{transformer_encoder_forward.1} parent=11 // pred_check
          %p409 = pneg %p61
        $region14: #{transformer_encoder_forward.1} parent=11 // pred_check_branch
          %411 = sbr.rel (%p409) target = $region16
        $region15: #{transformer_encoder_forward.1} parent=11 // pred_region
          _
        $region16: #{transformer_encoder_forward.1} parent=11 // pred_fallthru
          _
      $region12: #{transformer_encoder_forward.1} parent=5 // pred_fallthru
        _
      %p412 = scmp.lt.s32.totalorder %s40, 2
      // Predicated region
      $region17: #{transformer_encoder_forward.1} parent=5 // pred_check
        %p413 = pneg %p412
      $region18: #{transformer_encoder_forward.1} parent=5 // pred_check_branch
        %415 = sbr.rel (%p413) target = $region20
      $region19: #{transformer_encoder_forward.1} parent=5 // pred_region
        // Predicated region
        $region21: #{transformer_encoder_forward.1} parent=19 // pred_check
          %p416 = pneg %p81
        $region22: #{transformer_encoder_forward.1} parent=19 // pred_check_branch
          %418 = sbr.rel (%p416) target = $region24
        $region23: #{transformer_encoder_forward.1} parent=19 // pred_region
          %s419 = sand.u32 %s71, 1
          %s420 = scalar_lea.sflag [#allocation3], %s419
          %s421 = sand.u32 %s71, 1
          %s422 = smul.addr %s421, 768
          %s423 = scalar_lea.vmem [#allocation2], %s422
          %s425 = ssub.s32 12288, 12288
          %426 = vsyncadd %s420, %s425
          %s427 = smul.addr %s40, 192
          %s428 = smul.addr %s427, 64
          %s429 = scalar_lea.hbm %s1, %s428
          %s430 = sshll.u32 %s423, 4
          %s431 = int_to_ptr.vmem [resolvable:$true] %s430
          %436 = dma.hbm_to_vmem [thread:$0]  %s429, 12288, %s431, %s420, 384, 384, 24
        $region24: #{transformer_encoder_forward.1} parent=19 // pred_fallthru
          _
        // Predicated region
        $region25: #{transformer_encoder_forward.1} parent=19 // pred_check
          %p437 = pneg %p107
        $region26: #{transformer_encoder_forward.1} parent=19 // pred_check_branch
          %439 = sbr.rel (%p437) target = $region28
        $region27: #{transformer_encoder_forward.1} parent=19 // pred_region
          %s440 = sand.u32 %s40, 1
          %s441 = scalar_lea.sflag [#allocation5], %s440
          %s442 = sand.u32 %s97, 1
          %s443 = smul.addr %s442, 6
          %s444 = scalar_lea.vmem [#allocation4], %s443
          %s446 = ssub.s32 96, 96
          %447 = vsyncadd %s441, %s446
          %s448 = smul.addr %s40, 6
          %s449 = smul.addr %s448, 16
          %s450 = scalar_lea.hbm %s2, %s449
          %s452 = sshll.u32 %s444, 4
          %s453 = int_to_ptr.vmem [resolvable:$true] %s452
          %455 = dma.hbm_to_vmem [thread:$0]  %s450, 96, %s453, %s441
        $region28: #{transformer_encoder_forward.1} parent=19 // pred_fallthru
          _
        // Predicated region
        $region29: #{transformer_encoder_forward.1} parent=19 // pred_check
          %p456 = pneg %p133
        $region30: #{transformer_encoder_forward.1} parent=19 // pred_check_branch
          %458 = sbr.rel (%p456) target = $region32
        $region31: #{transformer_encoder_forward.1} parent=19 // pred_region
          %s459 = sand.u32 %s40, 1
          %s460 = scalar_lea.sflag [#allocation5], %s459
          %s461 = sand.u32 %s123, 1
          %s462 = smul.addr %s461, 256
          %s463 = scalar_lea.vmem [#allocation6], %s462
          %s465 = ssub.s32 4096, 4096
          %466 = vsyncadd %s460, %s465
          %s467 = smul.addr %s40, 64
          %s468 = smul.addr %s467, 64
          %s469 = scalar_lea.hbm %s3, %s468
          %s470 = sshll.u32 %s463, 4
          %s471 = int_to_ptr.vmem [resolvable:$true] %s470
          %476 = dma.hbm_to_vmem [thread:$0]  %s469, 4096, %s471, %s460, 128, 128, 8
        $region32: #{transformer_encoder_forward.1} parent=19 // pred_fallthru
          _
        // Predicated region
        $region33: #{transformer_encoder_forward.1} parent=19 // pred_check
          %p477 = pneg %p159
        $region34: #{transformer_encoder_forward.1} parent=19 // pred_check_branch
          %479 = sbr.rel (%p477) target = $region36
        $region35: #{transformer_encoder_forward.1} parent=19 // pred_region
          %s480 = sand.u32 %s40, 1
          %s481 = scalar_lea.sflag [#allocation8], %s480
          %s482 = sand.u32 %s149, 1
          %s483 = smul.addr %s482, 2
          %s484 = scalar_lea.vmem [#allocation7], %s483
          %s486 = ssub.s32 32, 32
          %487 = vsyncadd %s481, %s486
          %s488 = smul.addr %s40, 2
          %s489 = smul.addr %s488, 16
          %s490 = scalar_lea.hbm %s4, %s489
          %s492 = sshll.u32 %s484, 4
          %s493 = int_to_ptr.vmem [resolvable:$true] %s492
          %495 = dma.hbm_to_vmem [thread:$0]  %s490, 32, %s493, %s481
        $region36: #{transformer_encoder_forward.1} parent=19 // pred_fallthru
          _
        // Predicated region
        $region37: #{transformer_encoder_forward.1} parent=19 // pred_check
          %p496 = pneg %p185
        $region38: #{transformer_encoder_forward.1} parent=19 // pred_check_branch
          %498 = sbr.rel (%p496) target = $region40
        $region39: #{transformer_encoder_forward.1} parent=19 // pred_region
          %s499 = sand.u32 %s40, 1
          %s500 = scalar_lea.sflag [#allocation8], %s499
          %s501 = sand.u32 %s175, 1
          %s502 = smul.addr %s501, 2
          %s503 = scalar_lea.vmem [#allocation9], %s502
          %s505 = ssub.s32 32, 32
          %506 = vsyncadd %s500, %s505
          %s507 = smul.addr %s40, 2
          %s508 = smul.addr %s507, 16
          %s509 = scalar_lea.hbm %s5, %s508
          %s511 = sshll.u32 %s503, 4
          %s512 = int_to_ptr.vmem [resolvable:$true] %s511
          %514 = dma.hbm_to_vmem [thread:$0]  %s509, 32, %s512, %s500
        $region40: #{transformer_encoder_forward.1} parent=19 // pred_fallthru
          _
        // Predicated region
        $region41: #{transformer_encoder_forward.1} parent=19 // pred_check
          %p515 = pneg %p211
        $region42: #{transformer_encoder_forward.1} parent=19 // pred_check_branch
          %517 = sbr.rel (%p515) target = $region44
        $region43: #{transformer_encoder_forward.1} parent=19 // pred_region
          %s518 = sand.u32 %s40, 1
          %s519 = scalar_lea.sflag [#allocation11], %s518
          %s520 = sand.u32 %s201, 1
          %s521 = smul.addr %s520, 2
          %s522 = scalar_lea.vmem [#allocation10], %s521
          %s524 = ssub.s32 32, 32
          %525 = vsyncadd %s519, %s524
          %s526 = smul.addr %s40, 2
          %s527 = smul.addr %s526, 16
          %s528 = scalar_lea.hbm %s6, %s527
          %s530 = sshll.u32 %s522, 4
          %s531 = int_to_ptr.vmem [resolvable:$true] %s530
          %533 = dma.hbm_to_vmem [thread:$0]  %s528, 32, %s531, %s519
        $region44: #{transformer_encoder_forward.1} parent=19 // pred_fallthru
          _
        // Predicated region
        $region45: #{transformer_encoder_forward.1} parent=19 // pred_check
          %p534 = pneg %p237
        $region46: #{transformer_encoder_forward.1} parent=19 // pred_check_branch
          %536 = sbr.rel (%p534) target = $region48
        $region47: #{transformer_encoder_forward.1} parent=19 // pred_region
          %s537 = sand.u32 %s40, 1
          %s538 = scalar_lea.sflag [#allocation11], %s537
          %s539 = sand.u32 %s227, 1
          %s540 = smul.addr %s539, 2048
          %s541 = scalar_lea.vmem [#allocation12], %s540
          %s543 = ssub.s32 32768, 32768
          %544 = vsyncadd %s538, %s543
          %s545 = smul.addr %s40, 512
          %s546 = smul.addr %s545, 64
          %s547 = scalar_lea.hbm %s7, %s546
          %s548 = sshll.u32 %s541, 4
          %s549 = int_to_ptr.vmem [resolvable:$true] %s548
          %554 = dma.hbm_to_vmem [thread:$0]  %s547, 32768, %s549, %s538, 1024, 1024, 64
        $region48: #{transformer_encoder_forward.1} parent=19 // pred_fallthru
          _
        // Predicated region
        $region49: #{transformer_encoder_forward.1} parent=19 // pred_check
          %p555 = pneg %p263
        $region50: #{transformer_encoder_forward.1} parent=19 // pred_check_branch
          %557 = sbr.rel (%p555) target = $region52
        $region51: #{transformer_encoder_forward.1} parent=19 // pred_region
          %s558 = sand.u32 %s40, 1
          %s559 = scalar_lea.sflag [#allocation14], %s558
          %s560 = sand.u32 %s253, 1
          %s561 = smul.addr %s560, 16
          %s562 = scalar_lea.vmem [#allocation13], %s561
          %s564 = ssub.s32 256, 256
          %565 = vsyncadd %s559, %s564
          %s566 = smul.addr %s40, 16
          %s567 = smul.addr %s566, 16
          %s568 = scalar_lea.hbm %s8, %s567
          %s570 = sshll.u32 %s562, 4
          %s571 = int_to_ptr.vmem [resolvable:$true] %s570
          %573 = dma.hbm_to_vmem [thread:$0]  %s568, 256, %s571, %s559
        $region52: #{transformer_encoder_forward.1} parent=19 // pred_fallthru
          _
        // Predicated region
        $region53: #{transformer_encoder_forward.1} parent=19 // pred_check
          %p574 = pneg %p289
        $region54: #{transformer_encoder_forward.1} parent=19 // pred_check_branch
          %576 = sbr.rel (%p574) target = $region56
        $region55: #{transformer_encoder_forward.1} parent=19 // pred_region
          %s577 = sand.u32 %s40, 1
          %s578 = scalar_lea.sflag [#allocation14], %s577
          %s579 = sand.u32 %s279, 1
          %s580 = smul.addr %s579, 2048
          %s581 = scalar_lea.vmem [#allocation15], %s580
          %s583 = ssub.s32 32768, 32768
          %584 = vsyncadd %s578, %s583
          %s585 = smul.addr %s40, 512
          %s586 = smul.addr %s585, 64
          %s587 = scalar_lea.hbm %s9, %s586
          %s588 = sshll.u32 %s581, 4
          %s589 = int_to_ptr.vmem [resolvable:$true] %s588
          %594 = dma.hbm_to_vmem [thread:$0]  %s587, 32768, %s589, %s578, 128, 128, 8
        $region56: #{transformer_encoder_forward.1} parent=19 // pred_fallthru
          _
        // Predicated region
        $region57: #{transformer_encoder_forward.1} parent=19 // pred_check
          %p595 = pneg %p315
        $region58: #{transformer_encoder_forward.1} parent=19 // pred_check_branch
          %597 = sbr.rel (%p595) target = $region60
        $region59: #{transformer_encoder_forward.1} parent=19 // pred_region
          %s598 = sand.u32 %s40, 1
          %s599 = scalar_lea.sflag [#allocation17], %s598
          %s600 = sand.u32 %s305, 1
          %s601 = smul.addr %s600, 2
          %s602 = scalar_lea.vmem [#allocation16], %s601
          %s604 = ssub.s32 32, 32
          %605 = vsyncadd %s599, %s604
          %s606 = smul.addr %s40, 2
          %s607 = smul.addr %s606, 16
          %s608 = scalar_lea.hbm %s10, %s607
          %s610 = sshll.u32 %s602, 4
          %s611 = int_to_ptr.vmem [resolvable:$true] %s610
          %613 = dma.hbm_to_vmem [thread:$0]  %s608, 32, %s611, %s599
        $region60: #{transformer_encoder_forward.1} parent=19 // pred_fallthru
          _
        // Predicated region
        $region61: #{transformer_encoder_forward.1} parent=19 // pred_check
          %p614 = pneg %p341
        $region62: #{transformer_encoder_forward.1} parent=19 // pred_check_branch
          %616 = sbr.rel (%p614) target = $region64
        $region63: #{transformer_encoder_forward.1} parent=19 // pred_region
          %s617 = sand.u32 %s40, 1
          %s618 = scalar_lea.sflag [#allocation17], %s617
          %s619 = sand.u32 %s331, 1
          %s620 = smul.addr %s619, 2
          %s621 = scalar_lea.vmem [#allocation18], %s620
          %s623 = ssub.s32 32, 32
          %624 = vsyncadd %s618, %s623
          %s625 = smul.addr %s40, 2
          %s626 = smul.addr %s625, 16
          %s627 = scalar_lea.hbm %s11, %s626
          %s629 = sshll.u32 %s621, 4
          %s630 = int_to_ptr.vmem [resolvable:$true] %s629
          %632 = dma.hbm_to_vmem [thread:$0]  %s627, 32, %s630, %s618
        $region64: #{transformer_encoder_forward.1} parent=19 // pred_fallthru
          _
        // Predicated region
        $region65: #{transformer_encoder_forward.1} parent=19 // pred_check
          %p633 = pneg %p367
        $region66: #{transformer_encoder_forward.1} parent=19 // pred_check_branch
          %635 = sbr.rel (%p633) target = $region68
        $region67: #{transformer_encoder_forward.1} parent=19 // pred_region
          %s636 = sand.u32 %s357, 1
          %s637 = scalar_lea.sflag [#allocation20], %s636
          %s638 = sand.u32 %s357, 1
          %s639 = smul.addr %s638, 2
          %s640 = scalar_lea.vmem [#allocation19], %s639
          %s642 = ssub.s32 32, 32
          %643 = vsyncadd %s637, %s642
          %s644 = smul.addr %s40, 2
          %s645 = smul.addr %s644, 16
          %s646 = scalar_lea.hbm %s12, %s645
          %s648 = sshll.u32 %s640, 4
          %s649 = int_to_ptr.vmem [resolvable:$true] %s648
          %651 = dma.hbm_to_vmem [thread:$0]  %s646, 32, %s649, %s637
        $region68: #{transformer_encoder_forward.1} parent=19 // pred_fallthru
          _
      $region20: #{transformer_encoder_forward.1} parent=5 // pred_fallthru
        _
      %p652 = scmp.le.s32.totalorder 1, %s40
      %p653 = scmp.lt.s32.totalorder %s40, 3
      %p654 = pnand %p652, %p653
      %p655 = pneg %p654
      // Predicated region
      $region69: #{transformer_encoder_forward.1} parent=5 // pred_check
        _
      $region70: #{transformer_encoder_forward.1} parent=5 // pred_check_branch
        %657 = sbr.rel (%p654) target = $region72
      $region71: #{transformer_encoder_forward.1} parent=5 // pred_region
        %s658 = ssub.s32 %s40, 1
        %s659 = sand.u32 %s74, 1
        %s660 = scalar_lea.sflag [#allocation3], %s659
        %s661 = sand.u32 %s74, 1
        %s662 = smul.addr %s661, 768
        %s663 = scalar_lea.vmem [#allocation2], %s662
        // Predicated region
        $region73: #{transformer_encoder_forward.1} parent=71 // pred_check
          %p664 = pneg %p87
        $region74: #{transformer_encoder_forward.1} parent=71 // pred_check_branch
          %666 = sbr.rel (%p664) target = $region76
        $region75: #{transformer_encoder_forward.1} parent=71 // pred_region
          %667 = dma.done %s660, 12288
        $region76: #{transformer_encoder_forward.1} parent=71 // pred_fallthru
          _
        %s668 = sand.u32 %s45, 1
        %s669 = scalar_lea.sflag [#allocation5], %s668
        %s670 = sand.u32 %s100, 1
        %s671 = smul.addr %s670, 6
        %s672 = scalar_lea.vmem [#allocation4], %s671
        // Predicated region
        $region77: #{transformer_encoder_forward.1} parent=71 // pred_check
          %p673 = pneg %p113
        $region78: #{transformer_encoder_forward.1} parent=71 // pred_check_branch
          %675 = sbr.rel (%p673) target = $region80
        $region79: #{transformer_encoder_forward.1} parent=71 // pred_region
          %676 = dma.done %s669, 96
        $region80: #{transformer_encoder_forward.1} parent=71 // pred_fallthru
          _
        %s677 = sand.u32 %s45, 1
        %s678 = scalar_lea.sflag [#allocation5], %s677
        %s679 = sand.u32 %s126, 1
        %s680 = smul.addr %s679, 256
        %s681 = scalar_lea.vmem [#allocation6], %s680
        // Predicated region
        $region81: #{transformer_encoder_forward.1} parent=71 // pred_check
          %p682 = pneg %p139
        $region82: #{transformer_encoder_forward.1} parent=71 // pred_check_branch
          %684 = sbr.rel (%p682) target = $region84
        $region83: #{transformer_encoder_forward.1} parent=71 // pred_region
          %685 = dma.done %s678, 4096
        $region84: #{transformer_encoder_forward.1} parent=71 // pred_fallthru
          _
        %s686 = sand.u32 %s45, 1
        %s687 = scalar_lea.sflag [#allocation8], %s686
        %s688 = sand.u32 %s152, 1
        %s689 = smul.addr %s688, 2
        %s690 = scalar_lea.vmem [#allocation7], %s689
        // Predicated region
        $region85: #{transformer_encoder_forward.1} parent=71 // pred_check
          %p691 = pneg %p165
        $region86: #{transformer_encoder_forward.1} parent=71 // pred_check_branch
          %693 = sbr.rel (%p691) target = $region88
        $region87: #{transformer_encoder_forward.1} parent=71 // pred_region
          %694 = dma.done %s687, 32
        $region88: #{transformer_encoder_forward.1} parent=71 // pred_fallthru
          _
        %s695 = sand.u32 %s45, 1
        %s696 = scalar_lea.sflag [#allocation8], %s695
        %s697 = sand.u32 %s178, 1
        %s698 = smul.addr %s697, 2
        %s699 = scalar_lea.vmem [#allocation9], %s698
        // Predicated region
        $region89: #{transformer_encoder_forward.1} parent=71 // pred_check
          %p700 = pneg %p191
        $region90: #{transformer_encoder_forward.1} parent=71 // pred_check_branch
          %702 = sbr.rel (%p700) target = $region92
        $region91: #{transformer_encoder_forward.1} parent=71 // pred_region
          %703 = dma.done %s696, 32
        $region92: #{transformer_encoder_forward.1} parent=71 // pred_fallthru
          _
        %s704 = sand.u32 %s45, 1
        %s705 = scalar_lea.sflag [#allocation11], %s704
        %s706 = sand.u32 %s204, 1
        %s707 = smul.addr %s706, 2
        %s708 = scalar_lea.vmem [#allocation10], %s707
        // Predicated region
        $region93: #{transformer_encoder_forward.1} parent=71 // pred_check
          %p709 = pneg %p217
        $region94: #{transformer_encoder_forward.1} parent=71 // pred_check_branch
          %711 = sbr.rel (%p709) target = $region96
        $region95: #{transformer_encoder_forward.1} parent=71 // pred_region
          %712 = dma.done %s705, 32
        $region96: #{transformer_encoder_forward.1} parent=71 // pred_fallthru
          _
        %s713 = sand.u32 %s45, 1
        %s714 = scalar_lea.sflag [#allocation11], %s713
        %s715 = sand.u32 %s230, 1
        %s716 = smul.addr %s715, 2048
        %s717 = scalar_lea.vmem [#allocation12], %s716
        // Predicated region
        $region97: #{transformer_encoder_forward.1} parent=71 // pred_check
          %p718 = pneg %p243
        $region98: #{transformer_encoder_forward.1} parent=71 // pred_check_branch
          %720 = sbr.rel (%p718) target = $region100
        $region99: #{transformer_encoder_forward.1} parent=71 // pred_region
          %721 = dma.done %s714, 32768
        $region100: #{transformer_encoder_forward.1} parent=71 // pred_fallthru
          _
        %s722 = sand.u32 %s45, 1
        %s723 = scalar_lea.sflag [#allocation14], %s722
        %s724 = sand.u32 %s256, 1
        %s725 = smul.addr %s724, 16
        %s726 = scalar_lea.vmem [#allocation13], %s725
        // Predicated region
        $region101: #{transformer_encoder_forward.1} parent=71 // pred_check
          %p727 = pneg %p269
        $region102: #{transformer_encoder_forward.1} parent=71 // pred_check_branch
          %729 = sbr.rel (%p727) target = $region104
        $region103: #{transformer_encoder_forward.1} parent=71 // pred_region
          %730 = dma.done %s723, 256
        $region104: #{transformer_encoder_forward.1} parent=71 // pred_fallthru
          _
        %s731 = sand.u32 %s45, 1
        %s732 = scalar_lea.sflag [#allocation14], %s731
        %s733 = sand.u32 %s282, 1
        %s734 = smul.addr %s733, 2048
        %s735 = scalar_lea.vmem [#allocation15], %s734
        // Predicated region
        $region105: #{transformer_encoder_forward.1} parent=71 // pred_check
          %p736 = pneg %p295
        $region106: #{transformer_encoder_forward.1} parent=71 // pred_check_branch
          %738 = sbr.rel (%p736) target = $region108
        $region107: #{transformer_encoder_forward.1} parent=71 // pred_region
          %739 = dma.done %s732, 32768
        $region108: #{transformer_encoder_forward.1} parent=71 // pred_fallthru
          _
        %s740 = sand.u32 %s45, 1
        %s741 = scalar_lea.sflag [#allocation17], %s740
        %s742 = sand.u32 %s308, 1
        %s743 = smul.addr %s742, 2
        %s744 = scalar_lea.vmem [#allocation16], %s743
        // Predicated region
        $region109: #{transformer_encoder_forward.1} parent=71 // pred_check
          %p745 = pneg %p321
        $region110: #{transformer_encoder_forward.1} parent=71 // pred_check_branch
          %747 = sbr.rel (%p745) target = $region112
        $region111: #{transformer_encoder_forward.1} parent=71 // pred_region
          %748 = dma.done %s741, 32
        $region112: #{transformer_encoder_forward.1} parent=71 // pred_fallthru
          _
        %s749 = sand.u32 %s45, 1
        %s750 = scalar_lea.sflag [#allocation17], %s749
        %s751 = sand.u32 %s334, 1
        %s752 = smul.addr %s751, 2
        %s753 = scalar_lea.vmem [#allocation18], %s752
        // Predicated region
        $region113: #{transformer_encoder_forward.1} parent=71 // pred_check
          %p754 = pneg %p347
        $region114: #{transformer_encoder_forward.1} parent=71 // pred_check_branch
          %756 = sbr.rel (%p754) target = $region116
        $region115: #{transformer_encoder_forward.1} parent=71 // pred_region
          %757 = dma.done %s750, 32
        $region116: #{transformer_encoder_forward.1} parent=71 // pred_fallthru
          _
        %s758 = sand.u32 %s360, 1
        %s759 = scalar_lea.sflag [#allocation20], %s758
        %s760 = sand.u32 %s360, 1
        %s761 = smul.addr %s760, 2
        %s762 = scalar_lea.vmem [#allocation19], %s761
        // Predicated region
        $region117: #{transformer_encoder_forward.1} parent=71 // pred_check
          %p763 = pneg %p373
        $region118: #{transformer_encoder_forward.1} parent=71 // pred_check_branch
          %765 = sbr.rel (%p763) target = $region120
        $region119: #{transformer_encoder_forward.1} parent=71 // pred_region
          %766 = dma.done %s759, 32
        $region120: #{transformer_encoder_forward.1} parent=71 // pred_fallthru
          _
        %p767 = pneg %p61
        %p768 = pneg %p58
        %s769 = sand.u32 %s74, 1
        %s770 = scalar_lea.sflag [#allocation3], %s769
        %s771 = sand.u32 %s74, 1
        %s772 = smul.addr %s771, 768
        %s773 = scalar_lea.vmem [#allocation2], %s772
        %p774 = pneg %p87
        %p775 = pneg %p84
        %s776 = sand.u32 %s45, 1
        %s777 = scalar_lea.sflag [#allocation5], %s776
        %s778 = sand.u32 %s100, 1
        %s779 = smul.addr %s778, 6
        %s780 = scalar_lea.vmem [#allocation4], %s779
        %p781 = pneg %p113
        %p782 = pneg %p110
        %s783 = sand.u32 %s45, 1
        %s784 = scalar_lea.sflag [#allocation5], %s783
        %s785 = sand.u32 %s126, 1
        %s786 = smul.addr %s785, 256
        %s787 = scalar_lea.vmem [#allocation6], %s786
        %p788 = pneg %p139
        %p789 = pneg %p136
        %s790 = sand.u32 %s45, 1
        %s791 = scalar_lea.sflag [#allocation8], %s790
        %s792 = sand.u32 %s152, 1
        %s793 = smul.addr %s792, 2
        %s794 = scalar_lea.vmem [#allocation7], %s793
        %p795 = pneg %p165
        %p796 = pneg %p162
        %s797 = sand.u32 %s45, 1
        %s798 = scalar_lea.sflag [#allocation8], %s797
        %s799 = sand.u32 %s178, 1
        %s800 = smul.addr %s799, 2
        %s801 = scalar_lea.vmem [#allocation9], %s800
        %p802 = pneg %p191
        %p803 = pneg %p188
        %s804 = sand.u32 %s45, 1
        %s805 = scalar_lea.sflag [#allocation11], %s804
        %s806 = sand.u32 %s204, 1
        %s807 = smul.addr %s806, 2
        %s808 = scalar_lea.vmem [#allocation10], %s807
        %p809 = pneg %p217
        %p810 = pneg %p214
        %s811 = sand.u32 %s45, 1
        %s812 = scalar_lea.sflag [#allocation11], %s811
        %s813 = sand.u32 %s230, 1
        %s814 = smul.addr %s813, 2048
        %s815 = scalar_lea.vmem [#allocation12], %s814
        %p816 = pneg %p243
        %p817 = pneg %p240
        %s818 = sand.u32 %s45, 1
        %s819 = scalar_lea.sflag [#allocation14], %s818
        %s820 = sand.u32 %s256, 1
        %s821 = smul.addr %s820, 16
        %s822 = scalar_lea.vmem [#allocation13], %s821
        %p823 = pneg %p269
        %p824 = pneg %p266
        %s825 = sand.u32 %s45, 1
        %s826 = scalar_lea.sflag [#allocation14], %s825
        %s827 = sand.u32 %s282, 1
        %s828 = smul.addr %s827, 2048
        %s829 = scalar_lea.vmem [#allocation15], %s828
        %p830 = pneg %p295
        %p831 = pneg %p292
        %s832 = sand.u32 %s45, 1
        %s833 = scalar_lea.sflag [#allocation17], %s832
        %s834 = sand.u32 %s308, 1
        %s835 = smul.addr %s834, 2
        %s836 = scalar_lea.vmem [#allocation16], %s835
        %p837 = pneg %p321
        %p838 = pneg %p318
        %s839 = sand.u32 %s45, 1
        %s840 = scalar_lea.sflag [#allocation17], %s839
        %s841 = sand.u32 %s334, 1
        %s842 = smul.addr %s841, 2
        %s843 = scalar_lea.vmem [#allocation18], %s842
        %p844 = pneg %p347
        %p845 = pneg %p344
        %s846 = sand.u32 %s360, 1
        %s847 = scalar_lea.sflag [#allocation20], %s846
        %s848 = sand.u32 %s360, 1
        %s849 = smul.addr %s848, 2
        %s850 = scalar_lea.vmem [#allocation19], %s849
        %p851 = pneg %p373
        %p852 = pneg %p370
        %p853 = pneg %p394
        %p854 = pneg %p391
        %p856 = scmp.eq.s32.totalorder %s45, 0
        // Predicated region
        $region121: #{transformer_encoder_forward.1} parent=71 // pred_check
          %p857 = pneg %p856
        $region122: #{transformer_encoder_forward.1} parent=71 // pred_check_branch
          %859 = sbr.rel (%p857) target = $region124
        $region123: #{transformer_encoder_forward.1} parent=71 // pred_region
          %v860 = vld [vmem:[%s0] sm:$0xff]
          %v861 = vld [vmem:[%s0 + $0x8] sm:$0xff]
          %v862 = vld [vmem:[%s0 + $0x10] sm:$0xff]
          %v863 = vld [vmem:[%s0 + $0x18] sm:$0xff]
          %v864 = vld [vmem:[%s0 + $0x20] sm:$0xff]
          %v865 = vld [vmem:[%s0 + $0x28] sm:$0xff]
          %v866 = vld [vmem:[%s0 + $0x30] sm:$0xff]
          %v867 = vld [vmem:[%s0 + $0x38] sm:$0xff]
          %v868 = vld [vmem:[%s0 + $0x40] sm:$0xff]
          %v869 = vld [vmem:[%s0 + $0x48] sm:$0xff]
          %v870 = vld [vmem:[%s0 + $0x50] sm:$0xff]
          %v871 = vld [vmem:[%s0 + $0x58] sm:$0xff]
          %v872 = vld [vmem:[%s0 + $0x60] sm:$0xff]
          %v873 = vld [vmem:[%s0 + $0x68] sm:$0xff]
          %v874 = vld [vmem:[%s0 + $0x70] sm:$0xff]
          %v875 = vld [vmem:[%s0 + $0x78] sm:$0xff]
          %v876 = vld [vmem:[%s0 + $0x80] sm:$0xff]
          %v877 = vld [vmem:[%s0 + $0x88] sm:$0xff]
          %v878 = vld [vmem:[%s0 + $0x90] sm:$0xff]
          %v879 = vld [vmem:[%s0 + $0x98] sm:$0xff]
          %v880 = vld [vmem:[%s0 + $0xa0] sm:$0xff]
          %v881 = vld [vmem:[%s0 + $0xa8] sm:$0xff]
          %v882 = vld [vmem:[%s0 + $0xb0] sm:$0xff]
          %v883 = vld [vmem:[%s0 + $0xb8] sm:$0xff]
          %v884 = vld [vmem:[%s0 + $0xc0] sm:$0xff]
          %v885 = vld [vmem:[%s0 + $0xc8] sm:$0xff]
          %v886 = vld [vmem:[%s0 + $0xd0] sm:$0xff]
          %v887 = vld [vmem:[%s0 + $0xd8] sm:$0xff]
          %v888 = vld [vmem:[%s0 + $0xe0] sm:$0xff]
          %v889 = vld [vmem:[%s0 + $0xe8] sm:$0xff]
          %v890 = vld [vmem:[%s0 + $0xf0] sm:$0xff]
          %v891 = vld [vmem:[%s0 + $0xf8] sm:$0xff]
          %892 = vst [vmem:[%s13] sm:$0xff] %v860
          %893 = vst [vmem:[%s13 + $0x8] sm:$0xff] %v861
          %894 = vst [vmem:[%s13 + $0x10] sm:$0xff] %v862
          %895 = vst [vmem:[%s13 + $0x18] sm:$0xff] %v863
          %896 = vst [vmem:[%s13 + $0x20] sm:$0xff] %v864
          %897 = vst [vmem:[%s13 + $0x28] sm:$0xff] %v865
          %898 = vst [vmem:[%s13 + $0x30] sm:$0xff] %v866
          %899 = vst [vmem:[%s13 + $0x38] sm:$0xff] %v867
          %900 = vst [vmem:[%s13 + $0x40] sm:$0xff] %v868
          %901 = vst [vmem:[%s13 + $0x48] sm:$0xff] %v869
          %902 = vst [vmem:[%s13 + $0x50] sm:$0xff] %v870
          %903 = vst [vmem:[%s13 + $0x58] sm:$0xff] %v871
          %904 = vst [vmem:[%s13 + $0x60] sm:$0xff] %v872
          %905 = vst [vmem:[%s13 + $0x68] sm:$0xff] %v873
          %906 = vst [vmem:[%s13 + $0x70] sm:$0xff] %v874
          %907 = vst [vmem:[%s13 + $0x78] sm:$0xff] %v875
          %908 = vst [vmem:[%s13 + $0x80] sm:$0xff] %v876
          %909 = vst [vmem:[%s13 + $0x88] sm:$0xff] %v877
          %910 = vst [vmem:[%s13 + $0x90] sm:$0xff] %v878
          %911 = vst [vmem:[%s13 + $0x98] sm:$0xff] %v879
          %912 = vst [vmem:[%s13 + $0xa0] sm:$0xff] %v880
          %913 = vst [vmem:[%s13 + $0xa8] sm:$0xff] %v881
          %914 = vst [vmem:[%s13 + $0xb0] sm:$0xff] %v882
          %915 = vst [vmem:[%s13 + $0xb8] sm:$0xff] %v883
          %916 = vst [vmem:[%s13 + $0xc0] sm:$0xff] %v884
          %917 = vst [vmem:[%s13 + $0xc8] sm:$0xff] %v885
          %918 = vst [vmem:[%s13 + $0xd0] sm:$0xff] %v886
          %919 = vst [vmem:[%s13 + $0xd8] sm:$0xff] %v887
          %920 = vst [vmem:[%s13 + $0xe0] sm:$0xff] %v888
          %921 = vst [vmem:[%s13 + $0xe8] sm:$0xff] %v889
          %922 = vst [vmem:[%s13 + $0xf0] sm:$0xff] %v890
          %923 = vst [vmem:[%s13 + $0xf8] sm:$0xff] %v891
        $region124: #{transformer_encoder_forward.1} parent=71 // pred_fallthru
          _
        %v924 = vld [vmem:[%s13] sm:$0xff]
        %v925 = vld [vmem:[%s13 + $0x8] sm:$0xff]
        %v926 = vld [vmem:[%s13 + $0x10] sm:$0xff]
        %v927 = vld [vmem:[%s13 + $0x18] sm:$0xff]
        %v928 = vld [vmem:[%s13 + $0x20] sm:$0xff]
        %v929 = vld [vmem:[%s13 + $0x28] sm:$0xff]
        %v930 = vld [vmem:[%s13 + $0x30] sm:$0xff]
        %v931 = vld [vmem:[%s13 + $0x38] sm:$0xff]
        %v932 = vld [vmem:[%s13 + $0x40] sm:$0xff]
        %v933 = vld [vmem:[%s13 + $0x48] sm:$0xff]
        %v934 = vld [vmem:[%s13 + $0x50] sm:$0xff]
        %v935 = vld [vmem:[%s13 + $0x58] sm:$0xff]
        %v936 = vld [vmem:[%s13 + $0x60] sm:$0xff]
        %v937 = vld [vmem:[%s13 + $0x68] sm:$0xff]
        %v938 = vld [vmem:[%s13 + $0x70] sm:$0xff]
        %v939 = vld [vmem:[%s13 + $0x78] sm:$0xff]
        %v940 = vld [vmem:[%s13 + $0x80] sm:$0xff]
        %v941 = vld [vmem:[%s13 + $0x88] sm:$0xff]
        %v942 = vld [vmem:[%s13 + $0x90] sm:$0xff]
        %v943 = vld [vmem:[%s13 + $0x98] sm:$0xff]
        %v944 = vld [vmem:[%s13 + $0xa0] sm:$0xff]
        %v945 = vld [vmem:[%s13 + $0xa8] sm:$0xff]
        %v946 = vld [vmem:[%s13 + $0xb0] sm:$0xff]
        %v947 = vld [vmem:[%s13 + $0xb8] sm:$0xff]
        %v948 = vld [vmem:[%s13 + $0xc0] sm:$0xff]
        %v949 = vld [vmem:[%s13 + $0xc8] sm:$0xff]
        %v950 = vld [vmem:[%s13 + $0xd0] sm:$0xff]
        %v951 = vld [vmem:[%s13 + $0xd8] sm:$0xff]
        %v952 = vld [vmem:[%s13 + $0xe0] sm:$0xff]
        %v953 = vld [vmem:[%s13 + $0xe8] sm:$0xff]
        %v954 = vld [vmem:[%s13 + $0xf0] sm:$0xff]
        %v955 = vld [vmem:[%s13 + $0xf8] sm:$0xff]
        %v956 = vpack.c.bf16 %v926, %v924
        %v957 = vpack.c.bf16 %v927, %v925
        %v958 = vpack.c.bf16 %v930, %v928
        %v959 = vpack.c.bf16 %v931, %v929
        %v960 = vpack.c.bf16 %v934, %v932
        %v961 = vpack.c.bf16 %v935, %v933
        %v962 = vpack.c.bf16 %v938, %v936
        %v963 = vpack.c.bf16 %v939, %v937
        %v964 = vpack.c.bf16 %v942, %v940
        %v965 = vpack.c.bf16 %v943, %v941
        %v966 = vpack.c.bf16 %v946, %v944
        %v967 = vpack.c.bf16 %v947, %v945
        %v968 = vpack.c.bf16 %v950, %v948
        %v969 = vpack.c.bf16 %v951, %v949
        %v970 = vpack.c.bf16 %v954, %v952
        %v971 = vpack.c.bf16 %v955, %v953
        %v972 = vld [vmem:[%s663] sm:$0xff]
        %v973 = vld [vmem:[%s663 + $0x8] sm:$0xff]
        %v974 = vld [vmem:[%s663 + $0x10] sm:$0xff]
        %v975 = vld [vmem:[%s663 + $0x18] sm:$0xff]
        %v976 = vld [vmem:[%s663 + $0x20] sm:$0xff]
        %v977 = vld [vmem:[%s663 + $0x28] sm:$0xff]
        %v978 = vld [vmem:[%s663 + $0x30] sm:$0xff]
        %v979 = vld [vmem:[%s663 + $0x38] sm:$0xff]
        %v980 = vld [vmem:[%s663 + $0x40] sm:$0xff]
        %v981 = vld [vmem:[%s663 + $0x48] sm:$0xff]
        %v982 = vld [vmem:[%s663 + $0x50] sm:$0xff]
        %v983 = vld [vmem:[%s663 + $0x58] sm:$0xff]
        %v984 = vld [vmem:[%s663 + $0x60] sm:$0xff]
        %v985 = vld [vmem:[%s663 + $0x68] sm:$0xff]
        %v986 = vld [vmem:[%s663 + $0x70] sm:$0xff]
        %v987 = vld [vmem:[%s663 + $0x78] sm:$0xff]
        %v988 = vld [vmem:[%s663 + $0x80] sm:$0xff]
        %v989 = vld [vmem:[%s663 + $0x88] sm:$0xff]
        %v990 = vld [vmem:[%s663 + $0x90] sm:$0xff]
        %v991 = vld [vmem:[%s663 + $0x98] sm:$0xff]
        %v992 = vld [vmem:[%s663 + $0xa0] sm:$0xff]
        %v993 = vld [vmem:[%s663 + $0xa8] sm:$0xff]
        %v994 = vld [vmem:[%s663 + $0xb0] sm:$0xff]
        %v995 = vld [vmem:[%s663 + $0xb8] sm:$0xff]
        %v996 = vld [vmem:[%s663 + $0xc0] sm:$0xff]
        %v997 = vld [vmem:[%s663 + $0xc8] sm:$0xff]
        %v998 = vld [vmem:[%s663 + $0xd0] sm:$0xff]
        %v999 = vld [vmem:[%s663 + $0xd8] sm:$0xff]
        %v1000 = vld [vmem:[%s663 + $0xe0] sm:$0xff]
        %v1001 = vld [vmem:[%s663 + $0xe8] sm:$0xff]
        %v1002 = vld [vmem:[%s663 + $0xf0] sm:$0xff]
        %v1003 = vld [vmem:[%s663 + $0xf8] sm:$0xff]
        %v1004 = vld [vmem:[%s663 + $0x100] sm:$0xff]
        %v1005 = vld [vmem:[%s663 + $0x108] sm:$0xff]
        %v1006 = vld [vmem:[%s663 + $0x110] sm:$0xff]
        %v1007 = vld [vmem:[%s663 + $0x118] sm:$0xff]
        %v1008 = vld [vmem:[%s663 + $0x120] sm:$0xff]
        %v1009 = vld [vmem:[%s663 + $0x128] sm:$0xff]
        %v1010 = vld [vmem:[%s663 + $0x130] sm:$0xff]
        %v1011 = vld [vmem:[%s663 + $0x138] sm:$0xff]
        %v1012 = vld [vmem:[%s663 + $0x140] sm:$0xff]
        %v1013 = vld [vmem:[%s663 + $0x148] sm:$0xff]
        %v1014 = vld [vmem:[%s663 + $0x150] sm:$0xff]
        %v1015 = vld [vmem:[%s663 + $0x158] sm:$0xff]
        %v1016 = vld [vmem:[%s663 + $0x160] sm:$0xff]
        %v1017 = vld [vmem:[%s663 + $0x168] sm:$0xff]
        %v1018 = vld [vmem:[%s663 + $0x170] sm:$0xff]
        %v1019 = vld [vmem:[%s663 + $0x178] sm:$0xff]
        %v1020 = vld [vmem:[%s663 + $0x180] sm:$0xff]
        %v1021 = vld [vmem:[%s663 + $0x188] sm:$0xff]
        %v1022 = vld [vmem:[%s663 + $0x190] sm:$0xff]
        %v1023 = vld [vmem:[%s663 + $0x198] sm:$0xff]
        %v1024 = vld [vmem:[%s663 + $0x1a0] sm:$0xff]
        %v1025 = vld [vmem:[%s663 + $0x1a8] sm:$0xff]
        %v1026 = vld [vmem:[%s663 + $0x1b0] sm:$0xff]
        %v1027 = vld [vmem:[%s663 + $0x1b8] sm:$0xff]
        %v1028 = vld [vmem:[%s663 + $0x1c0] sm:$0xff]
        %v1029 = vld [vmem:[%s663 + $0x1c8] sm:$0xff]
        %v1030 = vld [vmem:[%s663 + $0x1d0] sm:$0xff]
        %v1031 = vld [vmem:[%s663 + $0x1d8] sm:$0xff]
        %v1032 = vld [vmem:[%s663 + $0x1e0] sm:$0xff]
        %v1033 = vld [vmem:[%s663 + $0x1e8] sm:$0xff]
        %v1034 = vld [vmem:[%s663 + $0x1f0] sm:$0xff]
        %v1035 = vld [vmem:[%s663 + $0x1f8] sm:$0xff]
        %v1036 = vld [vmem:[%s663 + $0x200] sm:$0xff]
        %v1037 = vld [vmem:[%s663 + $0x208] sm:$0xff]
        %v1038 = vld [vmem:[%s663 + $0x210] sm:$0xff]
        %v1039 = vld [vmem:[%s663 + $0x218] sm:$0xff]
        %v1040 = vld [vmem:[%s663 + $0x220] sm:$0xff]
        %v1041 = vld [vmem:[%s663 + $0x228] sm:$0xff]
        %v1042 = vld [vmem:[%s663 + $0x230] sm:$0xff]
        %v1043 = vld [vmem:[%s663 + $0x238] sm:$0xff]
        %v1044 = vld [vmem:[%s663 + $0x240] sm:$0xff]
        %v1045 = vld [vmem:[%s663 + $0x248] sm:$0xff]
        %v1046 = vld [vmem:[%s663 + $0x250] sm:$0xff]
        %v1047 = vld [vmem:[%s663 + $0x258] sm:$0xff]
        %v1048 = vld [vmem:[%s663 + $0x260] sm:$0xff]
        %v1049 = vld [vmem:[%s663 + $0x268] sm:$0xff]
        %v1050 = vld [vmem:[%s663 + $0x270] sm:$0xff]
        %v1051 = vld [vmem:[%s663 + $0x278] sm:$0xff]
        %v1052 = vld [vmem:[%s663 + $0x280] sm:$0xff]
        %v1053 = vld [vmem:[%s663 + $0x288] sm:$0xff]
        %v1054 = vld [vmem:[%s663 + $0x290] sm:$0xff]
        %v1055 = vld [vmem:[%s663 + $0x298] sm:$0xff]
        %v1056 = vld [vmem:[%s663 + $0x2a0] sm:$0xff]
        %v1057 = vld [vmem:[%s663 + $0x2a8] sm:$0xff]
        %v1058 = vld [vmem:[%s663 + $0x2b0] sm:$0xff]
        %v1059 = vld [vmem:[%s663 + $0x2b8] sm:$0xff]
        %v1060 = vld [vmem:[%s663 + $0x2c0] sm:$0xff]
        %v1061 = vld [vmem:[%s663 + $0x2c8] sm:$0xff]
        %v1062 = vld [vmem:[%s663 + $0x2d0] sm:$0xff]
        %v1063 = vld [vmem:[%s663 + $0x2d8] sm:$0xff]
        %v1064 = vld [vmem:[%s663 + $0x2e0] sm:$0xff]
        %v1065 = vld [vmem:[%s663 + $0x2e8] sm:$0xff]
        %v1066 = vld [vmem:[%s663 + $0x2f0] sm:$0xff]
        %v1067 = vld [vmem:[%s663 + $0x2f8] sm:$0xff]
        %v1068 = vld [vmem:[%s672] sm:$0x3f]
        %v1070 = vlaneseq
        %v1071 = vshrl.u32 %v1070, 7
        %v1072 = vsub.s32 0, %v1071
        %v1073 = vrot.slane %v1068, %v1072
        %v1074 = vlaneseq
        %v1075 = vshrl.u32 %v1074, 7
        %v1076 = vsub.s32 1, %v1075
        %v1077 = vrot.slane %v1068, %v1076
        %v1078 = vlaneseq
        %v1079 = vshrl.u32 %v1078, 7
        %v1080 = vsub.s32 2, %v1079
        %v1081 = vrot.slane %v1068, %v1080
        %v1082 = vlaneseq
        %v1083 = vshrl.u32 %v1082, 7
        %v1084 = vsub.s32 3, %v1083
        %v1085 = vrot.slane %v1068, %v1084
        %v1086 = vlaneseq
        %v1087 = vshrl.u32 %v1086, 7
        %v1088 = vsub.s32 4, %v1087
        %v1089 = vrot.slane %v1068, %v1088
        %v1090 = vlaneseq
        %v1091 = vshrl.u32 %v1090, 7
        %v1092 = vsub.s32 5, %v1091
        %v1093 = vrot.slane %v1068, %v1092
        %v1196 = vunpack.c.l.b16 %v972
        %v1197 = vunpack.c.h.b16 %v972
        %v1198 = vunpack.c.l.b16 %v973
        %v1199 = vunpack.c.h.b16 %v973
        %v1200 = vunpack.c.l.b16 %v974
        %v1201 = vunpack.c.h.b16 %v974
        %v1202 = vunpack.c.l.b16 %v975
        %v1203 = vunpack.c.h.b16 %v975
        %v1204 = vunpack.c.l.b16 %v976
        %v1205 = vunpack.c.h.b16 %v976
        %v1206 = vunpack.c.l.b16 %v977
        %v1207 = vunpack.c.h.b16 %v977
        %v1208 = vunpack.c.l.b16 %v978
        %v1209 = vunpack.c.h.b16 %v978
        %v1210 = vunpack.c.l.b16 %v979
        %v1211 = vunpack.c.h.b16 %v979
        %v1212 = vunpack.c.l.b16 %v980
        %v1213 = vunpack.c.h.b16 %v980
        %v1214 = vunpack.c.l.b16 %v981
        %v1215 = vunpack.c.h.b16 %v981
        %v1216 = vunpack.c.l.b16 %v982
        %v1217 = vunpack.c.h.b16 %v982
        %v1218 = vunpack.c.l.b16 %v983
        %v1219 = vunpack.c.h.b16 %v983
        %v1220 = vunpack.c.l.b16 %v984
        %v1221 = vunpack.c.h.b16 %v984
        %v1222 = vunpack.c.l.b16 %v985
        %v1223 = vunpack.c.h.b16 %v985
        %v1224 = vunpack.c.l.b16 %v986
        %v1225 = vunpack.c.h.b16 %v986
        %v1226 = vunpack.c.l.b16 %v987
        %v1227 = vunpack.c.h.b16 %v987
        %v1228 = vunpack.c.l.b16 %v988
        %v1229 = vunpack.c.h.b16 %v988
        %v1230 = vunpack.c.l.b16 %v989
        %v1231 = vunpack.c.h.b16 %v989
        %v1232 = vunpack.c.l.b16 %v990
        %v1233 = vunpack.c.h.b16 %v990
        %v1234 = vunpack.c.l.b16 %v991
        %v1235 = vunpack.c.h.b16 %v991
        %v1236 = vunpack.c.l.b16 %v992
        %v1237 = vunpack.c.h.b16 %v992
        %v1238 = vunpack.c.l.b16 %v993
        %v1239 = vunpack.c.h.b16 %v993
        %v1240 = vunpack.c.l.b16 %v994
        %v1241 = vunpack.c.h.b16 %v994
        %v1242 = vunpack.c.l.b16 %v995
        %v1243 = vunpack.c.h.b16 %v995
        %v1244 = vunpack.c.l.b16 %v996
        %v1245 = vunpack.c.h.b16 %v996
        %v1246 = vunpack.c.l.b16 %v997
        %v1247 = vunpack.c.h.b16 %v997
        %v1248 = vunpack.c.l.b16 %v998
        %v1249 = vunpack.c.h.b16 %v998
        %v1250 = vunpack.c.l.b16 %v999
        %v1251 = vunpack.c.h.b16 %v999
        %v1252 = vunpack.c.l.b16 %v1000
        %v1253 = vunpack.c.h.b16 %v1000
        %v1254 = vunpack.c.l.b16 %v1001
        %v1255 = vunpack.c.h.b16 %v1001
        %v1256 = vunpack.c.l.b16 %v1002
        %v1257 = vunpack.c.h.b16 %v1002
        %v1258 = vunpack.c.l.b16 %v1003
        %v1259 = vunpack.c.h.b16 %v1003
        %v1260 = vunpack.c.l.b16 %v1004
        %v1261 = vunpack.c.h.b16 %v1004
        %v1262 = vunpack.c.l.b16 %v1005
        %v1263 = vunpack.c.h.b16 %v1005
        %v1264 = vunpack.c.l.b16 %v1006
        %v1265 = vunpack.c.h.b16 %v1006
        %v1266 = vunpack.c.l.b16 %v1007
        %v1267 = vunpack.c.h.b16 %v1007
        %v1268 = vunpack.c.l.b16 %v1008
        %v1269 = vunpack.c.h.b16 %v1008
        %v1270 = vunpack.c.l.b16 %v1009
        %v1271 = vunpack.c.h.b16 %v1009
        %v1272 = vunpack.c.l.b16 %v1010
        %v1273 = vunpack.c.h.b16 %v1010
        %v1274 = vunpack.c.l.b16 %v1011
        %v1275 = vunpack.c.h.b16 %v1011
        %v1276 = vunpack.c.l.b16 %v1012
        %v1277 = vunpack.c.h.b16 %v1012
        %v1278 = vunpack.c.l.b16 %v1013
        %v1279 = vunpack.c.h.b16 %v1013
        %v1280 = vunpack.c.l.b16 %v1014
        %v1281 = vunpack.c.h.b16 %v1014
        %v1282 = vunpack.c.l.b16 %v1015
        %v1283 = vunpack.c.h.b16 %v1015
        %v1284 = vunpack.c.l.b16 %v1016
        %v1285 = vunpack.c.h.b16 %v1016
        %v1286 = vunpack.c.l.b16 %v1017
        %v1287 = vunpack.c.h.b16 %v1017
        %v1288 = vunpack.c.l.b16 %v1018
        %v1289 = vunpack.c.h.b16 %v1018
        %v1290 = vunpack.c.l.b16 %v1019
        %v1291 = vunpack.c.h.b16 %v1019
        %v1292 = vunpack.c.l.b16 %v1020
        %v1293 = vunpack.c.h.b16 %v1020
        %v1294 = vunpack.c.l.b16 %v1021
        %v1295 = vunpack.c.h.b16 %v1021
        %v1296 = vunpack.c.l.b16 %v1022
        %v1297 = vunpack.c.h.b16 %v1022
        %v1298 = vunpack.c.l.b16 %v1023
        %v1299 = vunpack.c.h.b16 %v1023
        %v1300 = vunpack.c.l.b16 %v1024
        %v1301 = vunpack.c.h.b16 %v1024
        %v1302 = vunpack.c.l.b16 %v1025
        %v1303 = vunpack.c.h.b16 %v1025
        %v1304 = vunpack.c.l.b16 %v1026
        %v1305 = vunpack.c.h.b16 %v1026
        %v1306 = vunpack.c.l.b16 %v1027
        %v1307 = vunpack.c.h.b16 %v1027
        %v1308 = vunpack.c.l.b16 %v1028
        %v1309 = vunpack.c.h.b16 %v1028
        %v1310 = vunpack.c.l.b16 %v1029
        %v1311 = vunpack.c.h.b16 %v1029
        %v1312 = vunpack.c.l.b16 %v1030
        %v1313 = vunpack.c.h.b16 %v1030
        %v1314 = vunpack.c.l.b16 %v1031
        %v1315 = vunpack.c.h.b16 %v1031
        %v1316 = vunpack.c.l.b16 %v1032
        %v1317 = vunpack.c.h.b16 %v1032
        %v1318 = vunpack.c.l.b16 %v1033
        %v1319 = vunpack.c.h.b16 %v1033
        %v1320 = vunpack.c.l.b16 %v1034
        %v1321 = vunpack.c.h.b16 %v1034
        %v1322 = vunpack.c.l.b16 %v1035
        %v1323 = vunpack.c.h.b16 %v1035
        %v1324 = vunpack.c.l.b16 %v1036
        %v1325 = vunpack.c.h.b16 %v1036
        %v1326 = vunpack.c.l.b16 %v1037
        %v1327 = vunpack.c.h.b16 %v1037
        %v1328 = vunpack.c.l.b16 %v1038
        %v1329 = vunpack.c.h.b16 %v1038
        %v1330 = vunpack.c.l.b16 %v1039
        %v1331 = vunpack.c.h.b16 %v1039
        %v1332 = vunpack.c.l.b16 %v1040
        %v1333 = vunpack.c.h.b16 %v1040
        %v1334 = vunpack.c.l.b16 %v1041
        %v1335 = vunpack.c.h.b16 %v1041
        %v1336 = vunpack.c.l.b16 %v1042
        %v1337 = vunpack.c.h.b16 %v1042
        %v1338 = vunpack.c.l.b16 %v1043
        %v1339 = vunpack.c.h.b16 %v1043
        %v1340 = vunpack.c.l.b16 %v1044
        %v1341 = vunpack.c.h.b16 %v1044
        %v1342 = vunpack.c.l.b16 %v1045
        %v1343 = vunpack.c.h.b16 %v1045
        %v1344 = vunpack.c.l.b16 %v1046
        %v1345 = vunpack.c.h.b16 %v1046
        %v1346 = vunpack.c.l.b16 %v1047
        %v1347 = vunpack.c.h.b16 %v1047
        %v1348 = vunpack.c.l.b16 %v1048
        %v1349 = vunpack.c.h.b16 %v1048
        %v1350 = vunpack.c.l.b16 %v1049
        %v1351 = vunpack.c.h.b16 %v1049
        %v1352 = vunpack.c.l.b16 %v1050
        %v1353 = vunpack.c.h.b16 %v1050
        %v1354 = vunpack.c.l.b16 %v1051
        %v1355 = vunpack.c.h.b16 %v1051
        %v1356 = vunpack.c.l.b16 %v1052
        %v1357 = vunpack.c.h.b16 %v1052
        %v1358 = vunpack.c.l.b16 %v1053
        %v1359 = vunpack.c.h.b16 %v1053
        %v1360 = vunpack.c.l.b16 %v1054
        %v1361 = vunpack.c.h.b16 %v1054
        %v1362 = vunpack.c.l.b16 %v1055
        %v1363 = vunpack.c.h.b16 %v1055
        %v1364 = vunpack.c.l.b16 %v1056
        %v1365 = vunpack.c.h.b16 %v1056
        %v1366 = vunpack.c.l.b16 %v1057
        %v1367 = vunpack.c.h.b16 %v1057
        %v1368 = vunpack.c.l.b16 %v1058
        %v1369 = vunpack.c.h.b16 %v1058
        %v1370 = vunpack.c.l.b16 %v1059
        %v1371 = vunpack.c.h.b16 %v1059
        %v1372 = vunpack.c.l.b16 %v1060
        %v1373 = vunpack.c.h.b16 %v1060
        %v1374 = vunpack.c.l.b16 %v1061
        %v1375 = vunpack.c.h.b16 %v1061
        %v1376 = vunpack.c.l.b16 %v1062
        %v1377 = vunpack.c.h.b16 %v1062
        %v1378 = vunpack.c.l.b16 %v1063
        %v1379 = vunpack.c.h.b16 %v1063
        %v1380 = vunpack.c.l.b16 %v1064
        %v1381 = vunpack.c.h.b16 %v1064
        %v1382 = vunpack.c.l.b16 %v1065
        %v1383 = vunpack.c.h.b16 %v1065
        %v1384 = vunpack.c.l.b16 %v1066
        %v1385 = vunpack.c.h.b16 %v1066
        %v1386 = vunpack.c.l.b16 %v1067
        %v1387 = vunpack.c.h.b16 %v1067
        %v1388 = vpack.c.b16 %v1202, %v1196
        %v1389 = vpack.c.b16 %v1203, %v1197
        %v1390 = vpack.c.b16 %v1204, %v1198
        %v1391 = vpack.c.b16 %v1205, %v1199
        %v1392 = vpack.c.b16 %v1206, %v1200
        %v1393 = vpack.c.b16 %v1207, %v1201
        %v1394 = vpack.c.b16 %v1214, %v1208
        %v1395 = vpack.c.b16 %v1215, %v1209
        %v1396 = vpack.c.b16 %v1216, %v1210
        %v1397 = vpack.c.b16 %v1217, %v1211
        %v1398 = vpack.c.b16 %v1218, %v1212
        %v1399 = vpack.c.b16 %v1219, %v1213
        %v1400 = vpack.c.b16 %v1226, %v1220
        %v1401 = vpack.c.b16 %v1227, %v1221
        %v1402 = vpack.c.b16 %v1228, %v1222
        %v1403 = vpack.c.b16 %v1229, %v1223
        %v1404 = vpack.c.b16 %v1230, %v1224
        %v1405 = vpack.c.b16 %v1231, %v1225
        %v1406 = vpack.c.b16 %v1238, %v1232
        %v1407 = vpack.c.b16 %v1239, %v1233
        %v1408 = vpack.c.b16 %v1240, %v1234
        %v1409 = vpack.c.b16 %v1241, %v1235
        %v1410 = vpack.c.b16 %v1242, %v1236
        %v1411 = vpack.c.b16 %v1243, %v1237
        %v1412 = vpack.c.b16 %v1250, %v1244
        %v1413 = vpack.c.b16 %v1251, %v1245
        %v1414 = vpack.c.b16 %v1252, %v1246
        %v1415 = vpack.c.b16 %v1253, %v1247
        %v1416 = vpack.c.b16 %v1254, %v1248
        %v1417 = vpack.c.b16 %v1255, %v1249
        %v1418 = vpack.c.b16 %v1262, %v1256
        %v1419 = vpack.c.b16 %v1263, %v1257
        %v1420 = vpack.c.b16 %v1264, %v1258
        %v1421 = vpack.c.b16 %v1265, %v1259
        %v1422 = vpack.c.b16 %v1266, %v1260
        %v1423 = vpack.c.b16 %v1267, %v1261
        %v1424 = vpack.c.b16 %v1274, %v1268
        %v1425 = vpack.c.b16 %v1275, %v1269
        %v1426 = vpack.c.b16 %v1276, %v1270
        %v1427 = vpack.c.b16 %v1277, %v1271
        %v1428 = vpack.c.b16 %v1278, %v1272
        %v1429 = vpack.c.b16 %v1279, %v1273
        %v1430 = vpack.c.b16 %v1286, %v1280
        %v1431 = vpack.c.b16 %v1287, %v1281
        %v1432 = vpack.c.b16 %v1288, %v1282
        %v1433 = vpack.c.b16 %v1289, %v1283
        %v1434 = vpack.c.b16 %v1290, %v1284
        %v1435 = vpack.c.b16 %v1291, %v1285
        %v1436 = vpack.c.b16 %v1298, %v1292
        %v1437 = vpack.c.b16 %v1299, %v1293
        %v1438 = vpack.c.b16 %v1300, %v1294
        %v1439 = vpack.c.b16 %v1301, %v1295
        %v1440 = vpack.c.b16 %v1302, %v1296
        %v1441 = vpack.c.b16 %v1303, %v1297
        %v1442 = vpack.c.b16 %v1310, %v1304
        %v1443 = vpack.c.b16 %v1311, %v1305
        %v1444 = vpack.c.b16 %v1312, %v1306
        %v1445 = vpack.c.b16 %v1313, %v1307
        %v1446 = vpack.c.b16 %v1314, %v1308
        %v1447 = vpack.c.b16 %v1315, %v1309
        %v1448 = vpack.c.b16 %v1322, %v1316
        %v1449 = vpack.c.b16 %v1323, %v1317
        %v1450 = vpack.c.b16 %v1324, %v1318
        %v1451 = vpack.c.b16 %v1325, %v1319
        %v1452 = vpack.c.b16 %v1326, %v1320
        %v1453 = vpack.c.b16 %v1327, %v1321
        %v1454 = vpack.c.b16 %v1334, %v1328
        %v1455 = vpack.c.b16 %v1335, %v1329
        %v1456 = vpack.c.b16 %v1336, %v1330
        %v1457 = vpack.c.b16 %v1337, %v1331
        %v1458 = vpack.c.b16 %v1338, %v1332
        %v1459 = vpack.c.b16 %v1339, %v1333
        %v1460 = vpack.c.b16 %v1346, %v1340
        %v1461 = vpack.c.b16 %v1347, %v1341
        %v1462 = vpack.c.b16 %v1348, %v1342
        %v1463 = vpack.c.b16 %v1349, %v1343
        %v1464 = vpack.c.b16 %v1350, %v1344
        %v1465 = vpack.c.b16 %v1351, %v1345
        %v1466 = vpack.c.b16 %v1358, %v1352
        %v1467 = vpack.c.b16 %v1359, %v1353
        %v1468 = vpack.c.b16 %v1360, %v1354
        %v1469 = vpack.c.b16 %v1361, %v1355
        %v1470 = vpack.c.b16 %v1362, %v1356
        %v1471 = vpack.c.b16 %v1363, %v1357
        %v1472 = vpack.c.b16 %v1370, %v1364
        %v1473 = vpack.c.b16 %v1371, %v1365
        %v1474 = vpack.c.b16 %v1372, %v1366
        %v1475 = vpack.c.b16 %v1373, %v1367
        %v1476 = vpack.c.b16 %v1374, %v1368
        %v1477 = vpack.c.b16 %v1375, %v1369
        %v1478 = vpack.c.b16 %v1382, %v1376
        %v1479 = vpack.c.b16 %v1383, %v1377
        %v1480 = vpack.c.b16 %v1384, %v1378
        %v1481 = vpack.c.b16 %v1385, %v1379
        %v1482 = vpack.c.b16 %v1386, %v1380
        %v1483 = vpack.c.b16 %v1387, %v1381
        %1580 = vmatprep.subr.bf16.mxu0 %v1431
        %1581 = vmatpush1.bf16.msra.mxu0 %v1430
        %1582 = vmatprep.subr.bf16.mxu0 %v1425
        %1583 = vmatpush1.bf16.msra.mxu0 %v1424
        %1584 = vmatprep.subr.bf16.mxu0 %v1419
        %1585 = vmatpush1.bf16.msra.mxu0 %v1418
        %1586 = vmatprep.subr.bf16.mxu0 %v1413
        %1587 = vmatpush1.bf16.msra.mxu0 %v1412
        %1588 = vmatprep.subr.bf16.mxu0 %v1407
        %1589 = vmatpush1.bf16.msra.mxu0 %v1406
        %1590 = vmatprep.subr.bf16.mxu0 %v1401
        %1591 = vmatpush1.bf16.msra.mxu0 %v1400
        %1592 = vmatprep.subr.bf16.mxu0 %v1395
        %1593 = vmatpush1.bf16.msra.mxu0 %v1394
        %1594 = vmatprep.subr.bf16.mxu0 %v1389
        %1595 = vmatpush1.bf16.msra.mxu0 %v1388
        %1596 = vmatprep.subr.bf16.mxu0 %v1479
        %1597 = vmatpush2.bf16.msra.mxu0 %v1478
        %1598 = vmatprep.subr.bf16.mxu0 %v1473
        %1599 = vmatpush2.bf16.msra.mxu0 %v1472
        %1600 = vmatprep.subr.bf16.mxu0 %v1467
        %1601 = vmatpush2.bf16.msra.mxu0 %v1466
        %1602 = vmatprep.subr.bf16.mxu0 %v1461
        %1603 = vmatpush2.bf16.msra.mxu0 %v1460
        %1604 = vmatprep.subr.bf16.mxu0 %v1455
        %1605 = vmatpush2.bf16.msra.mxu0 %v1454
        %1606 = vmatprep.subr.bf16.mxu0 %v1449
        %1607 = vmatpush2.bf16.msra.mxu0 %v1448
        %1608 = vmatprep.subr.bf16.mxu0 %v1443
        %1609 = vmatpush2.bf16.msra.mxu0 %v1442
        %1610 = vmatprep.subr.bf16.mxu0 %v1437
        %1611 = vmatpush2.bf16.msra.mxu0 %v1436
        %1612 = vmatprep.mubr.bf16.mxu0 %v957
        %1613 = vmatmul.mubr.bf16.gmra.mxu0 %v956
        %v1614 = vpop.f32.mrf.mxu0
        %v1615 = vadd.f32 %v1073, %v1614
        %v1616 = vpop.f32.mrf.mxu0
        %v1617 = vadd.f32 %v1077, %v1616
        %v1618 = vpop.f32.mrf.mxu0
        %v1619 = vadd.f32 %v1073, %v1618
        %v1620 = vpop.f32.mrf.mxu0
        %v1621 = vadd.f32 %v1077, %v1620
        %1622 = vmatprep.mubr.bf16.mxu0 %v959
        %1623 = vmatmul.mubr.bf16.gmra.mxu0 %v958
        %v1624 = vpop.f32.mrf.mxu0
        %v1625 = vadd.f32 %v1073, %v1624
        %v1626 = vpop.f32.mrf.mxu0
        %v1627 = vadd.f32 %v1077, %v1626
        %v1628 = vpop.f32.mrf.mxu0
        %v1629 = vadd.f32 %v1073, %v1628
        %v1630 = vpop.f32.mrf.mxu0
        %v1631 = vadd.f32 %v1077, %v1630
        %1632 = vmatprep.mubr.bf16.mxu0 %v961
        %1633 = vmatmul.mubr.bf16.gmra.mxu0 %v960
        %v1634 = vpop.f32.mrf.mxu0
        %v1635 = vadd.f32 %v1073, %v1634
        %v1636 = vpop.f32.mrf.mxu0
        %v1637 = vadd.f32 %v1077, %v1636
        %v1638 = vpop.f32.mrf.mxu0
        %v1639 = vadd.f32 %v1073, %v1638
        %v1640 = vpop.f32.mrf.mxu0
        %v1641 = vadd.f32 %v1077, %v1640
        %1642 = vmatprep.mubr.bf16.mxu0 %v963
        %1643 = vmatmul.mubr.bf16.gmra.mxu0 %v962
        %v1644 = vpop.f32.mrf.mxu0
        %v1645 = vadd.f32 %v1073, %v1644
        %v1646 = vpop.f32.mrf.mxu0
        %v1647 = vadd.f32 %v1077, %v1646
        %v1648 = vpop.f32.mrf.mxu0
        %v1649 = vadd.f32 %v1073, %v1648
        %v1650 = vpop.f32.mrf.mxu0
        %v1651 = vadd.f32 %v1077, %v1650
        %1652 = vmatprep.mubr.bf16.mxu0 %v965
        %1653 = vmatmul.mubr.bf16.gmra.mxu0 %v964
        %v1654 = vpop.f32.mrf.mxu0
        %v1655 = vadd.f32 %v1073, %v1654
        %v1656 = vpop.f32.mrf.mxu0
        %v1657 = vadd.f32 %v1077, %v1656
        %v1658 = vpop.f32.mrf.mxu0
        %v1659 = vadd.f32 %v1073, %v1658
        %v1660 = vpop.f32.mrf.mxu0
        %v1661 = vadd.f32 %v1077, %v1660
        %1662 = vmatprep.mubr.bf16.mxu0 %v967
        %1663 = vmatmul.mubr.bf16.gmra.mxu0 %v966
        %v1664 = vpop.f32.mrf.mxu0
        %v1665 = vadd.f32 %v1073, %v1664
        %v1666 = vpop.f32.mrf.mxu0
        %v1667 = vadd.f32 %v1077, %v1666
        %v1668 = vpop.f32.mrf.mxu0
        %v1669 = vadd.f32 %v1073, %v1668
        %v1670 = vpop.f32.mrf.mxu0
        %v1671 = vadd.f32 %v1077, %v1670
        %1672 = vmatprep.mubr.bf16.mxu0 %v969
        %1673 = vmatmul.mubr.bf16.gmra.mxu0 %v968
        %v1674 = vpop.f32.mrf.mxu0
        %v1675 = vadd.f32 %v1073, %v1674
        %v1676 = vpop.f32.mrf.mxu0
        %v1677 = vadd.f32 %v1077, %v1676
        %v1678 = vpop.f32.mrf.mxu0
        %v1679 = vadd.f32 %v1073, %v1678
        %v1680 = vpop.f32.mrf.mxu0
        %v1681 = vadd.f32 %v1077, %v1680
        %1682 = vmatprep.mubr.bf16.mxu0 %v971
        %1683 = vmatmul.mubr.bf16.gmra.mxu0 %v970
        %v1684 = vpop.f32.mrf.mxu0
        %v1685 = vadd.f32 %v1073, %v1684
        %v1686 = vpop.f32.mrf.mxu0
        %v1687 = vadd.f32 %v1077, %v1686
        %v1688 = vpop.f32.mrf.mxu0
        %v1689 = vadd.f32 %v1073, %v1688
        %v1690 = vpop.f32.mrf.mxu0
        %v1691 = vadd.f32 %v1077, %v1690
        %1692 = vdwg.mxu0
        %1693 = vmatprep.subr.bf16.mxu0 %v1433
        %1694 = vmatpush1.bf16.msra.mxu0 %v1432
        %1695 = vmatprep.subr.bf16.mxu0 %v1427
        %1696 = vmatpush1.bf16.msra.mxu0 %v1426
        %1697 = vmatprep.subr.bf16.mxu0 %v1421
        %1698 = vmatpush1.bf16.msra.mxu0 %v1420
        %1699 = vmatprep.subr.bf16.mxu0 %v1415
        %1700 = vmatpush1.bf16.msra.mxu0 %v1414
        %1701 = vmatprep.subr.bf16.mxu0 %v1409
        %1702 = vmatpush1.bf16.msra.mxu0 %v1408
        %1703 = vmatprep.subr.bf16.mxu0 %v1403
        %1704 = vmatpush1.bf16.msra.mxu0 %v1402
        %1705 = vmatprep.subr.bf16.mxu0 %v1397
        %1706 = vmatpush1.bf16.msra.mxu0 %v1396
        %1707 = vmatprep.subr.bf16.mxu0 %v1391
        %1708 = vmatpush1.bf16.msra.mxu0 %v1390
        %1709 = vmatprep.subr.bf16.mxu0 %v1481
        %1710 = vmatpush2.bf16.msra.mxu0 %v1480
        %1711 = vmatprep.subr.bf16.mxu0 %v1475
        %1712 = vmatpush2.bf16.msra.mxu0 %v1474
        %1713 = vmatprep.subr.bf16.mxu0 %v1469
        %1714 = vmatpush2.bf16.msra.mxu0 %v1468
        %1715 = vmatprep.subr.bf16.mxu0 %v1463
        %1716 = vmatpush2.bf16.msra.mxu0 %v1462
        %1717 = vmatprep.subr.bf16.mxu0 %v1457
        %1718 = vmatpush2.bf16.msra.mxu0 %v1456
        %1719 = vmatprep.subr.bf16.mxu0 %v1451
        %1720 = vmatpush2.bf16.msra.mxu0 %v1450
        %1721 = vmatprep.subr.bf16.mxu0 %v1445
        %1722 = vmatpush2.bf16.msra.mxu0 %v1444
        %1723 = vmatprep.subr.bf16.mxu0 %v1439
        %1724 = vmatpush2.bf16.msra.mxu0 %v1438
        %1725 = vmatprep.mubr.bf16.mxu0 %v957
        %1726 = vmatmul.mubr.bf16.gmra.mxu0 %v956
        %v1727 = vpop.f32.mrf.mxu0
        %v1728 = vadd.f32 %v1081, %v1727
        %v1729 = vpop.f32.mrf.mxu0
        %v1730 = vadd.f32 %v1085, %v1729
        %v1731 = vpop.f32.mrf.mxu0
        %v1732 = vadd.f32 %v1081, %v1731
        %v1733 = vpop.f32.mrf.mxu0
        %v1734 = vadd.f32 %v1085, %v1733
        %1735 = vmatprep.mubr.bf16.mxu0 %v959
        %1736 = vmatmul.mubr.bf16.gmra.mxu0 %v958
        %v1737 = vpop.f32.mrf.mxu0
        %v1738 = vadd.f32 %v1081, %v1737
        %v1739 = vpop.f32.mrf.mxu0
        %v1740 = vadd.f32 %v1085, %v1739
        %v1741 = vpop.f32.mrf.mxu0
        %v1742 = vadd.f32 %v1081, %v1741
        %v1743 = vpop.f32.mrf.mxu0
        %v1744 = vadd.f32 %v1085, %v1743
        %1745 = vmatprep.mubr.bf16.mxu0 %v961
        %1746 = vmatmul.mubr.bf16.gmra.mxu0 %v960
        %v1747 = vpop.f32.mrf.mxu0
        %v1748 = vadd.f32 %v1081, %v1747
        %v1749 = vpop.f32.mrf.mxu0
        %v1750 = vadd.f32 %v1085, %v1749
        %v1751 = vpop.f32.mrf.mxu0
        %v1752 = vadd.f32 %v1081, %v1751
        %v1753 = vpop.f32.mrf.mxu0
        %v1754 = vadd.f32 %v1085, %v1753
        %1755 = vmatprep.mubr.bf16.mxu0 %v963
        %1756 = vmatmul.mubr.bf16.gmra.mxu0 %v962
        %v1757 = vpop.f32.mrf.mxu0
        %v1758 = vadd.f32 %v1081, %v1757
        %v1759 = vpop.f32.mrf.mxu0
        %v1760 = vadd.f32 %v1085, %v1759
        %v1761 = vpop.f32.mrf.mxu0
        %v1762 = vadd.f32 %v1081, %v1761
        %v1763 = vpop.f32.mrf.mxu0
        %v1764 = vadd.f32 %v1085, %v1763
        %1765 = vmatprep.mubr.bf16.mxu0 %v965
        %1766 = vmatmul.mubr.bf16.gmra.mxu0 %v964
        %v1767 = vpop.f32.mrf.mxu0
        %v1768 = vadd.f32 %v1081, %v1767
        %v1769 = vpop.f32.mrf.mxu0
        %v1770 = vadd.f32 %v1085, %v1769
        %v1771 = vpop.f32.mrf.mxu0
        %v1772 = vadd.f32 %v1081, %v1771
        %v1773 = vpop.f32.mrf.mxu0
        %v1774 = vadd.f32 %v1085, %v1773
        %1775 = vmatprep.mubr.bf16.mxu0 %v967
        %1776 = vmatmul.mubr.bf16.gmra.mxu0 %v966
        %v1777 = vpop.f32.mrf.mxu0
        %v1778 = vadd.f32 %v1081, %v1777
        %v1779 = vpop.f32.mrf.mxu0
        %v1780 = vadd.f32 %v1085, %v1779
        %v1781 = vpop.f32.mrf.mxu0
        %v1782 = vadd.f32 %v1081, %v1781
        %v1783 = vpop.f32.mrf.mxu0
        %v1784 = vadd.f32 %v1085, %v1783
        %1785 = vmatprep.mubr.bf16.mxu0 %v969
        %1786 = vmatmul.mubr.bf16.gmra.mxu0 %v968
        %v1787 = vpop.f32.mrf.mxu0
        %v1788 = vadd.f32 %v1081, %v1787
        %v1789 = vpop.f32.mrf.mxu0
        %v1790 = vadd.f32 %v1085, %v1789
        %v1791 = vpop.f32.mrf.mxu0
        %v1792 = vadd.f32 %v1081, %v1791
        %v1793 = vpop.f32.mrf.mxu0
        %v1794 = vadd.f32 %v1085, %v1793
        %1795 = vmatprep.mubr.bf16.mxu0 %v971
        %1796 = vmatmul.mubr.bf16.gmra.mxu0 %v970
        %v1797 = vpop.f32.mrf.mxu0
        %v1798 = vadd.f32 %v1081, %v1797
        %v1799 = vpop.f32.mrf.mxu0
        %v1800 = vadd.f32 %v1085, %v1799
        %v1801 = vpop.f32.mrf.mxu0
        %v1802 = vadd.f32 %v1081, %v1801
        %v1803 = vpop.f32.mrf.mxu0
        %v1804 = vadd.f32 %v1085, %v1803
        %1805 = vdwg.mxu0
        %1806 = vmatprep.subr.bf16.mxu0 %v1435
        %1807 = vmatpush1.bf16.msra.mxu0 %v1434
        %1808 = vmatprep.subr.bf16.mxu0 %v1429
        %1809 = vmatpush1.bf16.msra.mxu0 %v1428
        %1810 = vmatprep.subr.bf16.mxu0 %v1423
        %1811 = vmatpush1.bf16.msra.mxu0 %v1422
        %1812 = vmatprep.subr.bf16.mxu0 %v1417
        %1813 = vmatpush1.bf16.msra.mxu0 %v1416
        %1814 = vmatprep.subr.bf16.mxu0 %v1411
        %1815 = vmatpush1.bf16.msra.mxu0 %v1410
        %1816 = vmatprep.subr.bf16.mxu0 %v1405
        %1817 = vmatpush1.bf16.msra.mxu0 %v1404
        %1818 = vmatprep.subr.bf16.mxu0 %v1399
        %1819 = vmatpush1.bf16.msra.mxu0 %v1398
        %1820 = vmatprep.subr.bf16.mxu0 %v1393
        %1821 = vmatpush1.bf16.msra.mxu0 %v1392
        %1822 = vmatprep.subr.bf16.mxu0 %v1483
        %1823 = vmatpush2.bf16.msra.mxu0 %v1482
        %1824 = vmatprep.subr.bf16.mxu0 %v1477
        %1825 = vmatpush2.bf16.msra.mxu0 %v1476
        %1826 = vmatprep.subr.bf16.mxu0 %v1471
        %1827 = vmatpush2.bf16.msra.mxu0 %v1470
        %1828 = vmatprep.subr.bf16.mxu0 %v1465
        %1829 = vmatpush2.bf16.msra.mxu0 %v1464
        %1830 = vmatprep.subr.bf16.mxu0 %v1459
        %1831 = vmatpush2.bf16.msra.mxu0 %v1458
        %1832 = vmatprep.subr.bf16.mxu0 %v1453
        %1833 = vmatpush2.bf16.msra.mxu0 %v1452
        %1834 = vmatprep.subr.bf16.mxu0 %v1447
        %1835 = vmatpush2.bf16.msra.mxu0 %v1446
        %1836 = vmatprep.subr.bf16.mxu0 %v1441
        %1837 = vmatpush2.bf16.msra.mxu0 %v1440
        %1838 = vmatprep.mubr.bf16.mxu0 %v957
        %1839 = vmatmul.mubr.bf16.gmra.mxu0 %v956
        %v1840 = vpop.f32.mrf.mxu0
        %v1841 = vadd.f32 %v1089, %v1840
        %v1842 = vpop.f32.mrf.mxu0
        %v1843 = vadd.f32 %v1093, %v1842
        %v1844 = vpop.f32.mrf.mxu0
        %v1845 = vadd.f32 %v1089, %v1844
        %v1846 = vpop.f32.mrf.mxu0
        %v1847 = vadd.f32 %v1093, %v1846
        %1848 = vmatprep.mubr.bf16.mxu0 %v959
        %1849 = vmatmul.mubr.bf16.gmra.mxu0 %v958
        %v1850 = vpop.f32.mrf.mxu0
        %v1851 = vadd.f32 %v1089, %v1850
        %v1852 = vpop.f32.mrf.mxu0
        %v1853 = vadd.f32 %v1093, %v1852
        %v1854 = vpop.f32.mrf.mxu0
        %v1855 = vadd.f32 %v1089, %v1854
        %v1856 = vpop.f32.mrf.mxu0
        %v1857 = vadd.f32 %v1093, %v1856
        %1858 = vmatprep.mubr.bf16.mxu0 %v961
        %1859 = vmatmul.mubr.bf16.gmra.mxu0 %v960
        %v1860 = vpop.f32.mrf.mxu0
        %v1861 = vadd.f32 %v1089, %v1860
        %v1862 = vpop.f32.mrf.mxu0
        %v1863 = vadd.f32 %v1093, %v1862
        %v1864 = vpop.f32.mrf.mxu0
        %v1865 = vadd.f32 %v1089, %v1864
        %v1866 = vpop.f32.mrf.mxu0
        %v1867 = vadd.f32 %v1093, %v1866
        %1868 = vmatprep.mubr.bf16.mxu0 %v963
        %1869 = vmatmul.mubr.bf16.gmra.mxu0 %v962
        %v1870 = vpop.f32.mrf.mxu0
        %v1871 = vadd.f32 %v1089, %v1870
        %v1872 = vpop.f32.mrf.mxu0
        %v1873 = vadd.f32 %v1093, %v1872
        %v1874 = vpop.f32.mrf.mxu0
        %v1875 = vadd.f32 %v1089, %v1874
        %v1876 = vpop.f32.mrf.mxu0
        %v1877 = vadd.f32 %v1093, %v1876
        %1878 = vmatprep.mubr.bf16.mxu0 %v965
        %1879 = vmatmul.mubr.bf16.gmra.mxu0 %v964
        %v1880 = vpop.f32.mrf.mxu0
        %v1881 = vadd.f32 %v1089, %v1880
        %v1882 = vpop.f32.mrf.mxu0
        %v1883 = vadd.f32 %v1093, %v1882
        %v1884 = vpop.f32.mrf.mxu0
        %v1885 = vadd.f32 %v1089, %v1884
        %v1886 = vpop.f32.mrf.mxu0
        %v1887 = vadd.f32 %v1093, %v1886
        %1888 = vmatprep.mubr.bf16.mxu0 %v967
        %1889 = vmatmul.mubr.bf16.gmra.mxu0 %v966
        %v1890 = vpop.f32.mrf.mxu0
        %v1891 = vadd.f32 %v1089, %v1890
        %v1892 = vpop.f32.mrf.mxu0
        %v1893 = vadd.f32 %v1093, %v1892
        %v1894 = vpop.f32.mrf.mxu0
        %v1895 = vadd.f32 %v1089, %v1894
        %v1896 = vpop.f32.mrf.mxu0
        %v1897 = vadd.f32 %v1093, %v1896
        %1898 = vmatprep.mubr.bf16.mxu0 %v969
        %1899 = vmatmul.mubr.bf16.gmra.mxu0 %v968
        %v1900 = vpop.f32.mrf.mxu0
        %v1901 = vadd.f32 %v1089, %v1900
        %v1902 = vpop.f32.mrf.mxu0
        %v1903 = vadd.f32 %v1093, %v1902
        %v1904 = vpop.f32.mrf.mxu0
        %v1905 = vadd.f32 %v1089, %v1904
        %v1906 = vpop.f32.mrf.mxu0
        %v1907 = vadd.f32 %v1093, %v1906
        %1908 = vmatprep.mubr.bf16.mxu0 %v971
        %1909 = vmatmul.mubr.bf16.gmra.mxu0 %v970
        %v1910 = vpop.f32.mrf.mxu0
        %v1911 = vadd.f32 %v1089, %v1910
        %v1912 = vpop.f32.mrf.mxu0
        %v1913 = vadd.f32 %v1093, %v1912
        %v1914 = vpop.f32.mrf.mxu0
        %v1915 = vadd.f32 %v1089, %v1914
        %v1916 = vpop.f32.mrf.mxu0
        %v1917 = vadd.f32 %v1093, %v1916
        %1918 = vdwg.mxu0
        %v1919 = vpack.c.bf16 %v1619, %v1615
        %v1920 = vpack.c.bf16 %v1621, %v1617
        %v1921 = vpack.c.bf16 %v1732, %v1728
        %v1922 = vpack.c.bf16 %v1734, %v1730
        %v1923 = vpack.c.bf16 %v1845, %v1841
        %v1924 = vpack.c.bf16 %v1847, %v1843
        %v1925 = vpack.c.bf16 %v1629, %v1625
        %v1926 = vpack.c.bf16 %v1631, %v1627
        %v1927 = vpack.c.bf16 %v1742, %v1738
        %v1928 = vpack.c.bf16 %v1744, %v1740
        %v1929 = vpack.c.bf16 %v1855, %v1851
        %v1930 = vpack.c.bf16 %v1857, %v1853
        %v1931 = vpack.c.bf16 %v1639, %v1635
        %v1932 = vpack.c.bf16 %v1641, %v1637
        %v1933 = vpack.c.bf16 %v1752, %v1748
        %v1934 = vpack.c.bf16 %v1754, %v1750
        %v1935 = vpack.c.bf16 %v1865, %v1861
        %v1936 = vpack.c.bf16 %v1867, %v1863
        %v1937 = vpack.c.bf16 %v1649, %v1645
        %v1938 = vpack.c.bf16 %v1651, %v1647
        %v1939 = vpack.c.bf16 %v1762, %v1758
        %v1940 = vpack.c.bf16 %v1764, %v1760
        %v1941 = vpack.c.bf16 %v1875, %v1871
        %v1942 = vpack.c.bf16 %v1877, %v1873
        %v1943 = vpack.c.bf16 %v1659, %v1655
        %v1944 = vpack.c.bf16 %v1661, %v1657
        %v1945 = vpack.c.bf16 %v1772, %v1768
        %v1946 = vpack.c.bf16 %v1774, %v1770
        %v1947 = vpack.c.bf16 %v1885, %v1881
        %v1948 = vpack.c.bf16 %v1887, %v1883
        %v1949 = vpack.c.bf16 %v1669, %v1665
        %v1950 = vpack.c.bf16 %v1671, %v1667
        %v1951 = vpack.c.bf16 %v1782, %v1778
        %v1952 = vpack.c.bf16 %v1784, %v1780
        %v1953 = vpack.c.bf16 %v1895, %v1891
        %v1954 = vpack.c.bf16 %v1897, %v1893
        %v1955 = vpack.c.bf16 %v1679, %v1675
        %v1956 = vpack.c.bf16 %v1681, %v1677
        %v1957 = vpack.c.bf16 %v1792, %v1788
        %v1958 = vpack.c.bf16 %v1794, %v1790
        %v1959 = vpack.c.bf16 %v1905, %v1901
        %v1960 = vpack.c.bf16 %v1907, %v1903
        %v1961 = vpack.c.bf16 %v1689, %v1685
        %v1962 = vpack.c.bf16 %v1691, %v1687
        %v1963 = vpack.c.bf16 %v1802, %v1798
        %v1964 = vpack.c.bf16 %v1804, %v1800
        %v1965 = vpack.c.bf16 %v1915, %v1911
        %v1966 = vpack.c.bf16 %v1917, %v1913
        %v1967 = vlaneseq
        %v1968 = vand.u32 %v1967, 127
        %vm1969 = vcmp.lt.s32.totalorder %v1968, 49
        %vm1970 = vcmask 523264
        %v1972 = vsel %vm1970, %v1919, 0
        %v1975 = vsel %vm1970, %v1925, 0
        %v1978 = vsel %vm1970, %v1931, 0
        %v1981 = vsel %vm1970, %v1937, 0
        %v1984 = vsel %vm1970, %v1921, 0
        %v1987 = vsel %vm1970, %v1927, 0
        %v1990 = vsel %vm1970, %v1933, 0
        %v1993 = vsel %vm1970, %v1939, 0
        %1995 = vmatprep.subr.bf16.mxu0 0
        %1996 = vmatpush1.bf16.xpose.msra.mxu0 0
        %1997 = vmatprep.subr.bf16.mxu0 0
        %1998 = vmatpush1.bf16.xpose.msra.mxu0 0
        %1999 = vmatprep.subr.bf16.mxu0 0
        %2000 = vmatpush1.bf16.xpose.msra.mxu0 0
        %2001 = vmatprep.subr.bf16.mxu0 0
        %2002 = vmatpush1.bf16.xpose.msra.mxu0 0
        %2003 = vmatprep.subr.bf16.mxu0 0
        %2004 = vmatpush1.bf16.xpose.msra.mxu0 %v1993
        %2005 = vmatprep.subr.bf16.mxu0 0
        %2006 = vmatpush1.bf16.xpose.msra.mxu0 %v1990
        %2007 = vmatprep.subr.bf16.mxu0 0
        %2008 = vmatpush1.bf16.xpose.msra.mxu0 %v1987
        %2009 = vmatprep.subr.bf16.mxu0 0
        %2010 = vmatpush1.bf16.xpose.msra.mxu0 %v1984
        %2011 = vmatprep.subr.bf16.mxu0 0
        %2012 = vmatpush2.bf16.xpose.msra.mxu0 0
        %2013 = vmatprep.subr.bf16.mxu0 0
        %2014 = vmatpush2.bf16.xpose.msra.mxu0 0
        %2015 = vmatprep.subr.bf16.mxu0 0
        %2016 = vmatpush2.bf16.xpose.msra.mxu0 0
        %2017 = vmatprep.subr.bf16.mxu0 0
        %2018 = vmatpush2.bf16.xpose.msra.mxu0 0
        %2019 = vmatprep.subr.bf16.mxu0 0
        %2020 = vmatpush2.bf16.xpose.msra.mxu0 0
        %2021 = vmatprep.subr.bf16.mxu0 0
        %2022 = vmatpush2.bf16.xpose.msra.mxu0 0
        %2023 = vmatprep.subr.bf16.mxu0 0
        %2024 = vmatpush2.bf16.xpose.msra.mxu0 0
        %2025 = vmatprep.subr.bf16.mxu0 0
        %2026 = vmatpush2.bf16.xpose.msra.mxu0 0
        %2027 = vmatprep.mubr.bf16.mxu0 0
        %2028 = vmatmul.mubr.bf16.gmra.mxu0 %v1972
        %v2029 = vpop.f32.mrf.mxu0
        %v2030 = vadd.f32 0.0, %v2029
        %v2031 = vpop.f32.mrf.mxu0
        %v2032 = vpop.f32.mrf.mxu0
        %v2033 = vadd.f32 0.0, %v2032
        %v2034 = vpop.f32.mrf.mxu0
        %2035 = vmatprep.mubr.bf16.mxu0 0
        %2036 = vmatmul.mubr.bf16.gmra.mxu0 %v1975
        %v2037 = vpop.f32.mrf.mxu0
        %v2038 = vadd.f32 0.0, %v2037
        %v2039 = vpop.f32.mrf.mxu0
        %v2040 = vpop.f32.mrf.mxu0
        %v2041 = vadd.f32 0.0, %v2040
        %v2042 = vpop.f32.mrf.mxu0
        %2043 = vmatprep.mubr.bf16.mxu0 0
        %2044 = vmatmul.mubr.bf16.gmra.mxu0 %v1978
        %v2045 = vpop.f32.mrf.mxu0
        %v2046 = vadd.f32 0.0, %v2045
        %v2047 = vpop.f32.mrf.mxu0
        %v2048 = vpop.f32.mrf.mxu0
        %v2049 = vadd.f32 0.0, %v2048
        %v2050 = vpop.f32.mrf.mxu0
        %2051 = vmatprep.mubr.bf16.mxu0 0
        %2052 = vmatmul.mubr.bf16.gmra.mxu0 %v1981
        %v2053 = vpop.f32.mrf.mxu0
        %v2054 = vadd.f32 0.0, %v2053
        %v2055 = vpop.f32.mrf.mxu0
        %v2056 = vpop.f32.mrf.mxu0
        %v2057 = vadd.f32 0.0, %v2056
        %v2058 = vpop.f32.mrf.mxu0
        %2059 = vdwg.mxu0
        %v2060 = vmul.f32 %v2030, 0.125
        %v2061 = vmul.f32 %v2033, 0.125
        %v2062 = vmul.f32 %v2038, 0.125
        %v2063 = vmul.f32 %v2041, 0.125
        %v2064 = vmul.f32 %v2046, 0.125
        %v2065 = vmul.f32 %v2049, 0.125
        %v2066 = vmul.f32 %v2054, 0.125
        %v2067 = vmul.f32 %v2057, 0.125
        %v2068 = vsel %vm1969, %v2060, -1e+30
        %v2069 = vsel %vm1969, %v2061, -1e+30
        %v2070 = vsel %vm1969, %v2062, -1e+30
        %v2071 = vsel %vm1969, %v2063, -1e+30
        %v2072 = vsel %vm1969, %v2064, -1e+30
        %v2073 = vsel %vm1969, %v2065, -1e+30
        %v2074 = vsel %vm1969, %v2066, -1e+30
        %v2075 = vsel %vm1969, %v2067, -1e+30
        %v2076 = vsel %vm1970, %v2068, -inf
        %2077 = vmax.xlane.f32.xlu0 %v2076
        %v2078 = vpop.xlane.xlu0 %2077
        %v2079 = vsel %vm1970, %v2069, -inf
        %2080 = vmax.xlane.f32.xlu0 %v2079
        %v2081 = vpop.xlane.xlu0 %2080
        %v2082 = vsel %vm1970, %v2070, -inf
        %2083 = vmax.xlane.f32.xlu0 %v2082
        %v2084 = vpop.xlane.xlu0 %2083
        %v2085 = vsel %vm1970, %v2071, -inf
        %2086 = vmax.xlane.f32.xlu0 %v2085
        %v2087 = vpop.xlane.xlu0 %2086
        %v2088 = vsel %vm1970, %v2072, -inf
        %2089 = vmax.xlane.f32.xlu0 %v2088
        %v2090 = vpop.xlane.xlu0 %2089
        %v2091 = vsel %vm1970, %v2073, -inf
        %2092 = vmax.xlane.f32.xlu0 %v2091
        %v2093 = vpop.xlane.xlu0 %2092
        %v2094 = vsel %vm1970, %v2074, -inf
        %2095 = vmax.xlane.f32.xlu0 %v2094
        %v2096 = vpop.xlane.xlu0 %2095
        %v2097 = vsel %vm1970, %v2075, -inf
        %2098 = vmax.xlane.f32.xlu0 %v2097
        %v2099 = vpop.xlane.xlu0 %2098
        %v2100 = vsub.f32 %v2068, %v2078
        %v2101 = vsub.f32 %v2069, %v2081
        %v2102 = vsub.f32 %v2070, %v2084
        %v2103 = vsub.f32 %v2071, %v2087
        %v2104 = vsub.f32 %v2072, %v2090
        %v2105 = vsub.f32 %v2073, %v2093
        %v2106 = vsub.f32 %v2074, %v2096
        %v2107 = vsub.f32 %v2075, %v2099
        %v2108 = vmul.f32 %v2100, 1.442695
        %v2109 = vpow.pop %v2108
        %v2110 = vmul.f32 %v2101, 1.442695
        %v2111 = vpow.pop %v2110
        %v2112 = vmul.f32 %v2102, 1.442695
        %v2113 = vpow.pop %v2112
        %v2114 = vmul.f32 %v2103, 1.442695
        %v2115 = vpow.pop %v2114
        %v2116 = vmul.f32 %v2104, 1.442695
        %v2117 = vpow.pop %v2116
        %v2118 = vmul.f32 %v2105, 1.442695
        %v2119 = vpow.pop %v2118
        %v2120 = vmul.f32 %v2106, 1.442695
        %v2121 = vpow.pop %v2120
        %v2122 = vmul.f32 %v2107, 1.442695
        %v2123 = vpow.pop %v2122
        %v2124 = vsel %vm1970, %v2109, 0.0
        %2125 = vadd.xlane.f32.xlu0 %v2124
        %v2126 = vpop.xlane.xlu0 %2125
        %v2127 = vsel %vm1970, %v2111, 0.0
        %2128 = vadd.xlane.f32.xlu0 %v2127
        %v2129 = vpop.xlane.xlu0 %2128
        %v2130 = vsel %vm1970, %v2113, 0.0
        %2131 = vadd.xlane.f32.xlu0 %v2130
        %v2132 = vpop.xlane.xlu0 %2131
        %v2133 = vsel %vm1970, %v2115, 0.0
        %2134 = vadd.xlane.f32.xlu0 %v2133
        %v2135 = vpop.xlane.xlu0 %2134
        %v2136 = vsel %vm1970, %v2117, 0.0
        %2137 = vadd.xlane.f32.xlu0 %v2136
        %v2138 = vpop.xlane.xlu0 %2137
        %v2139 = vsel %vm1970, %v2119, 0.0
        %2140 = vadd.xlane.f32.xlu0 %v2139
        %v2141 = vpop.xlane.xlu0 %2140
        %v2142 = vsel %vm1970, %v2121, 0.0
        %2143 = vadd.xlane.f32.xlu0 %v2142
        %v2144 = vpop.xlane.xlu0 %2143
        %v2145 = vsel %vm1970, %v2123, 0.0
        %2146 = vadd.xlane.f32.xlu0 %v2145
        %v2147 = vpop.xlane.xlu0 %2146
        %v2148 = vrcp.pop %v2126
        %v2149 = vmul.f32 %v2109, %v2148
        %v2150 = vrcp.pop %v2129
        %v2151 = vmul.f32 %v2111, %v2150
        %v2152 = vrcp.pop %v2132
        %v2153 = vmul.f32 %v2113, %v2152
        %v2154 = vrcp.pop %v2135
        %v2155 = vmul.f32 %v2115, %v2154
        %v2156 = vrcp.pop %v2138
        %v2157 = vmul.f32 %v2117, %v2156
        %v2158 = vrcp.pop %v2141
        %v2159 = vmul.f32 %v2119, %v2158
        %v2160 = vrcp.pop %v2144
        %v2161 = vmul.f32 %v2121, %v2160
        %v2162 = vrcp.pop %v2147
        %v2163 = vmul.f32 %v2123, %v2162
        %v2164 = vpack.c.bf16 %v2151, %v2149
        %v2165 = vpack.c.bf16 %v2155, %v2153
        %v2166 = vpack.c.bf16 %v2159, %v2157
        %v2167 = vpack.c.bf16 %v2163, %v2161
        %v2169 = vsel %vm1970, %v2164, 0
        %v2172 = vsel %vm1970, %v2165, 0
        %v2175 = vsel %vm1970, %v2166, 0
        %v2178 = vsel %vm1970, %v2167, 0
        %2180 = vmatprep.subr.bf16.mxu0 0
        %2181 = vmatpush1.bf16.msra.mxu0 0
        %2182 = vmatprep.subr.bf16.mxu0 0
        %2183 = vmatpush1.bf16.msra.mxu0 0
        %2184 = vmatprep.subr.bf16.mxu0 0
        %2185 = vmatpush1.bf16.msra.mxu0 0
        %2186 = vmatprep.subr.bf16.mxu0 0
        %2187 = vmatpush1.bf16.msra.mxu0 0
        %2188 = vmatprep.subr.bf16.mxu0 0
        %2189 = vmatpush1.bf16.msra.mxu0 %v1941
        %2190 = vmatprep.subr.bf16.mxu0 0
        %2191 = vmatpush1.bf16.msra.mxu0 %v1935
        %2192 = vmatprep.subr.bf16.mxu0 0
        %2193 = vmatpush1.bf16.msra.mxu0 %v1929
        %2194 = vmatprep.subr.bf16.mxu0 0
        %2195 = vmatpush1.bf16.msra.mxu0 %v1923
        %2196 = vmatprep.subr.bf16.mxu0 0
        %2197 = vmatpush2.bf16.msra.mxu0 0
        %2198 = vmatprep.subr.bf16.mxu0 0
        %2199 = vmatpush2.bf16.msra.mxu0 0
        %2200 = vmatprep.subr.bf16.mxu0 0
        %2201 = vmatpush2.bf16.msra.mxu0 0
        %2202 = vmatprep.subr.bf16.mxu0 0
        %2203 = vmatpush2.bf16.msra.mxu0 0
        %2204 = vmatprep.subr.bf16.mxu0 0
        %2205 = vmatpush2.bf16.msra.mxu0 0
        %2206 = vmatprep.subr.bf16.mxu0 0
        %2207 = vmatpush2.bf16.msra.mxu0 0
        %2208 = vmatprep.subr.bf16.mxu0 0
        %2209 = vmatpush2.bf16.msra.mxu0 0
        %2210 = vmatprep.subr.bf16.mxu0 0
        %2211 = vmatpush2.bf16.msra.mxu0 0
        %2212 = vmatprep.mubr.bf16.mxu0 0
        %2213 = vmatmul.mubr.bf16.gmra.mxu0 %v2169
        %v2214 = vpop.f32.mrf.mxu0
        %v2215 = vadd.f32 0.0, %v2214
        %v2216 = vpop.f32.mrf.mxu0
        %v2217 = vpop.f32.mrf.mxu0
        %v2218 = vadd.f32 0.0, %v2217
        %v2219 = vpop.f32.mrf.mxu0
        %2220 = vmatprep.mubr.bf16.mxu0 0
        %2221 = vmatmul.mubr.bf16.gmra.mxu0 %v2172
        %v2222 = vpop.f32.mrf.mxu0
        %v2223 = vadd.f32 0.0, %v2222
        %v2224 = vpop.f32.mrf.mxu0
        %v2225 = vpop.f32.mrf.mxu0
        %v2226 = vadd.f32 0.0, %v2225
        %v2227 = vpop.f32.mrf.mxu0
        %2228 = vmatprep.mubr.bf16.mxu0 0
        %2229 = vmatmul.mubr.bf16.gmra.mxu0 %v2175
        %v2230 = vpop.f32.mrf.mxu0
        %v2231 = vadd.f32 0.0, %v2230
        %v2232 = vpop.f32.mrf.mxu0
        %v2233 = vpop.f32.mrf.mxu0
        %v2234 = vadd.f32 0.0, %v2233
        %v2235 = vpop.f32.mrf.mxu0
        %2236 = vmatprep.mubr.bf16.mxu0 0
        %2237 = vmatmul.mubr.bf16.gmra.mxu0 %v2178
        %v2238 = vpop.f32.mrf.mxu0
        %v2239 = vadd.f32 0.0, %v2238
        %v2240 = vpop.f32.mrf.mxu0
        %v2241 = vpop.f32.mrf.mxu0
        %v2242 = vadd.f32 0.0, %v2241
        %v2243 = vpop.f32.mrf.mxu0
        %2244 = vdwg.mxu0
        %2249 = vrot.lane.b32.xlu0 %v1919, 64
        %v2250 = vpop.permute.xlu0 %2249
        %2251 = vrot.lane.b32.xlu0 %v1925, 64
        %v2252 = vpop.permute.xlu0 %2251
        %2253 = vrot.lane.b32.xlu0 %v1931, 64
        %v2254 = vpop.permute.xlu0 %2253
        %2255 = vrot.lane.b32.xlu0 %v1937, 64
        %v2256 = vpop.permute.xlu0 %2255
        %2261 = vrot.lane.b32.xlu0 %v1921, 64
        %v2262 = vpop.permute.xlu0 %2261
        %2263 = vrot.lane.b32.xlu0 %v1927, 64
        %v2264 = vpop.permute.xlu0 %2263
        %2265 = vrot.lane.b32.xlu0 %v1933, 64
        %v2266 = vpop.permute.xlu0 %2265
        %2267 = vrot.lane.b32.xlu0 %v1939, 64
        %v2268 = vpop.permute.xlu0 %2267
        %v2270 = vsel %vm1970, %v2250, 0
        %v2273 = vsel %vm1970, %v2252, 0
        %v2276 = vsel %vm1970, %v2254, 0
        %v2279 = vsel %vm1970, %v2256, 0
        %v2282 = vsel %vm1970, %v2262, 0
        %v2285 = vsel %vm1970, %v2264, 0
        %v2288 = vsel %vm1970, %v2266, 0
        %v2291 = vsel %vm1970, %v2268, 0
        %2293 = vmatprep.subr.bf16.mxu0 0
        %2294 = vmatpush1.bf16.xpose.msra.mxu0 0
        %2295 = vmatprep.subr.bf16.mxu0 0
        %2296 = vmatpush1.bf16.xpose.msra.mxu0 0
        %2297 = vmatprep.subr.bf16.mxu0 0
        %2298 = vmatpush1.bf16.xpose.msra.mxu0 0
        %2299 = vmatprep.subr.bf16.mxu0 0
        %2300 = vmatpush1.bf16.xpose.msra.mxu0 0
        %2301 = vmatprep.subr.bf16.mxu0 0
        %2302 = vmatpush1.bf16.xpose.msra.mxu0 %v2291
        %2303 = vmatprep.subr.bf16.mxu0 0
        %2304 = vmatpush1.bf16.xpose.msra.mxu0 %v2288
        %2305 = vmatprep.subr.bf16.mxu0 0
        %2306 = vmatpush1.bf16.xpose.msra.mxu0 %v2285
        %2307 = vmatprep.subr.bf16.mxu0 0
        %2308 = vmatpush1.bf16.xpose.msra.mxu0 %v2282
        %2309 = vmatprep.subr.bf16.mxu0 0
        %2310 = vmatpush2.bf16.xpose.msra.mxu0 0
        %2311 = vmatprep.subr.bf16.mxu0 0
        %2312 = vmatpush2.bf16.xpose.msra.mxu0 0
        %2313 = vmatprep.subr.bf16.mxu0 0
        %2314 = vmatpush2.bf16.xpose.msra.mxu0 0
        %2315 = vmatprep.subr.bf16.mxu0 0
        %2316 = vmatpush2.bf16.xpose.msra.mxu0 0
        %2317 = vmatprep.subr.bf16.mxu0 0
        %2318 = vmatpush2.bf16.xpose.msra.mxu0 0
        %2319 = vmatprep.subr.bf16.mxu0 0
        %2320 = vmatpush2.bf16.xpose.msra.mxu0 0
        %2321 = vmatprep.subr.bf16.mxu0 0
        %2322 = vmatpush2.bf16.xpose.msra.mxu0 0
        %2323 = vmatprep.subr.bf16.mxu0 0
        %2324 = vmatpush2.bf16.xpose.msra.mxu0 0
        %2325 = vmatprep.mubr.bf16.mxu0 0
        %2326 = vmatmul.mubr.bf16.gmra.mxu0 %v2270
        %v2327 = vpop.f32.mrf.mxu0
        %v2328 = vadd.f32 0.0, %v2327
        %v2329 = vpop.f32.mrf.mxu0
        %v2330 = vpop.f32.mrf.mxu0
        %v2331 = vadd.f32 0.0, %v2330
        %v2332 = vpop.f32.mrf.mxu0
        %2333 = vmatprep.mubr.bf16.mxu0 0
        %2334 = vmatmul.mubr.bf16.gmra.mxu0 %v2273
        %v2335 = vpop.f32.mrf.mxu0
        %v2336 = vadd.f32 0.0, %v2335
        %v2337 = vpop.f32.mrf.mxu0
        %v2338 = vpop.f32.mrf.mxu0
        %v2339 = vadd.f32 0.0, %v2338
        %v2340 = vpop.f32.mrf.mxu0
        %2341 = vmatprep.mubr.bf16.mxu0 0
        %2342 = vmatmul.mubr.bf16.gmra.mxu0 %v2276
        %v2343 = vpop.f32.mrf.mxu0
        %v2344 = vadd.f32 0.0, %v2343
        %v2345 = vpop.f32.mrf.mxu0
        %v2346 = vpop.f32.mrf.mxu0
        %v2347 = vadd.f32 0.0, %v2346
        %v2348 = vpop.f32.mrf.mxu0
        %2349 = vmatprep.mubr.bf16.mxu0 0
        %2350 = vmatmul.mubr.bf16.gmra.mxu0 %v2279
        %v2351 = vpop.f32.mrf.mxu0
        %v2352 = vadd.f32 0.0, %v2351
        %v2353 = vpop.f32.mrf.mxu0
        %v2354 = vpop.f32.mrf.mxu0
        %v2355 = vadd.f32 0.0, %v2354
        %v2356 = vpop.f32.mrf.mxu0
        %2357 = vdwg.mxu0
        %v2358 = vmul.f32 %v2328, 0.125
        %v2359 = vmul.f32 %v2331, 0.125
        %v2360 = vmul.f32 %v2336, 0.125
        %v2361 = vmul.f32 %v2339, 0.125
        %v2362 = vmul.f32 %v2344, 0.125
        %v2363 = vmul.f32 %v2347, 0.125
        %v2364 = vmul.f32 %v2352, 0.125
        %v2365 = vmul.f32 %v2355, 0.125
        %v2366 = vsel %vm1969, %v2358, -1e+30
        %v2367 = vsel %vm1969, %v2359, -1e+30
        %v2368 = vsel %vm1969, %v2360, -1e+30
        %v2369 = vsel %vm1969, %v2361, -1e+30
        %v2370 = vsel %vm1969, %v2362, -1e+30
        %v2371 = vsel %vm1969, %v2363, -1e+30
        %v2372 = vsel %vm1969, %v2364, -1e+30
        %v2373 = vsel %vm1969, %v2365, -1e+30
        %v2374 = vsel %vm1970, %v2366, -inf
        %2375 = vmax.xlane.f32.xlu0 %v2374
        %v2376 = vpop.xlane.xlu0 %2375
        %v2377 = vsel %vm1970, %v2367, -inf
        %2378 = vmax.xlane.f32.xlu0 %v2377
        %v2379 = vpop.xlane.xlu0 %2378
        %v2380 = vsel %vm1970, %v2368, -inf
        %2381 = vmax.xlane.f32.xlu0 %v2380
        %v2382 = vpop.xlane.xlu0 %2381
        %v2383 = vsel %vm1970, %v2369, -inf
        %2384 = vmax.xlane.f32.xlu0 %v2383
        %v2385 = vpop.xlane.xlu0 %2384
        %v2386 = vsel %vm1970, %v2370, -inf
        %2387 = vmax.xlane.f32.xlu0 %v2386
        %v2388 = vpop.xlane.xlu0 %2387
        %v2389 = vsel %vm1970, %v2371, -inf
        %2390 = vmax.xlane.f32.xlu0 %v2389
        %v2391 = vpop.xlane.xlu0 %2390
        %v2392 = vsel %vm1970, %v2372, -inf
        %2393 = vmax.xlane.f32.xlu0 %v2392
        %v2394 = vpop.xlane.xlu0 %2393
        %v2395 = vsel %vm1970, %v2373, -inf
        %2396 = vmax.xlane.f32.xlu0 %v2395
        %v2397 = vpop.xlane.xlu0 %2396
        %v2398 = vsub.f32 %v2366, %v2376
        %v2399 = vsub.f32 %v2367, %v2379
        %v2400 = vsub.f32 %v2368, %v2382
        %v2401 = vsub.f32 %v2369, %v2385
        %v2402 = vsub.f32 %v2370, %v2388
        %v2403 = vsub.f32 %v2371, %v2391
        %v2404 = vsub.f32 %v2372, %v2394
        %v2405 = vsub.f32 %v2373, %v2397
        %v2406 = vmul.f32 %v2398, 1.442695
        %v2407 = vpow.pop %v2406
        %v2408 = vmul.f32 %v2399, 1.442695
        %v2409 = vpow.pop %v2408
        %v2410 = vmul.f32 %v2400, 1.442695
        %v2411 = vpow.pop %v2410
        %v2412 = vmul.f32 %v2401, 1.442695
        %v2413 = vpow.pop %v2412
        %v2414 = vmul.f32 %v2402, 1.442695
        %v2415 = vpow.pop %v2414
        %v2416 = vmul.f32 %v2403, 1.442695
        %v2417 = vpow.pop %v2416
        %v2418 = vmul.f32 %v2404, 1.442695
        %v2419 = vpow.pop %v2418
        %v2420 = vmul.f32 %v2405, 1.442695
        %v2421 = vpow.pop %v2420
        %v2422 = vsel %vm1970, %v2407, 0.0
        %2423 = vadd.xlane.f32.xlu0 %v2422
        %v2424 = vpop.xlane.xlu0 %2423
        %v2425 = vsel %vm1970, %v2409, 0.0
        %2426 = vadd.xlane.f32.xlu0 %v2425
        %v2427 = vpop.xlane.xlu0 %2426
        %v2428 = vsel %vm1970, %v2411, 0.0
        %2429 = vadd.xlane.f32.xlu0 %v2428
        %v2430 = vpop.xlane.xlu0 %2429
        %v2431 = vsel %vm1970, %v2413, 0.0
        %2432 = vadd.xlane.f32.xlu0 %v2431
        %v2433 = vpop.xlane.xlu0 %2432
        %v2434 = vsel %vm1970, %v2415, 0.0
        %2435 = vadd.xlane.f32.xlu0 %v2434
        %v2436 = vpop.xlane.xlu0 %2435
        %v2437 = vsel %vm1970, %v2417, 0.0
        %2438 = vadd.xlane.f32.xlu0 %v2437
        %v2439 = vpop.xlane.xlu0 %2438
        %v2440 = vsel %vm1970, %v2419, 0.0
        %2441 = vadd.xlane.f32.xlu0 %v2440
        %v2442 = vpop.xlane.xlu0 %2441
        %v2443 = vsel %vm1970, %v2421, 0.0
        %2444 = vadd.xlane.f32.xlu0 %v2443
        %v2445 = vpop.xlane.xlu0 %2444
        %v2446 = vrcp.pop %v2424
        %v2447 = vmul.f32 %v2407, %v2446
        %v2448 = vrcp.pop %v2427
        %v2449 = vmul.f32 %v2409, %v2448
        %v2450 = vrcp.pop %v2430
        %v2451 = vmul.f32 %v2411, %v2450
        %v2452 = vrcp.pop %v2433
        %v2453 = vmul.f32 %v2413, %v2452
        %v2454 = vrcp.pop %v2436
        %v2455 = vmul.f32 %v2415, %v2454
        %v2456 = vrcp.pop %v2439
        %v2457 = vmul.f32 %v2417, %v2456
        %v2458 = vrcp.pop %v2442
        %v2459 = vmul.f32 %v2419, %v2458
        %v2460 = vrcp.pop %v2445
        %v2461 = vmul.f32 %v2421, %v2460
        %v2462 = vpack.c.bf16 %v2449, %v2447
        %v2463 = vpack.c.bf16 %v2453, %v2451
        %v2464 = vpack.c.bf16 %v2457, %v2455
        %v2465 = vpack.c.bf16 %v2461, %v2459
        %2470 = vrot.lane.b32.xlu0 %v1923, 64
        %v2471 = vpop.permute.xlu0 %2470
        %2472 = vrot.lane.b32.xlu0 %v1929, 64
        %v2473 = vpop.permute.xlu0 %2472
        %2474 = vrot.lane.b32.xlu0 %v1935, 64
        %v2475 = vpop.permute.xlu0 %2474
        %2476 = vrot.lane.b32.xlu0 %v1941, 64
        %v2477 = vpop.permute.xlu0 %2476
        %v2483 = vsel %vm1970, %v2462, 0
        %v2486 = vsel %vm1970, %v2463, 0
        %v2489 = vsel %vm1970, %v2464, 0
        %v2492 = vsel %vm1970, %v2465, 0
        %2494 = vmatprep.subr.bf16.mxu0 0
        %2495 = vmatpush1.bf16.msra.mxu0 0
        %2496 = vmatprep.subr.bf16.mxu0 0
        %2497 = vmatpush1.bf16.msra.mxu0 0
        %2498 = vmatprep.subr.bf16.mxu0 0
        %2499 = vmatpush1.bf16.msra.mxu0 0
        %2500 = vmatprep.subr.bf16.mxu0 0
        %2501 = vmatpush1.bf16.msra.mxu0 0
        %2502 = vmatprep.subr.bf16.mxu0 0
        %2503 = vmatpush1.bf16.msra.mxu0 %v2477
        %2504 = vmatprep.subr.bf16.mxu0 0
        %2505 = vmatpush1.bf16.msra.mxu0 %v2475
        %2506 = vmatprep.subr.bf16.mxu0 0
        %2507 = vmatpush1.bf16.msra.mxu0 %v2473
        %2508 = vmatprep.subr.bf16.mxu0 0
        %2509 = vmatpush1.bf16.msra.mxu0 %v2471
        %2510 = vmatprep.subr.bf16.mxu0 0
        %2511 = vmatpush2.bf16.msra.mxu0 0
        %2512 = vmatprep.subr.bf16.mxu0 0
        %2513 = vmatpush2.bf16.msra.mxu0 0
        %2514 = vmatprep.subr.bf16.mxu0 0
        %2515 = vmatpush2.bf16.msra.mxu0 0
        %2516 = vmatprep.subr.bf16.mxu0 0
        %2517 = vmatpush2.bf16.msra.mxu0 0
        %2518 = vmatprep.subr.bf16.mxu0 0
        %2519 = vmatpush2.bf16.msra.mxu0 0
        %2520 = vmatprep.subr.bf16.mxu0 0
        %2521 = vmatpush2.bf16.msra.mxu0 0
        %2522 = vmatprep.subr.bf16.mxu0 0
        %2523 = vmatpush2.bf16.msra.mxu0 0
        %2524 = vmatprep.subr.bf16.mxu0 0
        %2525 = vmatpush2.bf16.msra.mxu0 0
        %2526 = vmatprep.mubr.bf16.mxu0 0
        %2527 = vmatmul.mubr.bf16.gmra.mxu0 %v2483
        %v2528 = vpop.f32.mrf.mxu0
        %v2529 = vadd.f32 0.0, %v2528
        %v2530 = vpop.f32.mrf.mxu0
        %v2531 = vpop.f32.mrf.mxu0
        %v2532 = vadd.f32 0.0, %v2531
        %v2533 = vpop.f32.mrf.mxu0
        %2534 = vmatprep.mubr.bf16.mxu0 0
        %2535 = vmatmul.mubr.bf16.gmra.mxu0 %v2486
        %v2536 = vpop.f32.mrf.mxu0
        %v2537 = vadd.f32 0.0, %v2536
        %v2538 = vpop.f32.mrf.mxu0
        %v2539 = vpop.f32.mrf.mxu0
        %v2540 = vadd.f32 0.0, %v2539
        %v2541 = vpop.f32.mrf.mxu0
        %2542 = vmatprep.mubr.bf16.mxu0 0
        %2543 = vmatmul.mubr.bf16.gmra.mxu0 %v2489
        %v2544 = vpop.f32.mrf.mxu0
        %v2545 = vadd.f32 0.0, %v2544
        %v2546 = vpop.f32.mrf.mxu0
        %v2547 = vpop.f32.mrf.mxu0
        %v2548 = vadd.f32 0.0, %v2547
        %v2549 = vpop.f32.mrf.mxu0
        %2550 = vmatprep.mubr.bf16.mxu0 0
        %2551 = vmatmul.mubr.bf16.gmra.mxu0 %v2492
        %v2552 = vpop.f32.mrf.mxu0
        %v2553 = vadd.f32 0.0, %v2552
        %v2554 = vpop.f32.mrf.mxu0
        %v2555 = vpop.f32.mrf.mxu0
        %v2556 = vadd.f32 0.0, %v2555
        %v2557 = vpop.f32.mrf.mxu0
        %2558 = vdwg.mxu0
        %v2560 = vsel %vm1970, %v1920, 0
        %v2563 = vsel %vm1970, %v1926, 0
        %v2566 = vsel %vm1970, %v1932, 0
        %v2569 = vsel %vm1970, %v1938, 0
        %v2572 = vsel %vm1970, %v1922, 0
        %v2575 = vsel %vm1970, %v1928, 0
        %v2578 = vsel %vm1970, %v1934, 0
        %v2581 = vsel %vm1970, %v1940, 0
        %2583 = vmatprep.subr.bf16.mxu0 0
        %2584 = vmatpush1.bf16.xpose.msra.mxu0 0
        %2585 = vmatprep.subr.bf16.mxu0 0
        %2586 = vmatpush1.bf16.xpose.msra.mxu0 0
        %2587 = vmatprep.subr.bf16.mxu0 0
        %2588 = vmatpush1.bf16.xpose.msra.mxu0 0
        %2589 = vmatprep.subr.bf16.mxu0 0
        %2590 = vmatpush1.bf16.xpose.msra.mxu0 0
        %2591 = vmatprep.subr.bf16.mxu0 0
        %2592 = vmatpush1.bf16.xpose.msra.mxu0 %v2581
        %2593 = vmatprep.subr.bf16.mxu0 0
        %2594 = vmatpush1.bf16.xpose.msra.mxu0 %v2578
        %2595 = vmatprep.subr.bf16.mxu0 0
        %2596 = vmatpush1.bf16.xpose.msra.mxu0 %v2575
        %2597 = vmatprep.subr.bf16.mxu0 0
        %2598 = vmatpush1.bf16.xpose.msra.mxu0 %v2572
        %2599 = vmatprep.subr.bf16.mxu0 0
        %2600 = vmatpush2.bf16.xpose.msra.mxu0 0
        %2601 = vmatprep.subr.bf16.mxu0 0
        %2602 = vmatpush2.bf16.xpose.msra.mxu0 0
        %2603 = vmatprep.subr.bf16.mxu0 0
        %2604 = vmatpush2.bf16.xpose.msra.mxu0 0
        %2605 = vmatprep.subr.bf16.mxu0 0
        %2606 = vmatpush2.bf16.xpose.msra.mxu0 0
        %2607 = vmatprep.subr.bf16.mxu0 0
        %2608 = vmatpush2.bf16.xpose.msra.mxu0 0
        %2609 = vmatprep.subr.bf16.mxu0 0
        %2610 = vmatpush2.bf16.xpose.msra.mxu0 0
        %2611 = vmatprep.subr.bf16.mxu0 0
        %2612 = vmatpush2.bf16.xpose.msra.mxu0 0
        %2613 = vmatprep.subr.bf16.mxu0 0
        %2614 = vmatpush2.bf16.xpose.msra.mxu0 0
        %2615 = vmatprep.mubr.bf16.mxu0 0
        %2616 = vmatmul.mubr.bf16.gmra.mxu0 %v2560
        %v2617 = vpop.f32.mrf.mxu0
        %v2618 = vadd.f32 0.0, %v2617
        %v2619 = vpop.f32.mrf.mxu0
        %v2620 = vpop.f32.mrf.mxu0
        %v2621 = vadd.f32 0.0, %v2620
        %v2622 = vpop.f32.mrf.mxu0
        %2623 = vmatprep.mubr.bf16.mxu0 0
        %2624 = vmatmul.mubr.bf16.gmra.mxu0 %v2563
        %v2625 = vpop.f32.mrf.mxu0
        %v2626 = vadd.f32 0.0, %v2625
        %v2627 = vpop.f32.mrf.mxu0
        %v2628 = vpop.f32.mrf.mxu0
        %v2629 = vadd.f32 0.0, %v2628
        %v2630 = vpop.f32.mrf.mxu0
        %2631 = vmatprep.mubr.bf16.mxu0 0
        %2632 = vmatmul.mubr.bf16.gmra.mxu0 %v2566
        %v2633 = vpop.f32.mrf.mxu0
        %v2634 = vadd.f32 0.0, %v2633
        %v2635 = vpop.f32.mrf.mxu0
        %v2636 = vpop.f32.mrf.mxu0
        %v2637 = vadd.f32 0.0, %v2636
        %v2638 = vpop.f32.mrf.mxu0
        %2639 = vmatprep.mubr.bf16.mxu0 0
        %2640 = vmatmul.mubr.bf16.gmra.mxu0 %v2569
        %v2641 = vpop.f32.mrf.mxu0
        %v2642 = vadd.f32 0.0, %v2641
        %v2643 = vpop.f32.mrf.mxu0
        %v2644 = vpop.f32.mrf.mxu0
        %v2645 = vadd.f32 0.0, %v2644
        %v2646 = vpop.f32.mrf.mxu0
        %2647 = vdwg.mxu0
        %v2648 = vmul.f32 %v2618, 0.125
        %v2649 = vmul.f32 %v2621, 0.125
        %v2650 = vmul.f32 %v2626, 0.125
        %v2651 = vmul.f32 %v2629, 0.125
        %v2652 = vmul.f32 %v2634, 0.125
        %v2653 = vmul.f32 %v2637, 0.125
        %v2654 = vmul.f32 %v2642, 0.125
        %v2655 = vmul.f32 %v2645, 0.125
        %v2656 = vsel %vm1969, %v2648, -1e+30
        %v2657 = vsel %vm1969, %v2649, -1e+30
        %v2658 = vsel %vm1969, %v2650, -1e+30
        %v2659 = vsel %vm1969, %v2651, -1e+30
        %v2660 = vsel %vm1969, %v2652, -1e+30
        %v2661 = vsel %vm1969, %v2653, -1e+30
        %v2662 = vsel %vm1969, %v2654, -1e+30
        %v2663 = vsel %vm1969, %v2655, -1e+30
        %v2664 = vsel %vm1970, %v2656, -inf
        %2665 = vmax.xlane.f32.xlu0 %v2664
        %v2666 = vpop.xlane.xlu0 %2665
        %v2667 = vsel %vm1970, %v2657, -inf
        %2668 = vmax.xlane.f32.xlu0 %v2667
        %v2669 = vpop.xlane.xlu0 %2668
        %v2670 = vsel %vm1970, %v2658, -inf
        %2671 = vmax.xlane.f32.xlu0 %v2670
        %v2672 = vpop.xlane.xlu0 %2671
        %v2673 = vsel %vm1970, %v2659, -inf
        %2674 = vmax.xlane.f32.xlu0 %v2673
        %v2675 = vpop.xlane.xlu0 %2674
        %v2676 = vsel %vm1970, %v2660, -inf
        %2677 = vmax.xlane.f32.xlu0 %v2676
        %v2678 = vpop.xlane.xlu0 %2677
        %v2679 = vsel %vm1970, %v2661, -inf
        %2680 = vmax.xlane.f32.xlu0 %v2679
        %v2681 = vpop.xlane.xlu0 %2680
        %v2682 = vsel %vm1970, %v2662, -inf
        %2683 = vmax.xlane.f32.xlu0 %v2682
        %v2684 = vpop.xlane.xlu0 %2683
        %v2685 = vsel %vm1970, %v2663, -inf
        %2686 = vmax.xlane.f32.xlu0 %v2685
        %v2687 = vpop.xlane.xlu0 %2686
        %v2688 = vsub.f32 %v2656, %v2666
        %v2689 = vsub.f32 %v2657, %v2669
        %v2690 = vsub.f32 %v2658, %v2672
        %v2691 = vsub.f32 %v2659, %v2675
        %v2692 = vsub.f32 %v2660, %v2678
        %v2693 = vsub.f32 %v2661, %v2681
        %v2694 = vsub.f32 %v2662, %v2684
        %v2695 = vsub.f32 %v2663, %v2687
        %v2696 = vmul.f32 %v2688, 1.442695
        %v2697 = vpow.pop %v2696
        %v2698 = vmul.f32 %v2689, 1.442695
        %v2699 = vpow.pop %v2698
        %v2700 = vmul.f32 %v2690, 1.442695
        %v2701 = vpow.pop %v2700
        %v2702 = vmul.f32 %v2691, 1.442695
        %v2703 = vpow.pop %v2702
        %v2704 = vmul.f32 %v2692, 1.442695
        %v2705 = vpow.pop %v2704
        %v2706 = vmul.f32 %v2693, 1.442695
        %v2707 = vpow.pop %v2706
        %v2708 = vmul.f32 %v2694, 1.442695
        %v2709 = vpow.pop %v2708
        %v2710 = vmul.f32 %v2695, 1.442695
        %v2711 = vpow.pop %v2710
        %v2712 = vsel %vm1970, %v2697, 0.0
        %2713 = vadd.xlane.f32.xlu0 %v2712
        %v2714 = vpop.xlane.xlu0 %2713
        %v2715 = vsel %vm1970, %v2699, 0.0
        %2716 = vadd.xlane.f32.xlu0 %v2715
        %v2717 = vpop.xlane.xlu0 %2716
        %v2718 = vsel %vm1970, %v2701, 0.0
        %2719 = vadd.xlane.f32.xlu0 %v2718
        %v2720 = vpop.xlane.xlu0 %2719
        %v2721 = vsel %vm1970, %v2703, 0.0
        %2722 = vadd.xlane.f32.xlu0 %v2721
        %v2723 = vpop.xlane.xlu0 %2722
        %v2724 = vsel %vm1970, %v2705, 0.0
        %2725 = vadd.xlane.f32.xlu0 %v2724
        %v2726 = vpop.xlane.xlu0 %2725
        %v2727 = vsel %vm1970, %v2707, 0.0
        %2728 = vadd.xlane.f32.xlu0 %v2727
        %v2729 = vpop.xlane.xlu0 %2728
        %v2730 = vsel %vm1970, %v2709, 0.0
        %2731 = vadd.xlane.f32.xlu0 %v2730
        %v2732 = vpop.xlane.xlu0 %2731
        %v2733 = vsel %vm1970, %v2711, 0.0
        %2734 = vadd.xlane.f32.xlu0 %v2733
        %v2735 = vpop.xlane.xlu0 %2734
        %v2736 = vrcp.pop %v2714
        %v2737 = vmul.f32 %v2697, %v2736
        %v2738 = vrcp.pop %v2717
        %v2739 = vmul.f32 %v2699, %v2738
        %v2740 = vrcp.pop %v2720
        %v2741 = vmul.f32 %v2701, %v2740
        %v2742 = vrcp.pop %v2723
        %v2743 = vmul.f32 %v2703, %v2742
        %v2744 = vrcp.pop %v2726
        %v2745 = vmul.f32 %v2705, %v2744
        %v2746 = vrcp.pop %v2729
        %v2747 = vmul.f32 %v2707, %v2746
        %v2748 = vrcp.pop %v2732
        %v2749 = vmul.f32 %v2709, %v2748
        %v2750 = vrcp.pop %v2735
        %v2751 = vmul.f32 %v2711, %v2750
        %v2752 = vpack.c.bf16 %v2739, %v2737
        %v2753 = vpack.c.bf16 %v2743, %v2741
        %v2754 = vpack.c.bf16 %v2747, %v2745
        %v2755 = vpack.c.bf16 %v2751, %v2749
        %v2757 = vsel %vm1970, %v2752, 0
        %v2760 = vsel %vm1970, %v2753, 0
        %v2763 = vsel %vm1970, %v2754, 0
        %v2766 = vsel %vm1970, %v2755, 0
        %2768 = vmatprep.subr.bf16.mxu0 0
        %2769 = vmatpush1.bf16.msra.mxu0 0
        %2770 = vmatprep.subr.bf16.mxu0 0
        %2771 = vmatpush1.bf16.msra.mxu0 0
        %2772 = vmatprep.subr.bf16.mxu0 0
        %2773 = vmatpush1.bf16.msra.mxu0 0
        %2774 = vmatprep.subr.bf16.mxu0 0
        %2775 = vmatpush1.bf16.msra.mxu0 0
        %2776 = vmatprep.subr.bf16.mxu0 0
        %2777 = vmatpush1.bf16.msra.mxu0 %v1942
        %2778 = vmatprep.subr.bf16.mxu0 0
        %2779 = vmatpush1.bf16.msra.mxu0 %v1936
        %2780 = vmatprep.subr.bf16.mxu0 0
        %2781 = vmatpush1.bf16.msra.mxu0 %v1930
        %2782 = vmatprep.subr.bf16.mxu0 0
        %2783 = vmatpush1.bf16.msra.mxu0 %v1924
        %2784 = vmatprep.subr.bf16.mxu0 0
        %2785 = vmatpush2.bf16.msra.mxu0 0
        %2786 = vmatprep.subr.bf16.mxu0 0
        %2787 = vmatpush2.bf16.msra.mxu0 0
        %2788 = vmatprep.subr.bf16.mxu0 0
        %2789 = vmatpush2.bf16.msra.mxu0 0
        %2790 = vmatprep.subr.bf16.mxu0 0
        %2791 = vmatpush2.bf16.msra.mxu0 0
        %2792 = vmatprep.subr.bf16.mxu0 0
        %2793 = vmatpush2.bf16.msra.mxu0 0
        %2794 = vmatprep.subr.bf16.mxu0 0
        %2795 = vmatpush2.bf16.msra.mxu0 0
        %2796 = vmatprep.subr.bf16.mxu0 0
        %2797 = vmatpush2.bf16.msra.mxu0 0
        %2798 = vmatprep.subr.bf16.mxu0 0
        %2799 = vmatpush2.bf16.msra.mxu0 0
        %2800 = vmatprep.mubr.bf16.mxu0 0
        %2801 = vmatmul.mubr.bf16.gmra.mxu0 %v2757
        %v2802 = vpop.f32.mrf.mxu0
        %v2803 = vadd.f32 0.0, %v2802
        %v2804 = vpop.f32.mrf.mxu0
        %v2805 = vpop.f32.mrf.mxu0
        %v2806 = vadd.f32 0.0, %v2805
        %v2807 = vpop.f32.mrf.mxu0
        %2808 = vmatprep.mubr.bf16.mxu0 0
        %2809 = vmatmul.mubr.bf16.gmra.mxu0 %v2760
        %v2810 = vpop.f32.mrf.mxu0
        %v2811 = vadd.f32 0.0, %v2810
        %v2812 = vpop.f32.mrf.mxu0
        %v2813 = vpop.f32.mrf.mxu0
        %v2814 = vadd.f32 0.0, %v2813
        %v2815 = vpop.f32.mrf.mxu0
        %2816 = vmatprep.mubr.bf16.mxu0 0
        %2817 = vmatmul.mubr.bf16.gmra.mxu0 %v2763
        %v2818 = vpop.f32.mrf.mxu0
        %v2819 = vadd.f32 0.0, %v2818
        %v2820 = vpop.f32.mrf.mxu0
        %v2821 = vpop.f32.mrf.mxu0
        %v2822 = vadd.f32 0.0, %v2821
        %v2823 = vpop.f32.mrf.mxu0
        %2824 = vmatprep.mubr.bf16.mxu0 0
        %2825 = vmatmul.mubr.bf16.gmra.mxu0 %v2766
        %v2826 = vpop.f32.mrf.mxu0
        %v2827 = vadd.f32 0.0, %v2826
        %v2828 = vpop.f32.mrf.mxu0
        %v2829 = vpop.f32.mrf.mxu0
        %v2830 = vadd.f32 0.0, %v2829
        %v2831 = vpop.f32.mrf.mxu0
        %2832 = vdwg.mxu0
        %2837 = vrot.lane.b32.xlu0 %v1920, 64
        %v2838 = vpop.permute.xlu0 %2837
        %2839 = vrot.lane.b32.xlu0 %v1926, 64
        %v2840 = vpop.permute.xlu0 %2839
        %2841 = vrot.lane.b32.xlu0 %v1932, 64
        %v2842 = vpop.permute.xlu0 %2841
        %2843 = vrot.lane.b32.xlu0 %v1938, 64
        %v2844 = vpop.permute.xlu0 %2843
        %2849 = vrot.lane.b32.xlu0 %v1922, 64
        %v2850 = vpop.permute.xlu0 %2849
        %2851 = vrot.lane.b32.xlu0 %v1928, 64
        %v2852 = vpop.permute.xlu0 %2851
        %2853 = vrot.lane.b32.xlu0 %v1934, 64
        %v2854 = vpop.permute.xlu0 %2853
        %2855 = vrot.lane.b32.xlu0 %v1940, 64
        %v2856 = vpop.permute.xlu0 %2855
        %v2858 = vsel %vm1970, %v2838, 0
        %v2861 = vsel %vm1970, %v2840, 0
        %v2864 = vsel %vm1970, %v2842, 0
        %v2867 = vsel %vm1970, %v2844, 0
        %v2870 = vsel %vm1970, %v2850, 0
        %v2873 = vsel %vm1970, %v2852, 0
        %v2876 = vsel %vm1970, %v2854, 0
        %v2879 = vsel %vm1970, %v2856, 0
        %2881 = vmatprep.subr.bf16.mxu0 0
        %2882 = vmatpush1.bf16.xpose.msra.mxu0 0
        %2883 = vmatprep.subr.bf16.mxu0 0
        %2884 = vmatpush1.bf16.xpose.msra.mxu0 0
        %2885 = vmatprep.subr.bf16.mxu0 0
        %2886 = vmatpush1.bf16.xpose.msra.mxu0 0
        %2887 = vmatprep.subr.bf16.mxu0 0
        %2888 = vmatpush1.bf16.xpose.msra.mxu0 0
        %2889 = vmatprep.subr.bf16.mxu0 0
        %2890 = vmatpush1.bf16.xpose.msra.mxu0 %v2879
        %2891 = vmatprep.subr.bf16.mxu0 0
        %2892 = vmatpush1.bf16.xpose.msra.mxu0 %v2876
        %2893 = vmatprep.subr.bf16.mxu0 0
        %2894 = vmatpush1.bf16.xpose.msra.mxu0 %v2873
        %2895 = vmatprep.subr.bf16.mxu0 0
        %2896 = vmatpush1.bf16.xpose.msra.mxu0 %v2870
        %2897 = vmatprep.subr.bf16.mxu0 0
        %2898 = vmatpush2.bf16.xpose.msra.mxu0 0
        %2899 = vmatprep.subr.bf16.mxu0 0
        %2900 = vmatpush2.bf16.xpose.msra.mxu0 0
        %2901 = vmatprep.subr.bf16.mxu0 0
        %2902 = vmatpush2.bf16.xpose.msra.mxu0 0
        %2903 = vmatprep.subr.bf16.mxu0 0
        %2904 = vmatpush2.bf16.xpose.msra.mxu0 0
        %2905 = vmatprep.subr.bf16.mxu0 0
        %2906 = vmatpush2.bf16.xpose.msra.mxu0 0
        %2907 = vmatprep.subr.bf16.mxu0 0
        %2908 = vmatpush2.bf16.xpose.msra.mxu0 0
        %2909 = vmatprep.subr.bf16.mxu0 0
        %2910 = vmatpush2.bf16.xpose.msra.mxu0 0
        %2911 = vmatprep.subr.bf16.mxu0 0
        %2912 = vmatpush2.bf16.xpose.msra.mxu0 0
        %2913 = vmatprep.mubr.bf16.mxu0 0
        %2914 = vmatmul.mubr.bf16.gmra.mxu0 %v2858
        %v2915 = vpop.f32.mrf.mxu0
        %v2916 = vadd.f32 0.0, %v2915
        %v2917 = vpop.f32.mrf.mxu0
        %v2918 = vpop.f32.mrf.mxu0
        %v2919 = vadd.f32 0.0, %v2918
        %v2920 = vpop.f32.mrf.mxu0
        %2921 = vmatprep.mubr.bf16.mxu0 0
        %2922 = vmatmul.mubr.bf16.gmra.mxu0 %v2861
        %v2923 = vpop.f32.mrf.mxu0
        %v2924 = vadd.f32 0.0, %v2923
        %v2925 = vpop.f32.mrf.mxu0
        %v2926 = vpop.f32.mrf.mxu0
        %v2927 = vadd.f32 0.0, %v2926
        %v2928 = vpop.f32.mrf.mxu0
        %2929 = vmatprep.mubr.bf16.mxu0 0
        %2930 = vmatmul.mubr.bf16.gmra.mxu0 %v2864
        %v2931 = vpop.f32.mrf.mxu0
        %v2932 = vadd.f32 0.0, %v2931
        %v2933 = vpop.f32.mrf.mxu0
        %v2934 = vpop.f32.mrf.mxu0
        %v2935 = vadd.f32 0.0, %v2934
        %v2936 = vpop.f32.mrf.mxu0
        %2937 = vmatprep.mubr.bf16.mxu0 0
        %2938 = vmatmul.mubr.bf16.gmra.mxu0 %v2867
        %v2939 = vpop.f32.mrf.mxu0
        %v2940 = vadd.f32 0.0, %v2939
        %v2941 = vpop.f32.mrf.mxu0
        %v2942 = vpop.f32.mrf.mxu0
        %v2943 = vadd.f32 0.0, %v2942
        %v2944 = vpop.f32.mrf.mxu0
        %2945 = vdwg.mxu0
        %v2946 = vmul.f32 %v2916, 0.125
        %v2947 = vmul.f32 %v2919, 0.125
        %v2948 = vmul.f32 %v2924, 0.125
        %v2949 = vmul.f32 %v2927, 0.125
        %v2950 = vmul.f32 %v2932, 0.125
        %v2951 = vmul.f32 %v2935, 0.125
        %v2952 = vmul.f32 %v2940, 0.125
        %v2953 = vmul.f32 %v2943, 0.125
        %v2954 = vsel %vm1969, %v2946, -1e+30
        %v2955 = vsel %vm1969, %v2947, -1e+30
        %v2956 = vsel %vm1969, %v2948, -1e+30
        %v2957 = vsel %vm1969, %v2949, -1e+30
        %v2958 = vsel %vm1969, %v2950, -1e+30
        %v2959 = vsel %vm1969, %v2951, -1e+30
        %v2960 = vsel %vm1969, %v2952, -1e+30
        %v2961 = vsel %vm1969, %v2953, -1e+30
        %v2962 = vsel %vm1970, %v2954, -inf
        %2963 = vmax.xlane.f32.xlu0 %v2962
        %v2964 = vpop.xlane.xlu0 %2963
        %v2965 = vsel %vm1970, %v2955, -inf
        %2966 = vmax.xlane.f32.xlu0 %v2965
        %v2967 = vpop.xlane.xlu0 %2966
        %v2968 = vsel %vm1970, %v2956, -inf
        %2969 = vmax.xlane.f32.xlu0 %v2968
        %v2970 = vpop.xlane.xlu0 %2969
        %v2971 = vsel %vm1970, %v2957, -inf
        %2972 = vmax.xlane.f32.xlu0 %v2971
        %v2973 = vpop.xlane.xlu0 %2972
        %v2974 = vsel %vm1970, %v2958, -inf
        %2975 = vmax.xlane.f32.xlu0 %v2974
        %v2976 = vpop.xlane.xlu0 %2975
        %v2977 = vsel %vm1970, %v2959, -inf
        %2978 = vmax.xlane.f32.xlu0 %v2977
        %v2979 = vpop.xlane.xlu0 %2978
        %v2980 = vsel %vm1970, %v2960, -inf
        %2981 = vmax.xlane.f32.xlu0 %v2980
        %v2982 = vpop.xlane.xlu0 %2981
        %v2983 = vsel %vm1970, %v2961, -inf
        %2984 = vmax.xlane.f32.xlu0 %v2983
        %v2985 = vpop.xlane.xlu0 %2984
        %v2986 = vsub.f32 %v2954, %v2964
        %v2987 = vsub.f32 %v2955, %v2967
        %v2988 = vsub.f32 %v2956, %v2970
        %v2989 = vsub.f32 %v2957, %v2973
        %v2990 = vsub.f32 %v2958, %v2976
        %v2991 = vsub.f32 %v2959, %v2979
        %v2992 = vsub.f32 %v2960, %v2982
        %v2993 = vsub.f32 %v2961, %v2985
        %v2994 = vmul.f32 %v2986, 1.442695
        %v2995 = vpow.pop %v2994
        %v2996 = vmul.f32 %v2987, 1.442695
        %v2997 = vpow.pop %v2996
        %v2998 = vmul.f32 %v2988, 1.442695
        %v2999 = vpow.pop %v2998
        %v3000 = vmul.f32 %v2989, 1.442695
        %v3001 = vpow.pop %v3000
        %v3002 = vmul.f32 %v2990, 1.442695
        %v3003 = vpow.pop %v3002
        %v3004 = vmul.f32 %v2991, 1.442695
        %v3005 = vpow.pop %v3004
        %v3006 = vmul.f32 %v2992, 1.442695
        %v3007 = vpow.pop %v3006
        %v3008 = vmul.f32 %v2993, 1.442695
        %v3009 = vpow.pop %v3008
        %v3010 = vsel %vm1970, %v2995, 0.0
        %3011 = vadd.xlane.f32.xlu0 %v3010
        %v3012 = vpop.xlane.xlu0 %3011
        %v3013 = vsel %vm1970, %v2997, 0.0
        %3014 = vadd.xlane.f32.xlu0 %v3013
        %v3015 = vpop.xlane.xlu0 %3014
        %v3016 = vsel %vm1970, %v2999, 0.0
        %3017 = vadd.xlane.f32.xlu0 %v3016
        %v3018 = vpop.xlane.xlu0 %3017
        %v3019 = vsel %vm1970, %v3001, 0.0
        %3020 = vadd.xlane.f32.xlu0 %v3019
        %v3021 = vpop.xlane.xlu0 %3020
        %v3022 = vsel %vm1970, %v3003, 0.0
        %3023 = vadd.xlane.f32.xlu0 %v3022
        %v3024 = vpop.xlane.xlu0 %3023
        %v3025 = vsel %vm1970, %v3005, 0.0
        %3026 = vadd.xlane.f32.xlu0 %v3025
        %v3027 = vpop.xlane.xlu0 %3026
        %v3028 = vsel %vm1970, %v3007, 0.0
        %3029 = vadd.xlane.f32.xlu0 %v3028
        %v3030 = vpop.xlane.xlu0 %3029
        %v3031 = vsel %vm1970, %v3009, 0.0
        %3032 = vadd.xlane.f32.xlu0 %v3031
        %v3033 = vpop.xlane.xlu0 %3032
        %v3034 = vrcp.pop %v3012
        %v3035 = vmul.f32 %v2995, %v3034
        %v3036 = vrcp.pop %v3015
        %v3037 = vmul.f32 %v2997, %v3036
        %v3038 = vrcp.pop %v3018
        %v3039 = vmul.f32 %v2999, %v3038
        %v3040 = vrcp.pop %v3021
        %v3041 = vmul.f32 %v3001, %v3040
        %v3042 = vrcp.pop %v3024
        %v3043 = vmul.f32 %v3003, %v3042
        %v3044 = vrcp.pop %v3027
        %v3045 = vmul.f32 %v3005, %v3044
        %v3046 = vrcp.pop %v3030
        %v3047 = vmul.f32 %v3007, %v3046
        %v3048 = vrcp.pop %v3033
        %v3049 = vmul.f32 %v3009, %v3048
        %v3050 = vpack.c.bf16 %v3037, %v3035
        %v3051 = vpack.c.bf16 %v3041, %v3039
        %v3052 = vpack.c.bf16 %v3045, %v3043
        %v3053 = vpack.c.bf16 %v3049, %v3047
        %3058 = vrot.lane.b32.xlu0 %v1924, 64
        %v3059 = vpop.permute.xlu0 %3058
        %3060 = vrot.lane.b32.xlu0 %v1930, 64
        %v3061 = vpop.permute.xlu0 %3060
        %3062 = vrot.lane.b32.xlu0 %v1936, 64
        %v3063 = vpop.permute.xlu0 %3062
        %3064 = vrot.lane.b32.xlu0 %v1942, 64
        %v3065 = vpop.permute.xlu0 %3064
        %v3071 = vsel %vm1970, %v3050, 0
        %v3074 = vsel %vm1970, %v3051, 0
        %v3077 = vsel %vm1970, %v3052, 0
        %v3080 = vsel %vm1970, %v3053, 0
        %3082 = vmatprep.subr.bf16.mxu0 0
        %3083 = vmatpush1.bf16.msra.mxu0 0
        %3084 = vmatprep.subr.bf16.mxu0 0
        %3085 = vmatpush1.bf16.msra.mxu0 0
        %3086 = vmatprep.subr.bf16.mxu0 0
        %3087 = vmatpush1.bf16.msra.mxu0 0
        %3088 = vmatprep.subr.bf16.mxu0 0
        %3089 = vmatpush1.bf16.msra.mxu0 0
        %3090 = vmatprep.subr.bf16.mxu0 0
        %3091 = vmatpush1.bf16.msra.mxu0 %v3065
        %3092 = vmatprep.subr.bf16.mxu0 0
        %3093 = vmatpush1.bf16.msra.mxu0 %v3063
        %3094 = vmatprep.subr.bf16.mxu0 0
        %3095 = vmatpush1.bf16.msra.mxu0 %v3061
        %3096 = vmatprep.subr.bf16.mxu0 0
        %3097 = vmatpush1.bf16.msra.mxu0 %v3059
        %3098 = vmatprep.subr.bf16.mxu0 0
        %3099 = vmatpush2.bf16.msra.mxu0 0
        %3100 = vmatprep.subr.bf16.mxu0 0
        %3101 = vmatpush2.bf16.msra.mxu0 0
        %3102 = vmatprep.subr.bf16.mxu0 0
        %3103 = vmatpush2.bf16.msra.mxu0 0
        %3104 = vmatprep.subr.bf16.mxu0 0
        %3105 = vmatpush2.bf16.msra.mxu0 0
        %3106 = vmatprep.subr.bf16.mxu0 0
        %3107 = vmatpush2.bf16.msra.mxu0 0
        %3108 = vmatprep.subr.bf16.mxu0 0
        %3109 = vmatpush2.bf16.msra.mxu0 0
        %3110 = vmatprep.subr.bf16.mxu0 0
        %3111 = vmatpush2.bf16.msra.mxu0 0
        %3112 = vmatprep.subr.bf16.mxu0 0
        %3113 = vmatpush2.bf16.msra.mxu0 0
        %3114 = vmatprep.mubr.bf16.mxu0 0
        %3115 = vmatmul.mubr.bf16.gmra.mxu0 %v3071
        %v3116 = vpop.f32.mrf.mxu0
        %v3117 = vadd.f32 0.0, %v3116
        %v3118 = vpop.f32.mrf.mxu0
        %v3119 = vpop.f32.mrf.mxu0
        %v3120 = vadd.f32 0.0, %v3119
        %v3121 = vpop.f32.mrf.mxu0
        %3122 = vmatprep.mubr.bf16.mxu0 0
        %3123 = vmatmul.mubr.bf16.gmra.mxu0 %v3074
        %v3124 = vpop.f32.mrf.mxu0
        %v3125 = vadd.f32 0.0, %v3124
        %v3126 = vpop.f32.mrf.mxu0
        %v3127 = vpop.f32.mrf.mxu0
        %v3128 = vadd.f32 0.0, %v3127
        %v3129 = vpop.f32.mrf.mxu0
        %3130 = vmatprep.mubr.bf16.mxu0 0
        %3131 = vmatmul.mubr.bf16.gmra.mxu0 %v3077
        %v3132 = vpop.f32.mrf.mxu0
        %v3133 = vadd.f32 0.0, %v3132
        %v3134 = vpop.f32.mrf.mxu0
        %v3135 = vpop.f32.mrf.mxu0
        %v3136 = vadd.f32 0.0, %v3135
        %v3137 = vpop.f32.mrf.mxu0
        %3138 = vmatprep.mubr.bf16.mxu0 0
        %3139 = vmatmul.mubr.bf16.gmra.mxu0 %v3080
        %v3140 = vpop.f32.mrf.mxu0
        %v3141 = vadd.f32 0.0, %v3140
        %v3142 = vpop.f32.mrf.mxu0
        %v3143 = vpop.f32.mrf.mxu0
        %v3144 = vadd.f32 0.0, %v3143
        %v3145 = vpop.f32.mrf.mxu0
        %3146 = vdwg.mxu0
        %3155 = vrot.lane.b32.xlu0 %v2529, 64
        %v3156 = vpop.permute.xlu0 %3155
        %3157 = vrot.lane.b32.xlu0 %v2532, 64
        %v3158 = vpop.permute.xlu0 %3157
        %3159 = vrot.lane.b32.xlu0 %v2537, 64
        %v3160 = vpop.permute.xlu0 %3159
        %3161 = vrot.lane.b32.xlu0 %v2540, 64
        %v3162 = vpop.permute.xlu0 %3161
        %3163 = vrot.lane.b32.xlu0 %v2545, 64
        %v3164 = vpop.permute.xlu0 %3163
        %3165 = vrot.lane.b32.xlu0 %v2548, 64
        %v3166 = vpop.permute.xlu0 %3165
        %3167 = vrot.lane.b32.xlu0 %v2553, 64
        %v3168 = vpop.permute.xlu0 %3167
        %3169 = vrot.lane.b32.xlu0 %v2556, 64
        %v3170 = vpop.permute.xlu0 %3169
        %3187 = vrot.lane.b32.xlu0 %v3117, 64
        %v3188 = vpop.permute.xlu0 %3187
        %3189 = vrot.lane.b32.xlu0 %v3120, 64
        %v3190 = vpop.permute.xlu0 %3189
        %3191 = vrot.lane.b32.xlu0 %v3125, 64
        %v3192 = vpop.permute.xlu0 %3191
        %3193 = vrot.lane.b32.xlu0 %v3128, 64
        %v3194 = vpop.permute.xlu0 %3193
        %3195 = vrot.lane.b32.xlu0 %v3133, 64
        %v3196 = vpop.permute.xlu0 %3195
        %3197 = vrot.lane.b32.xlu0 %v3136, 64
        %v3198 = vpop.permute.xlu0 %3197
        %3199 = vrot.lane.b32.xlu0 %v3141, 64
        %v3200 = vpop.permute.xlu0 %3199
        %3201 = vrot.lane.b32.xlu0 %v3144, 64
        %v3202 = vpop.permute.xlu0 %3201
        %v3211 = vsel %vm1970, %v2215, %v3156
        %v3212 = vsel %vm1970, %v2218, %v3158
        %v3213 = vsel %vm1970, %v2223, %v3160
        %v3214 = vsel %vm1970, %v2226, %v3162
        %v3215 = vsel %vm1970, %v2231, %v3164
        %v3216 = vsel %vm1970, %v2234, %v3166
        %v3217 = vsel %vm1970, %v2239, %v3168
        %v3218 = vsel %vm1970, %v2242, %v3170
        %v3219 = vsel %vm1970, %v2803, %v3188
        %v3220 = vsel %vm1970, %v2806, %v3190
        %v3221 = vsel %vm1970, %v2811, %v3192
        %v3222 = vsel %vm1970, %v2814, %v3194
        %v3223 = vsel %vm1970, %v2819, %v3196
        %v3224 = vsel %vm1970, %v2822, %v3198
        %v3225 = vsel %vm1970, %v2827, %v3200
        %v3226 = vsel %vm1970, %v2830, %v3202
        %v3228 = vsel %vm1970, %v1943, 0
        %v3231 = vsel %vm1970, %v1949, 0
        %v3234 = vsel %vm1970, %v1955, 0
        %v3237 = vsel %vm1970, %v1961, 0
        %v3240 = vsel %vm1970, %v1945, 0
        %v3243 = vsel %vm1970, %v1951, 0
        %v3246 = vsel %vm1970, %v1957, 0
        %v3249 = vsel %vm1970, %v1963, 0
        %3251 = vmatprep.subr.bf16.mxu0 0
        %3252 = vmatpush1.bf16.xpose.msra.mxu0 0
        %3253 = vmatprep.subr.bf16.mxu0 0
        %3254 = vmatpush1.bf16.xpose.msra.mxu0 0
        %3255 = vmatprep.subr.bf16.mxu0 0
        %3256 = vmatpush1.bf16.xpose.msra.mxu0 0
        %3257 = vmatprep.subr.bf16.mxu0 0
        %3258 = vmatpush1.bf16.xpose.msra.mxu0 0
        %3259 = vmatprep.subr.bf16.mxu0 0
        %3260 = vmatpush1.bf16.xpose.msra.mxu0 %v3249
        %3261 = vmatprep.subr.bf16.mxu0 0
        %3262 = vmatpush1.bf16.xpose.msra.mxu0 %v3246
        %3263 = vmatprep.subr.bf16.mxu0 0
        %3264 = vmatpush1.bf16.xpose.msra.mxu0 %v3243
        %3265 = vmatprep.subr.bf16.mxu0 0
        %3266 = vmatpush1.bf16.xpose.msra.mxu0 %v3240
        %3267 = vmatprep.subr.bf16.mxu0 0
        %3268 = vmatpush2.bf16.xpose.msra.mxu0 0
        %3269 = vmatprep.subr.bf16.mxu0 0
        %3270 = vmatpush2.bf16.xpose.msra.mxu0 0
        %3271 = vmatprep.subr.bf16.mxu0 0
        %3272 = vmatpush2.bf16.xpose.msra.mxu0 0
        %3273 = vmatprep.subr.bf16.mxu0 0
        %3274 = vmatpush2.bf16.xpose.msra.mxu0 0
        %3275 = vmatprep.subr.bf16.mxu0 0
        %3276 = vmatpush2.bf16.xpose.msra.mxu0 0
        %3277 = vmatprep.subr.bf16.mxu0 0
        %3278 = vmatpush2.bf16.xpose.msra.mxu0 0
        %3279 = vmatprep.subr.bf16.mxu0 0
        %3280 = vmatpush2.bf16.xpose.msra.mxu0 0
        %3281 = vmatprep.subr.bf16.mxu0 0
        %3282 = vmatpush2.bf16.xpose.msra.mxu0 0
        %3283 = vmatprep.mubr.bf16.mxu0 0
        %3284 = vmatmul.mubr.bf16.gmra.mxu0 %v3228
        %v3285 = vpop.f32.mrf.mxu0
        %v3286 = vadd.f32 0.0, %v3285
        %v3287 = vpop.f32.mrf.mxu0
        %v3288 = vpop.f32.mrf.mxu0
        %v3289 = vadd.f32 0.0, %v3288
        %v3290 = vpop.f32.mrf.mxu0
        %3291 = vmatprep.mubr.bf16.mxu0 0
        %3292 = vmatmul.mubr.bf16.gmra.mxu0 %v3231
        %v3293 = vpop.f32.mrf.mxu0
        %v3294 = vadd.f32 0.0, %v3293
        %v3295 = vpop.f32.mrf.mxu0
        %v3296 = vpop.f32.mrf.mxu0
        %v3297 = vadd.f32 0.0, %v3296
        %v3298 = vpop.f32.mrf.mxu0
        %3299 = vmatprep.mubr.bf16.mxu0 0
        %3300 = vmatmul.mubr.bf16.gmra.mxu0 %v3234
        %v3301 = vpop.f32.mrf.mxu0
        %v3302 = vadd.f32 0.0, %v3301
        %v3303 = vpop.f32.mrf.mxu0
        %v3304 = vpop.f32.mrf.mxu0
        %v3305 = vadd.f32 0.0, %v3304
        %v3306 = vpop.f32.mrf.mxu0
        %3307 = vmatprep.mubr.bf16.mxu0 0
        %3308 = vmatmul.mubr.bf16.gmra.mxu0 %v3237
        %v3309 = vpop.f32.mrf.mxu0
        %v3310 = vadd.f32 0.0, %v3309
        %v3311 = vpop.f32.mrf.mxu0
        %v3312 = vpop.f32.mrf.mxu0
        %v3313 = vadd.f32 0.0, %v3312
        %v3314 = vpop.f32.mrf.mxu0
        %3315 = vdwg.mxu0
        %v3316 = vmul.f32 %v3286, 0.125
        %v3317 = vmul.f32 %v3289, 0.125
        %v3318 = vmul.f32 %v3294, 0.125
        %v3319 = vmul.f32 %v3297, 0.125
        %v3320 = vmul.f32 %v3302, 0.125
        %v3321 = vmul.f32 %v3305, 0.125
        %v3322 = vmul.f32 %v3310, 0.125
        %v3323 = vmul.f32 %v3313, 0.125
        %v3324 = vsel %vm1969, %v3316, -1e+30
        %v3325 = vsel %vm1969, %v3317, -1e+30
        %v3326 = vsel %vm1969, %v3318, -1e+30
        %v3327 = vsel %vm1969, %v3319, -1e+30
        %v3328 = vsel %vm1969, %v3320, -1e+30
        %v3329 = vsel %vm1969, %v3321, -1e+30
        %v3330 = vsel %vm1969, %v3322, -1e+30
        %v3331 = vsel %vm1969, %v3323, -1e+30
        %v3332 = vsel %vm1970, %v3324, -inf
        %3333 = vmax.xlane.f32.xlu0 %v3332
        %v3334 = vpop.xlane.xlu0 %3333
        %v3335 = vsel %vm1970, %v3325, -inf
        %3336 = vmax.xlane.f32.xlu0 %v3335
        %v3337 = vpop.xlane.xlu0 %3336
        %v3338 = vsel %vm1970, %v3326, -inf
        %3339 = vmax.xlane.f32.xlu0 %v3338
        %v3340 = vpop.xlane.xlu0 %3339
        %v3341 = vsel %vm1970, %v3327, -inf
        %3342 = vmax.xlane.f32.xlu0 %v3341
        %v3343 = vpop.xlane.xlu0 %3342
        %v3344 = vsel %vm1970, %v3328, -inf
        %3345 = vmax.xlane.f32.xlu0 %v3344
        %v3346 = vpop.xlane.xlu0 %3345
        %v3347 = vsel %vm1970, %v3329, -inf
        %3348 = vmax.xlane.f32.xlu0 %v3347
        %v3349 = vpop.xlane.xlu0 %3348
        %v3350 = vsel %vm1970, %v3330, -inf
        %3351 = vmax.xlane.f32.xlu0 %v3350
        %v3352 = vpop.xlane.xlu0 %3351
        %v3353 = vsel %vm1970, %v3331, -inf
        %3354 = vmax.xlane.f32.xlu0 %v3353
        %v3355 = vpop.xlane.xlu0 %3354
        %v3356 = vsub.f32 %v3324, %v3334
        %v3357 = vsub.f32 %v3325, %v3337
        %v3358 = vsub.f32 %v3326, %v3340
        %v3359 = vsub.f32 %v3327, %v3343
        %v3360 = vsub.f32 %v3328, %v3346
        %v3361 = vsub.f32 %v3329, %v3349
        %v3362 = vsub.f32 %v3330, %v3352
        %v3363 = vsub.f32 %v3331, %v3355
        %v3364 = vmul.f32 %v3356, 1.442695
        %v3365 = vpow.pop %v3364
        %v3366 = vmul.f32 %v3357, 1.442695
        %v3367 = vpow.pop %v3366
        %v3368 = vmul.f32 %v3358, 1.442695
        %v3369 = vpow.pop %v3368
        %v3370 = vmul.f32 %v3359, 1.442695
        %v3371 = vpow.pop %v3370
        %v3372 = vmul.f32 %v3360, 1.442695
        %v3373 = vpow.pop %v3372
        %v3374 = vmul.f32 %v3361, 1.442695
        %v3375 = vpow.pop %v3374
        %v3376 = vmul.f32 %v3362, 1.442695
        %v3377 = vpow.pop %v3376
        %v3378 = vmul.f32 %v3363, 1.442695
        %v3379 = vpow.pop %v3378
        %v3380 = vsel %vm1970, %v3365, 0.0
        %3381 = vadd.xlane.f32.xlu0 %v3380
        %v3382 = vpop.xlane.xlu0 %3381
        %v3383 = vsel %vm1970, %v3367, 0.0
        %3384 = vadd.xlane.f32.xlu0 %v3383
        %v3385 = vpop.xlane.xlu0 %3384
        %v3386 = vsel %vm1970, %v3369, 0.0
        %3387 = vadd.xlane.f32.xlu0 %v3386
        %v3388 = vpop.xlane.xlu0 %3387
        %v3389 = vsel %vm1970, %v3371, 0.0
        %3390 = vadd.xlane.f32.xlu0 %v3389
        %v3391 = vpop.xlane.xlu0 %3390
        %v3392 = vsel %vm1970, %v3373, 0.0
        %3393 = vadd.xlane.f32.xlu0 %v3392
        %v3394 = vpop.xlane.xlu0 %3393
        %v3395 = vsel %vm1970, %v3375, 0.0
        %3396 = vadd.xlane.f32.xlu0 %v3395
        %v3397 = vpop.xlane.xlu0 %3396
        %v3398 = vsel %vm1970, %v3377, 0.0
        %3399 = vadd.xlane.f32.xlu0 %v3398
        %v3400 = vpop.xlane.xlu0 %3399
        %v3401 = vsel %vm1970, %v3379, 0.0
        %3402 = vadd.xlane.f32.xlu0 %v3401
        %v3403 = vpop.xlane.xlu0 %3402
        %v3404 = vrcp.pop %v3382
        %v3405 = vmul.f32 %v3365, %v3404
        %v3406 = vrcp.pop %v3385
        %v3407 = vmul.f32 %v3367, %v3406
        %v3408 = vrcp.pop %v3388
        %v3409 = vmul.f32 %v3369, %v3408
        %v3410 = vrcp.pop %v3391
        %v3411 = vmul.f32 %v3371, %v3410
        %v3412 = vrcp.pop %v3394
        %v3413 = vmul.f32 %v3373, %v3412
        %v3414 = vrcp.pop %v3397
        %v3415 = vmul.f32 %v3375, %v3414
        %v3416 = vrcp.pop %v3400
        %v3417 = vmul.f32 %v3377, %v3416
        %v3418 = vrcp.pop %v3403
        %v3419 = vmul.f32 %v3379, %v3418
        %v3420 = vpack.c.bf16 %v3407, %v3405
        %v3421 = vpack.c.bf16 %v3411, %v3409
        %v3422 = vpack.c.bf16 %v3415, %v3413
        %v3423 = vpack.c.bf16 %v3419, %v3417
        %v3425 = vsel %vm1970, %v3420, 0
        %v3428 = vsel %vm1970, %v3421, 0
        %v3431 = vsel %vm1970, %v3422, 0
        %v3434 = vsel %vm1970, %v3423, 0
        %3436 = vmatprep.subr.bf16.mxu0 0
        %3437 = vmatpush1.bf16.msra.mxu0 0
        %3438 = vmatprep.subr.bf16.mxu0 0
        %3439 = vmatpush1.bf16.msra.mxu0 0
        %3440 = vmatprep.subr.bf16.mxu0 0
        %3441 = vmatpush1.bf16.msra.mxu0 0
        %3442 = vmatprep.subr.bf16.mxu0 0
        %3443 = vmatpush1.bf16.msra.mxu0 0
        %3444 = vmatprep.subr.bf16.mxu0 0
        %3445 = vmatpush1.bf16.msra.mxu0 %v1965
        %3446 = vmatprep.subr.bf16.mxu0 0
        %3447 = vmatpush1.bf16.msra.mxu0 %v1959
        %3448 = vmatprep.subr.bf16.mxu0 0
        %3449 = vmatpush1.bf16.msra.mxu0 %v1953
        %3450 = vmatprep.subr.bf16.mxu0 0
        %3451 = vmatpush1.bf16.msra.mxu0 %v1947
        %3452 = vmatprep.subr.bf16.mxu0 0
        %3453 = vmatpush2.bf16.msra.mxu0 0
        %3454 = vmatprep.subr.bf16.mxu0 0
        %3455 = vmatpush2.bf16.msra.mxu0 0
        %3456 = vmatprep.subr.bf16.mxu0 0
        %3457 = vmatpush2.bf16.msra.mxu0 0
        %3458 = vmatprep.subr.bf16.mxu0 0
        %3459 = vmatpush2.bf16.msra.mxu0 0
        %3460 = vmatprep.subr.bf16.mxu0 0
        %3461 = vmatpush2.bf16.msra.mxu0 0
        %3462 = vmatprep.subr.bf16.mxu0 0
        %3463 = vmatpush2.bf16.msra.mxu0 0
        %3464 = vmatprep.subr.bf16.mxu0 0
        %3465 = vmatpush2.bf16.msra.mxu0 0
        %3466 = vmatprep.subr.bf16.mxu0 0
        %3467 = vmatpush2.bf16.msra.mxu0 0
        %3468 = vmatprep.mubr.bf16.mxu0 0
        %3469 = vmatmul.mubr.bf16.gmra.mxu0 %v3425
        %v3470 = vpop.f32.mrf.mxu0
        %v3471 = vadd.f32 0.0, %v3470
        %v3472 = vpop.f32.mrf.mxu0
        %v3473 = vpop.f32.mrf.mxu0
        %v3474 = vadd.f32 0.0, %v3473
        %v3475 = vpop.f32.mrf.mxu0
        %3476 = vmatprep.mubr.bf16.mxu0 0
        %3477 = vmatmul.mubr.bf16.gmra.mxu0 %v3428
        %v3478 = vpop.f32.mrf.mxu0
        %v3479 = vadd.f32 0.0, %v3478
        %v3480 = vpop.f32.mrf.mxu0
        %v3481 = vpop.f32.mrf.mxu0
        %v3482 = vadd.f32 0.0, %v3481
        %v3483 = vpop.f32.mrf.mxu0
        %3484 = vmatprep.mubr.bf16.mxu0 0
        %3485 = vmatmul.mubr.bf16.gmra.mxu0 %v3431
        %v3486 = vpop.f32.mrf.mxu0
        %v3487 = vadd.f32 0.0, %v3486
        %v3488 = vpop.f32.mrf.mxu0
        %v3489 = vpop.f32.mrf.mxu0
        %v3490 = vadd.f32 0.0, %v3489
        %v3491 = vpop.f32.mrf.mxu0
        %3492 = vmatprep.mubr.bf16.mxu0 0
        %3493 = vmatmul.mubr.bf16.gmra.mxu0 %v3434
        %v3494 = vpop.f32.mrf.mxu0
        %v3495 = vadd.f32 0.0, %v3494
        %v3496 = vpop.f32.mrf.mxu0
        %v3497 = vpop.f32.mrf.mxu0
        %v3498 = vadd.f32 0.0, %v3497
        %v3499 = vpop.f32.mrf.mxu0
        %3500 = vdwg.mxu0
        %3505 = vrot.lane.b32.xlu0 %v1943, 64
        %v3506 = vpop.permute.xlu0 %3505
        %3507 = vrot.lane.b32.xlu0 %v1949, 64
        %v3508 = vpop.permute.xlu0 %3507
        %3509 = vrot.lane.b32.xlu0 %v1955, 64
        %v3510 = vpop.permute.xlu0 %3509
        %3511 = vrot.lane.b32.xlu0 %v1961, 64
        %v3512 = vpop.permute.xlu0 %3511
        %3517 = vrot.lane.b32.xlu0 %v1945, 64
        %v3518 = vpop.permute.xlu0 %3517
        %3519 = vrot.lane.b32.xlu0 %v1951, 64
        %v3520 = vpop.permute.xlu0 %3519
        %3521 = vrot.lane.b32.xlu0 %v1957, 64
        %v3522 = vpop.permute.xlu0 %3521
        %3523 = vrot.lane.b32.xlu0 %v1963, 64
        %v3524 = vpop.permute.xlu0 %3523
        %v3526 = vsel %vm1970, %v3506, 0
        %v3529 = vsel %vm1970, %v3508, 0
        %v3532 = vsel %vm1970, %v3510, 0
        %v3535 = vsel %vm1970, %v3512, 0
        %v3538 = vsel %vm1970, %v3518, 0
        %v3541 = vsel %vm1970, %v3520, 0
        %v3544 = vsel %vm1970, %v3522, 0
        %v3547 = vsel %vm1970, %v3524, 0
        %3549 = vmatprep.subr.bf16.mxu0 0
        %3550 = vmatpush1.bf16.xpose.msra.mxu0 0
        %3551 = vmatprep.subr.bf16.mxu0 0
        %3552 = vmatpush1.bf16.xpose.msra.mxu0 0
        %3553 = vmatprep.subr.bf16.mxu0 0
        %3554 = vmatpush1.bf16.xpose.msra.mxu0 0
        %3555 = vmatprep.subr.bf16.mxu0 0
        %3556 = vmatpush1.bf16.xpose.msra.mxu0 0
        %3557 = vmatprep.subr.bf16.mxu0 0
        %3558 = vmatpush1.bf16.xpose.msra.mxu0 %v3547
        %3559 = vmatprep.subr.bf16.mxu0 0
        %3560 = vmatpush1.bf16.xpose.msra.mxu0 %v3544
        %3561 = vmatprep.subr.bf16.mxu0 0
        %3562 = vmatpush1.bf16.xpose.msra.mxu0 %v3541
        %3563 = vmatprep.subr.bf16.mxu0 0
        %3564 = vmatpush1.bf16.xpose.msra.mxu0 %v3538
        %3565 = vmatprep.subr.bf16.mxu0 0
        %3566 = vmatpush2.bf16.xpose.msra.mxu0 0
        %3567 = vmatprep.subr.bf16.mxu0 0
        %3568 = vmatpush2.bf16.xpose.msra.mxu0 0
        %3569 = vmatprep.subr.bf16.mxu0 0
        %3570 = vmatpush2.bf16.xpose.msra.mxu0 0
        %3571 = vmatprep.subr.bf16.mxu0 0
        %3572 = vmatpush2.bf16.xpose.msra.mxu0 0
        %3573 = vmatprep.subr.bf16.mxu0 0
        %3574 = vmatpush2.bf16.xpose.msra.mxu0 0
        %3575 = vmatprep.subr.bf16.mxu0 0
        %3576 = vmatpush2.bf16.xpose.msra.mxu0 0
        %3577 = vmatprep.subr.bf16.mxu0 0
        %3578 = vmatpush2.bf16.xpose.msra.mxu0 0
        %3579 = vmatprep.subr.bf16.mxu0 0
        %3580 = vmatpush2.bf16.xpose.msra.mxu0 0
        %3581 = vmatprep.mubr.bf16.mxu0 0
        %3582 = vmatmul.mubr.bf16.gmra.mxu0 %v3526
        %v3583 = vpop.f32.mrf.mxu0
        %v3584 = vadd.f32 0.0, %v3583
        %v3585 = vpop.f32.mrf.mxu0
        %v3586 = vpop.f32.mrf.mxu0
        %v3587 = vadd.f32 0.0, %v3586
        %v3588 = vpop.f32.mrf.mxu0
        %3589 = vmatprep.mubr.bf16.mxu0 0
        %3590 = vmatmul.mubr.bf16.gmra.mxu0 %v3529
        %v3591 = vpop.f32.mrf.mxu0
        %v3592 = vadd.f32 0.0, %v3591
        %v3593 = vpop.f32.mrf.mxu0
        %v3594 = vpop.f32.mrf.mxu0
        %v3595 = vadd.f32 0.0, %v3594
        %v3596 = vpop.f32.mrf.mxu0
        %3597 = vmatprep.mubr.bf16.mxu0 0
        %3598 = vmatmul.mubr.bf16.gmra.mxu0 %v3532
        %v3599 = vpop.f32.mrf.mxu0
        %v3600 = vadd.f32 0.0, %v3599
        %v3601 = vpop.f32.mrf.mxu0
        %v3602 = vpop.f32.mrf.mxu0
        %v3603 = vadd.f32 0.0, %v3602
        %v3604 = vpop.f32.mrf.mxu0
        %3605 = vmatprep.mubr.bf16.mxu0 0
        %3606 = vmatmul.mubr.bf16.gmra.mxu0 %v3535
        %v3607 = vpop.f32.mrf.mxu0
        %v3608 = vadd.f32 0.0, %v3607
        %v3609 = vpop.f32.mrf.mxu0
        %v3610 = vpop.f32.mrf.mxu0
        %v3611 = vadd.f32 0.0, %v3610
        %v3612 = vpop.f32.mrf.mxu0
        %3613 = vdwg.mxu0
        %v3614 = vmul.f32 %v3584, 0.125
        %v3615 = vmul.f32 %v3587, 0.125
        %v3616 = vmul.f32 %v3592, 0.125
        %v3617 = vmul.f32 %v3595, 0.125
        %v3618 = vmul.f32 %v3600, 0.125
        %v3619 = vmul.f32 %v3603, 0.125
        %v3620 = vmul.f32 %v3608, 0.125
        %v3621 = vmul.f32 %v3611, 0.125
        %v3622 = vsel %vm1969, %v3614, -1e+30
        %v3623 = vsel %vm1969, %v3615, -1e+30
        %v3624 = vsel %vm1969, %v3616, -1e+30
        %v3625 = vsel %vm1969, %v3617, -1e+30
        %v3626 = vsel %vm1969, %v3618, -1e+30
        %v3627 = vsel %vm1969, %v3619, -1e+30
        %v3628 = vsel %vm1969, %v3620, -1e+30
        %v3629 = vsel %vm1969, %v3621, -1e+30
        %v3630 = vsel %vm1970, %v3622, -inf
        %3631 = vmax.xlane.f32.xlu0 %v3630
        %v3632 = vpop.xlane.xlu0 %3631
        %v3633 = vsel %vm1970, %v3623, -inf
        %3634 = vmax.xlane.f32.xlu0 %v3633
        %v3635 = vpop.xlane.xlu0 %3634
        %v3636 = vsel %vm1970, %v3624, -inf
        %3637 = vmax.xlane.f32.xlu0 %v3636
        %v3638 = vpop.xlane.xlu0 %3637
        %v3639 = vsel %vm1970, %v3625, -inf
        %3640 = vmax.xlane.f32.xlu0 %v3639
        %v3641 = vpop.xlane.xlu0 %3640
        %v3642 = vsel %vm1970, %v3626, -inf
        %3643 = vmax.xlane.f32.xlu0 %v3642
        %v3644 = vpop.xlane.xlu0 %3643
        %v3645 = vsel %vm1970, %v3627, -inf
        %3646 = vmax.xlane.f32.xlu0 %v3645
        %v3647 = vpop.xlane.xlu0 %3646
        %v3648 = vsel %vm1970, %v3628, -inf
        %3649 = vmax.xlane.f32.xlu0 %v3648
        %v3650 = vpop.xlane.xlu0 %3649
        %v3651 = vsel %vm1970, %v3629, -inf
        %3652 = vmax.xlane.f32.xlu0 %v3651
        %v3653 = vpop.xlane.xlu0 %3652
        %v3654 = vsub.f32 %v3622, %v3632
        %v3655 = vsub.f32 %v3623, %v3635
        %v3656 = vsub.f32 %v3624, %v3638
        %v3657 = vsub.f32 %v3625, %v3641
        %v3658 = vsub.f32 %v3626, %v3644
        %v3659 = vsub.f32 %v3627, %v3647
        %v3660 = vsub.f32 %v3628, %v3650
        %v3661 = vsub.f32 %v3629, %v3653
        %v3662 = vmul.f32 %v3654, 1.442695
        %v3663 = vpow.pop %v3662
        %v3664 = vmul.f32 %v3655, 1.442695
        %v3665 = vpow.pop %v3664
        %v3666 = vmul.f32 %v3656, 1.442695
        %v3667 = vpow.pop %v3666
        %v3668 = vmul.f32 %v3657, 1.442695
        %v3669 = vpow.pop %v3668
        %v3670 = vmul.f32 %v3658, 1.442695
        %v3671 = vpow.pop %v3670
        %v3672 = vmul.f32 %v3659, 1.442695
        %v3673 = vpow.pop %v3672
        %v3674 = vmul.f32 %v3660, 1.442695
        %v3675 = vpow.pop %v3674
        %v3676 = vmul.f32 %v3661, 1.442695
        %v3677 = vpow.pop %v3676
        %v3678 = vsel %vm1970, %v3663, 0.0
        %3679 = vadd.xlane.f32.xlu0 %v3678
        %v3680 = vpop.xlane.xlu0 %3679
        %v3681 = vsel %vm1970, %v3665, 0.0
        %3682 = vadd.xlane.f32.xlu0 %v3681
        %v3683 = vpop.xlane.xlu0 %3682
        %v3684 = vsel %vm1970, %v3667, 0.0
        %3685 = vadd.xlane.f32.xlu0 %v3684
        %v3686 = vpop.xlane.xlu0 %3685
        %v3687 = vsel %vm1970, %v3669, 0.0
        %3688 = vadd.xlane.f32.xlu0 %v3687
        %v3689 = vpop.xlane.xlu0 %3688
        %v3690 = vsel %vm1970, %v3671, 0.0
        %3691 = vadd.xlane.f32.xlu0 %v3690
        %v3692 = vpop.xlane.xlu0 %3691
        %v3693 = vsel %vm1970, %v3673, 0.0
        %3694 = vadd.xlane.f32.xlu0 %v3693
        %v3695 = vpop.xlane.xlu0 %3694
        %v3696 = vsel %vm1970, %v3675, 0.0
        %3697 = vadd.xlane.f32.xlu0 %v3696
        %v3698 = vpop.xlane.xlu0 %3697
        %v3699 = vsel %vm1970, %v3677, 0.0
        %3700 = vadd.xlane.f32.xlu0 %v3699
        %v3701 = vpop.xlane.xlu0 %3700
        %v3702 = vrcp.pop %v3680
        %v3703 = vmul.f32 %v3663, %v3702
        %v3704 = vrcp.pop %v3683
        %v3705 = vmul.f32 %v3665, %v3704
        %v3706 = vrcp.pop %v3686
        %v3707 = vmul.f32 %v3667, %v3706
        %v3708 = vrcp.pop %v3689
        %v3709 = vmul.f32 %v3669, %v3708
        %v3710 = vrcp.pop %v3692
        %v3711 = vmul.f32 %v3671, %v3710
        %v3712 = vrcp.pop %v3695
        %v3713 = vmul.f32 %v3673, %v3712
        %v3714 = vrcp.pop %v3698
        %v3715 = vmul.f32 %v3675, %v3714
        %v3716 = vrcp.pop %v3701
        %v3717 = vmul.f32 %v3677, %v3716
        %v3718 = vpack.c.bf16 %v3705, %v3703
        %v3719 = vpack.c.bf16 %v3709, %v3707
        %v3720 = vpack.c.bf16 %v3713, %v3711
        %v3721 = vpack.c.bf16 %v3717, %v3715
        %3726 = vrot.lane.b32.xlu0 %v1947, 64
        %v3727 = vpop.permute.xlu0 %3726
        %3728 = vrot.lane.b32.xlu0 %v1953, 64
        %v3729 = vpop.permute.xlu0 %3728
        %3730 = vrot.lane.b32.xlu0 %v1959, 64
        %v3731 = vpop.permute.xlu0 %3730
        %3732 = vrot.lane.b32.xlu0 %v1965, 64
        %v3733 = vpop.permute.xlu0 %3732
        %v3739 = vsel %vm1970, %v3718, 0
        %v3742 = vsel %vm1970, %v3719, 0
        %v3745 = vsel %vm1970, %v3720, 0
        %v3748 = vsel %vm1970, %v3721, 0
        %3750 = vmatprep.subr.bf16.mxu0 0
        %3751 = vmatpush1.bf16.msra.mxu0 0
        %3752 = vmatprep.subr.bf16.mxu0 0
        %3753 = vmatpush1.bf16.msra.mxu0 0
        %3754 = vmatprep.subr.bf16.mxu0 0
        %3755 = vmatpush1.bf16.msra.mxu0 0
        %3756 = vmatprep.subr.bf16.mxu0 0
        %3757 = vmatpush1.bf16.msra.mxu0 0
        %3758 = vmatprep.subr.bf16.mxu0 0
        %3759 = vmatpush1.bf16.msra.mxu0 %v3733
        %3760 = vmatprep.subr.bf16.mxu0 0
        %3761 = vmatpush1.bf16.msra.mxu0 %v3731
        %3762 = vmatprep.subr.bf16.mxu0 0
        %3763 = vmatpush1.bf16.msra.mxu0 %v3729
        %3764 = vmatprep.subr.bf16.mxu0 0
        %3765 = vmatpush1.bf16.msra.mxu0 %v3727
        %3766 = vmatprep.subr.bf16.mxu0 0
        %3767 = vmatpush2.bf16.msra.mxu0 0
        %3768 = vmatprep.subr.bf16.mxu0 0
        %3769 = vmatpush2.bf16.msra.mxu0 0
        %3770 = vmatprep.subr.bf16.mxu0 0
        %3771 = vmatpush2.bf16.msra.mxu0 0
        %3772 = vmatprep.subr.bf16.mxu0 0
        %3773 = vmatpush2.bf16.msra.mxu0 0
        %3774 = vmatprep.subr.bf16.mxu0 0
        %3775 = vmatpush2.bf16.msra.mxu0 0
        %3776 = vmatprep.subr.bf16.mxu0 0
        %3777 = vmatpush2.bf16.msra.mxu0 0
        %3778 = vmatprep.subr.bf16.mxu0 0
        %3779 = vmatpush2.bf16.msra.mxu0 0
        %3780 = vmatprep.subr.bf16.mxu0 0
        %3781 = vmatpush2.bf16.msra.mxu0 0
        %3782 = vmatprep.mubr.bf16.mxu0 0
        %3783 = vmatmul.mubr.bf16.gmra.mxu0 %v3739
        %v3784 = vpop.f32.mrf.mxu0
        %v3785 = vadd.f32 0.0, %v3784
        %v3786 = vpop.f32.mrf.mxu0
        %v3787 = vpop.f32.mrf.mxu0
        %v3788 = vadd.f32 0.0, %v3787
        %v3789 = vpop.f32.mrf.mxu0
        %3790 = vmatprep.mubr.bf16.mxu0 0
        %3791 = vmatmul.mubr.bf16.gmra.mxu0 %v3742
        %v3792 = vpop.f32.mrf.mxu0
        %v3793 = vadd.f32 0.0, %v3792
        %v3794 = vpop.f32.mrf.mxu0
        %v3795 = vpop.f32.mrf.mxu0
        %v3796 = vadd.f32 0.0, %v3795
        %v3797 = vpop.f32.mrf.mxu0
        %3798 = vmatprep.mubr.bf16.mxu0 0
        %3799 = vmatmul.mubr.bf16.gmra.mxu0 %v3745
        %v3800 = vpop.f32.mrf.mxu0
        %v3801 = vadd.f32 0.0, %v3800
        %v3802 = vpop.f32.mrf.mxu0
        %v3803 = vpop.f32.mrf.mxu0
        %v3804 = vadd.f32 0.0, %v3803
        %v3805 = vpop.f32.mrf.mxu0
        %3806 = vmatprep.mubr.bf16.mxu0 0
        %3807 = vmatmul.mubr.bf16.gmra.mxu0 %v3748
        %v3808 = vpop.f32.mrf.mxu0
        %v3809 = vadd.f32 0.0, %v3808
        %v3810 = vpop.f32.mrf.mxu0
        %v3811 = vpop.f32.mrf.mxu0
        %v3812 = vadd.f32 0.0, %v3811
        %v3813 = vpop.f32.mrf.mxu0
        %3814 = vdwg.mxu0
        %v3816 = vsel %vm1970, %v1944, 0
        %v3819 = vsel %vm1970, %v1950, 0
        %v3822 = vsel %vm1970, %v1956, 0
        %v3825 = vsel %vm1970, %v1962, 0
        %v3828 = vsel %vm1970, %v1946, 0
        %v3831 = vsel %vm1970, %v1952, 0
        %v3834 = vsel %vm1970, %v1958, 0
        %v3837 = vsel %vm1970, %v1964, 0
        %3839 = vmatprep.subr.bf16.mxu0 0
        %3840 = vmatpush1.bf16.xpose.msra.mxu0 0
        %3841 = vmatprep.subr.bf16.mxu0 0
        %3842 = vmatpush1.bf16.xpose.msra.mxu0 0
        %3843 = vmatprep.subr.bf16.mxu0 0
        %3844 = vmatpush1.bf16.xpose.msra.mxu0 0
        %3845 = vmatprep.subr.bf16.mxu0 0
        %3846 = vmatpush1.bf16.xpose.msra.mxu0 0
        %3847 = vmatprep.subr.bf16.mxu0 0
        %3848 = vmatpush1.bf16.xpose.msra.mxu0 %v3837
        %3849 = vmatprep.subr.bf16.mxu0 0
        %3850 = vmatpush1.bf16.xpose.msra.mxu0 %v3834
        %3851 = vmatprep.subr.bf16.mxu0 0
        %3852 = vmatpush1.bf16.xpose.msra.mxu0 %v3831
        %3853 = vmatprep.subr.bf16.mxu0 0
        %3854 = vmatpush1.bf16.xpose.msra.mxu0 %v3828
        %3855 = vmatprep.subr.bf16.mxu0 0
        %3856 = vmatpush2.bf16.xpose.msra.mxu0 0
        %3857 = vmatprep.subr.bf16.mxu0 0
        %3858 = vmatpush2.bf16.xpose.msra.mxu0 0
        %3859 = vmatprep.subr.bf16.mxu0 0
        %3860 = vmatpush2.bf16.xpose.msra.mxu0 0
        %3861 = vmatprep.subr.bf16.mxu0 0
        %3862 = vmatpush2.bf16.xpose.msra.mxu0 0
        %3863 = vmatprep.subr.bf16.mxu0 0
        %3864 = vmatpush2.bf16.xpose.msra.mxu0 0
        %3865 = vmatprep.subr.bf16.mxu0 0
        %3866 = vmatpush2.bf16.xpose.msra.mxu0 0
        %3867 = vmatprep.subr.bf16.mxu0 0
        %3868 = vmatpush2.bf16.xpose.msra.mxu0 0
        %3869 = vmatprep.subr.bf16.mxu0 0
        %3870 = vmatpush2.bf16.xpose.msra.mxu0 0
        %3871 = vmatprep.mubr.bf16.mxu0 0
        %3872 = vmatmul.mubr.bf16.gmra.mxu0 %v3816
        %v3873 = vpop.f32.mrf.mxu0
        %v3874 = vadd.f32 0.0, %v3873
        %v3875 = vpop.f32.mrf.mxu0
        %v3876 = vpop.f32.mrf.mxu0
        %v3877 = vadd.f32 0.0, %v3876
        %v3878 = vpop.f32.mrf.mxu0
        %3879 = vmatprep.mubr.bf16.mxu0 0
        %3880 = vmatmul.mubr.bf16.gmra.mxu0 %v3819
        %v3881 = vpop.f32.mrf.mxu0
        %v3882 = vadd.f32 0.0, %v3881
        %v3883 = vpop.f32.mrf.mxu0
        %v3884 = vpop.f32.mrf.mxu0
        %v3885 = vadd.f32 0.0, %v3884
        %v3886 = vpop.f32.mrf.mxu0
        %3887 = vmatprep.mubr.bf16.mxu0 0
        %3888 = vmatmul.mubr.bf16.gmra.mxu0 %v3822
        %v3889 = vpop.f32.mrf.mxu0
        %v3890 = vadd.f32 0.0, %v3889
        %v3891 = vpop.f32.mrf.mxu0
        %v3892 = vpop.f32.mrf.mxu0
        %v3893 = vadd.f32 0.0, %v3892
        %v3894 = vpop.f32.mrf.mxu0
        %3895 = vmatprep.mubr.bf16.mxu0 0
        %3896 = vmatmul.mubr.bf16.gmra.mxu0 %v3825
        %v3897 = vpop.f32.mrf.mxu0
        %v3898 = vadd.f32 0.0, %v3897
        %v3899 = vpop.f32.mrf.mxu0
        %v3900 = vpop.f32.mrf.mxu0
        %v3901 = vadd.f32 0.0, %v3900
        %v3902 = vpop.f32.mrf.mxu0
        %3903 = vdwg.mxu0
        %v3904 = vmul.f32 %v3874, 0.125
        %v3905 = vmul.f32 %v3877, 0.125
        %v3906 = vmul.f32 %v3882, 0.125
        %v3907 = vmul.f32 %v3885, 0.125
        %v3908 = vmul.f32 %v3890, 0.125
        %v3909 = vmul.f32 %v3893, 0.125
        %v3910 = vmul.f32 %v3898, 0.125
        %v3911 = vmul.f32 %v3901, 0.125
        %v3912 = vsel %vm1969, %v3904, -1e+30
        %v3913 = vsel %vm1969, %v3905, -1e+30
        %v3914 = vsel %vm1969, %v3906, -1e+30
        %v3915 = vsel %vm1969, %v3907, -1e+30
        %v3916 = vsel %vm1969, %v3908, -1e+30
        %v3917 = vsel %vm1969, %v3909, -1e+30
        %v3918 = vsel %vm1969, %v3910, -1e+30
        %v3919 = vsel %vm1969, %v3911, -1e+30
        %v3920 = vsel %vm1970, %v3912, -inf
        %3921 = vmax.xlane.f32.xlu0 %v3920
        %v3922 = vpop.xlane.xlu0 %3921
        %v3923 = vsel %vm1970, %v3913, -inf
        %3924 = vmax.xlane.f32.xlu0 %v3923
        %v3925 = vpop.xlane.xlu0 %3924
        %v3926 = vsel %vm1970, %v3914, -inf
        %3927 = vmax.xlane.f32.xlu0 %v3926
        %v3928 = vpop.xlane.xlu0 %3927
        %v3929 = vsel %vm1970, %v3915, -inf
        %3930 = vmax.xlane.f32.xlu0 %v3929
        %v3931 = vpop.xlane.xlu0 %3930
        %v3932 = vsel %vm1970, %v3916, -inf
        %3933 = vmax.xlane.f32.xlu0 %v3932
        %v3934 = vpop.xlane.xlu0 %3933
        %v3935 = vsel %vm1970, %v3917, -inf
        %3936 = vmax.xlane.f32.xlu0 %v3935
        %v3937 = vpop.xlane.xlu0 %3936
        %v3938 = vsel %vm1970, %v3918, -inf
        %3939 = vmax.xlane.f32.xlu0 %v3938
        %v3940 = vpop.xlane.xlu0 %3939
        %v3941 = vsel %vm1970, %v3919, -inf
        %3942 = vmax.xlane.f32.xlu0 %v3941
        %v3943 = vpop.xlane.xlu0 %3942
        %v3944 = vsub.f32 %v3912, %v3922
        %v3945 = vsub.f32 %v3913, %v3925
        %v3946 = vsub.f32 %v3914, %v3928
        %v3947 = vsub.f32 %v3915, %v3931
        %v3948 = vsub.f32 %v3916, %v3934
        %v3949 = vsub.f32 %v3917, %v3937
        %v3950 = vsub.f32 %v3918, %v3940
        %v3951 = vsub.f32 %v3919, %v3943
        %v3952 = vmul.f32 %v3944, 1.442695
        %v3953 = vpow.pop %v3952
        %v3954 = vmul.f32 %v3945, 1.442695
        %v3955 = vpow.pop %v3954
        %v3956 = vmul.f32 %v3946, 1.442695
        %v3957 = vpow.pop %v3956
        %v3958 = vmul.f32 %v3947, 1.442695
        %v3959 = vpow.pop %v3958
        %v3960 = vmul.f32 %v3948, 1.442695
        %v3961 = vpow.pop %v3960
        %v3962 = vmul.f32 %v3949, 1.442695
        %v3963 = vpow.pop %v3962
        %v3964 = vmul.f32 %v3950, 1.442695
        %v3965 = vpow.pop %v3964
        %v3966 = vmul.f32 %v3951, 1.442695
        %v3967 = vpow.pop %v3966
        %v3968 = vsel %vm1970, %v3953, 0.0
        %3969 = vadd.xlane.f32.xlu0 %v3968
        %v3970 = vpop.xlane.xlu0 %3969
        %v3971 = vsel %vm1970, %v3955, 0.0
        %3972 = vadd.xlane.f32.xlu0 %v3971
        %v3973 = vpop.xlane.xlu0 %3972
        %v3974 = vsel %vm1970, %v3957, 0.0
        %3975 = vadd.xlane.f32.xlu0 %v3974
        %v3976 = vpop.xlane.xlu0 %3975
        %v3977 = vsel %vm1970, %v3959, 0.0
        %3978 = vadd.xlane.f32.xlu0 %v3977
        %v3979 = vpop.xlane.xlu0 %3978
        %v3980 = vsel %vm1970, %v3961, 0.0
        %3981 = vadd.xlane.f32.xlu0 %v3980
        %v3982 = vpop.xlane.xlu0 %3981
        %v3983 = vsel %vm1970, %v3963, 0.0
        %3984 = vadd.xlane.f32.xlu0 %v3983
        %v3985 = vpop.xlane.xlu0 %3984
        %v3986 = vsel %vm1970, %v3965, 0.0
        %3987 = vadd.xlane.f32.xlu0 %v3986
        %v3988 = vpop.xlane.xlu0 %3987
        %v3989 = vsel %vm1970, %v3967, 0.0
        %3990 = vadd.xlane.f32.xlu0 %v3989
        %v3991 = vpop.xlane.xlu0 %3990
        %v3992 = vrcp.pop %v3970
        %v3993 = vmul.f32 %v3953, %v3992
        %v3994 = vrcp.pop %v3973
        %v3995 = vmul.f32 %v3955, %v3994
        %v3996 = vrcp.pop %v3976
        %v3997 = vmul.f32 %v3957, %v3996
        %v3998 = vrcp.pop %v3979
        %v3999 = vmul.f32 %v3959, %v3998
        %v4000 = vrcp.pop %v3982
        %v4001 = vmul.f32 %v3961, %v4000
        %v4002 = vrcp.pop %v3985
        %v4003 = vmul.f32 %v3963, %v4002
        %v4004 = vrcp.pop %v3988
        %v4005 = vmul.f32 %v3965, %v4004
        %v4006 = vrcp.pop %v3991
        %v4007 = vmul.f32 %v3967, %v4006
        %v4008 = vpack.c.bf16 %v3995, %v3993
        %v4009 = vpack.c.bf16 %v3999, %v3997
        %v4010 = vpack.c.bf16 %v4003, %v4001
        %v4011 = vpack.c.bf16 %v4007, %v4005
        %v4013 = vsel %vm1970, %v4008, 0
        %v4016 = vsel %vm1970, %v4009, 0
        %v4019 = vsel %vm1970, %v4010, 0
        %v4022 = vsel %vm1970, %v4011, 0
        %4024 = vmatprep.subr.bf16.mxu0 0
        %4025 = vmatpush1.bf16.msra.mxu0 0
        %4026 = vmatprep.subr.bf16.mxu0 0
        %4027 = vmatpush1.bf16.msra.mxu0 0
        %4028 = vmatprep.subr.bf16.mxu0 0
        %4029 = vmatpush1.bf16.msra.mxu0 0
        %4030 = vmatprep.subr.bf16.mxu0 0
        %4031 = vmatpush1.bf16.msra.mxu0 0
        %4032 = vmatprep.subr.bf16.mxu0 0
        %4033 = vmatpush1.bf16.msra.mxu0 %v1966
        %4034 = vmatprep.subr.bf16.mxu0 0
        %4035 = vmatpush1.bf16.msra.mxu0 %v1960
        %4036 = vmatprep.subr.bf16.mxu0 0
        %4037 = vmatpush1.bf16.msra.mxu0 %v1954
        %4038 = vmatprep.subr.bf16.mxu0 0
        %4039 = vmatpush1.bf16.msra.mxu0 %v1948
        %4040 = vmatprep.subr.bf16.mxu0 0
        %4041 = vmatpush2.bf16.msra.mxu0 0
        %4042 = vmatprep.subr.bf16.mxu0 0
        %4043 = vmatpush2.bf16.msra.mxu0 0
        %4044 = vmatprep.subr.bf16.mxu0 0
        %4045 = vmatpush2.bf16.msra.mxu0 0
        %4046 = vmatprep.subr.bf16.mxu0 0
        %4047 = vmatpush2.bf16.msra.mxu0 0
        %4048 = vmatprep.subr.bf16.mxu0 0
        %4049 = vmatpush2.bf16.msra.mxu0 0
        %4050 = vmatprep.subr.bf16.mxu0 0
        %4051 = vmatpush2.bf16.msra.mxu0 0
        %4052 = vmatprep.subr.bf16.mxu0 0
        %4053 = vmatpush2.bf16.msra.mxu0 0
        %4054 = vmatprep.subr.bf16.mxu0 0
        %4055 = vmatpush2.bf16.msra.mxu0 0
        %4056 = vmatprep.mubr.bf16.mxu0 0
        %4057 = vmatmul.mubr.bf16.gmra.mxu0 %v4013
        %v4058 = vpop.f32.mrf.mxu0
        %v4059 = vadd.f32 0.0, %v4058
        %v4060 = vpop.f32.mrf.mxu0
        %v4061 = vpop.f32.mrf.mxu0
        %v4062 = vadd.f32 0.0, %v4061
        %v4063 = vpop.f32.mrf.mxu0
        %4064 = vmatprep.mubr.bf16.mxu0 0
        %4065 = vmatmul.mubr.bf16.gmra.mxu0 %v4016
        %v4066 = vpop.f32.mrf.mxu0
        %v4067 = vadd.f32 0.0, %v4066
        %v4068 = vpop.f32.mrf.mxu0
        %v4069 = vpop.f32.mrf.mxu0
        %v4070 = vadd.f32 0.0, %v4069
        %v4071 = vpop.f32.mrf.mxu0
        %4072 = vmatprep.mubr.bf16.mxu0 0
        %4073 = vmatmul.mubr.bf16.gmra.mxu0 %v4019
        %v4074 = vpop.f32.mrf.mxu0
        %v4075 = vadd.f32 0.0, %v4074
        %v4076 = vpop.f32.mrf.mxu0
        %v4077 = vpop.f32.mrf.mxu0
        %v4078 = vadd.f32 0.0, %v4077
        %v4079 = vpop.f32.mrf.mxu0
        %4080 = vmatprep.mubr.bf16.mxu0 0
        %4081 = vmatmul.mubr.bf16.gmra.mxu0 %v4022
        %v4082 = vpop.f32.mrf.mxu0
        %v4083 = vadd.f32 0.0, %v4082
        %v4084 = vpop.f32.mrf.mxu0
        %v4085 = vpop.f32.mrf.mxu0
        %v4086 = vadd.f32 0.0, %v4085
        %v4087 = vpop.f32.mrf.mxu0
        %4088 = vdwg.mxu0
        %4093 = vrot.lane.b32.xlu0 %v1944, 64
        %v4094 = vpop.permute.xlu0 %4093
        %4095 = vrot.lane.b32.xlu0 %v1950, 64
        %v4096 = vpop.permute.xlu0 %4095
        %4097 = vrot.lane.b32.xlu0 %v1956, 64
        %v4098 = vpop.permute.xlu0 %4097
        %4099 = vrot.lane.b32.xlu0 %v1962, 64
        %v4100 = vpop.permute.xlu0 %4099
        %4105 = vrot.lane.b32.xlu0 %v1946, 64
        %v4106 = vpop.permute.xlu0 %4105
        %4107 = vrot.lane.b32.xlu0 %v1952, 64
        %v4108 = vpop.permute.xlu0 %4107
        %4109 = vrot.lane.b32.xlu0 %v1958, 64
        %v4110 = vpop.permute.xlu0 %4109
        %4111 = vrot.lane.b32.xlu0 %v1964, 64
        %v4112 = vpop.permute.xlu0 %4111
        %v4114 = vsel %vm1970, %v4094, 0
        %v4117 = vsel %vm1970, %v4096, 0
        %v4120 = vsel %vm1970, %v4098, 0
        %v4123 = vsel %vm1970, %v4100, 0
        %v4126 = vsel %vm1970, %v4106, 0
        %v4129 = vsel %vm1970, %v4108, 0
        %v4132 = vsel %vm1970, %v4110, 0
        %v4135 = vsel %vm1970, %v4112, 0
        %4137 = vmatprep.subr.bf16.mxu0 0
        %4138 = vmatpush1.bf16.xpose.msra.mxu0 0
        %4139 = vmatprep.subr.bf16.mxu0 0
        %4140 = vmatpush1.bf16.xpose.msra.mxu0 0
        %4141 = vmatprep.subr.bf16.mxu0 0
        %4142 = vmatpush1.bf16.xpose.msra.mxu0 0
        %4143 = vmatprep.subr.bf16.mxu0 0
        %4144 = vmatpush1.bf16.xpose.msra.mxu0 0
        %4145 = vmatprep.subr.bf16.mxu0 0
        %4146 = vmatpush1.bf16.xpose.msra.mxu0 %v4135
        %4147 = vmatprep.subr.bf16.mxu0 0
        %4148 = vmatpush1.bf16.xpose.msra.mxu0 %v4132
        %4149 = vmatprep.subr.bf16.mxu0 0
        %4150 = vmatpush1.bf16.xpose.msra.mxu0 %v4129
        %4151 = vmatprep.subr.bf16.mxu0 0
        %4152 = vmatpush1.bf16.xpose.msra.mxu0 %v4126
        %4153 = vmatprep.subr.bf16.mxu0 0
        %4154 = vmatpush2.bf16.xpose.msra.mxu0 0
        %4155 = vmatprep.subr.bf16.mxu0 0
        %4156 = vmatpush2.bf16.xpose.msra.mxu0 0
        %4157 = vmatprep.subr.bf16.mxu0 0
        %4158 = vmatpush2.bf16.xpose.msra.mxu0 0
        %4159 = vmatprep.subr.bf16.mxu0 0
        %4160 = vmatpush2.bf16.xpose.msra.mxu0 0
        %4161 = vmatprep.subr.bf16.mxu0 0
        %4162 = vmatpush2.bf16.xpose.msra.mxu0 0
        %4163 = vmatprep.subr.bf16.mxu0 0
        %4164 = vmatpush2.bf16.xpose.msra.mxu0 0
        %4165 = vmatprep.subr.bf16.mxu0 0
        %4166 = vmatpush2.bf16.xpose.msra.mxu0 0
        %4167 = vmatprep.subr.bf16.mxu0 0
        %4168 = vmatpush2.bf16.xpose.msra.mxu0 0
        %4169 = vmatprep.mubr.bf16.mxu0 0
        %4170 = vmatmul.mubr.bf16.gmra.mxu0 %v4114
        %v4171 = vpop.f32.mrf.mxu0
        %v4172 = vadd.f32 0.0, %v4171
        %v4173 = vpop.f32.mrf.mxu0
        %v4174 = vpop.f32.mrf.mxu0
        %v4175 = vadd.f32 0.0, %v4174
        %v4176 = vpop.f32.mrf.mxu0
        %4177 = vmatprep.mubr.bf16.mxu0 0
        %4178 = vmatmul.mubr.bf16.gmra.mxu0 %v4117
        %v4179 = vpop.f32.mrf.mxu0
        %v4180 = vadd.f32 0.0, %v4179
        %v4181 = vpop.f32.mrf.mxu0
        %v4182 = vpop.f32.mrf.mxu0
        %v4183 = vadd.f32 0.0, %v4182
        %v4184 = vpop.f32.mrf.mxu0
        %4185 = vmatprep.mubr.bf16.mxu0 0
        %4186 = vmatmul.mubr.bf16.gmra.mxu0 %v4120
        %v4187 = vpop.f32.mrf.mxu0
        %v4188 = vadd.f32 0.0, %v4187
        %v4189 = vpop.f32.mrf.mxu0
        %v4190 = vpop.f32.mrf.mxu0
        %v4191 = vadd.f32 0.0, %v4190
        %v4192 = vpop.f32.mrf.mxu0
        %4193 = vmatprep.mubr.bf16.mxu0 0
        %4194 = vmatmul.mubr.bf16.gmra.mxu0 %v4123
        %v4195 = vpop.f32.mrf.mxu0
        %v4196 = vadd.f32 0.0, %v4195
        %v4197 = vpop.f32.mrf.mxu0
        %v4198 = vpop.f32.mrf.mxu0
        %v4199 = vadd.f32 0.0, %v4198
        %v4200 = vpop.f32.mrf.mxu0
        %4201 = vdwg.mxu0
        %v4202 = vmul.f32 %v4172, 0.125
        %v4203 = vmul.f32 %v4175, 0.125
        %v4204 = vmul.f32 %v4180, 0.125
        %v4205 = vmul.f32 %v4183, 0.125
        %v4206 = vmul.f32 %v4188, 0.125
        %v4207 = vmul.f32 %v4191, 0.125
        %v4208 = vmul.f32 %v4196, 0.125
        %v4209 = vmul.f32 %v4199, 0.125
        %v4210 = vsel %vm1969, %v4202, -1e+30
        %v4211 = vsel %vm1969, %v4203, -1e+30
        %v4212 = vsel %vm1969, %v4204, -1e+30
        %v4213 = vsel %vm1969, %v4205, -1e+30
        %v4214 = vsel %vm1969, %v4206, -1e+30
        %v4215 = vsel %vm1969, %v4207, -1e+30
        %v4216 = vsel %vm1969, %v4208, -1e+30
        %v4217 = vsel %vm1969, %v4209, -1e+30
        %v4218 = vsel %vm1970, %v4210, -inf
        %4219 = vmax.xlane.f32.xlu0 %v4218
        %v4220 = vpop.xlane.xlu0 %4219
        %v4221 = vsel %vm1970, %v4211, -inf
        %4222 = vmax.xlane.f32.xlu0 %v4221
        %v4223 = vpop.xlane.xlu0 %4222
        %v4224 = vsel %vm1970, %v4212, -inf
        %4225 = vmax.xlane.f32.xlu0 %v4224
        %v4226 = vpop.xlane.xlu0 %4225
        %v4227 = vsel %vm1970, %v4213, -inf
        %4228 = vmax.xlane.f32.xlu0 %v4227
        %v4229 = vpop.xlane.xlu0 %4228
        %v4230 = vsel %vm1970, %v4214, -inf
        %4231 = vmax.xlane.f32.xlu0 %v4230
        %v4232 = vpop.xlane.xlu0 %4231
        %v4233 = vsel %vm1970, %v4215, -inf
        %4234 = vmax.xlane.f32.xlu0 %v4233
        %v4235 = vpop.xlane.xlu0 %4234
        %v4236 = vsel %vm1970, %v4216, -inf
        %4237 = vmax.xlane.f32.xlu0 %v4236
        %v4238 = vpop.xlane.xlu0 %4237
        %v4239 = vsel %vm1970, %v4217, -inf
        %4240 = vmax.xlane.f32.xlu0 %v4239
        %v4241 = vpop.xlane.xlu0 %4240
        %v4242 = vsub.f32 %v4210, %v4220
        %v4243 = vsub.f32 %v4211, %v4223
        %v4244 = vsub.f32 %v4212, %v4226
        %v4245 = vsub.f32 %v4213, %v4229
        %v4246 = vsub.f32 %v4214, %v4232
        %v4247 = vsub.f32 %v4215, %v4235
        %v4248 = vsub.f32 %v4216, %v4238
        %v4249 = vsub.f32 %v4217, %v4241
        %v4250 = vmul.f32 %v4242, 1.442695
        %v4251 = vpow.pop %v4250
        %v4252 = vmul.f32 %v4243, 1.442695
        %v4253 = vpow.pop %v4252
        %v4254 = vmul.f32 %v4244, 1.442695
        %v4255 = vpow.pop %v4254
        %v4256 = vmul.f32 %v4245, 1.442695
        %v4257 = vpow.pop %v4256
        %v4258 = vmul.f32 %v4246, 1.442695
        %v4259 = vpow.pop %v4258
        %v4260 = vmul.f32 %v4247, 1.442695
        %v4261 = vpow.pop %v4260
        %v4262 = vmul.f32 %v4248, 1.442695
        %v4263 = vpow.pop %v4262
        %v4264 = vmul.f32 %v4249, 1.442695
        %v4265 = vpow.pop %v4264
        %v4266 = vsel %vm1970, %v4251, 0.0
        %4267 = vadd.xlane.f32.xlu0 %v4266
        %v4268 = vpop.xlane.xlu0 %4267
        %v4269 = vsel %vm1970, %v4253, 0.0
        %4270 = vadd.xlane.f32.xlu0 %v4269
        %v4271 = vpop.xlane.xlu0 %4270
        %v4272 = vsel %vm1970, %v4255, 0.0
        %4273 = vadd.xlane.f32.xlu0 %v4272
        %v4274 = vpop.xlane.xlu0 %4273
        %v4275 = vsel %vm1970, %v4257, 0.0
        %4276 = vadd.xlane.f32.xlu0 %v4275
        %v4277 = vpop.xlane.xlu0 %4276
        %v4278 = vsel %vm1970, %v4259, 0.0
        %4279 = vadd.xlane.f32.xlu0 %v4278
        %v4280 = vpop.xlane.xlu0 %4279
        %v4281 = vsel %vm1970, %v4261, 0.0
        %4282 = vadd.xlane.f32.xlu0 %v4281
        %v4283 = vpop.xlane.xlu0 %4282
        %v4284 = vsel %vm1970, %v4263, 0.0
        %4285 = vadd.xlane.f32.xlu0 %v4284
        %v4286 = vpop.xlane.xlu0 %4285
        %v4287 = vsel %vm1970, %v4265, 0.0
        %4288 = vadd.xlane.f32.xlu0 %v4287
        %v4289 = vpop.xlane.xlu0 %4288
        %v4290 = vrcp.pop %v4268
        %v4291 = vmul.f32 %v4251, %v4290
        %v4292 = vrcp.pop %v4271
        %v4293 = vmul.f32 %v4253, %v4292
        %v4294 = vrcp.pop %v4274
        %v4295 = vmul.f32 %v4255, %v4294
        %v4296 = vrcp.pop %v4277
        %v4297 = vmul.f32 %v4257, %v4296
        %v4298 = vrcp.pop %v4280
        %v4299 = vmul.f32 %v4259, %v4298
        %v4300 = vrcp.pop %v4283
        %v4301 = vmul.f32 %v4261, %v4300
        %v4302 = vrcp.pop %v4286
        %v4303 = vmul.f32 %v4263, %v4302
        %v4304 = vrcp.pop %v4289
        %v4305 = vmul.f32 %v4265, %v4304
        %v4306 = vpack.c.bf16 %v4293, %v4291
        %v4307 = vpack.c.bf16 %v4297, %v4295
        %v4308 = vpack.c.bf16 %v4301, %v4299
        %v4309 = vpack.c.bf16 %v4305, %v4303
        %4314 = vrot.lane.b32.xlu0 %v1948, 64
        %v4315 = vpop.permute.xlu0 %4314
        %4316 = vrot.lane.b32.xlu0 %v1954, 64
        %v4317 = vpop.permute.xlu0 %4316
        %4318 = vrot.lane.b32.xlu0 %v1960, 64
        %v4319 = vpop.permute.xlu0 %4318
        %4320 = vrot.lane.b32.xlu0 %v1966, 64
        %v4321 = vpop.permute.xlu0 %4320
        %v4327 = vsel %vm1970, %v4306, 0
        %v4330 = vsel %vm1970, %v4307, 0
        %v4333 = vsel %vm1970, %v4308, 0
        %v4336 = vsel %vm1970, %v4309, 0
        %4338 = vmatprep.subr.bf16.mxu0 0
        %4339 = vmatpush1.bf16.msra.mxu0 0
        %4340 = vmatprep.subr.bf16.mxu0 0
        %4341 = vmatpush1.bf16.msra.mxu0 0
        %4342 = vmatprep.subr.bf16.mxu0 0
        %4343 = vmatpush1.bf16.msra.mxu0 0
        %4344 = vmatprep.subr.bf16.mxu0 0
        %4345 = vmatpush1.bf16.msra.mxu0 0
        %4346 = vmatprep.subr.bf16.mxu0 0
        %4347 = vmatpush1.bf16.msra.mxu0 %v4321
        %4348 = vmatprep.subr.bf16.mxu0 0
        %4349 = vmatpush1.bf16.msra.mxu0 %v4319
        %4350 = vmatprep.subr.bf16.mxu0 0
        %4351 = vmatpush1.bf16.msra.mxu0 %v4317
        %4352 = vmatprep.subr.bf16.mxu0 0
        %4353 = vmatpush1.bf16.msra.mxu0 %v4315
        %4354 = vmatprep.subr.bf16.mxu0 0
        %4355 = vmatpush2.bf16.msra.mxu0 0
        %4356 = vmatprep.subr.bf16.mxu0 0
        %4357 = vmatpush2.bf16.msra.mxu0 0
        %4358 = vmatprep.subr.bf16.mxu0 0
        %4359 = vmatpush2.bf16.msra.mxu0 0
        %4360 = vmatprep.subr.bf16.mxu0 0
        %4361 = vmatpush2.bf16.msra.mxu0 0
        %4362 = vmatprep.subr.bf16.mxu0 0
        %4363 = vmatpush2.bf16.msra.mxu0 0
        %4364 = vmatprep.subr.bf16.mxu0 0
        %4365 = vmatpush2.bf16.msra.mxu0 0
        %4366 = vmatprep.subr.bf16.mxu0 0
        %4367 = vmatpush2.bf16.msra.mxu0 0
        %4368 = vmatprep.subr.bf16.mxu0 0
        %4369 = vmatpush2.bf16.msra.mxu0 0
        %4370 = vmatprep.mubr.bf16.mxu0 0
        %4371 = vmatmul.mubr.bf16.gmra.mxu0 %v4327
        %v4372 = vpop.f32.mrf.mxu0
        %v4373 = vadd.f32 0.0, %v4372
        %v4374 = vpop.f32.mrf.mxu0
        %v4375 = vpop.f32.mrf.mxu0
        %v4376 = vadd.f32 0.0, %v4375
        %v4377 = vpop.f32.mrf.mxu0
        %4378 = vmatprep.mubr.bf16.mxu0 0
        %4379 = vmatmul.mubr.bf16.gmra.mxu0 %v4330
        %v4380 = vpop.f32.mrf.mxu0
        %v4381 = vadd.f32 0.0, %v4380
        %v4382 = vpop.f32.mrf.mxu0
        %v4383 = vpop.f32.mrf.mxu0
        %v4384 = vadd.f32 0.0, %v4383
        %v4385 = vpop.f32.mrf.mxu0
        %4386 = vmatprep.mubr.bf16.mxu0 0
        %4387 = vmatmul.mubr.bf16.gmra.mxu0 %v4333
        %v4388 = vpop.f32.mrf.mxu0
        %v4389 = vadd.f32 0.0, %v4388
        %v4390 = vpop.f32.mrf.mxu0
        %v4391 = vpop.f32.mrf.mxu0
        %v4392 = vadd.f32 0.0, %v4391
        %v4393 = vpop.f32.mrf.mxu0
        %4394 = vmatprep.mubr.bf16.mxu0 0
        %4395 = vmatmul.mubr.bf16.gmra.mxu0 %v4336
        %v4396 = vpop.f32.mrf.mxu0
        %v4397 = vadd.f32 0.0, %v4396
        %v4398 = vpop.f32.mrf.mxu0
        %v4399 = vpop.f32.mrf.mxu0
        %v4400 = vadd.f32 0.0, %v4399
        %v4401 = vpop.f32.mrf.mxu0
        %4402 = vdwg.mxu0
        %4411 = vrot.lane.b32.xlu0 %v3785, 64
        %v4412 = vpop.permute.xlu0 %4411
        %4413 = vrot.lane.b32.xlu0 %v3788, 64
        %v4414 = vpop.permute.xlu0 %4413
        %4415 = vrot.lane.b32.xlu0 %v3793, 64
        %v4416 = vpop.permute.xlu0 %4415
        %4417 = vrot.lane.b32.xlu0 %v3796, 64
        %v4418 = vpop.permute.xlu0 %4417
        %4419 = vrot.lane.b32.xlu0 %v3801, 64
        %v4420 = vpop.permute.xlu0 %4419
        %4421 = vrot.lane.b32.xlu0 %v3804, 64
        %v4422 = vpop.permute.xlu0 %4421
        %4423 = vrot.lane.b32.xlu0 %v3809, 64
        %v4424 = vpop.permute.xlu0 %4423
        %4425 = vrot.lane.b32.xlu0 %v3812, 64
        %v4426 = vpop.permute.xlu0 %4425
        %4443 = vrot.lane.b32.xlu0 %v4373, 64
        %v4444 = vpop.permute.xlu0 %4443
        %4445 = vrot.lane.b32.xlu0 %v4376, 64
        %v4446 = vpop.permute.xlu0 %4445
        %4447 = vrot.lane.b32.xlu0 %v4381, 64
        %v4448 = vpop.permute.xlu0 %4447
        %4449 = vrot.lane.b32.xlu0 %v4384, 64
        %v4450 = vpop.permute.xlu0 %4449
        %4451 = vrot.lane.b32.xlu0 %v4389, 64
        %v4452 = vpop.permute.xlu0 %4451
        %4453 = vrot.lane.b32.xlu0 %v4392, 64
        %v4454 = vpop.permute.xlu0 %4453
        %4455 = vrot.lane.b32.xlu0 %v4397, 64
        %v4456 = vpop.permute.xlu0 %4455
        %4457 = vrot.lane.b32.xlu0 %v4400, 64
        %v4458 = vpop.permute.xlu0 %4457
        %v4467 = vsel %vm1970, %v3471, %v4412
        %v4468 = vsel %vm1970, %v3474, %v4414
        %v4469 = vsel %vm1970, %v3479, %v4416
        %v4470 = vsel %vm1970, %v3482, %v4418
        %v4471 = vsel %vm1970, %v3487, %v4420
        %v4472 = vsel %vm1970, %v3490, %v4422
        %v4473 = vsel %vm1970, %v3495, %v4424
        %v4474 = vsel %vm1970, %v3498, %v4426
        %v4475 = vsel %vm1970, %v4059, %v4444
        %v4476 = vsel %vm1970, %v4062, %v4446
        %v4477 = vsel %vm1970, %v4067, %v4448
        %v4478 = vsel %vm1970, %v4070, %v4450
        %v4479 = vsel %vm1970, %v4075, %v4452
        %v4480 = vsel %vm1970, %v4078, %v4454
        %v4481 = vsel %vm1970, %v4083, %v4456
        %v4482 = vsel %vm1970, %v4086, %v4458
        %v4483 = vpack.c.bf16 %v3212, %v3211
        %v4484 = vpack.c.bf16 %v3220, %v3219
        %v4485 = vpack.c.bf16 %v3214, %v3213
        %v4486 = vpack.c.bf16 %v3222, %v3221
        %v4487 = vpack.c.bf16 %v3216, %v3215
        %v4488 = vpack.c.bf16 %v3224, %v3223
        %v4489 = vpack.c.bf16 %v3218, %v3217
        %v4490 = vpack.c.bf16 %v3226, %v3225
        %v4491 = vpack.c.bf16 %v4468, %v4467
        %v4492 = vpack.c.bf16 %v4476, %v4475
        %v4493 = vpack.c.bf16 %v4470, %v4469
        %v4494 = vpack.c.bf16 %v4478, %v4477
        %v4495 = vpack.c.bf16 %v4472, %v4471
        %v4496 = vpack.c.bf16 %v4480, %v4479
        %v4497 = vpack.c.bf16 %v4474, %v4473
        %v4498 = vpack.c.bf16 %v4482, %v4481
        %v4499 = vld [vmem:[%s681] sm:$0xff]
        %v4500 = vld [vmem:[%s681 + $0x8] sm:$0xff]
        %v4501 = vld [vmem:[%s681 + $0x10] sm:$0xff]
        %v4502 = vld [vmem:[%s681 + $0x18] sm:$0xff]
        %v4503 = vld [vmem:[%s681 + $0x20] sm:$0xff]
        %v4504 = vld [vmem:[%s681 + $0x28] sm:$0xff]
        %v4505 = vld [vmem:[%s681 + $0x30] sm:$0xff]
        %v4506 = vld [vmem:[%s681 + $0x38] sm:$0xff]
        %v4507 = vld [vmem:[%s681 + $0x40] sm:$0xff]
        %v4508 = vld [vmem:[%s681 + $0x48] sm:$0xff]
        %v4509 = vld [vmem:[%s681 + $0x50] sm:$0xff]
        %v4510 = vld [vmem:[%s681 + $0x58] sm:$0xff]
        %v4511 = vld [vmem:[%s681 + $0x60] sm:$0xff]
        %v4512 = vld [vmem:[%s681 + $0x68] sm:$0xff]
        %v4513 = vld [vmem:[%s681 + $0x70] sm:$0xff]
        %v4514 = vld [vmem:[%s681 + $0x78] sm:$0xff]
        %v4515 = vld [vmem:[%s681 + $0x80] sm:$0xff]
        %v4516 = vld [vmem:[%s681 + $0x88] sm:$0xff]
        %v4517 = vld [vmem:[%s681 + $0x90] sm:$0xff]
        %v4518 = vld [vmem:[%s681 + $0x98] sm:$0xff]
        %v4519 = vld [vmem:[%s681 + $0xa0] sm:$0xff]
        %v4520 = vld [vmem:[%s681 + $0xa8] sm:$0xff]
        %v4521 = vld [vmem:[%s681 + $0xb0] sm:$0xff]
        %v4522 = vld [vmem:[%s681 + $0xb8] sm:$0xff]
        %v4523 = vld [vmem:[%s681 + $0xc0] sm:$0xff]
        %v4524 = vld [vmem:[%s681 + $0xc8] sm:$0xff]
        %v4525 = vld [vmem:[%s681 + $0xd0] sm:$0xff]
        %v4526 = vld [vmem:[%s681 + $0xd8] sm:$0xff]
        %v4527 = vld [vmem:[%s681 + $0xe0] sm:$0xff]
        %v4528 = vld [vmem:[%s681 + $0xe8] sm:$0xff]
        %v4529 = vld [vmem:[%s681 + $0xf0] sm:$0xff]
        %v4530 = vld [vmem:[%s681 + $0xf8] sm:$0xff]
        %v4531 = vld [vmem:[%s690] sm:$0x3]
        %v4533 = vlaneseq
        %v4534 = vshrl.u32 %v4533, 7
        %v4535 = vsub.s32 0, %v4534
        %v4536 = vrot.slane %v4531, %v4535
        %v4537 = vlaneseq
        %v4538 = vshrl.u32 %v4537, 7
        %v4539 = vsub.s32 1, %v4538
        %v4540 = vrot.slane %v4531, %v4539
        %v4575 = vunpack.c.l.b16 %v4499
        %v4576 = vunpack.c.h.b16 %v4499
        %v4577 = vunpack.c.l.b16 %v4500
        %v4578 = vunpack.c.h.b16 %v4500
        %v4579 = vunpack.c.l.b16 %v4501
        %v4580 = vunpack.c.h.b16 %v4501
        %v4581 = vunpack.c.l.b16 %v4502
        %v4582 = vunpack.c.h.b16 %v4502
        %v4583 = vunpack.c.l.b16 %v4503
        %v4584 = vunpack.c.h.b16 %v4503
        %v4585 = vunpack.c.l.b16 %v4504
        %v4586 = vunpack.c.h.b16 %v4504
        %v4587 = vunpack.c.l.b16 %v4505
        %v4588 = vunpack.c.h.b16 %v4505
        %v4589 = vunpack.c.l.b16 %v4506
        %v4590 = vunpack.c.h.b16 %v4506
        %v4591 = vunpack.c.l.b16 %v4507
        %v4592 = vunpack.c.h.b16 %v4507
        %v4593 = vunpack.c.l.b16 %v4508
        %v4594 = vunpack.c.h.b16 %v4508
        %v4595 = vunpack.c.l.b16 %v4509
        %v4596 = vunpack.c.h.b16 %v4509
        %v4597 = vunpack.c.l.b16 %v4510
        %v4598 = vunpack.c.h.b16 %v4510
        %v4599 = vunpack.c.l.b16 %v4511
        %v4600 = vunpack.c.h.b16 %v4511
        %v4601 = vunpack.c.l.b16 %v4512
        %v4602 = vunpack.c.h.b16 %v4512
        %v4603 = vunpack.c.l.b16 %v4513
        %v4604 = vunpack.c.h.b16 %v4513
        %v4605 = vunpack.c.l.b16 %v4514
        %v4606 = vunpack.c.h.b16 %v4514
        %v4607 = vunpack.c.l.b16 %v4515
        %v4608 = vunpack.c.h.b16 %v4515
        %v4609 = vunpack.c.l.b16 %v4516
        %v4610 = vunpack.c.h.b16 %v4516
        %v4611 = vunpack.c.l.b16 %v4517
        %v4612 = vunpack.c.h.b16 %v4517
        %v4613 = vunpack.c.l.b16 %v4518
        %v4614 = vunpack.c.h.b16 %v4518
        %v4615 = vunpack.c.l.b16 %v4519
        %v4616 = vunpack.c.h.b16 %v4519
        %v4617 = vunpack.c.l.b16 %v4520
        %v4618 = vunpack.c.h.b16 %v4520
        %v4619 = vunpack.c.l.b16 %v4521
        %v4620 = vunpack.c.h.b16 %v4521
        %v4621 = vunpack.c.l.b16 %v4522
        %v4622 = vunpack.c.h.b16 %v4522
        %v4623 = vunpack.c.l.b16 %v4523
        %v4624 = vunpack.c.h.b16 %v4523
        %v4625 = vunpack.c.l.b16 %v4524
        %v4626 = vunpack.c.h.b16 %v4524
        %v4627 = vunpack.c.l.b16 %v4525
        %v4628 = vunpack.c.h.b16 %v4525
        %v4629 = vunpack.c.l.b16 %v4526
        %v4630 = vunpack.c.h.b16 %v4526
        %v4631 = vunpack.c.l.b16 %v4527
        %v4632 = vunpack.c.h.b16 %v4527
        %v4633 = vunpack.c.l.b16 %v4528
        %v4634 = vunpack.c.h.b16 %v4528
        %v4635 = vunpack.c.l.b16 %v4529
        %v4636 = vunpack.c.h.b16 %v4529
        %v4637 = vunpack.c.l.b16 %v4530
        %v4638 = vunpack.c.h.b16 %v4530
        %v4639 = vpack.c.b16 %v4577, %v4575
        %v4640 = vpack.c.b16 %v4578, %v4576
        %v4641 = vpack.c.b16 %v4581, %v4579
        %v4642 = vpack.c.b16 %v4582, %v4580
        %v4643 = vpack.c.b16 %v4585, %v4583
        %v4644 = vpack.c.b16 %v4586, %v4584
        %v4645 = vpack.c.b16 %v4589, %v4587
        %v4646 = vpack.c.b16 %v4590, %v4588
        %v4647 = vpack.c.b16 %v4593, %v4591
        %v4648 = vpack.c.b16 %v4594, %v4592
        %v4649 = vpack.c.b16 %v4597, %v4595
        %v4650 = vpack.c.b16 %v4598, %v4596
        %v4651 = vpack.c.b16 %v4601, %v4599
        %v4652 = vpack.c.b16 %v4602, %v4600
        %v4653 = vpack.c.b16 %v4605, %v4603
        %v4654 = vpack.c.b16 %v4606, %v4604
        %v4655 = vpack.c.b16 %v4609, %v4607
        %v4656 = vpack.c.b16 %v4610, %v4608
        %v4657 = vpack.c.b16 %v4613, %v4611
        %v4658 = vpack.c.b16 %v4614, %v4612
        %v4659 = vpack.c.b16 %v4617, %v4615
        %v4660 = vpack.c.b16 %v4618, %v4616
        %v4661 = vpack.c.b16 %v4621, %v4619
        %v4662 = vpack.c.b16 %v4622, %v4620
        %v4663 = vpack.c.b16 %v4625, %v4623
        %v4664 = vpack.c.b16 %v4626, %v4624
        %v4665 = vpack.c.b16 %v4629, %v4627
        %v4666 = vpack.c.b16 %v4630, %v4628
        %v4667 = vpack.c.b16 %v4633, %v4631
        %v4668 = vpack.c.b16 %v4634, %v4632
        %v4669 = vpack.c.b16 %v4637, %v4635
        %v4670 = vpack.c.b16 %v4638, %v4636
        %4703 = vmatprep.subr.bf16.mxu0 %v4654
        %4704 = vmatpush1.bf16.msra.mxu0 %v4653
        %4705 = vmatprep.subr.bf16.mxu0 %v4652
        %4706 = vmatpush1.bf16.msra.mxu0 %v4651
        %4707 = vmatprep.subr.bf16.mxu0 %v4650
        %4708 = vmatpush1.bf16.msra.mxu0 %v4649
        %4709 = vmatprep.subr.bf16.mxu0 %v4648
        %4710 = vmatpush1.bf16.msra.mxu0 %v4647
        %4711 = vmatprep.subr.bf16.mxu0 %v4646
        %4712 = vmatpush1.bf16.msra.mxu0 %v4645
        %4713 = vmatprep.subr.bf16.mxu0 %v4644
        %4714 = vmatpush1.bf16.msra.mxu0 %v4643
        %4715 = vmatprep.subr.bf16.mxu0 %v4642
        %4716 = vmatpush1.bf16.msra.mxu0 %v4641
        %4717 = vmatprep.subr.bf16.mxu0 %v4640
        %4718 = vmatpush1.bf16.msra.mxu0 %v4639
        %4719 = vmatprep.subr.bf16.mxu0 %v4670
        %4720 = vmatpush2.bf16.msra.mxu0 %v4669
        %4721 = vmatprep.subr.bf16.mxu0 %v4668
        %4722 = vmatpush2.bf16.msra.mxu0 %v4667
        %4723 = vmatprep.subr.bf16.mxu0 %v4666
        %4724 = vmatpush2.bf16.msra.mxu0 %v4665
        %4725 = vmatprep.subr.bf16.mxu0 %v4664
        %4726 = vmatpush2.bf16.msra.mxu0 %v4663
        %4727 = vmatprep.subr.bf16.mxu0 %v4662
        %4728 = vmatpush2.bf16.msra.mxu0 %v4661
        %4729 = vmatprep.subr.bf16.mxu0 %v4660
        %4730 = vmatpush2.bf16.msra.mxu0 %v4659
        %4731 = vmatprep.subr.bf16.mxu0 %v4658
        %4732 = vmatpush2.bf16.msra.mxu0 %v4657
        %4733 = vmatprep.subr.bf16.mxu0 %v4656
        %4734 = vmatpush2.bf16.msra.mxu0 %v4655
        %4735 = vmatprep.mubr.bf16.mxu0 %v4484
        %4736 = vmatmul.mubr.bf16.gmra.mxu0 %v4483
        %v4737 = vpop.f32.mrf.mxu0
        %v4738 = vadd.f32 %v4536, %v4737
        %v4739 = vpop.f32.mrf.mxu0
        %v4740 = vadd.f32 %v4540, %v4739
        %v4741 = vpop.f32.mrf.mxu0
        %v4742 = vadd.f32 %v4536, %v4741
        %v4743 = vpop.f32.mrf.mxu0
        %v4744 = vadd.f32 %v4540, %v4743
        %4745 = vmatprep.mubr.bf16.mxu0 %v4486
        %4746 = vmatmul.mubr.bf16.gmra.mxu0 %v4485
        %v4747 = vpop.f32.mrf.mxu0
        %v4748 = vadd.f32 %v4536, %v4747
        %v4749 = vpop.f32.mrf.mxu0
        %v4750 = vadd.f32 %v4540, %v4749
        %v4751 = vpop.f32.mrf.mxu0
        %v4752 = vadd.f32 %v4536, %v4751
        %v4753 = vpop.f32.mrf.mxu0
        %v4754 = vadd.f32 %v4540, %v4753
        %4755 = vmatprep.mubr.bf16.mxu0 %v4488
        %4756 = vmatmul.mubr.bf16.gmra.mxu0 %v4487
        %v4757 = vpop.f32.mrf.mxu0
        %v4758 = vadd.f32 %v4536, %v4757
        %v4759 = vpop.f32.mrf.mxu0
        %v4760 = vadd.f32 %v4540, %v4759
        %v4761 = vpop.f32.mrf.mxu0
        %v4762 = vadd.f32 %v4536, %v4761
        %v4763 = vpop.f32.mrf.mxu0
        %v4764 = vadd.f32 %v4540, %v4763
        %4765 = vmatprep.mubr.bf16.mxu0 %v4490
        %4766 = vmatmul.mubr.bf16.gmra.mxu0 %v4489
        %v4767 = vpop.f32.mrf.mxu0
        %v4768 = vadd.f32 %v4536, %v4767
        %v4769 = vpop.f32.mrf.mxu0
        %v4770 = vadd.f32 %v4540, %v4769
        %v4771 = vpop.f32.mrf.mxu0
        %v4772 = vadd.f32 %v4536, %v4771
        %v4773 = vpop.f32.mrf.mxu0
        %v4774 = vadd.f32 %v4540, %v4773
        %4775 = vmatprep.mubr.bf16.mxu0 %v4492
        %4776 = vmatmul.mubr.bf16.gmra.mxu0 %v4491
        %v4777 = vpop.f32.mrf.mxu0
        %v4778 = vadd.f32 %v4536, %v4777
        %v4779 = vpop.f32.mrf.mxu0
        %v4780 = vadd.f32 %v4540, %v4779
        %v4781 = vpop.f32.mrf.mxu0
        %v4782 = vadd.f32 %v4536, %v4781
        %v4783 = vpop.f32.mrf.mxu0
        %v4784 = vadd.f32 %v4540, %v4783
        %4785 = vmatprep.mubr.bf16.mxu0 %v4494
        %4786 = vmatmul.mubr.bf16.gmra.mxu0 %v4493
        %v4787 = vpop.f32.mrf.mxu0
        %v4788 = vadd.f32 %v4536, %v4787
        %v4789 = vpop.f32.mrf.mxu0
        %v4790 = vadd.f32 %v4540, %v4789
        %v4791 = vpop.f32.mrf.mxu0
        %v4792 = vadd.f32 %v4536, %v4791
        %v4793 = vpop.f32.mrf.mxu0
        %v4794 = vadd.f32 %v4540, %v4793
        %4795 = vmatprep.mubr.bf16.mxu0 %v4496
        %4796 = vmatmul.mubr.bf16.gmra.mxu0 %v4495
        %v4797 = vpop.f32.mrf.mxu0
        %v4798 = vadd.f32 %v4536, %v4797
        %v4799 = vpop.f32.mrf.mxu0
        %v4800 = vadd.f32 %v4540, %v4799
        %v4801 = vpop.f32.mrf.mxu0
        %v4802 = vadd.f32 %v4536, %v4801
        %v4803 = vpop.f32.mrf.mxu0
        %v4804 = vadd.f32 %v4540, %v4803
        %4805 = vmatprep.mubr.bf16.mxu0 %v4498
        %4806 = vmatmul.mubr.bf16.gmra.mxu0 %v4497
        %v4807 = vpop.f32.mrf.mxu0
        %v4808 = vadd.f32 %v4536, %v4807
        %v4809 = vpop.f32.mrf.mxu0
        %v4810 = vadd.f32 %v4540, %v4809
        %v4811 = vpop.f32.mrf.mxu0
        %v4812 = vadd.f32 %v4536, %v4811
        %v4813 = vpop.f32.mrf.mxu0
        %v4814 = vadd.f32 %v4540, %v4813
        %4815 = vdwg.mxu0
        %v4816 = vadd.f32 %v4738, %v924
        %v4817 = vadd.f32 %v4740, %v925
        %v4818 = vadd.f32 %v4742, %v926
        %v4819 = vadd.f32 %v4744, %v927
        %v4820 = vadd.f32 %v4748, %v928
        %v4821 = vadd.f32 %v4750, %v929
        %v4822 = vadd.f32 %v4752, %v930
        %v4823 = vadd.f32 %v4754, %v931
        %v4824 = vadd.f32 %v4758, %v932
        %v4825 = vadd.f32 %v4760, %v933
        %v4826 = vadd.f32 %v4762, %v934
        %v4827 = vadd.f32 %v4764, %v935
        %v4828 = vadd.f32 %v4768, %v936
        %v4829 = vadd.f32 %v4770, %v937
        %v4830 = vadd.f32 %v4772, %v938
        %v4831 = vadd.f32 %v4774, %v939
        %v4832 = vadd.f32 %v4778, %v940
        %v4833 = vadd.f32 %v4780, %v941
        %v4834 = vadd.f32 %v4782, %v942
        %v4835 = vadd.f32 %v4784, %v943
        %v4836 = vadd.f32 %v4788, %v944
        %v4837 = vadd.f32 %v4790, %v945
        %v4838 = vadd.f32 %v4792, %v946
        %v4839 = vadd.f32 %v4794, %v947
        %v4840 = vadd.f32 %v4798, %v948
        %v4841 = vadd.f32 %v4800, %v949
        %v4842 = vadd.f32 %v4802, %v950
        %v4843 = vadd.f32 %v4804, %v951
        %v4844 = vadd.f32 %v4808, %v952
        %v4845 = vadd.f32 %v4810, %v953
        %v4846 = vadd.f32 %v4812, %v954
        %v4847 = vadd.f32 %v4814, %v955
        %v4848 = vld [vmem:[%s699] sm:$0x3]
        %v4849 = vld [vmem:[%s708] sm:$0x3]
        %v4850 = vadd.f32 %v4816, %v4817
        %4851 = vadd.xlane.f32.xlu0 %v4850
        %v4852 = vpop.xlane.xlu0 %4851
        %v4853 = vadd.f32 %v4818, %v4819
        %4854 = vadd.xlane.f32.xlu0 %v4853
        %v4855 = vpop.xlane.xlu0 %4854
        %v4856 = vadd.f32 %v4820, %v4821
        %4857 = vadd.xlane.f32.xlu0 %v4856
        %v4858 = vpop.xlane.xlu0 %4857
        %v4859 = vadd.f32 %v4822, %v4823
        %4860 = vadd.xlane.f32.xlu0 %v4859
        %v4861 = vpop.xlane.xlu0 %4860
        %v4862 = vadd.f32 %v4824, %v4825
        %4863 = vadd.xlane.f32.xlu0 %v4862
        %v4864 = vpop.xlane.xlu0 %4863
        %v4865 = vadd.f32 %v4826, %v4827
        %4866 = vadd.xlane.f32.xlu0 %v4865
        %v4867 = vpop.xlane.xlu0 %4866
        %v4868 = vadd.f32 %v4828, %v4829
        %4869 = vadd.xlane.f32.xlu0 %v4868
        %v4870 = vpop.xlane.xlu0 %4869
        %v4871 = vadd.f32 %v4830, %v4831
        %4872 = vadd.xlane.f32.xlu0 %v4871
        %v4873 = vpop.xlane.xlu0 %4872
        %v4874 = vadd.f32 %v4832, %v4833
        %4875 = vadd.xlane.f32.xlu0 %v4874
        %v4876 = vpop.xlane.xlu0 %4875
        %v4877 = vadd.f32 %v4834, %v4835
        %4878 = vadd.xlane.f32.xlu0 %v4877
        %v4879 = vpop.xlane.xlu0 %4878
        %v4880 = vadd.f32 %v4836, %v4837
        %4881 = vadd.xlane.f32.xlu0 %v4880
        %v4882 = vpop.xlane.xlu0 %4881
        %v4883 = vadd.f32 %v4838, %v4839
        %4884 = vadd.xlane.f32.xlu0 %v4883
        %v4885 = vpop.xlane.xlu0 %4884
        %v4886 = vadd.f32 %v4840, %v4841
        %4887 = vadd.xlane.f32.xlu0 %v4886
        %v4888 = vpop.xlane.xlu0 %4887
        %v4889 = vadd.f32 %v4842, %v4843
        %4890 = vadd.xlane.f32.xlu0 %v4889
        %v4891 = vpop.xlane.xlu0 %4890
        %v4892 = vadd.f32 %v4844, %v4845
        %4893 = vadd.xlane.f32.xlu0 %v4892
        %v4894 = vpop.xlane.xlu0 %4893
        %v4895 = vadd.f32 %v4846, %v4847
        %4896 = vadd.xlane.f32.xlu0 %v4895
        %v4897 = vpop.xlane.xlu0 %4896
        %v4898 = vrcp.pop 256.0
        %v4899 = vmul.f32 %v4852, %v4898
        %v4900 = vmul.f32 %v4855, %v4898
        %v4901 = vmul.f32 %v4858, %v4898
        %v4902 = vmul.f32 %v4861, %v4898
        %v4903 = vmul.f32 %v4864, %v4898
        %v4904 = vmul.f32 %v4867, %v4898
        %v4905 = vmul.f32 %v4870, %v4898
        %v4906 = vmul.f32 %v4873, %v4898
        %v4907 = vmul.f32 %v4876, %v4898
        %v4908 = vmul.f32 %v4879, %v4898
        %v4909 = vmul.f32 %v4882, %v4898
        %v4910 = vmul.f32 %v4885, %v4898
        %v4911 = vmul.f32 %v4888, %v4898
        %v4912 = vmul.f32 %v4891, %v4898
        %v4913 = vmul.f32 %v4894, %v4898
        %v4914 = vmul.f32 %v4897, %v4898
        %v4915 = vsub.f32 %v4816, %v4899
        %v4916 = vsub.f32 %v4817, %v4899
        %v4917 = vsub.f32 %v4818, %v4900
        %v4918 = vsub.f32 %v4819, %v4900
        %v4919 = vsub.f32 %v4820, %v4901
        %v4920 = vsub.f32 %v4821, %v4901
        %v4921 = vsub.f32 %v4822, %v4902
        %v4922 = vsub.f32 %v4823, %v4902
        %v4923 = vsub.f32 %v4824, %v4903
        %v4924 = vsub.f32 %v4825, %v4903
        %v4925 = vsub.f32 %v4826, %v4904
        %v4926 = vsub.f32 %v4827, %v4904
        %v4927 = vsub.f32 %v4828, %v4905
        %v4928 = vsub.f32 %v4829, %v4905
        %v4929 = vsub.f32 %v4830, %v4906
        %v4930 = vsub.f32 %v4831, %v4906
        %v4931 = vsub.f32 %v4832, %v4907
        %v4932 = vsub.f32 %v4833, %v4907
        %v4933 = vsub.f32 %v4834, %v4908
        %v4934 = vsub.f32 %v4835, %v4908
        %v4935 = vsub.f32 %v4836, %v4909
        %v4936 = vsub.f32 %v4837, %v4909
        %v4937 = vsub.f32 %v4838, %v4910
        %v4938 = vsub.f32 %v4839, %v4910
        %v4939 = vsub.f32 %v4840, %v4911
        %v4940 = vsub.f32 %v4841, %v4911
        %v4941 = vsub.f32 %v4842, %v4912
        %v4942 = vsub.f32 %v4843, %v4912
        %v4943 = vsub.f32 %v4844, %v4913
        %v4944 = vsub.f32 %v4845, %v4913
        %v4945 = vsub.f32 %v4846, %v4914
        %v4946 = vsub.f32 %v4847, %v4914
        %v4947 = vmul.f32 %v4915, %v4915
        %v4948 = vmul.f32 %v4916, %v4916
        %v4949 = vmul.f32 %v4917, %v4917
        %v4950 = vmul.f32 %v4918, %v4918
        %v4951 = vmul.f32 %v4919, %v4919
        %v4952 = vmul.f32 %v4920, %v4920
        %v4953 = vmul.f32 %v4921, %v4921
        %v4954 = vmul.f32 %v4922, %v4922
        %v4955 = vmul.f32 %v4923, %v4923
        %v4956 = vmul.f32 %v4924, %v4924
        %v4957 = vmul.f32 %v4925, %v4925
        %v4958 = vmul.f32 %v4926, %v4926
        %v4959 = vmul.f32 %v4927, %v4927
        %v4960 = vmul.f32 %v4928, %v4928
        %v4961 = vmul.f32 %v4929, %v4929
        %v4962 = vmul.f32 %v4930, %v4930
        %v4963 = vmul.f32 %v4931, %v4931
        %v4964 = vmul.f32 %v4932, %v4932
        %v4965 = vmul.f32 %v4933, %v4933
        %v4966 = vmul.f32 %v4934, %v4934
        %v4967 = vmul.f32 %v4935, %v4935
        %v4968 = vmul.f32 %v4936, %v4936
        %v4969 = vmul.f32 %v4937, %v4937
        %v4970 = vmul.f32 %v4938, %v4938
        %v4971 = vmul.f32 %v4939, %v4939
        %v4972 = vmul.f32 %v4940, %v4940
        %v4973 = vmul.f32 %v4941, %v4941
        %v4974 = vmul.f32 %v4942, %v4942
        %v4975 = vmul.f32 %v4943, %v4943
        %v4976 = vmul.f32 %v4944, %v4944
        %v4977 = vmul.f32 %v4945, %v4945
        %v4978 = vmul.f32 %v4946, %v4946
        %v4979 = vadd.f32 %v4947, %v4948
        %4980 = vadd.xlane.f32.xlu0 %v4979
        %v4981 = vpop.xlane.xlu0 %4980
        %v4982 = vadd.f32 %v4949, %v4950
        %4983 = vadd.xlane.f32.xlu0 %v4982
        %v4984 = vpop.xlane.xlu0 %4983
        %v4985 = vadd.f32 %v4951, %v4952
        %4986 = vadd.xlane.f32.xlu0 %v4985
        %v4987 = vpop.xlane.xlu0 %4986
        %v4988 = vadd.f32 %v4953, %v4954
        %4989 = vadd.xlane.f32.xlu0 %v4988
        %v4990 = vpop.xlane.xlu0 %4989
        %v4991 = vadd.f32 %v4955, %v4956
        %4992 = vadd.xlane.f32.xlu0 %v4991
        %v4993 = vpop.xlane.xlu0 %4992
        %v4994 = vadd.f32 %v4957, %v4958
        %4995 = vadd.xlane.f32.xlu0 %v4994
        %v4996 = vpop.xlane.xlu0 %4995
        %v4997 = vadd.f32 %v4959, %v4960
        %4998 = vadd.xlane.f32.xlu0 %v4997
        %v4999 = vpop.xlane.xlu0 %4998
        %v5000 = vadd.f32 %v4961, %v4962
        %5001 = vadd.xlane.f32.xlu0 %v5000
        %v5002 = vpop.xlane.xlu0 %5001
        %v5003 = vadd.f32 %v4963, %v4964
        %5004 = vadd.xlane.f32.xlu0 %v5003
        %v5005 = vpop.xlane.xlu0 %5004
        %v5006 = vadd.f32 %v4965, %v4966
        %5007 = vadd.xlane.f32.xlu0 %v5006
        %v5008 = vpop.xlane.xlu0 %5007
        %v5009 = vadd.f32 %v4967, %v4968
        %5010 = vadd.xlane.f32.xlu0 %v5009
        %v5011 = vpop.xlane.xlu0 %5010
        %v5012 = vadd.f32 %v4969, %v4970
        %5013 = vadd.xlane.f32.xlu0 %v5012
        %v5014 = vpop.xlane.xlu0 %5013
        %v5015 = vadd.f32 %v4971, %v4972
        %5016 = vadd.xlane.f32.xlu0 %v5015
        %v5017 = vpop.xlane.xlu0 %5016
        %v5018 = vadd.f32 %v4973, %v4974
        %5019 = vadd.xlane.f32.xlu0 %v5018
        %v5020 = vpop.xlane.xlu0 %5019
        %v5021 = vadd.f32 %v4975, %v4976
        %5022 = vadd.xlane.f32.xlu0 %v5021
        %v5023 = vpop.xlane.xlu0 %5022
        %v5024 = vadd.f32 %v4977, %v4978
        %5025 = vadd.xlane.f32.xlu0 %v5024
        %v5026 = vpop.xlane.xlu0 %5025
        %v5027 = vmul.f32 %v4981, %v4898
        %v5028 = vmul.f32 %v4984, %v4898
        %v5029 = vmul.f32 %v4987, %v4898
        %v5030 = vmul.f32 %v4990, %v4898
        %v5031 = vmul.f32 %v4993, %v4898
        %v5032 = vmul.f32 %v4996, %v4898
        %v5033 = vmul.f32 %v4999, %v4898
        %v5034 = vmul.f32 %v5002, %v4898
        %v5035 = vmul.f32 %v5005, %v4898
        %v5036 = vmul.f32 %v5008, %v4898
        %v5037 = vmul.f32 %v5011, %v4898
        %v5038 = vmul.f32 %v5014, %v4898
        %v5039 = vmul.f32 %v5017, %v4898
        %v5040 = vmul.f32 %v5020, %v4898
        %v5041 = vmul.f32 %v5023, %v4898
        %v5042 = vmul.f32 %v5026, %v4898
        %v5043 = vadd.f32 %v5027, 1e-05
        %v5044 = vadd.f32 %v5028, 1e-05
        %v5045 = vadd.f32 %v5029, 1e-05
        %v5046 = vadd.f32 %v5030, 1e-05
        %v5047 = vadd.f32 %v5031, 1e-05
        %v5048 = vadd.f32 %v5032, 1e-05
        %v5049 = vadd.f32 %v5033, 1e-05
        %v5050 = vadd.f32 %v5034, 1e-05
        %v5051 = vadd.f32 %v5035, 1e-05
        %v5052 = vadd.f32 %v5036, 1e-05
        %v5053 = vadd.f32 %v5037, 1e-05
        %v5054 = vadd.f32 %v5038, 1e-05
        %v5055 = vadd.f32 %v5039, 1e-05
        %v5056 = vadd.f32 %v5040, 1e-05
        %v5057 = vadd.f32 %v5041, 1e-05
        %v5058 = vadd.f32 %v5042, 1e-05
        %v5059 = vrsqrt.pop %v5043
        %v5060 = vrsqrt.pop %v5044
        %v5061 = vrsqrt.pop %v5045
        %v5062 = vrsqrt.pop %v5046
        %v5063 = vrsqrt.pop %v5047
        %v5064 = vrsqrt.pop %v5048
        %v5065 = vrsqrt.pop %v5049
        %v5066 = vrsqrt.pop %v5050
        %v5067 = vrsqrt.pop %v5051
        %v5068 = vrsqrt.pop %v5052
        %v5069 = vrsqrt.pop %v5053
        %v5070 = vrsqrt.pop %v5054
        %v5071 = vrsqrt.pop %v5055
        %v5072 = vrsqrt.pop %v5056
        %v5073 = vrsqrt.pop %v5057
        %v5074 = vrsqrt.pop %v5058
        %v5075 = vmul.f32 %v4915, %v5059
        %v5076 = vmul.f32 %v4916, %v5059
        %v5077 = vmul.f32 %v4917, %v5060
        %v5078 = vmul.f32 %v4918, %v5060
        %v5079 = vmul.f32 %v4919, %v5061
        %v5080 = vmul.f32 %v4920, %v5061
        %v5081 = vmul.f32 %v4921, %v5062
        %v5082 = vmul.f32 %v4922, %v5062
        %v5083 = vmul.f32 %v4923, %v5063
        %v5084 = vmul.f32 %v4924, %v5063
        %v5085 = vmul.f32 %v4925, %v5064
        %v5086 = vmul.f32 %v4926, %v5064
        %v5087 = vmul.f32 %v4927, %v5065
        %v5088 = vmul.f32 %v4928, %v5065
        %v5089 = vmul.f32 %v4929, %v5066
        %v5090 = vmul.f32 %v4930, %v5066
        %v5091 = vmul.f32 %v4931, %v5067
        %v5092 = vmul.f32 %v4932, %v5067
        %v5093 = vmul.f32 %v4933, %v5068
        %v5094 = vmul.f32 %v4934, %v5068
        %v5095 = vmul.f32 %v4935, %v5069
        %v5096 = vmul.f32 %v4936, %v5069
        %v5097 = vmul.f32 %v4937, %v5070
        %v5098 = vmul.f32 %v4938, %v5070
        %v5099 = vmul.f32 %v4939, %v5071
        %v5100 = vmul.f32 %v4940, %v5071
        %v5101 = vmul.f32 %v4941, %v5072
        %v5102 = vmul.f32 %v4942, %v5072
        %v5103 = vmul.f32 %v4943, %v5073
        %v5104 = vmul.f32 %v4944, %v5073
        %v5105 = vmul.f32 %v4945, %v5074
        %v5106 = vmul.f32 %v4946, %v5074
        %v5108 = vlaneseq
        %v5109 = vshrl.u32 %v5108, 7
        %v5110 = vsub.s32 0, %v5109
        %v5111 = vrot.slane %v4848, %v5110
        %v5112 = vlaneseq
        %v5113 = vshrl.u32 %v5112, 7
        %v5114 = vsub.s32 1, %v5113
        %v5115 = vrot.slane %v4848, %v5114
        %v5118 = vmul.f32 %v5075, %v5111
        %v5119 = vmul.f32 %v5076, %v5115
        %v5120 = vmul.f32 %v5077, %v5111
        %v5121 = vmul.f32 %v5078, %v5115
        %v5122 = vmul.f32 %v5079, %v5111
        %v5123 = vmul.f32 %v5080, %v5115
        %v5124 = vmul.f32 %v5081, %v5111
        %v5125 = vmul.f32 %v5082, %v5115
        %v5126 = vmul.f32 %v5083, %v5111
        %v5127 = vmul.f32 %v5084, %v5115
        %v5128 = vmul.f32 %v5085, %v5111
        %v5129 = vmul.f32 %v5086, %v5115
        %v5130 = vmul.f32 %v5087, %v5111
        %v5131 = vmul.f32 %v5088, %v5115
        %v5132 = vmul.f32 %v5089, %v5111
        %v5133 = vmul.f32 %v5090, %v5115
        %v5134 = vmul.f32 %v5091, %v5111
        %v5135 = vmul.f32 %v5092, %v5115
        %v5136 = vmul.f32 %v5093, %v5111
        %v5137 = vmul.f32 %v5094, %v5115
        %v5138 = vmul.f32 %v5095, %v5111
        %v5139 = vmul.f32 %v5096, %v5115
        %v5140 = vmul.f32 %v5097, %v5111
        %v5141 = vmul.f32 %v5098, %v5115
        %v5142 = vmul.f32 %v5099, %v5111
        %v5143 = vmul.f32 %v5100, %v5115
        %v5144 = vmul.f32 %v5101, %v5111
        %v5145 = vmul.f32 %v5102, %v5115
        %v5146 = vmul.f32 %v5103, %v5111
        %v5147 = vmul.f32 %v5104, %v5115
        %v5148 = vmul.f32 %v5105, %v5111
        %v5149 = vmul.f32 %v5106, %v5115
        %v5151 = vlaneseq
        %v5152 = vshrl.u32 %v5151, 7
        %v5153 = vsub.s32 0, %v5152
        %v5154 = vrot.slane %v4849, %v5153
        %v5155 = vlaneseq
        %v5156 = vshrl.u32 %v5155, 7
        %v5157 = vsub.s32 1, %v5156
        %v5158 = vrot.slane %v4849, %v5157
        %v5161 = vadd.f32 %v5118, %v5154
        %v5162 = vadd.f32 %v5119, %v5158
        %v5163 = vadd.f32 %v5120, %v5154
        %v5164 = vadd.f32 %v5121, %v5158
        %v5165 = vadd.f32 %v5122, %v5154
        %v5166 = vadd.f32 %v5123, %v5158
        %v5167 = vadd.f32 %v5124, %v5154
        %v5168 = vadd.f32 %v5125, %v5158
        %v5169 = vadd.f32 %v5126, %v5154
        %v5170 = vadd.f32 %v5127, %v5158
        %v5171 = vadd.f32 %v5128, %v5154
        %v5172 = vadd.f32 %v5129, %v5158
        %v5173 = vadd.f32 %v5130, %v5154
        %v5174 = vadd.f32 %v5131, %v5158
        %v5175 = vadd.f32 %v5132, %v5154
        %v5176 = vadd.f32 %v5133, %v5158
        %v5177 = vadd.f32 %v5134, %v5154
        %v5178 = vadd.f32 %v5135, %v5158
        %v5179 = vadd.f32 %v5136, %v5154
        %v5180 = vadd.f32 %v5137, %v5158
        %v5181 = vadd.f32 %v5138, %v5154
        %v5182 = vadd.f32 %v5139, %v5158
        %v5183 = vadd.f32 %v5140, %v5154
        %v5184 = vadd.f32 %v5141, %v5158
        %v5185 = vadd.f32 %v5142, %v5154
        %v5186 = vadd.f32 %v5143, %v5158
        %v5187 = vadd.f32 %v5144, %v5154
        %v5188 = vadd.f32 %v5145, %v5158
        %v5189 = vadd.f32 %v5146, %v5154
        %v5190 = vadd.f32 %v5147, %v5158
        %v5191 = vadd.f32 %v5148, %v5154
        %v5192 = vadd.f32 %v5149, %v5158
        %v5193 = vpack.c.bf16 %v5163, %v5161
        %v5194 = vpack.c.bf16 %v5164, %v5162
        %v5195 = vpack.c.bf16 %v5167, %v5165
        %v5196 = vpack.c.bf16 %v5168, %v5166
        %v5197 = vpack.c.bf16 %v5171, %v5169
        %v5198 = vpack.c.bf16 %v5172, %v5170
        %v5199 = vpack.c.bf16 %v5175, %v5173
        %v5200 = vpack.c.bf16 %v5176, %v5174
        %v5201 = vpack.c.bf16 %v5179, %v5177
        %v5202 = vpack.c.bf16 %v5180, %v5178
        %v5203 = vpack.c.bf16 %v5183, %v5181
        %v5204 = vpack.c.bf16 %v5184, %v5182
        %v5205 = vpack.c.bf16 %v5187, %v5185
        %v5206 = vpack.c.bf16 %v5188, %v5186
        %v5207 = vpack.c.bf16 %v5191, %v5189
        %v5208 = vpack.c.bf16 %v5192, %v5190
        %v5209 = vld [vmem:[%s744] sm:$0x3]
        %v5211 = vlaneseq
        %v5212 = vshrl.u32 %v5211, 7
        %v5213 = vsub.s32 0, %v5212
        %v5214 = vrot.slane %v5209, %v5213
        %v5215 = vlaneseq
        %v5216 = vshrl.u32 %v5215, 7
        %v5217 = vsub.s32 1, %v5216
        %v5218 = vrot.slane %v5209, %v5217
        %v5221 = vadd.f32 %v5161, %v5214
        %v5222 = vadd.f32 %v5162, %v5218
        %v5223 = vadd.f32 %v5163, %v5214
        %v5224 = vadd.f32 %v5164, %v5218
        %v5225 = vadd.f32 %v5165, %v5214
        %v5226 = vadd.f32 %v5166, %v5218
        %v5227 = vadd.f32 %v5167, %v5214
        %v5228 = vadd.f32 %v5168, %v5218
        %v5229 = vadd.f32 %v5169, %v5214
        %v5230 = vadd.f32 %v5170, %v5218
        %v5231 = vadd.f32 %v5171, %v5214
        %v5232 = vadd.f32 %v5172, %v5218
        %v5233 = vadd.f32 %v5173, %v5214
        %v5234 = vadd.f32 %v5174, %v5218
        %v5235 = vadd.f32 %v5175, %v5214
        %v5236 = vadd.f32 %v5176, %v5218
        %v5237 = vadd.f32 %v5177, %v5214
        %v5238 = vadd.f32 %v5178, %v5218
        %v5239 = vadd.f32 %v5179, %v5214
        %v5240 = vadd.f32 %v5180, %v5218
        %v5241 = vadd.f32 %v5181, %v5214
        %v5242 = vadd.f32 %v5182, %v5218
        %v5243 = vadd.f32 %v5183, %v5214
        %v5244 = vadd.f32 %v5184, %v5218
        %v5245 = vadd.f32 %v5185, %v5214
        %v5246 = vadd.f32 %v5186, %v5218
        %v5247 = vadd.f32 %v5187, %v5214
        %v5248 = vadd.f32 %v5188, %v5218
        %v5249 = vadd.f32 %v5189, %v5214
        %v5250 = vadd.f32 %v5190, %v5218
        %v5251 = vadd.f32 %v5191, %v5214
        %v5252 = vadd.f32 %v5192, %v5218
        %v5253 = vld [vmem:[%s717] sm:$0xff]
        %v5254 = vld [vmem:[%s717 + $0x8] sm:$0xff]
        %v5255 = vld [vmem:[%s717 + $0x40] sm:$0xff]
        %v5256 = vld [vmem:[%s717 + $0x48] sm:$0xff]
        %v5257 = vld [vmem:[%s717 + $0x80] sm:$0xff]
        %v5258 = vld [vmem:[%s717 + $0x88] sm:$0xff]
        %v5259 = vld [vmem:[%s717 + $0xc0] sm:$0xff]
        %v5260 = vld [vmem:[%s717 + $0xc8] sm:$0xff]
        %v5261 = vld [vmem:[%s717 + $0x100] sm:$0xff]
        %v5262 = vld [vmem:[%s717 + $0x108] sm:$0xff]
        %v5263 = vld [vmem:[%s717 + $0x140] sm:$0xff]
        %v5264 = vld [vmem:[%s717 + $0x148] sm:$0xff]
        %v5265 = vld [vmem:[%s717 + $0x180] sm:$0xff]
        %v5266 = vld [vmem:[%s717 + $0x188] sm:$0xff]
        %v5267 = vld [vmem:[%s717 + $0x1c0] sm:$0xff]
        %v5268 = vld [vmem:[%s717 + $0x1c8] sm:$0xff]
        %v5269 = vld [vmem:[%s717 + $0x200] sm:$0xff]
        %v5270 = vld [vmem:[%s717 + $0x208] sm:$0xff]
        %v5271 = vld [vmem:[%s717 + $0x240] sm:$0xff]
        %v5272 = vld [vmem:[%s717 + $0x248] sm:$0xff]
        %v5273 = vld [vmem:[%s717 + $0x280] sm:$0xff]
        %v5274 = vld [vmem:[%s717 + $0x288] sm:$0xff]
        %v5275 = vld [vmem:[%s717 + $0x2c0] sm:$0xff]
        %v5276 = vld [vmem:[%s717 + $0x2c8] sm:$0xff]
        %v5277 = vld [vmem:[%s717 + $0x300] sm:$0xff]
        %v5278 = vld [vmem:[%s717 + $0x308] sm:$0xff]
        %v5279 = vld [vmem:[%s717 + $0x340] sm:$0xff]
        %v5280 = vld [vmem:[%s717 + $0x348] sm:$0xff]
        %v5281 = vld [vmem:[%s717 + $0x380] sm:$0xff]
        %v5282 = vld [vmem:[%s717 + $0x388] sm:$0xff]
        %v5283 = vld [vmem:[%s717 + $0x3c0] sm:$0xff]
        %v5284 = vld [vmem:[%s717 + $0x3c8] sm:$0xff]
        %v5285 = vld [vmem:[%s717 + $0x400] sm:$0xff]
        %v5286 = vld [vmem:[%s717 + $0x408] sm:$0xff]
        %v5287 = vld [vmem:[%s717 + $0x440] sm:$0xff]
        %v5288 = vld [vmem:[%s717 + $0x448] sm:$0xff]
        %v5289 = vld [vmem:[%s717 + $0x480] sm:$0xff]
        %v5290 = vld [vmem:[%s717 + $0x488] sm:$0xff]
        %v5291 = vld [vmem:[%s717 + $0x4c0] sm:$0xff]
        %v5292 = vld [vmem:[%s717 + $0x4c8] sm:$0xff]
        %v5293 = vld [vmem:[%s717 + $0x500] sm:$0xff]
        %v5294 = vld [vmem:[%s717 + $0x508] sm:$0xff]
        %v5295 = vld [vmem:[%s717 + $0x540] sm:$0xff]
        %v5296 = vld [vmem:[%s717 + $0x548] sm:$0xff]
        %v5297 = vld [vmem:[%s717 + $0x580] sm:$0xff]
        %v5298 = vld [vmem:[%s717 + $0x588] sm:$0xff]
        %v5299 = vld [vmem:[%s717 + $0x5c0] sm:$0xff]
        %v5300 = vld [vmem:[%s717 + $0x5c8] sm:$0xff]
        %v5301 = vld [vmem:[%s717 + $0x600] sm:$0xff]
        %v5302 = vld [vmem:[%s717 + $0x608] sm:$0xff]
        %v5303 = vld [vmem:[%s717 + $0x640] sm:$0xff]
        %v5304 = vld [vmem:[%s717 + $0x648] sm:$0xff]
        %v5305 = vld [vmem:[%s717 + $0x680] sm:$0xff]
        %v5306 = vld [vmem:[%s717 + $0x688] sm:$0xff]
        %v5307 = vld [vmem:[%s717 + $0x6c0] sm:$0xff]
        %v5308 = vld [vmem:[%s717 + $0x6c8] sm:$0xff]
        %v5309 = vld [vmem:[%s717 + $0x700] sm:$0xff]
        %v5310 = vld [vmem:[%s717 + $0x708] sm:$0xff]
        %v5311 = vld [vmem:[%s717 + $0x740] sm:$0xff]
        %v5312 = vld [vmem:[%s717 + $0x748] sm:$0xff]
        %v5313 = vld [vmem:[%s717 + $0x780] sm:$0xff]
        %v5314 = vld [vmem:[%s717 + $0x788] sm:$0xff]
        %v5315 = vld [vmem:[%s717 + $0x7c0] sm:$0xff]
        %v5316 = vld [vmem:[%s717 + $0x7c8] sm:$0xff]
        %v5317 = vld [vmem:[%s726] sm:$0xf]
        %v5319 = vlaneseq
        %v5320 = vshrl.u32 %v5319, 7
        %v5321 = vsub.s32 0, %v5320
        %v5322 = vrot.slane %v5317, %v5321
        %v5323 = vlaneseq
        %v5324 = vshrl.u32 %v5323, 7
        %v5325 = vsub.s32 1, %v5324
        %v5326 = vrot.slane %v5317, %v5325
        %v5327 = vlaneseq
        %v5328 = vshrl.u32 %v5327, 7
        %v5329 = vsub.s32 2, %v5328
        %v5330 = vrot.slane %v5317, %v5329
        %v5331 = vlaneseq
        %v5332 = vshrl.u32 %v5331, 7
        %v5333 = vsub.s32 3, %v5332
        %v5334 = vrot.slane %v5317, %v5333
        %v5403 = vunpack.c.l.b16 %v5253
        %v5404 = vunpack.c.h.b16 %v5253
        %v5405 = vunpack.c.l.b16 %v5254
        %v5406 = vunpack.c.h.b16 %v5254
        %v5407 = vunpack.c.l.b16 %v5255
        %v5408 = vunpack.c.h.b16 %v5255
        %v5409 = vunpack.c.l.b16 %v5256
        %v5410 = vunpack.c.h.b16 %v5256
        %v5411 = vunpack.c.l.b16 %v5257
        %v5412 = vunpack.c.h.b16 %v5257
        %v5413 = vunpack.c.l.b16 %v5258
        %v5414 = vunpack.c.h.b16 %v5258
        %v5415 = vunpack.c.l.b16 %v5259
        %v5416 = vunpack.c.h.b16 %v5259
        %v5417 = vunpack.c.l.b16 %v5260
        %v5418 = vunpack.c.h.b16 %v5260
        %v5419 = vunpack.c.l.b16 %v5261
        %v5420 = vunpack.c.h.b16 %v5261
        %v5421 = vunpack.c.l.b16 %v5262
        %v5422 = vunpack.c.h.b16 %v5262
        %v5423 = vunpack.c.l.b16 %v5263
        %v5424 = vunpack.c.h.b16 %v5263
        %v5425 = vunpack.c.l.b16 %v5264
        %v5426 = vunpack.c.h.b16 %v5264
        %v5427 = vunpack.c.l.b16 %v5265
        %v5428 = vunpack.c.h.b16 %v5265
        %v5429 = vunpack.c.l.b16 %v5266
        %v5430 = vunpack.c.h.b16 %v5266
        %v5431 = vunpack.c.l.b16 %v5267
        %v5432 = vunpack.c.h.b16 %v5267
        %v5433 = vunpack.c.l.b16 %v5268
        %v5434 = vunpack.c.h.b16 %v5268
        %v5435 = vunpack.c.l.b16 %v5269
        %v5436 = vunpack.c.h.b16 %v5269
        %v5437 = vunpack.c.l.b16 %v5270
        %v5438 = vunpack.c.h.b16 %v5270
        %v5439 = vunpack.c.l.b16 %v5271
        %v5440 = vunpack.c.h.b16 %v5271
        %v5441 = vunpack.c.l.b16 %v5272
        %v5442 = vunpack.c.h.b16 %v5272
        %v5443 = vunpack.c.l.b16 %v5273
        %v5444 = vunpack.c.h.b16 %v5273
        %v5445 = vunpack.c.l.b16 %v5274
        %v5446 = vunpack.c.h.b16 %v5274
        %v5447 = vunpack.c.l.b16 %v5275
        %v5448 = vunpack.c.h.b16 %v5275
        %v5449 = vunpack.c.l.b16 %v5276
        %v5450 = vunpack.c.h.b16 %v5276
        %v5451 = vunpack.c.l.b16 %v5277
        %v5452 = vunpack.c.h.b16 %v5277
        %v5453 = vunpack.c.l.b16 %v5278
        %v5454 = vunpack.c.h.b16 %v5278
        %v5455 = vunpack.c.l.b16 %v5279
        %v5456 = vunpack.c.h.b16 %v5279
        %v5457 = vunpack.c.l.b16 %v5280
        %v5458 = vunpack.c.h.b16 %v5280
        %v5459 = vunpack.c.l.b16 %v5281
        %v5460 = vunpack.c.h.b16 %v5281
        %v5461 = vunpack.c.l.b16 %v5282
        %v5462 = vunpack.c.h.b16 %v5282
        %v5463 = vunpack.c.l.b16 %v5283
        %v5464 = vunpack.c.h.b16 %v5283
        %v5465 = vunpack.c.l.b16 %v5284
        %v5466 = vunpack.c.h.b16 %v5284
        %v5467 = vunpack.c.l.b16 %v5285
        %v5468 = vunpack.c.h.b16 %v5285
        %v5469 = vunpack.c.l.b16 %v5286
        %v5470 = vunpack.c.h.b16 %v5286
        %v5471 = vunpack.c.l.b16 %v5287
        %v5472 = vunpack.c.h.b16 %v5287
        %v5473 = vunpack.c.l.b16 %v5288
        %v5474 = vunpack.c.h.b16 %v5288
        %v5475 = vunpack.c.l.b16 %v5289
        %v5476 = vunpack.c.h.b16 %v5289
        %v5477 = vunpack.c.l.b16 %v5290
        %v5478 = vunpack.c.h.b16 %v5290
        %v5479 = vunpack.c.l.b16 %v5291
        %v5480 = vunpack.c.h.b16 %v5291
        %v5481 = vunpack.c.l.b16 %v5292
        %v5482 = vunpack.c.h.b16 %v5292
        %v5483 = vunpack.c.l.b16 %v5293
        %v5484 = vunpack.c.h.b16 %v5293
        %v5485 = vunpack.c.l.b16 %v5294
        %v5486 = vunpack.c.h.b16 %v5294
        %v5487 = vunpack.c.l.b16 %v5295
        %v5488 = vunpack.c.h.b16 %v5295
        %v5489 = vunpack.c.l.b16 %v5296
        %v5490 = vunpack.c.h.b16 %v5296
        %v5491 = vunpack.c.l.b16 %v5297
        %v5492 = vunpack.c.h.b16 %v5297
        %v5493 = vunpack.c.l.b16 %v5298
        %v5494 = vunpack.c.h.b16 %v5298
        %v5495 = vunpack.c.l.b16 %v5299
        %v5496 = vunpack.c.h.b16 %v5299
        %v5497 = vunpack.c.l.b16 %v5300
        %v5498 = vunpack.c.h.b16 %v5300
        %v5499 = vunpack.c.l.b16 %v5301
        %v5500 = vunpack.c.h.b16 %v5301
        %v5501 = vunpack.c.l.b16 %v5302
        %v5502 = vunpack.c.h.b16 %v5302
        %v5503 = vunpack.c.l.b16 %v5303
        %v5504 = vunpack.c.h.b16 %v5303
        %v5505 = vunpack.c.l.b16 %v5304
        %v5506 = vunpack.c.h.b16 %v5304
        %v5507 = vunpack.c.l.b16 %v5305
        %v5508 = vunpack.c.h.b16 %v5305
        %v5509 = vunpack.c.l.b16 %v5306
        %v5510 = vunpack.c.h.b16 %v5306
        %v5511 = vunpack.c.l.b16 %v5307
        %v5512 = vunpack.c.h.b16 %v5307
        %v5513 = vunpack.c.l.b16 %v5308
        %v5514 = vunpack.c.h.b16 %v5308
        %v5515 = vunpack.c.l.b16 %v5309
        %v5516 = vunpack.c.h.b16 %v5309
        %v5517 = vunpack.c.l.b16 %v5310
        %v5518 = vunpack.c.h.b16 %v5310
        %v5519 = vunpack.c.l.b16 %v5311
        %v5520 = vunpack.c.h.b16 %v5311
        %v5521 = vunpack.c.l.b16 %v5312
        %v5522 = vunpack.c.h.b16 %v5312
        %v5523 = vunpack.c.l.b16 %v5313
        %v5524 = vunpack.c.h.b16 %v5313
        %v5525 = vunpack.c.l.b16 %v5314
        %v5526 = vunpack.c.h.b16 %v5314
        %v5527 = vunpack.c.l.b16 %v5315
        %v5528 = vunpack.c.h.b16 %v5315
        %v5529 = vunpack.c.l.b16 %v5316
        %v5530 = vunpack.c.h.b16 %v5316
        %v5531 = vpack.c.b16 %v5407, %v5403
        %v5532 = vpack.c.b16 %v5408, %v5404
        %v5533 = vpack.c.b16 %v5409, %v5405
        %v5534 = vpack.c.b16 %v5410, %v5406
        %v5535 = vpack.c.b16 %v5415, %v5411
        %v5536 = vpack.c.b16 %v5416, %v5412
        %v5537 = vpack.c.b16 %v5417, %v5413
        %v5538 = vpack.c.b16 %v5418, %v5414
        %v5539 = vpack.c.b16 %v5423, %v5419
        %v5540 = vpack.c.b16 %v5424, %v5420
        %v5541 = vpack.c.b16 %v5425, %v5421
        %v5542 = vpack.c.b16 %v5426, %v5422
        %v5543 = vpack.c.b16 %v5431, %v5427
        %v5544 = vpack.c.b16 %v5432, %v5428
        %v5545 = vpack.c.b16 %v5433, %v5429
        %v5546 = vpack.c.b16 %v5434, %v5430
        %v5547 = vpack.c.b16 %v5439, %v5435
        %v5548 = vpack.c.b16 %v5440, %v5436
        %v5549 = vpack.c.b16 %v5441, %v5437
        %v5550 = vpack.c.b16 %v5442, %v5438
        %v5551 = vpack.c.b16 %v5447, %v5443
        %v5552 = vpack.c.b16 %v5448, %v5444
        %v5553 = vpack.c.b16 %v5449, %v5445
        %v5554 = vpack.c.b16 %v5450, %v5446
        %v5555 = vpack.c.b16 %v5455, %v5451
        %v5556 = vpack.c.b16 %v5456, %v5452
        %v5557 = vpack.c.b16 %v5457, %v5453
        %v5558 = vpack.c.b16 %v5458, %v5454
        %v5559 = vpack.c.b16 %v5463, %v5459
        %v5560 = vpack.c.b16 %v5464, %v5460
        %v5561 = vpack.c.b16 %v5465, %v5461
        %v5562 = vpack.c.b16 %v5466, %v5462
        %v5563 = vpack.c.b16 %v5471, %v5467
        %v5564 = vpack.c.b16 %v5472, %v5468
        %v5565 = vpack.c.b16 %v5473, %v5469
        %v5566 = vpack.c.b16 %v5474, %v5470
        %v5567 = vpack.c.b16 %v5479, %v5475
        %v5568 = vpack.c.b16 %v5480, %v5476
        %v5569 = vpack.c.b16 %v5481, %v5477
        %v5570 = vpack.c.b16 %v5482, %v5478
        %v5571 = vpack.c.b16 %v5487, %v5483
        %v5572 = vpack.c.b16 %v5488, %v5484
        %v5573 = vpack.c.b16 %v5489, %v5485
        %v5574 = vpack.c.b16 %v5490, %v5486
        %v5575 = vpack.c.b16 %v5495, %v5491
        %v5576 = vpack.c.b16 %v5496, %v5492
        %v5577 = vpack.c.b16 %v5497, %v5493
        %v5578 = vpack.c.b16 %v5498, %v5494
        %v5579 = vpack.c.b16 %v5503, %v5499
        %v5580 = vpack.c.b16 %v5504, %v5500
        %v5581 = vpack.c.b16 %v5505, %v5501
        %v5582 = vpack.c.b16 %v5506, %v5502
        %v5583 = vpack.c.b16 %v5511, %v5507
        %v5584 = vpack.c.b16 %v5512, %v5508
        %v5585 = vpack.c.b16 %v5513, %v5509
        %v5586 = vpack.c.b16 %v5514, %v5510
        %v5587 = vpack.c.b16 %v5519, %v5515
        %v5588 = vpack.c.b16 %v5520, %v5516
        %v5589 = vpack.c.b16 %v5521, %v5517
        %v5590 = vpack.c.b16 %v5522, %v5518
        %v5591 = vpack.c.b16 %v5527, %v5523
        %v5592 = vpack.c.b16 %v5528, %v5524
        %v5593 = vpack.c.b16 %v5529, %v5525
        %v5594 = vpack.c.b16 %v5530, %v5526
        %5659 = vmatprep.subr.bf16.mxu0 %v5560
        %5660 = vmatpush1.bf16.msra.mxu0 %v5559
        %5661 = vmatprep.subr.bf16.mxu0 %v5556
        %5662 = vmatpush1.bf16.msra.mxu0 %v5555
        %5663 = vmatprep.subr.bf16.mxu0 %v5552
        %5664 = vmatpush1.bf16.msra.mxu0 %v5551
        %5665 = vmatprep.subr.bf16.mxu0 %v5548
        %5666 = vmatpush1.bf16.msra.mxu0 %v5547
        %5667 = vmatprep.subr.bf16.mxu0 %v5544
        %5668 = vmatpush1.bf16.msra.mxu0 %v5543
        %5669 = vmatprep.subr.bf16.mxu0 %v5540
        %5670 = vmatpush1.bf16.msra.mxu0 %v5539
        %5671 = vmatprep.subr.bf16.mxu0 %v5536
        %5672 = vmatpush1.bf16.msra.mxu0 %v5535
        %5673 = vmatprep.subr.bf16.mxu0 %v5532
        %5674 = vmatpush1.bf16.msra.mxu0 %v5531
        %5675 = vmatprep.subr.bf16.mxu0 %v5592
        %5676 = vmatpush2.bf16.msra.mxu0 %v5591
        %5677 = vmatprep.subr.bf16.mxu0 %v5588
        %5678 = vmatpush2.bf16.msra.mxu0 %v5587
        %5679 = vmatprep.subr.bf16.mxu0 %v5584
        %5680 = vmatpush2.bf16.msra.mxu0 %v5583
        %5681 = vmatprep.subr.bf16.mxu0 %v5580
        %5682 = vmatpush2.bf16.msra.mxu0 %v5579
        %5683 = vmatprep.subr.bf16.mxu0 %v5576
        %5684 = vmatpush2.bf16.msra.mxu0 %v5575
        %5685 = vmatprep.subr.bf16.mxu0 %v5572
        %5686 = vmatpush2.bf16.msra.mxu0 %v5571
        %5687 = vmatprep.subr.bf16.mxu0 %v5568
        %5688 = vmatpush2.bf16.msra.mxu0 %v5567
        %5689 = vmatprep.subr.bf16.mxu0 %v5564
        %5690 = vmatpush2.bf16.msra.mxu0 %v5563
        %5691 = vmatprep.mubr.bf16.mxu0 %v5194
        %5692 = vmatmul.mubr.bf16.gmra.mxu0 %v5193
        %v5693 = vpop.f32.mrf.mxu0
        %v5694 = vadd.f32 %v5322, %v5693
        %v5695 = vpop.f32.mrf.mxu0
        %v5696 = vadd.f32 %v5326, %v5695
        %v5697 = vpop.f32.mrf.mxu0
        %v5698 = vadd.f32 %v5322, %v5697
        %v5699 = vpop.f32.mrf.mxu0
        %v5700 = vadd.f32 %v5326, %v5699
        %5701 = vmatprep.mubr.bf16.mxu0 %v5196
        %5702 = vmatmul.mubr.bf16.gmra.mxu0 %v5195
        %v5703 = vpop.f32.mrf.mxu0
        %v5704 = vadd.f32 %v5322, %v5703
        %v5705 = vpop.f32.mrf.mxu0
        %v5706 = vadd.f32 %v5326, %v5705
        %v5707 = vpop.f32.mrf.mxu0
        %v5708 = vadd.f32 %v5322, %v5707
        %v5709 = vpop.f32.mrf.mxu0
        %v5710 = vadd.f32 %v5326, %v5709
        %5711 = vmatprep.mubr.bf16.mxu0 %v5198
        %5712 = vmatmul.mubr.bf16.gmra.mxu0 %v5197
        %v5713 = vpop.f32.mrf.mxu0
        %v5714 = vadd.f32 %v5322, %v5713
        %v5715 = vpop.f32.mrf.mxu0
        %v5716 = vadd.f32 %v5326, %v5715
        %v5717 = vpop.f32.mrf.mxu0
        %v5718 = vadd.f32 %v5322, %v5717
        %v5719 = vpop.f32.mrf.mxu0
        %v5720 = vadd.f32 %v5326, %v5719
        %5721 = vmatprep.mubr.bf16.mxu0 %v5200
        %5722 = vmatmul.mubr.bf16.gmra.mxu0 %v5199
        %v5723 = vpop.f32.mrf.mxu0
        %v5724 = vadd.f32 %v5322, %v5723
        %v5725 = vpop.f32.mrf.mxu0
        %v5726 = vadd.f32 %v5326, %v5725
        %v5727 = vpop.f32.mrf.mxu0
        %v5728 = vadd.f32 %v5322, %v5727
        %v5729 = vpop.f32.mrf.mxu0
        %v5730 = vadd.f32 %v5326, %v5729
        %5731 = vmatprep.mubr.bf16.mxu0 %v5202
        %5732 = vmatmul.mubr.bf16.gmra.mxu0 %v5201
        %v5733 = vpop.f32.mrf.mxu0
        %v5734 = vadd.f32 %v5322, %v5733
        %v5735 = vpop.f32.mrf.mxu0
        %v5736 = vadd.f32 %v5326, %v5735
        %v5737 = vpop.f32.mrf.mxu0
        %v5738 = vadd.f32 %v5322, %v5737
        %v5739 = vpop.f32.mrf.mxu0
        %v5740 = vadd.f32 %v5326, %v5739
        %5741 = vmatprep.mubr.bf16.mxu0 %v5204
        %5742 = vmatmul.mubr.bf16.gmra.mxu0 %v5203
        %v5743 = vpop.f32.mrf.mxu0
        %v5744 = vadd.f32 %v5322, %v5743
        %v5745 = vpop.f32.mrf.mxu0
        %v5746 = vadd.f32 %v5326, %v5745
        %v5747 = vpop.f32.mrf.mxu0
        %v5748 = vadd.f32 %v5322, %v5747
        %v5749 = vpop.f32.mrf.mxu0
        %v5750 = vadd.f32 %v5326, %v5749
        %5751 = vmatprep.mubr.bf16.mxu0 %v5206
        %5752 = vmatmul.mubr.bf16.gmra.mxu0 %v5205
        %v5753 = vpop.f32.mrf.mxu0
        %v5754 = vadd.f32 %v5322, %v5753
        %v5755 = vpop.f32.mrf.mxu0
        %v5756 = vadd.f32 %v5326, %v5755
        %v5757 = vpop.f32.mrf.mxu0
        %v5758 = vadd.f32 %v5322, %v5757
        %v5759 = vpop.f32.mrf.mxu0
        %v5760 = vadd.f32 %v5326, %v5759
        %5761 = vmatprep.mubr.bf16.mxu0 %v5208
        %5762 = vmatmul.mubr.bf16.gmra.mxu0 %v5207
        %v5763 = vpop.f32.mrf.mxu0
        %v5764 = vadd.f32 %v5322, %v5763
        %v5765 = vpop.f32.mrf.mxu0
        %v5766 = vadd.f32 %v5326, %v5765
        %v5767 = vpop.f32.mrf.mxu0
        %v5768 = vadd.f32 %v5322, %v5767
        %v5769 = vpop.f32.mrf.mxu0
        %v5770 = vadd.f32 %v5326, %v5769
        %5771 = vdwg.mxu0
        %5772 = vmatprep.subr.bf16.mxu0 %v5562
        %5773 = vmatpush1.bf16.msra.mxu0 %v5561
        %5774 = vmatprep.subr.bf16.mxu0 %v5558
        %5775 = vmatpush1.bf16.msra.mxu0 %v5557
        %5776 = vmatprep.subr.bf16.mxu0 %v5554
        %5777 = vmatpush1.bf16.msra.mxu0 %v5553
        %5778 = vmatprep.subr.bf16.mxu0 %v5550
        %5779 = vmatpush1.bf16.msra.mxu0 %v5549
        %5780 = vmatprep.subr.bf16.mxu0 %v5546
        %5781 = vmatpush1.bf16.msra.mxu0 %v5545
        %5782 = vmatprep.subr.bf16.mxu0 %v5542
        %5783 = vmatpush1.bf16.msra.mxu0 %v5541
        %5784 = vmatprep.subr.bf16.mxu0 %v5538
        %5785 = vmatpush1.bf16.msra.mxu0 %v5537
        %5786 = vmatprep.subr.bf16.mxu0 %v5534
        %5787 = vmatpush1.bf16.msra.mxu0 %v5533
        %5788 = vmatprep.subr.bf16.mxu0 %v5594
        %5789 = vmatpush2.bf16.msra.mxu0 %v5593
        %5790 = vmatprep.subr.bf16.mxu0 %v5590
        %5791 = vmatpush2.bf16.msra.mxu0 %v5589
        %5792 = vmatprep.subr.bf16.mxu0 %v5586
        %5793 = vmatpush2.bf16.msra.mxu0 %v5585
        %5794 = vmatprep.subr.bf16.mxu0 %v5582
        %5795 = vmatpush2.bf16.msra.mxu0 %v5581
        %5796 = vmatprep.subr.bf16.mxu0 %v5578
        %5797 = vmatpush2.bf16.msra.mxu0 %v5577
        %5798 = vmatprep.subr.bf16.mxu0 %v5574
        %5799 = vmatpush2.bf16.msra.mxu0 %v5573
        %5800 = vmatprep.subr.bf16.mxu0 %v5570
        %5801 = vmatpush2.bf16.msra.mxu0 %v5569
        %5802 = vmatprep.subr.bf16.mxu0 %v5566
        %5803 = vmatpush2.bf16.msra.mxu0 %v5565
        %5804 = vmatprep.mubr.bf16.mxu0 %v5194
        %5805 = vmatmul.mubr.bf16.gmra.mxu0 %v5193
        %v5806 = vpop.f32.mrf.mxu0
        %v5807 = vadd.f32 %v5330, %v5806
        %v5808 = vpop.f32.mrf.mxu0
        %v5809 = vadd.f32 %v5334, %v5808
        %v5810 = vpop.f32.mrf.mxu0
        %v5811 = vadd.f32 %v5330, %v5810
        %v5812 = vpop.f32.mrf.mxu0
        %v5813 = vadd.f32 %v5334, %v5812
        %5814 = vmatprep.mubr.bf16.mxu0 %v5196
        %5815 = vmatmul.mubr.bf16.gmra.mxu0 %v5195
        %v5816 = vpop.f32.mrf.mxu0
        %v5817 = vadd.f32 %v5330, %v5816
        %v5818 = vpop.f32.mrf.mxu0
        %v5819 = vadd.f32 %v5334, %v5818
        %v5820 = vpop.f32.mrf.mxu0
        %v5821 = vadd.f32 %v5330, %v5820
        %v5822 = vpop.f32.mrf.mxu0
        %v5823 = vadd.f32 %v5334, %v5822
        %5824 = vmatprep.mubr.bf16.mxu0 %v5198
        %5825 = vmatmul.mubr.bf16.gmra.mxu0 %v5197
        %v5826 = vpop.f32.mrf.mxu0
        %v5827 = vadd.f32 %v5330, %v5826
        %v5828 = vpop.f32.mrf.mxu0
        %v5829 = vadd.f32 %v5334, %v5828
        %v5830 = vpop.f32.mrf.mxu0
        %v5831 = vadd.f32 %v5330, %v5830
        %v5832 = vpop.f32.mrf.mxu0
        %v5833 = vadd.f32 %v5334, %v5832
        %5834 = vmatprep.mubr.bf16.mxu0 %v5200
        %5835 = vmatmul.mubr.bf16.gmra.mxu0 %v5199
        %v5836 = vpop.f32.mrf.mxu0
        %v5837 = vadd.f32 %v5330, %v5836
        %v5838 = vpop.f32.mrf.mxu0
        %v5839 = vadd.f32 %v5334, %v5838
        %v5840 = vpop.f32.mrf.mxu0
        %v5841 = vadd.f32 %v5330, %v5840
        %v5842 = vpop.f32.mrf.mxu0
        %v5843 = vadd.f32 %v5334, %v5842
        %5844 = vmatprep.mubr.bf16.mxu0 %v5202
        %5845 = vmatmul.mubr.bf16.gmra.mxu0 %v5201
        %v5846 = vpop.f32.mrf.mxu0
        %v5847 = vadd.f32 %v5330, %v5846
        %v5848 = vpop.f32.mrf.mxu0
        %v5849 = vadd.f32 %v5334, %v5848
        %v5850 = vpop.f32.mrf.mxu0
        %v5851 = vadd.f32 %v5330, %v5850
        %v5852 = vpop.f32.mrf.mxu0
        %v5853 = vadd.f32 %v5334, %v5852
        %5854 = vmatprep.mubr.bf16.mxu0 %v5204
        %5855 = vmatmul.mubr.bf16.gmra.mxu0 %v5203
        %v5856 = vpop.f32.mrf.mxu0
        %v5857 = vadd.f32 %v5330, %v5856
        %v5858 = vpop.f32.mrf.mxu0
        %v5859 = vadd.f32 %v5334, %v5858
        %v5860 = vpop.f32.mrf.mxu0
        %v5861 = vadd.f32 %v5330, %v5860
        %v5862 = vpop.f32.mrf.mxu0
        %v5863 = vadd.f32 %v5334, %v5862
        %5864 = vmatprep.mubr.bf16.mxu0 %v5206
        %5865 = vmatmul.mubr.bf16.gmra.mxu0 %v5205
        %v5866 = vpop.f32.mrf.mxu0
        %v5867 = vadd.f32 %v5330, %v5866
        %v5868 = vpop.f32.mrf.mxu0
        %v5869 = vadd.f32 %v5334, %v5868
        %v5870 = vpop.f32.mrf.mxu0
        %v5871 = vadd.f32 %v5330, %v5870
        %v5872 = vpop.f32.mrf.mxu0
        %v5873 = vadd.f32 %v5334, %v5872
        %5874 = vmatprep.mubr.bf16.mxu0 %v5208
        %5875 = vmatmul.mubr.bf16.gmra.mxu0 %v5207
        %v5876 = vpop.f32.mrf.mxu0
        %v5877 = vadd.f32 %v5330, %v5876
        %v5878 = vpop.f32.mrf.mxu0
        %v5879 = vadd.f32 %v5334, %v5878
        %v5880 = vpop.f32.mrf.mxu0
        %v5881 = vadd.f32 %v5330, %v5880
        %v5882 = vpop.f32.mrf.mxu0
        %v5883 = vadd.f32 %v5334, %v5882
        %5884 = vdwg.mxu0
        %v5885 = vmax.f32 %v5694, 0.0
        %v5886 = vmax.f32 %v5696, 0.0
        %v5887 = vmax.f32 %v5807, 0.0
        %v5888 = vmax.f32 %v5809, 0.0
        %v5889 = vmax.f32 %v5698, 0.0
        %v5890 = vmax.f32 %v5700, 0.0
        %v5891 = vmax.f32 %v5811, 0.0
        %v5892 = vmax.f32 %v5813, 0.0
        %v5893 = vmax.f32 %v5704, 0.0
        %v5894 = vmax.f32 %v5706, 0.0
        %v5895 = vmax.f32 %v5817, 0.0
        %v5896 = vmax.f32 %v5819, 0.0
        %v5897 = vmax.f32 %v5708, 0.0
        %v5898 = vmax.f32 %v5710, 0.0
        %v5899 = vmax.f32 %v5821, 0.0
        %v5900 = vmax.f32 %v5823, 0.0
        %v5901 = vmax.f32 %v5714, 0.0
        %v5902 = vmax.f32 %v5716, 0.0
        %v5903 = vmax.f32 %v5827, 0.0
        %v5904 = vmax.f32 %v5829, 0.0
        %v5905 = vmax.f32 %v5718, 0.0
        %v5906 = vmax.f32 %v5720, 0.0
        %v5907 = vmax.f32 %v5831, 0.0
        %v5908 = vmax.f32 %v5833, 0.0
        %v5909 = vmax.f32 %v5724, 0.0
        %v5910 = vmax.f32 %v5726, 0.0
        %v5911 = vmax.f32 %v5837, 0.0
        %v5912 = vmax.f32 %v5839, 0.0
        %v5913 = vmax.f32 %v5728, 0.0
        %v5914 = vmax.f32 %v5730, 0.0
        %v5915 = vmax.f32 %v5841, 0.0
        %v5916 = vmax.f32 %v5843, 0.0
        %v5917 = vmax.f32 %v5734, 0.0
        %v5918 = vmax.f32 %v5736, 0.0
        %v5919 = vmax.f32 %v5847, 0.0
        %v5920 = vmax.f32 %v5849, 0.0
        %v5921 = vmax.f32 %v5738, 0.0
        %v5922 = vmax.f32 %v5740, 0.0
        %v5923 = vmax.f32 %v5851, 0.0
        %v5924 = vmax.f32 %v5853, 0.0
        %v5925 = vmax.f32 %v5744, 0.0
        %v5926 = vmax.f32 %v5746, 0.0
        %v5927 = vmax.f32 %v5857, 0.0
        %v5928 = vmax.f32 %v5859, 0.0
        %v5929 = vmax.f32 %v5748, 0.0
        %v5930 = vmax.f32 %v5750, 0.0
        %v5931 = vmax.f32 %v5861, 0.0
        %v5932 = vmax.f32 %v5863, 0.0
        %v5933 = vmax.f32 %v5754, 0.0
        %v5934 = vmax.f32 %v5756, 0.0
        %v5935 = vmax.f32 %v5867, 0.0
        %v5936 = vmax.f32 %v5869, 0.0
        %v5937 = vmax.f32 %v5758, 0.0
        %v5938 = vmax.f32 %v5760, 0.0
        %v5939 = vmax.f32 %v5871, 0.0
        %v5940 = vmax.f32 %v5873, 0.0
        %v5941 = vmax.f32 %v5764, 0.0
        %v5942 = vmax.f32 %v5766, 0.0
        %v5943 = vmax.f32 %v5877, 0.0
        %v5944 = vmax.f32 %v5879, 0.0
        %v5945 = vmax.f32 %v5768, 0.0
        %v5946 = vmax.f32 %v5770, 0.0
        %v5947 = vmax.f32 %v5881, 0.0
        %v5948 = vmax.f32 %v5883, 0.0
        %v5949 = vpack.c.bf16 %v5889, %v5885
        %v5950 = vpack.c.bf16 %v5890, %v5886
        %v5951 = vpack.c.bf16 %v5891, %v5887
        %v5952 = vpack.c.bf16 %v5892, %v5888
        %v5953 = vpack.c.bf16 %v5897, %v5893
        %v5954 = vpack.c.bf16 %v5898, %v5894
        %v5955 = vpack.c.bf16 %v5899, %v5895
        %v5956 = vpack.c.bf16 %v5900, %v5896
        %v5957 = vpack.c.bf16 %v5905, %v5901
        %v5958 = vpack.c.bf16 %v5906, %v5902
        %v5959 = vpack.c.bf16 %v5907, %v5903
        %v5960 = vpack.c.bf16 %v5908, %v5904
        %v5961 = vpack.c.bf16 %v5913, %v5909
        %v5962 = vpack.c.bf16 %v5914, %v5910
        %v5963 = vpack.c.bf16 %v5915, %v5911
        %v5964 = vpack.c.bf16 %v5916, %v5912
        %v5965 = vpack.c.bf16 %v5921, %v5917
        %v5966 = vpack.c.bf16 %v5922, %v5918
        %v5967 = vpack.c.bf16 %v5923, %v5919
        %v5968 = vpack.c.bf16 %v5924, %v5920
        %v5969 = vpack.c.bf16 %v5929, %v5925
        %v5970 = vpack.c.bf16 %v5930, %v5926
        %v5971 = vpack.c.bf16 %v5931, %v5927
        %v5972 = vpack.c.bf16 %v5932, %v5928
        %v5973 = vpack.c.bf16 %v5937, %v5933
        %v5974 = vpack.c.bf16 %v5938, %v5934
        %v5975 = vpack.c.bf16 %v5939, %v5935
        %v5976 = vpack.c.bf16 %v5940, %v5936
        %v5977 = vpack.c.bf16 %v5945, %v5941
        %v5978 = vpack.c.bf16 %v5946, %v5942
        %v5979 = vpack.c.bf16 %v5947, %v5943
        %v5980 = vpack.c.bf16 %v5948, %v5944
        %v5981 = vld [vmem:[%s735] sm:$0xff]
        %v5982 = vld [vmem:[%s735 + $0x8] sm:$0xff]
        %v5983 = vld [vmem:[%s735 + $0x10] sm:$0xff]
        %v5984 = vld [vmem:[%s735 + $0x18] sm:$0xff]
        %v5985 = vld [vmem:[%s735 + $0x20] sm:$0xff]
        %v5986 = vld [vmem:[%s735 + $0x28] sm:$0xff]
        %v5987 = vld [vmem:[%s735 + $0x30] sm:$0xff]
        %v5988 = vld [vmem:[%s735 + $0x38] sm:$0xff]
        %v5989 = vld [vmem:[%s735 + $0x40] sm:$0xff]
        %v5990 = vld [vmem:[%s735 + $0x48] sm:$0xff]
        %v5991 = vld [vmem:[%s735 + $0x50] sm:$0xff]
        %v5992 = vld [vmem:[%s735 + $0x58] sm:$0xff]
        %v5993 = vld [vmem:[%s735 + $0x60] sm:$0xff]
        %v5994 = vld [vmem:[%s735 + $0x68] sm:$0xff]
        %v5995 = vld [vmem:[%s735 + $0x70] sm:$0xff]
        %v5996 = vld [vmem:[%s735 + $0x78] sm:$0xff]
        %v5997 = vld [vmem:[%s735 + $0x80] sm:$0xff]
        %v5998 = vld [vmem:[%s735 + $0x88] sm:$0xff]
        %v5999 = vld [vmem:[%s735 + $0x90] sm:$0xff]
        %v6000 = vld [vmem:[%s735 + $0x98] sm:$0xff]
        %v6001 = vld [vmem:[%s735 + $0xa0] sm:$0xff]
        %v6002 = vld [vmem:[%s735 + $0xa8] sm:$0xff]
        %v6003 = vld [vmem:[%s735 + $0xb0] sm:$0xff]
        %v6004 = vld [vmem:[%s735 + $0xb8] sm:$0xff]
        %v6005 = vld [vmem:[%s735 + $0xc0] sm:$0xff]
        %v6006 = vld [vmem:[%s735 + $0xc8] sm:$0xff]
        %v6007 = vld [vmem:[%s735 + $0xd0] sm:$0xff]
        %v6008 = vld [vmem:[%s735 + $0xd8] sm:$0xff]
        %v6009 = vld [vmem:[%s735 + $0xe0] sm:$0xff]
        %v6010 = vld [vmem:[%s735 + $0xe8] sm:$0xff]
        %v6011 = vld [vmem:[%s735 + $0xf0] sm:$0xff]
        %v6012 = vld [vmem:[%s735 + $0xf8] sm:$0xff]
        %v6013 = vld [vmem:[%s735 + $0x100] sm:$0xff]
        %v6014 = vld [vmem:[%s735 + $0x108] sm:$0xff]
        %v6015 = vld [vmem:[%s735 + $0x110] sm:$0xff]
        %v6016 = vld [vmem:[%s735 + $0x118] sm:$0xff]
        %v6017 = vld [vmem:[%s735 + $0x120] sm:$0xff]
        %v6018 = vld [vmem:[%s735 + $0x128] sm:$0xff]
        %v6019 = vld [vmem:[%s735 + $0x130] sm:$0xff]
        %v6020 = vld [vmem:[%s735 + $0x138] sm:$0xff]
        %v6021 = vld [vmem:[%s735 + $0x140] sm:$0xff]
        %v6022 = vld [vmem:[%s735 + $0x148] sm:$0xff]
        %v6023 = vld [vmem:[%s735 + $0x150] sm:$0xff]
        %v6024 = vld [vmem:[%s735 + $0x158] sm:$0xff]
        %v6025 = vld [vmem:[%s735 + $0x160] sm:$0xff]
        %v6026 = vld [vmem:[%s735 + $0x168] sm:$0xff]
        %v6027 = vld [vmem:[%s735 + $0x170] sm:$0xff]
        %v6028 = vld [vmem:[%s735 + $0x178] sm:$0xff]
        %v6029 = vld [vmem:[%s735 + $0x180] sm:$0xff]
        %v6030 = vld [vmem:[%s735 + $0x188] sm:$0xff]
        %v6031 = vld [vmem:[%s735 + $0x190] sm:$0xff]
        %v6032 = vld [vmem:[%s735 + $0x198] sm:$0xff]
        %v6033 = vld [vmem:[%s735 + $0x1a0] sm:$0xff]
        %v6034 = vld [vmem:[%s735 + $0x1a8] sm:$0xff]
        %v6035 = vld [vmem:[%s735 + $0x1b0] sm:$0xff]
        %v6036 = vld [vmem:[%s735 + $0x1b8] sm:$0xff]
        %v6037 = vld [vmem:[%s735 + $0x1c0] sm:$0xff]
        %v6038 = vld [vmem:[%s735 + $0x1c8] sm:$0xff]
        %v6039 = vld [vmem:[%s735 + $0x1d0] sm:$0xff]
        %v6040 = vld [vmem:[%s735 + $0x1d8] sm:$0xff]
        %v6041 = vld [vmem:[%s735 + $0x1e0] sm:$0xff]
        %v6042 = vld [vmem:[%s735 + $0x1e8] sm:$0xff]
        %v6043 = vld [vmem:[%s735 + $0x1f0] sm:$0xff]
        %v6044 = vld [vmem:[%s735 + $0x1f8] sm:$0xff]
        %v6109 = vunpack.c.l.b16 %v5981
        %v6110 = vunpack.c.h.b16 %v5981
        %v6111 = vunpack.c.l.b16 %v5982
        %v6112 = vunpack.c.h.b16 %v5982
        %v6113 = vunpack.c.l.b16 %v5983
        %v6114 = vunpack.c.h.b16 %v5983
        %v6115 = vunpack.c.l.b16 %v5984
        %v6116 = vunpack.c.h.b16 %v5984
        %v6117 = vunpack.c.l.b16 %v5985
        %v6118 = vunpack.c.h.b16 %v5985
        %v6119 = vunpack.c.l.b16 %v5986
        %v6120 = vunpack.c.h.b16 %v5986
        %v6121 = vunpack.c.l.b16 %v5987
        %v6122 = vunpack.c.h.b16 %v5987
        %v6123 = vunpack.c.l.b16 %v5988
        %v6124 = vunpack.c.h.b16 %v5988
        %v6125 = vunpack.c.l.b16 %v5989
        %v6126 = vunpack.c.h.b16 %v5989
        %v6127 = vunpack.c.l.b16 %v5990
        %v6128 = vunpack.c.h.b16 %v5990
        %v6129 = vunpack.c.l.b16 %v5991
        %v6130 = vunpack.c.h.b16 %v5991
        %v6131 = vunpack.c.l.b16 %v5992
        %v6132 = vunpack.c.h.b16 %v5992
        %v6133 = vunpack.c.l.b16 %v5993
        %v6134 = vunpack.c.h.b16 %v5993
        %v6135 = vunpack.c.l.b16 %v5994
        %v6136 = vunpack.c.h.b16 %v5994
        %v6137 = vunpack.c.l.b16 %v5995
        %v6138 = vunpack.c.h.b16 %v5995
        %v6139 = vunpack.c.l.b16 %v5996
        %v6140 = vunpack.c.h.b16 %v5996
        %v6141 = vunpack.c.l.b16 %v5997
        %v6142 = vunpack.c.h.b16 %v5997
        %v6143 = vunpack.c.l.b16 %v5998
        %v6144 = vunpack.c.h.b16 %v5998
        %v6145 = vunpack.c.l.b16 %v5999
        %v6146 = vunpack.c.h.b16 %v5999
        %v6147 = vunpack.c.l.b16 %v6000
        %v6148 = vunpack.c.h.b16 %v6000
        %v6149 = vunpack.c.l.b16 %v6001
        %v6150 = vunpack.c.h.b16 %v6001
        %v6151 = vunpack.c.l.b16 %v6002
        %v6152 = vunpack.c.h.b16 %v6002
        %v6153 = vunpack.c.l.b16 %v6003
        %v6154 = vunpack.c.h.b16 %v6003
        %v6155 = vunpack.c.l.b16 %v6004
        %v6156 = vunpack.c.h.b16 %v6004
        %v6157 = vunpack.c.l.b16 %v6005
        %v6158 = vunpack.c.h.b16 %v6005
        %v6159 = vunpack.c.l.b16 %v6006
        %v6160 = vunpack.c.h.b16 %v6006
        %v6161 = vunpack.c.l.b16 %v6007
        %v6162 = vunpack.c.h.b16 %v6007
        %v6163 = vunpack.c.l.b16 %v6008
        %v6164 = vunpack.c.h.b16 %v6008
        %v6165 = vunpack.c.l.b16 %v6009
        %v6166 = vunpack.c.h.b16 %v6009
        %v6167 = vunpack.c.l.b16 %v6010
        %v6168 = vunpack.c.h.b16 %v6010
        %v6169 = vunpack.c.l.b16 %v6011
        %v6170 = vunpack.c.h.b16 %v6011
        %v6171 = vunpack.c.l.b16 %v6012
        %v6172 = vunpack.c.h.b16 %v6012
        %v6173 = vunpack.c.l.b16 %v6013
        %v6174 = vunpack.c.h.b16 %v6013
        %v6175 = vunpack.c.l.b16 %v6014
        %v6176 = vunpack.c.h.b16 %v6014
        %v6177 = vunpack.c.l.b16 %v6015
        %v6178 = vunpack.c.h.b16 %v6015
        %v6179 = vunpack.c.l.b16 %v6016
        %v6180 = vunpack.c.h.b16 %v6016
        %v6181 = vunpack.c.l.b16 %v6017
        %v6182 = vunpack.c.h.b16 %v6017
        %v6183 = vunpack.c.l.b16 %v6018
        %v6184 = vunpack.c.h.b16 %v6018
        %v6185 = vunpack.c.l.b16 %v6019
        %v6186 = vunpack.c.h.b16 %v6019
        %v6187 = vunpack.c.l.b16 %v6020
        %v6188 = vunpack.c.h.b16 %v6020
        %v6189 = vunpack.c.l.b16 %v6021
        %v6190 = vunpack.c.h.b16 %v6021
        %v6191 = vunpack.c.l.b16 %v6022
        %v6192 = vunpack.c.h.b16 %v6022
        %v6193 = vunpack.c.l.b16 %v6023
        %v6194 = vunpack.c.h.b16 %v6023
        %v6195 = vunpack.c.l.b16 %v6024
        %v6196 = vunpack.c.h.b16 %v6024
        %v6197 = vunpack.c.l.b16 %v6025
        %v6198 = vunpack.c.h.b16 %v6025
        %v6199 = vunpack.c.l.b16 %v6026
        %v6200 = vunpack.c.h.b16 %v6026
        %v6201 = vunpack.c.l.b16 %v6027
        %v6202 = vunpack.c.h.b16 %v6027
        %v6203 = vunpack.c.l.b16 %v6028
        %v6204 = vunpack.c.h.b16 %v6028
        %v6205 = vunpack.c.l.b16 %v6029
        %v6206 = vunpack.c.h.b16 %v6029
        %v6207 = vunpack.c.l.b16 %v6030
        %v6208 = vunpack.c.h.b16 %v6030
        %v6209 = vunpack.c.l.b16 %v6031
        %v6210 = vunpack.c.h.b16 %v6031
        %v6211 = vunpack.c.l.b16 %v6032
        %v6212 = vunpack.c.h.b16 %v6032
        %v6213 = vunpack.c.l.b16 %v6033
        %v6214 = vunpack.c.h.b16 %v6033
        %v6215 = vunpack.c.l.b16 %v6034
        %v6216 = vunpack.c.h.b16 %v6034
        %v6217 = vunpack.c.l.b16 %v6035
        %v6218 = vunpack.c.h.b16 %v6035
        %v6219 = vunpack.c.l.b16 %v6036
        %v6220 = vunpack.c.h.b16 %v6036
        %v6221 = vunpack.c.l.b16 %v6037
        %v6222 = vunpack.c.h.b16 %v6037
        %v6223 = vunpack.c.l.b16 %v6038
        %v6224 = vunpack.c.h.b16 %v6038
        %v6225 = vunpack.c.l.b16 %v6039
        %v6226 = vunpack.c.h.b16 %v6039
        %v6227 = vunpack.c.l.b16 %v6040
        %v6228 = vunpack.c.h.b16 %v6040
        %v6229 = vunpack.c.l.b16 %v6041
        %v6230 = vunpack.c.h.b16 %v6041
        %v6231 = vunpack.c.l.b16 %v6042
        %v6232 = vunpack.c.h.b16 %v6042
        %v6233 = vunpack.c.l.b16 %v6043
        %v6234 = vunpack.c.h.b16 %v6043
        %v6235 = vunpack.c.l.b16 %v6044
        %v6236 = vunpack.c.h.b16 %v6044
        %v6237 = vpack.c.b16 %v6111, %v6109
        %v6238 = vpack.c.b16 %v6112, %v6110
        %v6239 = vpack.c.b16 %v6115, %v6113
        %v6240 = vpack.c.b16 %v6116, %v6114
        %v6241 = vpack.c.b16 %v6119, %v6117
        %v6242 = vpack.c.b16 %v6120, %v6118
        %v6243 = vpack.c.b16 %v6123, %v6121
        %v6244 = vpack.c.b16 %v6124, %v6122
        %v6245 = vpack.c.b16 %v6127, %v6125
        %v6246 = vpack.c.b16 %v6128, %v6126
        %v6247 = vpack.c.b16 %v6131, %v6129
        %v6248 = vpack.c.b16 %v6132, %v6130
        %v6249 = vpack.c.b16 %v6135, %v6133
        %v6250 = vpack.c.b16 %v6136, %v6134
        %v6251 = vpack.c.b16 %v6139, %v6137
        %v6252 = vpack.c.b16 %v6140, %v6138
        %v6253 = vpack.c.b16 %v6143, %v6141
        %v6254 = vpack.c.b16 %v6144, %v6142
        %v6255 = vpack.c.b16 %v6147, %v6145
        %v6256 = vpack.c.b16 %v6148, %v6146
        %v6257 = vpack.c.b16 %v6151, %v6149
        %v6258 = vpack.c.b16 %v6152, %v6150
        %v6259 = vpack.c.b16 %v6155, %v6153
        %v6260 = vpack.c.b16 %v6156, %v6154
        %v6261 = vpack.c.b16 %v6159, %v6157
        %v6262 = vpack.c.b16 %v6160, %v6158
        %v6263 = vpack.c.b16 %v6163, %v6161
        %v6264 = vpack.c.b16 %v6164, %v6162
        %v6265 = vpack.c.b16 %v6167, %v6165
        %v6266 = vpack.c.b16 %v6168, %v6166
        %v6267 = vpack.c.b16 %v6171, %v6169
        %v6268 = vpack.c.b16 %v6172, %v6170
        %v6269 = vpack.c.b16 %v6175, %v6173
        %v6270 = vpack.c.b16 %v6176, %v6174
        %v6271 = vpack.c.b16 %v6179, %v6177
        %v6272 = vpack.c.b16 %v6180, %v6178
        %v6273 = vpack.c.b16 %v6183, %v6181
        %v6274 = vpack.c.b16 %v6184, %v6182
        %v6275 = vpack.c.b16 %v6187, %v6185
        %v6276 = vpack.c.b16 %v6188, %v6186
        %v6277 = vpack.c.b16 %v6191, %v6189
        %v6278 = vpack.c.b16 %v6192, %v6190
        %v6279 = vpack.c.b16 %v6195, %v6193
        %v6280 = vpack.c.b16 %v6196, %v6194
        %v6281 = vpack.c.b16 %v6199, %v6197
        %v6282 = vpack.c.b16 %v6200, %v6198
        %v6283 = vpack.c.b16 %v6203, %v6201
        %v6284 = vpack.c.b16 %v6204, %v6202
        %v6285 = vpack.c.b16 %v6207, %v6205
        %v6286 = vpack.c.b16 %v6208, %v6206
        %v6287 = vpack.c.b16 %v6211, %v6209
        %v6288 = vpack.c.b16 %v6212, %v6210
        %v6289 = vpack.c.b16 %v6215, %v6213
        %v6290 = vpack.c.b16 %v6216, %v6214
        %v6291 = vpack.c.b16 %v6219, %v6217
        %v6292 = vpack.c.b16 %v6220, %v6218
        %v6293 = vpack.c.b16 %v6223, %v6221
        %v6294 = vpack.c.b16 %v6224, %v6222
        %v6295 = vpack.c.b16 %v6227, %v6225
        %v6296 = vpack.c.b16 %v6228, %v6226
        %v6297 = vpack.c.b16 %v6231, %v6229
        %v6298 = vpack.c.b16 %v6232, %v6230
        %v6299 = vpack.c.b16 %v6235, %v6233
        %v6300 = vpack.c.b16 %v6236, %v6234
        %6365 = vmatprep.subr.bf16.mxu0 %v6252
        %6366 = vmatpush1.bf16.msra.mxu0 %v6251
        %6367 = vmatprep.subr.bf16.mxu0 %v6250
        %6368 = vmatpush1.bf16.msra.mxu0 %v6249
        %6369 = vmatprep.subr.bf16.mxu0 %v6248
        %6370 = vmatpush1.bf16.msra.mxu0 %v6247
        %6371 = vmatprep.subr.bf16.mxu0 %v6246
        %6372 = vmatpush1.bf16.msra.mxu0 %v6245
        %6373 = vmatprep.subr.bf16.mxu0 %v6244
        %6374 = vmatpush1.bf16.msra.mxu0 %v6243
        %6375 = vmatprep.subr.bf16.mxu0 %v6242
        %6376 = vmatpush1.bf16.msra.mxu0 %v6241
        %6377 = vmatprep.subr.bf16.mxu0 %v6240
        %6378 = vmatpush1.bf16.msra.mxu0 %v6239
        %6379 = vmatprep.subr.bf16.mxu0 %v6238
        %6380 = vmatpush1.bf16.msra.mxu0 %v6237
        %6381 = vmatprep.subr.bf16.mxu0 %v6268
        %6382 = vmatpush2.bf16.msra.mxu0 %v6267
        %6383 = vmatprep.subr.bf16.mxu0 %v6266
        %6384 = vmatpush2.bf16.msra.mxu0 %v6265
        %6385 = vmatprep.subr.bf16.mxu0 %v6264
        %6386 = vmatpush2.bf16.msra.mxu0 %v6263
        %6387 = vmatprep.subr.bf16.mxu0 %v6262
        %6388 = vmatpush2.bf16.msra.mxu0 %v6261
        %6389 = vmatprep.subr.bf16.mxu0 %v6260
        %6390 = vmatpush2.bf16.msra.mxu0 %v6259
        %6391 = vmatprep.subr.bf16.mxu0 %v6258
        %6392 = vmatpush2.bf16.msra.mxu0 %v6257
        %6393 = vmatprep.subr.bf16.mxu0 %v6256
        %6394 = vmatpush2.bf16.msra.mxu0 %v6255
        %6395 = vmatprep.subr.bf16.mxu0 %v6254
        %6396 = vmatpush2.bf16.msra.mxu0 %v6253
        %6397 = vmatprep.mubr.bf16.mxu0 %v5950
        %6398 = vmatmul.mubr.bf16.gmra.mxu0 %v5949
        %v6399 = vpop.f32.mrf.mxu0
        %v6400 = vadd.f32 0.0, %v6399
        %v6401 = vpop.f32.mrf.mxu0
        %v6402 = vadd.f32 0.0, %v6401
        %v6403 = vpop.f32.mrf.mxu0
        %v6404 = vadd.f32 0.0, %v6403
        %v6405 = vpop.f32.mrf.mxu0
        %v6406 = vadd.f32 0.0, %v6405
        %6407 = vmatprep.mubr.bf16.mxu0 %v5954
        %6408 = vmatmul.mubr.bf16.gmra.mxu0 %v5953
        %v6409 = vpop.f32.mrf.mxu0
        %v6410 = vadd.f32 0.0, %v6409
        %v6411 = vpop.f32.mrf.mxu0
        %v6412 = vadd.f32 0.0, %v6411
        %v6413 = vpop.f32.mrf.mxu0
        %v6414 = vadd.f32 0.0, %v6413
        %v6415 = vpop.f32.mrf.mxu0
        %v6416 = vadd.f32 0.0, %v6415
        %6417 = vmatprep.mubr.bf16.mxu0 %v5958
        %6418 = vmatmul.mubr.bf16.gmra.mxu0 %v5957
        %v6419 = vpop.f32.mrf.mxu0
        %v6420 = vadd.f32 0.0, %v6419
        %v6421 = vpop.f32.mrf.mxu0
        %v6422 = vadd.f32 0.0, %v6421
        %v6423 = vpop.f32.mrf.mxu0
        %v6424 = vadd.f32 0.0, %v6423
        %v6425 = vpop.f32.mrf.mxu0
        %v6426 = vadd.f32 0.0, %v6425
        %6427 = vmatprep.mubr.bf16.mxu0 %v5962
        %6428 = vmatmul.mubr.bf16.gmra.mxu0 %v5961
        %v6429 = vpop.f32.mrf.mxu0
        %v6430 = vadd.f32 0.0, %v6429
        %v6431 = vpop.f32.mrf.mxu0
        %v6432 = vadd.f32 0.0, %v6431
        %v6433 = vpop.f32.mrf.mxu0
        %v6434 = vadd.f32 0.0, %v6433
        %v6435 = vpop.f32.mrf.mxu0
        %v6436 = vadd.f32 0.0, %v6435
        %6437 = vmatprep.mubr.bf16.mxu0 %v5966
        %6438 = vmatmul.mubr.bf16.gmra.mxu0 %v5965
        %v6439 = vpop.f32.mrf.mxu0
        %v6440 = vadd.f32 0.0, %v6439
        %v6441 = vpop.f32.mrf.mxu0
        %v6442 = vadd.f32 0.0, %v6441
        %v6443 = vpop.f32.mrf.mxu0
        %v6444 = vadd.f32 0.0, %v6443
        %v6445 = vpop.f32.mrf.mxu0
        %v6446 = vadd.f32 0.0, %v6445
        %6447 = vmatprep.mubr.bf16.mxu0 %v5970
        %6448 = vmatmul.mubr.bf16.gmra.mxu0 %v5969
        %v6449 = vpop.f32.mrf.mxu0
        %v6450 = vadd.f32 0.0, %v6449
        %v6451 = vpop.f32.mrf.mxu0
        %v6452 = vadd.f32 0.0, %v6451
        %v6453 = vpop.f32.mrf.mxu0
        %v6454 = vadd.f32 0.0, %v6453
        %v6455 = vpop.f32.mrf.mxu0
        %v6456 = vadd.f32 0.0, %v6455
        %6457 = vmatprep.mubr.bf16.mxu0 %v5974
        %6458 = vmatmul.mubr.bf16.gmra.mxu0 %v5973
        %v6459 = vpop.f32.mrf.mxu0
        %v6460 = vadd.f32 0.0, %v6459
        %v6461 = vpop.f32.mrf.mxu0
        %v6462 = vadd.f32 0.0, %v6461
        %v6463 = vpop.f32.mrf.mxu0
        %v6464 = vadd.f32 0.0, %v6463
        %v6465 = vpop.f32.mrf.mxu0
        %v6466 = vadd.f32 0.0, %v6465
        %6467 = vmatprep.mubr.bf16.mxu0 %v5978
        %6468 = vmatmul.mubr.bf16.gmra.mxu0 %v5977
        %v6469 = vpop.f32.mrf.mxu0
        %v6470 = vadd.f32 0.0, %v6469
        %v6471 = vpop.f32.mrf.mxu0
        %v6472 = vadd.f32 0.0, %v6471
        %v6473 = vpop.f32.mrf.mxu0
        %v6474 = vadd.f32 0.0, %v6473
        %v6475 = vpop.f32.mrf.mxu0
        %v6476 = vadd.f32 0.0, %v6475
        %6477 = vdwg.mxu0
        %6478 = vmatprep.subr.bf16.mxu0 %v6284
        %6479 = vmatpush1.bf16.msra.mxu0 %v6283
        %6480 = vmatprep.subr.bf16.mxu0 %v6282
        %6481 = vmatpush1.bf16.msra.mxu0 %v6281
        %6482 = vmatprep.subr.bf16.mxu0 %v6280
        %6483 = vmatpush1.bf16.msra.mxu0 %v6279
        %6484 = vmatprep.subr.bf16.mxu0 %v6278
        %6485 = vmatpush1.bf16.msra.mxu0 %v6277
        %6486 = vmatprep.subr.bf16.mxu0 %v6276
        %6487 = vmatpush1.bf16.msra.mxu0 %v6275
        %6488 = vmatprep.subr.bf16.mxu0 %v6274
        %6489 = vmatpush1.bf16.msra.mxu0 %v6273
        %6490 = vmatprep.subr.bf16.mxu0 %v6272
        %6491 = vmatpush1.bf16.msra.mxu0 %v6271
        %6492 = vmatprep.subr.bf16.mxu0 %v6270
        %6493 = vmatpush1.bf16.msra.mxu0 %v6269
        %6494 = vmatprep.subr.bf16.mxu0 %v6300
        %6495 = vmatpush2.bf16.msra.mxu0 %v6299
        %6496 = vmatprep.subr.bf16.mxu0 %v6298
        %6497 = vmatpush2.bf16.msra.mxu0 %v6297
        %6498 = vmatprep.subr.bf16.mxu0 %v6296
        %6499 = vmatpush2.bf16.msra.mxu0 %v6295
        %6500 = vmatprep.subr.bf16.mxu0 %v6294
        %6501 = vmatpush2.bf16.msra.mxu0 %v6293
        %6502 = vmatprep.subr.bf16.mxu0 %v6292
        %6503 = vmatpush2.bf16.msra.mxu0 %v6291
        %6504 = vmatprep.subr.bf16.mxu0 %v6290
        %6505 = vmatpush2.bf16.msra.mxu0 %v6289
        %6506 = vmatprep.subr.bf16.mxu0 %v6288
        %6507 = vmatpush2.bf16.msra.mxu0 %v6287
        %6508 = vmatprep.subr.bf16.mxu0 %v6286
        %6509 = vmatpush2.bf16.msra.mxu0 %v6285
        %6510 = vmatprep.mubr.bf16.mxu0 %v5952
        %6511 = vmatmul.mubr.bf16.gmra.mxu0 %v5951
        %v6512 = vpop.f32.mrf.mxu0
        %v6513 = vadd.f32 %v6400, %v6512
        %v6514 = vpop.f32.mrf.mxu0
        %v6515 = vadd.f32 %v6402, %v6514
        %v6516 = vpop.f32.mrf.mxu0
        %v6517 = vadd.f32 %v6404, %v6516
        %v6518 = vpop.f32.mrf.mxu0
        %v6519 = vadd.f32 %v6406, %v6518
        %6520 = vmatprep.mubr.bf16.mxu0 %v5956
        %6521 = vmatmul.mubr.bf16.gmra.mxu0 %v5955
        %v6522 = vpop.f32.mrf.mxu0
        %v6523 = vadd.f32 %v6410, %v6522
        %v6524 = vpop.f32.mrf.mxu0
        %v6525 = vadd.f32 %v6412, %v6524
        %v6526 = vpop.f32.mrf.mxu0
        %v6527 = vadd.f32 %v6414, %v6526
        %v6528 = vpop.f32.mrf.mxu0
        %v6529 = vadd.f32 %v6416, %v6528
        %6530 = vmatprep.mubr.bf16.mxu0 %v5960
        %6531 = vmatmul.mubr.bf16.gmra.mxu0 %v5959
        %v6532 = vpop.f32.mrf.mxu0
        %v6533 = vadd.f32 %v6420, %v6532
        %v6534 = vpop.f32.mrf.mxu0
        %v6535 = vadd.f32 %v6422, %v6534
        %v6536 = vpop.f32.mrf.mxu0
        %v6537 = vadd.f32 %v6424, %v6536
        %v6538 = vpop.f32.mrf.mxu0
        %v6539 = vadd.f32 %v6426, %v6538
        %6540 = vmatprep.mubr.bf16.mxu0 %v5964
        %6541 = vmatmul.mubr.bf16.gmra.mxu0 %v5963
        %v6542 = vpop.f32.mrf.mxu0
        %v6543 = vadd.f32 %v6430, %v6542
        %v6544 = vpop.f32.mrf.mxu0
        %v6545 = vadd.f32 %v6432, %v6544
        %v6546 = vpop.f32.mrf.mxu0
        %v6547 = vadd.f32 %v6434, %v6546
        %v6548 = vpop.f32.mrf.mxu0
        %v6549 = vadd.f32 %v6436, %v6548
        %6550 = vmatprep.mubr.bf16.mxu0 %v5968
        %6551 = vmatmul.mubr.bf16.gmra.mxu0 %v5967
        %v6552 = vpop.f32.mrf.mxu0
        %v6553 = vadd.f32 %v6440, %v6552
        %v6554 = vpop.f32.mrf.mxu0
        %v6555 = vadd.f32 %v6442, %v6554
        %v6556 = vpop.f32.mrf.mxu0
        %v6557 = vadd.f32 %v6444, %v6556
        %v6558 = vpop.f32.mrf.mxu0
        %v6559 = vadd.f32 %v6446, %v6558
        %6560 = vmatprep.mubr.bf16.mxu0 %v5972
        %6561 = vmatmul.mubr.bf16.gmra.mxu0 %v5971
        %v6562 = vpop.f32.mrf.mxu0
        %v6563 = vadd.f32 %v6450, %v6562
        %v6564 = vpop.f32.mrf.mxu0
        %v6565 = vadd.f32 %v6452, %v6564
        %v6566 = vpop.f32.mrf.mxu0
        %v6567 = vadd.f32 %v6454, %v6566
        %v6568 = vpop.f32.mrf.mxu0
        %v6569 = vadd.f32 %v6456, %v6568
        %6570 = vmatprep.mubr.bf16.mxu0 %v5976
        %6571 = vmatmul.mubr.bf16.gmra.mxu0 %v5975
        %v6572 = vpop.f32.mrf.mxu0
        %v6573 = vadd.f32 %v6460, %v6572
        %v6574 = vpop.f32.mrf.mxu0
        %v6575 = vadd.f32 %v6462, %v6574
        %v6576 = vpop.f32.mrf.mxu0
        %v6577 = vadd.f32 %v6464, %v6576
        %v6578 = vpop.f32.mrf.mxu0
        %v6579 = vadd.f32 %v6466, %v6578
        %6580 = vmatprep.mubr.bf16.mxu0 %v5980
        %6581 = vmatmul.mubr.bf16.gmra.mxu0 %v5979
        %v6582 = vpop.f32.mrf.mxu0
        %v6583 = vadd.f32 %v6470, %v6582
        %v6584 = vpop.f32.mrf.mxu0
        %v6585 = vadd.f32 %v6472, %v6584
        %v6586 = vpop.f32.mrf.mxu0
        %v6587 = vadd.f32 %v6474, %v6586
        %v6588 = vpop.f32.mrf.mxu0
        %v6589 = vadd.f32 %v6476, %v6588
        %6590 = vdwg.mxu0
        %v6591 = vadd.f32 %v5221, %v6513
        %v6592 = vadd.f32 %v5222, %v6515
        %v6593 = vadd.f32 %v5223, %v6517
        %v6594 = vadd.f32 %v5224, %v6519
        %v6595 = vadd.f32 %v5225, %v6523
        %v6596 = vadd.f32 %v5226, %v6525
        %v6597 = vadd.f32 %v5227, %v6527
        %v6598 = vadd.f32 %v5228, %v6529
        %v6599 = vadd.f32 %v5229, %v6533
        %v6600 = vadd.f32 %v5230, %v6535
        %v6601 = vadd.f32 %v5231, %v6537
        %v6602 = vadd.f32 %v5232, %v6539
        %v6603 = vadd.f32 %v5233, %v6543
        %v6604 = vadd.f32 %v5234, %v6545
        %v6605 = vadd.f32 %v5235, %v6547
        %v6606 = vadd.f32 %v5236, %v6549
        %v6607 = vadd.f32 %v5237, %v6553
        %v6608 = vadd.f32 %v5238, %v6555
        %v6609 = vadd.f32 %v5239, %v6557
        %v6610 = vadd.f32 %v5240, %v6559
        %v6611 = vadd.f32 %v5241, %v6563
        %v6612 = vadd.f32 %v5242, %v6565
        %v6613 = vadd.f32 %v5243, %v6567
        %v6614 = vadd.f32 %v5244, %v6569
        %v6615 = vadd.f32 %v5245, %v6573
        %v6616 = vadd.f32 %v5246, %v6575
        %v6617 = vadd.f32 %v5247, %v6577
        %v6618 = vadd.f32 %v5248, %v6579
        %v6619 = vadd.f32 %v5249, %v6583
        %v6620 = vadd.f32 %v5250, %v6585
        %v6621 = vadd.f32 %v5251, %v6587
        %v6622 = vadd.f32 %v5252, %v6589
        %v6623 = vld [vmem:[%s717 + $0x10] sm:$0xff]
        %v6624 = vld [vmem:[%s717 + $0x18] sm:$0xff]
        %v6625 = vld [vmem:[%s717 + $0x50] sm:$0xff]
        %v6626 = vld [vmem:[%s717 + $0x58] sm:$0xff]
        %v6627 = vld [vmem:[%s717 + $0x90] sm:$0xff]
        %v6628 = vld [vmem:[%s717 + $0x98] sm:$0xff]
        %v6629 = vld [vmem:[%s717 + $0xd0] sm:$0xff]
        %v6630 = vld [vmem:[%s717 + $0xd8] sm:$0xff]
        %v6631 = vld [vmem:[%s717 + $0x110] sm:$0xff]
        %v6632 = vld [vmem:[%s717 + $0x118] sm:$0xff]
        %v6633 = vld [vmem:[%s717 + $0x150] sm:$0xff]
        %v6634 = vld [vmem:[%s717 + $0x158] sm:$0xff]
        %v6635 = vld [vmem:[%s717 + $0x190] sm:$0xff]
        %v6636 = vld [vmem:[%s717 + $0x198] sm:$0xff]
        %v6637 = vld [vmem:[%s717 + $0x1d0] sm:$0xff]
        %v6638 = vld [vmem:[%s717 + $0x1d8] sm:$0xff]
        %v6639 = vld [vmem:[%s717 + $0x210] sm:$0xff]
        %v6640 = vld [vmem:[%s717 + $0x218] sm:$0xff]
        %v6641 = vld [vmem:[%s717 + $0x250] sm:$0xff]
        %v6642 = vld [vmem:[%s717 + $0x258] sm:$0xff]
        %v6643 = vld [vmem:[%s717 + $0x290] sm:$0xff]
        %v6644 = vld [vmem:[%s717 + $0x298] sm:$0xff]
        %v6645 = vld [vmem:[%s717 + $0x2d0] sm:$0xff]
        %v6646 = vld [vmem:[%s717 + $0x2d8] sm:$0xff]
        %v6647 = vld [vmem:[%s717 + $0x310] sm:$0xff]
        %v6648 = vld [vmem:[%s717 + $0x318] sm:$0xff]
        %v6649 = vld [vmem:[%s717 + $0x350] sm:$0xff]
        %v6650 = vld [vmem:[%s717 + $0x358] sm:$0xff]
        %v6651 = vld [vmem:[%s717 + $0x390] sm:$0xff]
        %v6652 = vld [vmem:[%s717 + $0x398] sm:$0xff]
        %v6653 = vld [vmem:[%s717 + $0x3d0] sm:$0xff]
        %v6654 = vld [vmem:[%s717 + $0x3d8] sm:$0xff]
        %v6655 = vld [vmem:[%s717 + $0x410] sm:$0xff]
        %v6656 = vld [vmem:[%s717 + $0x418] sm:$0xff]
        %v6657 = vld [vmem:[%s717 + $0x450] sm:$0xff]
        %v6658 = vld [vmem:[%s717 + $0x458] sm:$0xff]
        %v6659 = vld [vmem:[%s717 + $0x490] sm:$0xff]
        %v6660 = vld [vmem:[%s717 + $0x498] sm:$0xff]
        %v6661 = vld [vmem:[%s717 + $0x4d0] sm:$0xff]
        %v6662 = vld [vmem:[%s717 + $0x4d8] sm:$0xff]
        %v6663 = vld [vmem:[%s717 + $0x510] sm:$0xff]
        %v6664 = vld [vmem:[%s717 + $0x518] sm:$0xff]
        %v6665 = vld [vmem:[%s717 + $0x550] sm:$0xff]
        %v6666 = vld [vmem:[%s717 + $0x558] sm:$0xff]
        %v6667 = vld [vmem:[%s717 + $0x590] sm:$0xff]
        %v6668 = vld [vmem:[%s717 + $0x598] sm:$0xff]
        %v6669 = vld [vmem:[%s717 + $0x5d0] sm:$0xff]
        %v6670 = vld [vmem:[%s717 + $0x5d8] sm:$0xff]
        %v6671 = vld [vmem:[%s717 + $0x610] sm:$0xff]
        %v6672 = vld [vmem:[%s717 + $0x618] sm:$0xff]
        %v6673 = vld [vmem:[%s717 + $0x650] sm:$0xff]
        %v6674 = vld [vmem:[%s717 + $0x658] sm:$0xff]
        %v6675 = vld [vmem:[%s717 + $0x690] sm:$0xff]
        %v6676 = vld [vmem:[%s717 + $0x698] sm:$0xff]
        %v6677 = vld [vmem:[%s717 + $0x6d0] sm:$0xff]
        %v6678 = vld [vmem:[%s717 + $0x6d8] sm:$0xff]
        %v6679 = vld [vmem:[%s717 + $0x710] sm:$0xff]
        %v6680 = vld [vmem:[%s717 + $0x718] sm:$0xff]
        %v6681 = vld [vmem:[%s717 + $0x750] sm:$0xff]
        %v6682 = vld [vmem:[%s717 + $0x758] sm:$0xff]
        %v6683 = vld [vmem:[%s717 + $0x790] sm:$0xff]
        %v6684 = vld [vmem:[%s717 + $0x798] sm:$0xff]
        %v6685 = vld [vmem:[%s717 + $0x7d0] sm:$0xff]
        %v6686 = vld [vmem:[%s717 + $0x7d8] sm:$0xff]
        %v6687 = vld [vmem:[%s726 + $0x4] sm:$0xf]
        %v6689 = vlaneseq
        %v6690 = vshrl.u32 %v6689, 7
        %v6691 = vsub.s32 0, %v6690
        %v6692 = vrot.slane %v6687, %v6691
        %v6693 = vlaneseq
        %v6694 = vshrl.u32 %v6693, 7
        %v6695 = vsub.s32 1, %v6694
        %v6696 = vrot.slane %v6687, %v6695
        %v6697 = vlaneseq
        %v6698 = vshrl.u32 %v6697, 7
        %v6699 = vsub.s32 2, %v6698
        %v6700 = vrot.slane %v6687, %v6699
        %v6701 = vlaneseq
        %v6702 = vshrl.u32 %v6701, 7
        %v6703 = vsub.s32 3, %v6702
        %v6704 = vrot.slane %v6687, %v6703
        %v6773 = vunpack.c.l.b16 %v6623
        %v6774 = vunpack.c.h.b16 %v6623
        %v6775 = vunpack.c.l.b16 %v6624
        %v6776 = vunpack.c.h.b16 %v6624
        %v6777 = vunpack.c.l.b16 %v6625
        %v6778 = vunpack.c.h.b16 %v6625
        %v6779 = vunpack.c.l.b16 %v6626
        %v6780 = vunpack.c.h.b16 %v6626
        %v6781 = vunpack.c.l.b16 %v6627
        %v6782 = vunpack.c.h.b16 %v6627
        %v6783 = vunpack.c.l.b16 %v6628
        %v6784 = vunpack.c.h.b16 %v6628
        %v6785 = vunpack.c.l.b16 %v6629
        %v6786 = vunpack.c.h.b16 %v6629
        %v6787 = vunpack.c.l.b16 %v6630
        %v6788 = vunpack.c.h.b16 %v6630
        %v6789 = vunpack.c.l.b16 %v6631
        %v6790 = vunpack.c.h.b16 %v6631
        %v6791 = vunpack.c.l.b16 %v6632
        %v6792 = vunpack.c.h.b16 %v6632
        %v6793 = vunpack.c.l.b16 %v6633
        %v6794 = vunpack.c.h.b16 %v6633
        %v6795 = vunpack.c.l.b16 %v6634
        %v6796 = vunpack.c.h.b16 %v6634
        %v6797 = vunpack.c.l.b16 %v6635
        %v6798 = vunpack.c.h.b16 %v6635
        %v6799 = vunpack.c.l.b16 %v6636
        %v6800 = vunpack.c.h.b16 %v6636
        %v6801 = vunpack.c.l.b16 %v6637
        %v6802 = vunpack.c.h.b16 %v6637
        %v6803 = vunpack.c.l.b16 %v6638
        %v6804 = vunpack.c.h.b16 %v6638
        %v6805 = vunpack.c.l.b16 %v6639
        %v6806 = vunpack.c.h.b16 %v6639
        %v6807 = vunpack.c.l.b16 %v6640
        %v6808 = vunpack.c.h.b16 %v6640
        %v6809 = vunpack.c.l.b16 %v6641
        %v6810 = vunpack.c.h.b16 %v6641
        %v6811 = vunpack.c.l.b16 %v6642
        %v6812 = vunpack.c.h.b16 %v6642
        %v6813 = vunpack.c.l.b16 %v6643
        %v6814 = vunpack.c.h.b16 %v6643
        %v6815 = vunpack.c.l.b16 %v6644
        %v6816 = vunpack.c.h.b16 %v6644
        %v6817 = vunpack.c.l.b16 %v6645
        %v6818 = vunpack.c.h.b16 %v6645
        %v6819 = vunpack.c.l.b16 %v6646
        %v6820 = vunpack.c.h.b16 %v6646
        %v6821 = vunpack.c.l.b16 %v6647
        %v6822 = vunpack.c.h.b16 %v6647
        %v6823 = vunpack.c.l.b16 %v6648
        %v6824 = vunpack.c.h.b16 %v6648
        %v6825 = vunpack.c.l.b16 %v6649
        %v6826 = vunpack.c.h.b16 %v6649
        %v6827 = vunpack.c.l.b16 %v6650
        %v6828 = vunpack.c.h.b16 %v6650
        %v6829 = vunpack.c.l.b16 %v6651
        %v6830 = vunpack.c.h.b16 %v6651
        %v6831 = vunpack.c.l.b16 %v6652
        %v6832 = vunpack.c.h.b16 %v6652
        %v6833 = vunpack.c.l.b16 %v6653
        %v6834 = vunpack.c.h.b16 %v6653
        %v6835 = vunpack.c.l.b16 %v6654
        %v6836 = vunpack.c.h.b16 %v6654
        %v6837 = vunpack.c.l.b16 %v6655
        %v6838 = vunpack.c.h.b16 %v6655
        %v6839 = vunpack.c.l.b16 %v6656
        %v6840 = vunpack.c.h.b16 %v6656
        %v6841 = vunpack.c.l.b16 %v6657
        %v6842 = vunpack.c.h.b16 %v6657
        %v6843 = vunpack.c.l.b16 %v6658
        %v6844 = vunpack.c.h.b16 %v6658
        %v6845 = vunpack.c.l.b16 %v6659
        %v6846 = vunpack.c.h.b16 %v6659
        %v6847 = vunpack.c.l.b16 %v6660
        %v6848 = vunpack.c.h.b16 %v6660
        %v6849 = vunpack.c.l.b16 %v6661
        %v6850 = vunpack.c.h.b16 %v6661
        %v6851 = vunpack.c.l.b16 %v6662
        %v6852 = vunpack.c.h.b16 %v6662
        %v6853 = vunpack.c.l.b16 %v6663
        %v6854 = vunpack.c.h.b16 %v6663
        %v6855 = vunpack.c.l.b16 %v6664
        %v6856 = vunpack.c.h.b16 %v6664
        %v6857 = vunpack.c.l.b16 %v6665
        %v6858 = vunpack.c.h.b16 %v6665
        %v6859 = vunpack.c.l.b16 %v6666
        %v6860 = vunpack.c.h.b16 %v6666
        %v6861 = vunpack.c.l.b16 %v6667
        %v6862 = vunpack.c.h.b16 %v6667
        %v6863 = vunpack.c.l.b16 %v6668
        %v6864 = vunpack.c.h.b16 %v6668
        %v6865 = vunpack.c.l.b16 %v6669
        %v6866 = vunpack.c.h.b16 %v6669
        %v6867 = vunpack.c.l.b16 %v6670
        %v6868 = vunpack.c.h.b16 %v6670
        %v6869 = vunpack.c.l.b16 %v6671
        %v6870 = vunpack.c.h.b16 %v6671
        %v6871 = vunpack.c.l.b16 %v6672
        %v6872 = vunpack.c.h.b16 %v6672
        %v6873 = vunpack.c.l.b16 %v6673
        %v6874 = vunpack.c.h.b16 %v6673
        %v6875 = vunpack.c.l.b16 %v6674
        %v6876 = vunpack.c.h.b16 %v6674
        %v6877 = vunpack.c.l.b16 %v6675
        %v6878 = vunpack.c.h.b16 %v6675
        %v6879 = vunpack.c.l.b16 %v6676
        %v6880 = vunpack.c.h.b16 %v6676
        %v6881 = vunpack.c.l.b16 %v6677
        %v6882 = vunpack.c.h.b16 %v6677
        %v6883 = vunpack.c.l.b16 %v6678
        %v6884 = vunpack.c.h.b16 %v6678
        %v6885 = vunpack.c.l.b16 %v6679
        %v6886 = vunpack.c.h.b16 %v6679
        %v6887 = vunpack.c.l.b16 %v6680
        %v6888 = vunpack.c.h.b16 %v6680
        %v6889 = vunpack.c.l.b16 %v6681
        %v6890 = vunpack.c.h.b16 %v6681
        %v6891 = vunpack.c.l.b16 %v6682
        %v6892 = vunpack.c.h.b16 %v6682
        %v6893 = vunpack.c.l.b16 %v6683
        %v6894 = vunpack.c.h.b16 %v6683
        %v6895 = vunpack.c.l.b16 %v6684
        %v6896 = vunpack.c.h.b16 %v6684
        %v6897 = vunpack.c.l.b16 %v6685
        %v6898 = vunpack.c.h.b16 %v6685
        %v6899 = vunpack.c.l.b16 %v6686
        %v6900 = vunpack.c.h.b16 %v6686
        %v6901 = vpack.c.b16 %v6777, %v6773
        %v6902 = vpack.c.b16 %v6778, %v6774
        %v6903 = vpack.c.b16 %v6779, %v6775
        %v6904 = vpack.c.b16 %v6780, %v6776
        %v6905 = vpack.c.b16 %v6785, %v6781
        %v6906 = vpack.c.b16 %v6786, %v6782
        %v6907 = vpack.c.b16 %v6787, %v6783
        %v6908 = vpack.c.b16 %v6788, %v6784
        %v6909 = vpack.c.b16 %v6793, %v6789
        %v6910 = vpack.c.b16 %v6794, %v6790
        %v6911 = vpack.c.b16 %v6795, %v6791
        %v6912 = vpack.c.b16 %v6796, %v6792
        %v6913 = vpack.c.b16 %v6801, %v6797
        %v6914 = vpack.c.b16 %v6802, %v6798
        %v6915 = vpack.c.b16 %v6803, %v6799
        %v6916 = vpack.c.b16 %v6804, %v6800
        %v6917 = vpack.c.b16 %v6809, %v6805
        %v6918 = vpack.c.b16 %v6810, %v6806
        %v6919 = vpack.c.b16 %v6811, %v6807
        %v6920 = vpack.c.b16 %v6812, %v6808
        %v6921 = vpack.c.b16 %v6817, %v6813
        %v6922 = vpack.c.b16 %v6818, %v6814
        %v6923 = vpack.c.b16 %v6819, %v6815
        %v6924 = vpack.c.b16 %v6820, %v6816
        %v6925 = vpack.c.b16 %v6825, %v6821
        %v6926 = vpack.c.b16 %v6826, %v6822
        %v6927 = vpack.c.b16 %v6827, %v6823
        %v6928 = vpack.c.b16 %v6828, %v6824
        %v6929 = vpack.c.b16 %v6833, %v6829
        %v6930 = vpack.c.b16 %v6834, %v6830
        %v6931 = vpack.c.b16 %v6835, %v6831
        %v6932 = vpack.c.b16 %v6836, %v6832
        %v6933 = vpack.c.b16 %v6841, %v6837
        %v6934 = vpack.c.b16 %v6842, %v6838
        %v6935 = vpack.c.b16 %v6843, %v6839
        %v6936 = vpack.c.b16 %v6844, %v6840
        %v6937 = vpack.c.b16 %v6849, %v6845
        %v6938 = vpack.c.b16 %v6850, %v6846
        %v6939 = vpack.c.b16 %v6851, %v6847
        %v6940 = vpack.c.b16 %v6852, %v6848
        %v6941 = vpack.c.b16 %v6857, %v6853
        %v6942 = vpack.c.b16 %v6858, %v6854
        %v6943 = vpack.c.b16 %v6859, %v6855
        %v6944 = vpack.c.b16 %v6860, %v6856
        %v6945 = vpack.c.b16 %v6865, %v6861
        %v6946 = vpack.c.b16 %v6866, %v6862
        %v6947 = vpack.c.b16 %v6867, %v6863
        %v6948 = vpack.c.b16 %v6868, %v6864
        %v6949 = vpack.c.b16 %v6873, %v6869
        %v6950 = vpack.c.b16 %v6874, %v6870
        %v6951 = vpack.c.b16 %v6875, %v6871
        %v6952 = vpack.c.b16 %v6876, %v6872
        %v6953 = vpack.c.b16 %v6881, %v6877
        %v6954 = vpack.c.b16 %v6882, %v6878
        %v6955 = vpack.c.b16 %v6883, %v6879
        %v6956 = vpack.c.b16 %v6884, %v6880
        %v6957 = vpack.c.b16 %v6889, %v6885
        %v6958 = vpack.c.b16 %v6890, %v6886
        %v6959 = vpack.c.b16 %v6891, %v6887
        %v6960 = vpack.c.b16 %v6892, %v6888
        %v6961 = vpack.c.b16 %v6897, %v6893
        %v6962 = vpack.c.b16 %v6898, %v6894
        %v6963 = vpack.c.b16 %v6899, %v6895
        %v6964 = vpack.c.b16 %v6900, %v6896
        %7029 = vmatprep.subr.bf16.mxu0 %v6930
        %7030 = vmatpush1.bf16.msra.mxu0 %v6929
        %7031 = vmatprep.subr.bf16.mxu0 %v6926
        %7032 = vmatpush1.bf16.msra.mxu0 %v6925
        %7033 = vmatprep.subr.bf16.mxu0 %v6922
        %7034 = vmatpush1.bf16.msra.mxu0 %v6921
        %7035 = vmatprep.subr.bf16.mxu0 %v6918
        %7036 = vmatpush1.bf16.msra.mxu0 %v6917
        %7037 = vmatprep.subr.bf16.mxu0 %v6914
        %7038 = vmatpush1.bf16.msra.mxu0 %v6913
        %7039 = vmatprep.subr.bf16.mxu0 %v6910
        %7040 = vmatpush1.bf16.msra.mxu0 %v6909
        %7041 = vmatprep.subr.bf16.mxu0 %v6906
        %7042 = vmatpush1.bf16.msra.mxu0 %v6905
        %7043 = vmatprep.subr.bf16.mxu0 %v6902
        %7044 = vmatpush1.bf16.msra.mxu0 %v6901
        %7045 = vmatprep.subr.bf16.mxu0 %v6962
        %7046 = vmatpush2.bf16.msra.mxu0 %v6961
        %7047 = vmatprep.subr.bf16.mxu0 %v6958
        %7048 = vmatpush2.bf16.msra.mxu0 %v6957
        %7049 = vmatprep.subr.bf16.mxu0 %v6954
        %7050 = vmatpush2.bf16.msra.mxu0 %v6953
        %7051 = vmatprep.subr.bf16.mxu0 %v6950
        %7052 = vmatpush2.bf16.msra.mxu0 %v6949
        %7053 = vmatprep.subr.bf16.mxu0 %v6946
        %7054 = vmatpush2.bf16.msra.mxu0 %v6945
        %7055 = vmatprep.subr.bf16.mxu0 %v6942
        %7056 = vmatpush2.bf16.msra.mxu0 %v6941
        %7057 = vmatprep.subr.bf16.mxu0 %v6938
        %7058 = vmatpush2.bf16.msra.mxu0 %v6937
        %7059 = vmatprep.subr.bf16.mxu0 %v6934
        %7060 = vmatpush2.bf16.msra.mxu0 %v6933
        %7061 = vmatprep.mubr.bf16.mxu0 %v5194
        %7062 = vmatmul.mubr.bf16.gmra.mxu0 %v5193
        %v7063 = vpop.f32.mrf.mxu0
        %v7064 = vadd.f32 %v6692, %v7063
        %v7065 = vpop.f32.mrf.mxu0
        %v7066 = vadd.f32 %v6696, %v7065
        %v7067 = vpop.f32.mrf.mxu0
        %v7068 = vadd.f32 %v6692, %v7067
        %v7069 = vpop.f32.mrf.mxu0
        %v7070 = vadd.f32 %v6696, %v7069
        %7071 = vmatprep.mubr.bf16.mxu0 %v5196
        %7072 = vmatmul.mubr.bf16.gmra.mxu0 %v5195
        %v7073 = vpop.f32.mrf.mxu0
        %v7074 = vadd.f32 %v6692, %v7073
        %v7075 = vpop.f32.mrf.mxu0
        %v7076 = vadd.f32 %v6696, %v7075
        %v7077 = vpop.f32.mrf.mxu0
        %v7078 = vadd.f32 %v6692, %v7077
        %v7079 = vpop.f32.mrf.mxu0
        %v7080 = vadd.f32 %v6696, %v7079
        %7081 = vmatprep.mubr.bf16.mxu0 %v5198
        %7082 = vmatmul.mubr.bf16.gmra.mxu0 %v5197
        %v7083 = vpop.f32.mrf.mxu0
        %v7084 = vadd.f32 %v6692, %v7083
        %v7085 = vpop.f32.mrf.mxu0
        %v7086 = vadd.f32 %v6696, %v7085
        %v7087 = vpop.f32.mrf.mxu0
        %v7088 = vadd.f32 %v6692, %v7087
        %v7089 = vpop.f32.mrf.mxu0
        %v7090 = vadd.f32 %v6696, %v7089
        %7091 = vmatprep.mubr.bf16.mxu0 %v5200
        %7092 = vmatmul.mubr.bf16.gmra.mxu0 %v5199
        %v7093 = vpop.f32.mrf.mxu0
        %v7094 = vadd.f32 %v6692, %v7093
        %v7095 = vpop.f32.mrf.mxu0
        %v7096 = vadd.f32 %v6696, %v7095
        %v7097 = vpop.f32.mrf.mxu0
        %v7098 = vadd.f32 %v6692, %v7097
        %v7099 = vpop.f32.mrf.mxu0
        %v7100 = vadd.f32 %v6696, %v7099
        %7101 = vmatprep.mubr.bf16.mxu0 %v5202
        %7102 = vmatmul.mubr.bf16.gmra.mxu0 %v5201
        %v7103 = vpop.f32.mrf.mxu0
        %v7104 = vadd.f32 %v6692, %v7103
        %v7105 = vpop.f32.mrf.mxu0
        %v7106 = vadd.f32 %v6696, %v7105
        %v7107 = vpop.f32.mrf.mxu0
        %v7108 = vadd.f32 %v6692, %v7107
        %v7109 = vpop.f32.mrf.mxu0
        %v7110 = vadd.f32 %v6696, %v7109
        %7111 = vmatprep.mubr.bf16.mxu0 %v5204
        %7112 = vmatmul.mubr.bf16.gmra.mxu0 %v5203
        %v7113 = vpop.f32.mrf.mxu0
        %v7114 = vadd.f32 %v6692, %v7113
        %v7115 = vpop.f32.mrf.mxu0
        %v7116 = vadd.f32 %v6696, %v7115
        %v7117 = vpop.f32.mrf.mxu0
        %v7118 = vadd.f32 %v6692, %v7117
        %v7119 = vpop.f32.mrf.mxu0
        %v7120 = vadd.f32 %v6696, %v7119
        %7121 = vmatprep.mubr.bf16.mxu0 %v5206
        %7122 = vmatmul.mubr.bf16.gmra.mxu0 %v5205
        %v7123 = vpop.f32.mrf.mxu0
        %v7124 = vadd.f32 %v6692, %v7123
        %v7125 = vpop.f32.mrf.mxu0
        %v7126 = vadd.f32 %v6696, %v7125
        %v7127 = vpop.f32.mrf.mxu0
        %v7128 = vadd.f32 %v6692, %v7127
        %v7129 = vpop.f32.mrf.mxu0
        %v7130 = vadd.f32 %v6696, %v7129
        %7131 = vmatprep.mubr.bf16.mxu0 %v5208
        %7132 = vmatmul.mubr.bf16.gmra.mxu0 %v5207
        %v7133 = vpop.f32.mrf.mxu0
        %v7134 = vadd.f32 %v6692, %v7133
        %v7135 = vpop.f32.mrf.mxu0
        %v7136 = vadd.f32 %v6696, %v7135
        %v7137 = vpop.f32.mrf.mxu0
        %v7138 = vadd.f32 %v6692, %v7137
        %v7139 = vpop.f32.mrf.mxu0
        %v7140 = vadd.f32 %v6696, %v7139
        %7141 = vdwg.mxu0
        %7142 = vmatprep.subr.bf16.mxu0 %v6932
        %7143 = vmatpush1.bf16.msra.mxu0 %v6931
        %7144 = vmatprep.subr.bf16.mxu0 %v6928
        %7145 = vmatpush1.bf16.msra.mxu0 %v6927
        %7146 = vmatprep.subr.bf16.mxu0 %v6924
        %7147 = vmatpush1.bf16.msra.mxu0 %v6923
        %7148 = vmatprep.subr.bf16.mxu0 %v6920
        %7149 = vmatpush1.bf16.msra.mxu0 %v6919
        %7150 = vmatprep.subr.bf16.mxu0 %v6916
        %7151 = vmatpush1.bf16.msra.mxu0 %v6915
        %7152 = vmatprep.subr.bf16.mxu0 %v6912
        %7153 = vmatpush1.bf16.msra.mxu0 %v6911
        %7154 = vmatprep.subr.bf16.mxu0 %v6908
        %7155 = vmatpush1.bf16.msra.mxu0 %v6907
        %7156 = vmatprep.subr.bf16.mxu0 %v6904
        %7157 = vmatpush1.bf16.msra.mxu0 %v6903
        %7158 = vmatprep.subr.bf16.mxu0 %v6964
        %7159 = vmatpush2.bf16.msra.mxu0 %v6963
        %7160 = vmatprep.subr.bf16.mxu0 %v6960
        %7161 = vmatpush2.bf16.msra.mxu0 %v6959
        %7162 = vmatprep.subr.bf16.mxu0 %v6956
        %7163 = vmatpush2.bf16.msra.mxu0 %v6955
        %7164 = vmatprep.subr.bf16.mxu0 %v6952
        %7165 = vmatpush2.bf16.msra.mxu0 %v6951
        %7166 = vmatprep.subr.bf16.mxu0 %v6948
        %7167 = vmatpush2.bf16.msra.mxu0 %v6947
        %7168 = vmatprep.subr.bf16.mxu0 %v6944
        %7169 = vmatpush2.bf16.msra.mxu0 %v6943
        %7170 = vmatprep.subr.bf16.mxu0 %v6940
        %7171 = vmatpush2.bf16.msra.mxu0 %v6939
        %7172 = vmatprep.subr.bf16.mxu0 %v6936
        %7173 = vmatpush2.bf16.msra.mxu0 %v6935
        %7174 = vmatprep.mubr.bf16.mxu0 %v5194
        %7175 = vmatmul.mubr.bf16.gmra.mxu0 %v5193
        %v7176 = vpop.f32.mrf.mxu0
        %v7177 = vadd.f32 %v6700, %v7176
        %v7178 = vpop.f32.mrf.mxu0
        %v7179 = vadd.f32 %v6704, %v7178
        %v7180 = vpop.f32.mrf.mxu0
        %v7181 = vadd.f32 %v6700, %v7180
        %v7182 = vpop.f32.mrf.mxu0
        %v7183 = vadd.f32 %v6704, %v7182
        %7184 = vmatprep.mubr.bf16.mxu0 %v5196
        %7185 = vmatmul.mubr.bf16.gmra.mxu0 %v5195
        %v7186 = vpop.f32.mrf.mxu0
        %v7187 = vadd.f32 %v6700, %v7186
        %v7188 = vpop.f32.mrf.mxu0
        %v7189 = vadd.f32 %v6704, %v7188
        %v7190 = vpop.f32.mrf.mxu0
        %v7191 = vadd.f32 %v6700, %v7190
        %v7192 = vpop.f32.mrf.mxu0
        %v7193 = vadd.f32 %v6704, %v7192
        %7194 = vmatprep.mubr.bf16.mxu0 %v5198
        %7195 = vmatmul.mubr.bf16.gmra.mxu0 %v5197
        %v7196 = vpop.f32.mrf.mxu0
        %v7197 = vadd.f32 %v6700, %v7196
        %v7198 = vpop.f32.mrf.mxu0
        %v7199 = vadd.f32 %v6704, %v7198
        %v7200 = vpop.f32.mrf.mxu0
        %v7201 = vadd.f32 %v6700, %v7200
        %v7202 = vpop.f32.mrf.mxu0
        %v7203 = vadd.f32 %v6704, %v7202
        %7204 = vmatprep.mubr.bf16.mxu0 %v5200
        %7205 = vmatmul.mubr.bf16.gmra.mxu0 %v5199
        %v7206 = vpop.f32.mrf.mxu0
        %v7207 = vadd.f32 %v6700, %v7206
        %v7208 = vpop.f32.mrf.mxu0
        %v7209 = vadd.f32 %v6704, %v7208
        %v7210 = vpop.f32.mrf.mxu0
        %v7211 = vadd.f32 %v6700, %v7210
        %v7212 = vpop.f32.mrf.mxu0
        %v7213 = vadd.f32 %v6704, %v7212
        %7214 = vmatprep.mubr.bf16.mxu0 %v5202
        %7215 = vmatmul.mubr.bf16.gmra.mxu0 %v5201
        %v7216 = vpop.f32.mrf.mxu0
        %v7217 = vadd.f32 %v6700, %v7216
        %v7218 = vpop.f32.mrf.mxu0
        %v7219 = vadd.f32 %v6704, %v7218
        %v7220 = vpop.f32.mrf.mxu0
        %v7221 = vadd.f32 %v6700, %v7220
        %v7222 = vpop.f32.mrf.mxu0
        %v7223 = vadd.f32 %v6704, %v7222
        %7224 = vmatprep.mubr.bf16.mxu0 %v5204
        %7225 = vmatmul.mubr.bf16.gmra.mxu0 %v5203
        %v7226 = vpop.f32.mrf.mxu0
        %v7227 = vadd.f32 %v6700, %v7226
        %v7228 = vpop.f32.mrf.mxu0
        %v7229 = vadd.f32 %v6704, %v7228
        %v7230 = vpop.f32.mrf.mxu0
        %v7231 = vadd.f32 %v6700, %v7230
        %v7232 = vpop.f32.mrf.mxu0
        %v7233 = vadd.f32 %v6704, %v7232
        %7234 = vmatprep.mubr.bf16.mxu0 %v5206
        %7235 = vmatmul.mubr.bf16.gmra.mxu0 %v5205
        %v7236 = vpop.f32.mrf.mxu0
        %v7237 = vadd.f32 %v6700, %v7236
        %v7238 = vpop.f32.mrf.mxu0
        %v7239 = vadd.f32 %v6704, %v7238
        %v7240 = vpop.f32.mrf.mxu0
        %v7241 = vadd.f32 %v6700, %v7240
        %v7242 = vpop.f32.mrf.mxu0
        %v7243 = vadd.f32 %v6704, %v7242
        %7244 = vmatprep.mubr.bf16.mxu0 %v5208
        %7245 = vmatmul.mubr.bf16.gmra.mxu0 %v5207
        %v7246 = vpop.f32.mrf.mxu0
        %v7247 = vadd.f32 %v6700, %v7246
        %v7248 = vpop.f32.mrf.mxu0
        %v7249 = vadd.f32 %v6704, %v7248
        %v7250 = vpop.f32.mrf.mxu0
        %v7251 = vadd.f32 %v6700, %v7250
        %v7252 = vpop.f32.mrf.mxu0
        %v7253 = vadd.f32 %v6704, %v7252
        %7254 = vdwg.mxu0
        %v7255 = vmax.f32 %v7064, 0.0
        %v7256 = vmax.f32 %v7066, 0.0
        %v7257 = vmax.f32 %v7177, 0.0
        %v7258 = vmax.f32 %v7179, 0.0
        %v7259 = vmax.f32 %v7068, 0.0
        %v7260 = vmax.f32 %v7070, 0.0
        %v7261 = vmax.f32 %v7181, 0.0
        %v7262 = vmax.f32 %v7183, 0.0
        %v7263 = vmax.f32 %v7074, 0.0
        %v7264 = vmax.f32 %v7076, 0.0
        %v7265 = vmax.f32 %v7187, 0.0
        %v7266 = vmax.f32 %v7189, 0.0
        %v7267 = vmax.f32 %v7078, 0.0
        %v7268 = vmax.f32 %v7080, 0.0
        %v7269 = vmax.f32 %v7191, 0.0
        %v7270 = vmax.f32 %v7193, 0.0
        %v7271 = vmax.f32 %v7084, 0.0
        %v7272 = vmax.f32 %v7086, 0.0
        %v7273 = vmax.f32 %v7197, 0.0
        %v7274 = vmax.f32 %v7199, 0.0
        %v7275 = vmax.f32 %v7088, 0.0
        %v7276 = vmax.f32 %v7090, 0.0
        %v7277 = vmax.f32 %v7201, 0.0
        %v7278 = vmax.f32 %v7203, 0.0
        %v7279 = vmax.f32 %v7094, 0.0
        %v7280 = vmax.f32 %v7096, 0.0
        %v7281 = vmax.f32 %v7207, 0.0
        %v7282 = vmax.f32 %v7209, 0.0
        %v7283 = vmax.f32 %v7098, 0.0
        %v7284 = vmax.f32 %v7100, 0.0
        %v7285 = vmax.f32 %v7211, 0.0
        %v7286 = vmax.f32 %v7213, 0.0
        %v7287 = vmax.f32 %v7104, 0.0
        %v7288 = vmax.f32 %v7106, 0.0
        %v7289 = vmax.f32 %v7217, 0.0
        %v7290 = vmax.f32 %v7219, 0.0
        %v7291 = vmax.f32 %v7108, 0.0
        %v7292 = vmax.f32 %v7110, 0.0
        %v7293 = vmax.f32 %v7221, 0.0
        %v7294 = vmax.f32 %v7223, 0.0
        %v7295 = vmax.f32 %v7114, 0.0
        %v7296 = vmax.f32 %v7116, 0.0
        %v7297 = vmax.f32 %v7227, 0.0
        %v7298 = vmax.f32 %v7229, 0.0
        %v7299 = vmax.f32 %v7118, 0.0
        %v7300 = vmax.f32 %v7120, 0.0
        %v7301 = vmax.f32 %v7231, 0.0
        %v7302 = vmax.f32 %v7233, 0.0
        %v7303 = vmax.f32 %v7124, 0.0
        %v7304 = vmax.f32 %v7126, 0.0
        %v7305 = vmax.f32 %v7237, 0.0
        %v7306 = vmax.f32 %v7239, 0.0
        %v7307 = vmax.f32 %v7128, 0.0
        %v7308 = vmax.f32 %v7130, 0.0
        %v7309 = vmax.f32 %v7241, 0.0
        %v7310 = vmax.f32 %v7243, 0.0
        %v7311 = vmax.f32 %v7134, 0.0
        %v7312 = vmax.f32 %v7136, 0.0
        %v7313 = vmax.f32 %v7247, 0.0
        %v7314 = vmax.f32 %v7249, 0.0
        %v7315 = vmax.f32 %v7138, 0.0
        %v7316 = vmax.f32 %v7140, 0.0
        %v7317 = vmax.f32 %v7251, 0.0
        %v7318 = vmax.f32 %v7253, 0.0
        %v7319 = vpack.c.bf16 %v7259, %v7255
        %v7320 = vpack.c.bf16 %v7260, %v7256
        %v7321 = vpack.c.bf16 %v7261, %v7257
        %v7322 = vpack.c.bf16 %v7262, %v7258
        %v7323 = vpack.c.bf16 %v7267, %v7263
        %v7324 = vpack.c.bf16 %v7268, %v7264
        %v7325 = vpack.c.bf16 %v7269, %v7265
        %v7326 = vpack.c.bf16 %v7270, %v7266
        %v7327 = vpack.c.bf16 %v7275, %v7271
        %v7328 = vpack.c.bf16 %v7276, %v7272
        %v7329 = vpack.c.bf16 %v7277, %v7273
        %v7330 = vpack.c.bf16 %v7278, %v7274
        %v7331 = vpack.c.bf16 %v7283, %v7279
        %v7332 = vpack.c.bf16 %v7284, %v7280
        %v7333 = vpack.c.bf16 %v7285, %v7281
        %v7334 = vpack.c.bf16 %v7286, %v7282
        %v7335 = vpack.c.bf16 %v7291, %v7287
        %v7336 = vpack.c.bf16 %v7292, %v7288
        %v7337 = vpack.c.bf16 %v7293, %v7289
        %v7338 = vpack.c.bf16 %v7294, %v7290
        %v7339 = vpack.c.bf16 %v7299, %v7295
        %v7340 = vpack.c.bf16 %v7300, %v7296
        %v7341 = vpack.c.bf16 %v7301, %v7297
        %v7342 = vpack.c.bf16 %v7302, %v7298
        %v7343 = vpack.c.bf16 %v7307, %v7303
        %v7344 = vpack.c.bf16 %v7308, %v7304
        %v7345 = vpack.c.bf16 %v7309, %v7305
        %v7346 = vpack.c.bf16 %v7310, %v7306
        %v7347 = vpack.c.bf16 %v7315, %v7311
        %v7348 = vpack.c.bf16 %v7316, %v7312
        %v7349 = vpack.c.bf16 %v7317, %v7313
        %v7350 = vpack.c.bf16 %v7318, %v7314
        %v7351 = vld [vmem:[%s735 + $0x200] sm:$0xff]
        %v7352 = vld [vmem:[%s735 + $0x208] sm:$0xff]
        %v7353 = vld [vmem:[%s735 + $0x210] sm:$0xff]
        %v7354 = vld [vmem:[%s735 + $0x218] sm:$0xff]
        %v7355 = vld [vmem:[%s735 + $0x220] sm:$0xff]
        %v7356 = vld [vmem:[%s735 + $0x228] sm:$0xff]
        %v7357 = vld [vmem:[%s735 + $0x230] sm:$0xff]
        %v7358 = vld [vmem:[%s735 + $0x238] sm:$0xff]
        %v7359 = vld [vmem:[%s735 + $0x240] sm:$0xff]
        %v7360 = vld [vmem:[%s735 + $0x248] sm:$0xff]
        %v7361 = vld [vmem:[%s735 + $0x250] sm:$0xff]
        %v7362 = vld [vmem:[%s735 + $0x258] sm:$0xff]
        %v7363 = vld [vmem:[%s735 + $0x260] sm:$0xff]
        %v7364 = vld [vmem:[%s735 + $0x268] sm:$0xff]
        %v7365 = vld [vmem:[%s735 + $0x270] sm:$0xff]
        %v7366 = vld [vmem:[%s735 + $0x278] sm:$0xff]
        %v7367 = vld [vmem:[%s735 + $0x280] sm:$0xff]
        %v7368 = vld [vmem:[%s735 + $0x288] sm:$0xff]
        %v7369 = vld [vmem:[%s735 + $0x290] sm:$0xff]
        %v7370 = vld [vmem:[%s735 + $0x298] sm:$0xff]
        %v7371 = vld [vmem:[%s735 + $0x2a0] sm:$0xff]
        %v7372 = vld [vmem:[%s735 + $0x2a8] sm:$0xff]
        %v7373 = vld [vmem:[%s735 + $0x2b0] sm:$0xff]
        %v7374 = vld [vmem:[%s735 + $0x2b8] sm:$0xff]
        %v7375 = vld [vmem:[%s735 + $0x2c0] sm:$0xff]
        %v7376 = vld [vmem:[%s735 + $0x2c8] sm:$0xff]
        %v7377 = vld [vmem:[%s735 + $0x2d0] sm:$0xff]
        %v7378 = vld [vmem:[%s735 + $0x2d8] sm:$0xff]
        %v7379 = vld [vmem:[%s735 + $0x2e0] sm:$0xff]
        %v7380 = vld [vmem:[%s735 + $0x2e8] sm:$0xff]
        %v7381 = vld [vmem:[%s735 + $0x2f0] sm:$0xff]
        %v7382 = vld [vmem:[%s735 + $0x2f8] sm:$0xff]
        %v7383 = vld [vmem:[%s735 + $0x300] sm:$0xff]
        %v7384 = vld [vmem:[%s735 + $0x308] sm:$0xff]
        %v7385 = vld [vmem:[%s735 + $0x310] sm:$0xff]
        %v7386 = vld [vmem:[%s735 + $0x318] sm:$0xff]
        %v7387 = vld [vmem:[%s735 + $0x320] sm:$0xff]
        %v7388 = vld [vmem:[%s735 + $0x328] sm:$0xff]
        %v7389 = vld [vmem:[%s735 + $0x330] sm:$0xff]
        %v7390 = vld [vmem:[%s735 + $0x338] sm:$0xff]
        %v7391 = vld [vmem:[%s735 + $0x340] sm:$0xff]
        %v7392 = vld [vmem:[%s735 + $0x348] sm:$0xff]
        %v7393 = vld [vmem:[%s735 + $0x350] sm:$0xff]
        %v7394 = vld [vmem:[%s735 + $0x358] sm:$0xff]
        %v7395 = vld [vmem:[%s735 + $0x360] sm:$0xff]
        %v7396 = vld [vmem:[%s735 + $0x368] sm:$0xff]
        %v7397 = vld [vmem:[%s735 + $0x370] sm:$0xff]
        %v7398 = vld [vmem:[%s735 + $0x378] sm:$0xff]
        %v7399 = vld [vmem:[%s735 + $0x380] sm:$0xff]
        %v7400 = vld [vmem:[%s735 + $0x388] sm:$0xff]
        %v7401 = vld [vmem:[%s735 + $0x390] sm:$0xff]
        %v7402 = vld [vmem:[%s735 + $0x398] sm:$0xff]
        %v7403 = vld [vmem:[%s735 + $0x3a0] sm:$0xff]
        %v7404 = vld [vmem:[%s735 + $0x3a8] sm:$0xff]
        %v7405 = vld [vmem:[%s735 + $0x3b0] sm:$0xff]
        %v7406 = vld [vmem:[%s735 + $0x3b8] sm:$0xff]
        %v7407 = vld [vmem:[%s735 + $0x3c0] sm:$0xff]
        %v7408 = vld [vmem:[%s735 + $0x3c8] sm:$0xff]
        %v7409 = vld [vmem:[%s735 + $0x3d0] sm:$0xff]
        %v7410 = vld [vmem:[%s735 + $0x3d8] sm:$0xff]
        %v7411 = vld [vmem:[%s735 + $0x3e0] sm:$0xff]
        %v7412 = vld [vmem:[%s735 + $0x3e8] sm:$0xff]
        %v7413 = vld [vmem:[%s735 + $0x3f0] sm:$0xff]
        %v7414 = vld [vmem:[%s735 + $0x3f8] sm:$0xff]
        %v7479 = vunpack.c.l.b16 %v7351
        %v7480 = vunpack.c.h.b16 %v7351
        %v7481 = vunpack.c.l.b16 %v7352
        %v7482 = vunpack.c.h.b16 %v7352
        %v7483 = vunpack.c.l.b16 %v7353
        %v7484 = vunpack.c.h.b16 %v7353
        %v7485 = vunpack.c.l.b16 %v7354
        %v7486 = vunpack.c.h.b16 %v7354
        %v7487 = vunpack.c.l.b16 %v7355
        %v7488 = vunpack.c.h.b16 %v7355
        %v7489 = vunpack.c.l.b16 %v7356
        %v7490 = vunpack.c.h.b16 %v7356
        %v7491 = vunpack.c.l.b16 %v7357
        %v7492 = vunpack.c.h.b16 %v7357
        %v7493 = vunpack.c.l.b16 %v7358
        %v7494 = vunpack.c.h.b16 %v7358
        %v7495 = vunpack.c.l.b16 %v7359
        %v7496 = vunpack.c.h.b16 %v7359
        %v7497 = vunpack.c.l.b16 %v7360
        %v7498 = vunpack.c.h.b16 %v7360
        %v7499 = vunpack.c.l.b16 %v7361
        %v7500 = vunpack.c.h.b16 %v7361
        %v7501 = vunpack.c.l.b16 %v7362
        %v7502 = vunpack.c.h.b16 %v7362
        %v7503 = vunpack.c.l.b16 %v7363
        %v7504 = vunpack.c.h.b16 %v7363
        %v7505 = vunpack.c.l.b16 %v7364
        %v7506 = vunpack.c.h.b16 %v7364
        %v7507 = vunpack.c.l.b16 %v7365
        %v7508 = vunpack.c.h.b16 %v7365
        %v7509 = vunpack.c.l.b16 %v7366
        %v7510 = vunpack.c.h.b16 %v7366
        %v7511 = vunpack.c.l.b16 %v7367
        %v7512 = vunpack.c.h.b16 %v7367
        %v7513 = vunpack.c.l.b16 %v7368
        %v7514 = vunpack.c.h.b16 %v7368
        %v7515 = vunpack.c.l.b16 %v7369
        %v7516 = vunpack.c.h.b16 %v7369
        %v7517 = vunpack.c.l.b16 %v7370
        %v7518 = vunpack.c.h.b16 %v7370
        %v7519 = vunpack.c.l.b16 %v7371
        %v7520 = vunpack.c.h.b16 %v7371
        %v7521 = vunpack.c.l.b16 %v7372
        %v7522 = vunpack.c.h.b16 %v7372
        %v7523 = vunpack.c.l.b16 %v7373
        %v7524 = vunpack.c.h.b16 %v7373
        %v7525 = vunpack.c.l.b16 %v7374
        %v7526 = vunpack.c.h.b16 %v7374
        %v7527 = vunpack.c.l.b16 %v7375
        %v7528 = vunpack.c.h.b16 %v7375
        %v7529 = vunpack.c.l.b16 %v7376
        %v7530 = vunpack.c.h.b16 %v7376
        %v7531 = vunpack.c.l.b16 %v7377
        %v7532 = vunpack.c.h.b16 %v7377
        %v7533 = vunpack.c.l.b16 %v7378
        %v7534 = vunpack.c.h.b16 %v7378
        %v7535 = vunpack.c.l.b16 %v7379
        %v7536 = vunpack.c.h.b16 %v7379
        %v7537 = vunpack.c.l.b16 %v7380
        %v7538 = vunpack.c.h.b16 %v7380
        %v7539 = vunpack.c.l.b16 %v7381
        %v7540 = vunpack.c.h.b16 %v7381
        %v7541 = vunpack.c.l.b16 %v7382
        %v7542 = vunpack.c.h.b16 %v7382
        %v7543 = vunpack.c.l.b16 %v7383
        %v7544 = vunpack.c.h.b16 %v7383
        %v7545 = vunpack.c.l.b16 %v7384
        %v7546 = vunpack.c.h.b16 %v7384
        %v7547 = vunpack.c.l.b16 %v7385
        %v7548 = vunpack.c.h.b16 %v7385
        %v7549 = vunpack.c.l.b16 %v7386
        %v7550 = vunpack.c.h.b16 %v7386
        %v7551 = vunpack.c.l.b16 %v7387
        %v7552 = vunpack.c.h.b16 %v7387
        %v7553 = vunpack.c.l.b16 %v7388
        %v7554 = vunpack.c.h.b16 %v7388
        %v7555 = vunpack.c.l.b16 %v7389
        %v7556 = vunpack.c.h.b16 %v7389
        %v7557 = vunpack.c.l.b16 %v7390
        %v7558 = vunpack.c.h.b16 %v7390
        %v7559 = vunpack.c.l.b16 %v7391
        %v7560 = vunpack.c.h.b16 %v7391
        %v7561 = vunpack.c.l.b16 %v7392
        %v7562 = vunpack.c.h.b16 %v7392
        %v7563 = vunpack.c.l.b16 %v7393
        %v7564 = vunpack.c.h.b16 %v7393
        %v7565 = vunpack.c.l.b16 %v7394
        %v7566 = vunpack.c.h.b16 %v7394
        %v7567 = vunpack.c.l.b16 %v7395
        %v7568 = vunpack.c.h.b16 %v7395
        %v7569 = vunpack.c.l.b16 %v7396
        %v7570 = vunpack.c.h.b16 %v7396
        %v7571 = vunpack.c.l.b16 %v7397
        %v7572 = vunpack.c.h.b16 %v7397
        %v7573 = vunpack.c.l.b16 %v7398
        %v7574 = vunpack.c.h.b16 %v7398
        %v7575 = vunpack.c.l.b16 %v7399
        %v7576 = vunpack.c.h.b16 %v7399
        %v7577 = vunpack.c.l.b16 %v7400
        %v7578 = vunpack.c.h.b16 %v7400
        %v7579 = vunpack.c.l.b16 %v7401
        %v7580 = vunpack.c.h.b16 %v7401
        %v7581 = vunpack.c.l.b16 %v7402
        %v7582 = vunpack.c.h.b16 %v7402
        %v7583 = vunpack.c.l.b16 %v7403
        %v7584 = vunpack.c.h.b16 %v7403
        %v7585 = vunpack.c.l.b16 %v7404
        %v7586 = vunpack.c.h.b16 %v7404
        %v7587 = vunpack.c.l.b16 %v7405
        %v7588 = vunpack.c.h.b16 %v7405
        %v7589 = vunpack.c.l.b16 %v7406
        %v7590 = vunpack.c.h.b16 %v7406
        %v7591 = vunpack.c.l.b16 %v7407
        %v7592 = vunpack.c.h.b16 %v7407
        %v7593 = vunpack.c.l.b16 %v7408
        %v7594 = vunpack.c.h.b16 %v7408
        %v7595 = vunpack.c.l.b16 %v7409
        %v7596 = vunpack.c.h.b16 %v7409
        %v7597 = vunpack.c.l.b16 %v7410
        %v7598 = vunpack.c.h.b16 %v7410
        %v7599 = vunpack.c.l.b16 %v7411
        %v7600 = vunpack.c.h.b16 %v7411
        %v7601 = vunpack.c.l.b16 %v7412
        %v7602 = vunpack.c.h.b16 %v7412
        %v7603 = vunpack.c.l.b16 %v7413
        %v7604 = vunpack.c.h.b16 %v7413
        %v7605 = vunpack.c.l.b16 %v7414
        %v7606 = vunpack.c.h.b16 %v7414
        %v7607 = vpack.c.b16 %v7481, %v7479
        %v7608 = vpack.c.b16 %v7482, %v7480
        %v7609 = vpack.c.b16 %v7485, %v7483
        %v7610 = vpack.c.b16 %v7486, %v7484
        %v7611 = vpack.c.b16 %v7489, %v7487
        %v7612 = vpack.c.b16 %v7490, %v7488
        %v7613 = vpack.c.b16 %v7493, %v7491
        %v7614 = vpack.c.b16 %v7494, %v7492
        %v7615 = vpack.c.b16 %v7497, %v7495
        %v7616 = vpack.c.b16 %v7498, %v7496
        %v7617 = vpack.c.b16 %v7501, %v7499
        %v7618 = vpack.c.b16 %v7502, %v7500
        %v7619 = vpack.c.b16 %v7505, %v7503
        %v7620 = vpack.c.b16 %v7506, %v7504
        %v7621 = vpack.c.b16 %v7509, %v7507
        %v7622 = vpack.c.b16 %v7510, %v7508
        %v7623 = vpack.c.b16 %v7513, %v7511
        %v7624 = vpack.c.b16 %v7514, %v7512
        %v7625 = vpack.c.b16 %v7517, %v7515
        %v7626 = vpack.c.b16 %v7518, %v7516
        %v7627 = vpack.c.b16 %v7521, %v7519
        %v7628 = vpack.c.b16 %v7522, %v7520
        %v7629 = vpack.c.b16 %v7525, %v7523
        %v7630 = vpack.c.b16 %v7526, %v7524
        %v7631 = vpack.c.b16 %v7529, %v7527
        %v7632 = vpack.c.b16 %v7530, %v7528
        %v7633 = vpack.c.b16 %v7533, %v7531
        %v7634 = vpack.c.b16 %v7534, %v7532
        %v7635 = vpack.c.b16 %v7537, %v7535
        %v7636 = vpack.c.b16 %v7538, %v7536
        %v7637 = vpack.c.b16 %v7541, %v7539
        %v7638 = vpack.c.b16 %v7542, %v7540
        %v7639 = vpack.c.b16 %v7545, %v7543
        %v7640 = vpack.c.b16 %v7546, %v7544
        %v7641 = vpack.c.b16 %v7549, %v7547
        %v7642 = vpack.c.b16 %v7550, %v7548
        %v7643 = vpack.c.b16 %v7553, %v7551
        %v7644 = vpack.c.b16 %v7554, %v7552
        %v7645 = vpack.c.b16 %v7557, %v7555
        %v7646 = vpack.c.b16 %v7558, %v7556
        %v7647 = vpack.c.b16 %v7561, %v7559
        %v7648 = vpack.c.b16 %v7562, %v7560
        %v7649 = vpack.c.b16 %v7565, %v7563
        %v7650 = vpack.c.b16 %v7566, %v7564
        %v7651 = vpack.c.b16 %v7569, %v7567
        %v7652 = vpack.c.b16 %v7570, %v7568
        %v7653 = vpack.c.b16 %v7573, %v7571
        %v7654 = vpack.c.b16 %v7574, %v7572
        %v7655 = vpack.c.b16 %v7577, %v7575
        %v7656 = vpack.c.b16 %v7578, %v7576
        %v7657 = vpack.c.b16 %v7581, %v7579
        %v7658 = vpack.c.b16 %v7582, %v7580
        %v7659 = vpack.c.b16 %v7585, %v7583
        %v7660 = vpack.c.b16 %v7586, %v7584
        %v7661 = vpack.c.b16 %v7589, %v7587
        %v7662 = vpack.c.b16 %v7590, %v7588
        %v7663 = vpack.c.b16 %v7593, %v7591
        %v7664 = vpack.c.b16 %v7594, %v7592
        %v7665 = vpack.c.b16 %v7597, %v7595
        %v7666 = vpack.c.b16 %v7598, %v7596
        %v7667 = vpack.c.b16 %v7601, %v7599
        %v7668 = vpack.c.b16 %v7602, %v7600
        %v7669 = vpack.c.b16 %v7605, %v7603
        %v7670 = vpack.c.b16 %v7606, %v7604
        %7735 = vmatprep.subr.bf16.mxu0 %v7622
        %7736 = vmatpush1.bf16.msra.mxu0 %v7621
        %7737 = vmatprep.subr.bf16.mxu0 %v7620
        %7738 = vmatpush1.bf16.msra.mxu0 %v7619
        %7739 = vmatprep.subr.bf16.mxu0 %v7618
        %7740 = vmatpush1.bf16.msra.mxu0 %v7617
        %7741 = vmatprep.subr.bf16.mxu0 %v7616
        %7742 = vmatpush1.bf16.msra.mxu0 %v7615
        %7743 = vmatprep.subr.bf16.mxu0 %v7614
        %7744 = vmatpush1.bf16.msra.mxu0 %v7613
        %7745 = vmatprep.subr.bf16.mxu0 %v7612
        %7746 = vmatpush1.bf16.msra.mxu0 %v7611
        %7747 = vmatprep.subr.bf16.mxu0 %v7610
        %7748 = vmatpush1.bf16.msra.mxu0 %v7609
        %7749 = vmatprep.subr.bf16.mxu0 %v7608
        %7750 = vmatpush1.bf16.msra.mxu0 %v7607
        %7751 = vmatprep.subr.bf16.mxu0 %v7638
        %7752 = vmatpush2.bf16.msra.mxu0 %v7637
        %7753 = vmatprep.subr.bf16.mxu0 %v7636
        %7754 = vmatpush2.bf16.msra.mxu0 %v7635
        %7755 = vmatprep.subr.bf16.mxu0 %v7634
        %7756 = vmatpush2.bf16.msra.mxu0 %v7633
        %7757 = vmatprep.subr.bf16.mxu0 %v7632
        %7758 = vmatpush2.bf16.msra.mxu0 %v7631
        %7759 = vmatprep.subr.bf16.mxu0 %v7630
        %7760 = vmatpush2.bf16.msra.mxu0 %v7629
        %7761 = vmatprep.subr.bf16.mxu0 %v7628
        %7762 = vmatpush2.bf16.msra.mxu0 %v7627
        %7763 = vmatprep.subr.bf16.mxu0 %v7626
        %7764 = vmatpush2.bf16.msra.mxu0 %v7625
        %7765 = vmatprep.subr.bf16.mxu0 %v7624
        %7766 = vmatpush2.bf16.msra.mxu0 %v7623
        %7767 = vmatprep.mubr.bf16.mxu0 %v7320
        %7768 = vmatmul.mubr.bf16.gmra.mxu0 %v7319
        %v7769 = vpop.f32.mrf.mxu0
        %v7770 = vadd.f32 0.0, %v7769
        %v7771 = vpop.f32.mrf.mxu0
        %v7772 = vadd.f32 0.0, %v7771
        %v7773 = vpop.f32.mrf.mxu0
        %v7774 = vadd.f32 0.0, %v7773
        %v7775 = vpop.f32.mrf.mxu0
        %v7776 = vadd.f32 0.0, %v7775
        %7777 = vmatprep.mubr.bf16.mxu0 %v7324
        %7778 = vmatmul.mubr.bf16.gmra.mxu0 %v7323
        %v7779 = vpop.f32.mrf.mxu0
        %v7780 = vadd.f32 0.0, %v7779
        %v7781 = vpop.f32.mrf.mxu0
        %v7782 = vadd.f32 0.0, %v7781
        %v7783 = vpop.f32.mrf.mxu0
        %v7784 = vadd.f32 0.0, %v7783
        %v7785 = vpop.f32.mrf.mxu0
        %v7786 = vadd.f32 0.0, %v7785
        %7787 = vmatprep.mubr.bf16.mxu0 %v7328
        %7788 = vmatmul.mubr.bf16.gmra.mxu0 %v7327
        %v7789 = vpop.f32.mrf.mxu0
        %v7790 = vadd.f32 0.0, %v7789
        %v7791 = vpop.f32.mrf.mxu0
        %v7792 = vadd.f32 0.0, %v7791
        %v7793 = vpop.f32.mrf.mxu0
        %v7794 = vadd.f32 0.0, %v7793
        %v7795 = vpop.f32.mrf.mxu0
        %v7796 = vadd.f32 0.0, %v7795
        %7797 = vmatprep.mubr.bf16.mxu0 %v7332
        %7798 = vmatmul.mubr.bf16.gmra.mxu0 %v7331
        %v7799 = vpop.f32.mrf.mxu0
        %v7800 = vadd.f32 0.0, %v7799
        %v7801 = vpop.f32.mrf.mxu0
        %v7802 = vadd.f32 0.0, %v7801
        %v7803 = vpop.f32.mrf.mxu0
        %v7804 = vadd.f32 0.0, %v7803
        %v7805 = vpop.f32.mrf.mxu0
        %v7806 = vadd.f32 0.0, %v7805
        %7807 = vmatprep.mubr.bf16.mxu0 %v7336
        %7808 = vmatmul.mubr.bf16.gmra.mxu0 %v7335
        %v7809 = vpop.f32.mrf.mxu0
        %v7810 = vadd.f32 0.0, %v7809
        %v7811 = vpop.f32.mrf.mxu0
        %v7812 = vadd.f32 0.0, %v7811
        %v7813 = vpop.f32.mrf.mxu0
        %v7814 = vadd.f32 0.0, %v7813
        %v7815 = vpop.f32.mrf.mxu0
        %v7816 = vadd.f32 0.0, %v7815
        %7817 = vmatprep.mubr.bf16.mxu0 %v7340
        %7818 = vmatmul.mubr.bf16.gmra.mxu0 %v7339
        %v7819 = vpop.f32.mrf.mxu0
        %v7820 = vadd.f32 0.0, %v7819
        %v7821 = vpop.f32.mrf.mxu0
        %v7822 = vadd.f32 0.0, %v7821
        %v7823 = vpop.f32.mrf.mxu0
        %v7824 = vadd.f32 0.0, %v7823
        %v7825 = vpop.f32.mrf.mxu0
        %v7826 = vadd.f32 0.0, %v7825
        %7827 = vmatprep.mubr.bf16.mxu0 %v7344
        %7828 = vmatmul.mubr.bf16.gmra.mxu0 %v7343
        %v7829 = vpop.f32.mrf.mxu0
        %v7830 = vadd.f32 0.0, %v7829
        %v7831 = vpop.f32.mrf.mxu0
        %v7832 = vadd.f32 0.0, %v7831
        %v7833 = vpop.f32.mrf.mxu0
        %v7834 = vadd.f32 0.0, %v7833
        %v7835 = vpop.f32.mrf.mxu0
        %v7836 = vadd.f32 0.0, %v7835
        %7837 = vmatprep.mubr.bf16.mxu0 %v7348
        %7838 = vmatmul.mubr.bf16.gmra.mxu0 %v7347
        %v7839 = vpop.f32.mrf.mxu0
        %v7840 = vadd.f32 0.0, %v7839
        %v7841 = vpop.f32.mrf.mxu0
        %v7842 = vadd.f32 0.0, %v7841
        %v7843 = vpop.f32.mrf.mxu0
        %v7844 = vadd.f32 0.0, %v7843
        %v7845 = vpop.f32.mrf.mxu0
        %v7846 = vadd.f32 0.0, %v7845
        %7847 = vdwg.mxu0
        %7848 = vmatprep.subr.bf16.mxu0 %v7654
        %7849 = vmatpush1.bf16.msra.mxu0 %v7653
        %7850 = vmatprep.subr.bf16.mxu0 %v7652
        %7851 = vmatpush1.bf16.msra.mxu0 %v7651
        %7852 = vmatprep.subr.bf16.mxu0 %v7650
        %7853 = vmatpush1.bf16.msra.mxu0 %v7649
        %7854 = vmatprep.subr.bf16.mxu0 %v7648
        %7855 = vmatpush1.bf16.msra.mxu0 %v7647
        %7856 = vmatprep.subr.bf16.mxu0 %v7646
        %7857 = vmatpush1.bf16.msra.mxu0 %v7645
        %7858 = vmatprep.subr.bf16.mxu0 %v7644
        %7859 = vmatpush1.bf16.msra.mxu0 %v7643
        %7860 = vmatprep.subr.bf16.mxu0 %v7642
        %7861 = vmatpush1.bf16.msra.mxu0 %v7641
        %7862 = vmatprep.subr.bf16.mxu0 %v7640
        %7863 = vmatpush1.bf16.msra.mxu0 %v7639
        %7864 = vmatprep.subr.bf16.mxu0 %v7670
        %7865 = vmatpush2.bf16.msra.mxu0 %v7669
        %7866 = vmatprep.subr.bf16.mxu0 %v7668
        %7867 = vmatpush2.bf16.msra.mxu0 %v7667
        %7868 = vmatprep.subr.bf16.mxu0 %v7666
        %7869 = vmatpush2.bf16.msra.mxu0 %v7665
        %7870 = vmatprep.subr.bf16.mxu0 %v7664
        %7871 = vmatpush2.bf16.msra.mxu0 %v7663
        %7872 = vmatprep.subr.bf16.mxu0 %v7662
        %7873 = vmatpush2.bf16.msra.mxu0 %v7661
        %7874 = vmatprep.subr.bf16.mxu0 %v7660
        %7875 = vmatpush2.bf16.msra.mxu0 %v7659
        %7876 = vmatprep.subr.bf16.mxu0 %v7658
        %7877 = vmatpush2.bf16.msra.mxu0 %v7657
        %7878 = vmatprep.subr.bf16.mxu0 %v7656
        %7879 = vmatpush2.bf16.msra.mxu0 %v7655
        %7880 = vmatprep.mubr.bf16.mxu0 %v7322
        %7881 = vmatmul.mubr.bf16.gmra.mxu0 %v7321
        %v7882 = vpop.f32.mrf.mxu0
        %v7883 = vadd.f32 %v7770, %v7882
        %v7884 = vpop.f32.mrf.mxu0
        %v7885 = vadd.f32 %v7772, %v7884
        %v7886 = vpop.f32.mrf.mxu0
        %v7887 = vadd.f32 %v7774, %v7886
        %v7888 = vpop.f32.mrf.mxu0
        %v7889 = vadd.f32 %v7776, %v7888
        %7890 = vmatprep.mubr.bf16.mxu0 %v7326
        %7891 = vmatmul.mubr.bf16.gmra.mxu0 %v7325
        %v7892 = vpop.f32.mrf.mxu0
        %v7893 = vadd.f32 %v7780, %v7892
        %v7894 = vpop.f32.mrf.mxu0
        %v7895 = vadd.f32 %v7782, %v7894
        %v7896 = vpop.f32.mrf.mxu0
        %v7897 = vadd.f32 %v7784, %v7896
        %v7898 = vpop.f32.mrf.mxu0
        %v7899 = vadd.f32 %v7786, %v7898
        %7900 = vmatprep.mubr.bf16.mxu0 %v7330
        %7901 = vmatmul.mubr.bf16.gmra.mxu0 %v7329
        %v7902 = vpop.f32.mrf.mxu0
        %v7903 = vadd.f32 %v7790, %v7902
        %v7904 = vpop.f32.mrf.mxu0
        %v7905 = vadd.f32 %v7792, %v7904
        %v7906 = vpop.f32.mrf.mxu0
        %v7907 = vadd.f32 %v7794, %v7906
        %v7908 = vpop.f32.mrf.mxu0
        %v7909 = vadd.f32 %v7796, %v7908
        %7910 = vmatprep.mubr.bf16.mxu0 %v7334
        %7911 = vmatmul.mubr.bf16.gmra.mxu0 %v7333
        %v7912 = vpop.f32.mrf.mxu0
        %v7913 = vadd.f32 %v7800, %v7912
        %v7914 = vpop.f32.mrf.mxu0
        %v7915 = vadd.f32 %v7802, %v7914
        %v7916 = vpop.f32.mrf.mxu0
        %v7917 = vadd.f32 %v7804, %v7916
        %v7918 = vpop.f32.mrf.mxu0
        %v7919 = vadd.f32 %v7806, %v7918
        %7920 = vmatprep.mubr.bf16.mxu0 %v7338
        %7921 = vmatmul.mubr.bf16.gmra.mxu0 %v7337
        %v7922 = vpop.f32.mrf.mxu0
        %v7923 = vadd.f32 %v7810, %v7922
        %v7924 = vpop.f32.mrf.mxu0
        %v7925 = vadd.f32 %v7812, %v7924
        %v7926 = vpop.f32.mrf.mxu0
        %v7927 = vadd.f32 %v7814, %v7926
        %v7928 = vpop.f32.mrf.mxu0
        %v7929 = vadd.f32 %v7816, %v7928
        %7930 = vmatprep.mubr.bf16.mxu0 %v7342
        %7931 = vmatmul.mubr.bf16.gmra.mxu0 %v7341
        %v7932 = vpop.f32.mrf.mxu0
        %v7933 = vadd.f32 %v7820, %v7932
        %v7934 = vpop.f32.mrf.mxu0
        %v7935 = vadd.f32 %v7822, %v7934
        %v7936 = vpop.f32.mrf.mxu0
        %v7937 = vadd.f32 %v7824, %v7936
        %v7938 = vpop.f32.mrf.mxu0
        %v7939 = vadd.f32 %v7826, %v7938
        %7940 = vmatprep.mubr.bf16.mxu0 %v7346
        %7941 = vmatmul.mubr.bf16.gmra.mxu0 %v7345
        %v7942 = vpop.f32.mrf.mxu0
        %v7943 = vadd.f32 %v7830, %v7942
        %v7944 = vpop.f32.mrf.mxu0
        %v7945 = vadd.f32 %v7832, %v7944
        %v7946 = vpop.f32.mrf.mxu0
        %v7947 = vadd.f32 %v7834, %v7946
        %v7948 = vpop.f32.mrf.mxu0
        %v7949 = vadd.f32 %v7836, %v7948
        %7950 = vmatprep.mubr.bf16.mxu0 %v7350
        %7951 = vmatmul.mubr.bf16.gmra.mxu0 %v7349
        %v7952 = vpop.f32.mrf.mxu0
        %v7953 = vadd.f32 %v7840, %v7952
        %v7954 = vpop.f32.mrf.mxu0
        %v7955 = vadd.f32 %v7842, %v7954
        %v7956 = vpop.f32.mrf.mxu0
        %v7957 = vadd.f32 %v7844, %v7956
        %v7958 = vpop.f32.mrf.mxu0
        %v7959 = vadd.f32 %v7846, %v7958
        %7960 = vdwg.mxu0
        %v7961 = vadd.f32 %v6591, %v7883
        %v7962 = vadd.f32 %v6592, %v7885
        %v7963 = vadd.f32 %v6593, %v7887
        %v7964 = vadd.f32 %v6594, %v7889
        %v7965 = vadd.f32 %v6595, %v7893
        %v7966 = vadd.f32 %v6596, %v7895
        %v7967 = vadd.f32 %v6597, %v7897
        %v7968 = vadd.f32 %v6598, %v7899
        %v7969 = vadd.f32 %v6599, %v7903
        %v7970 = vadd.f32 %v6600, %v7905
        %v7971 = vadd.f32 %v6601, %v7907
        %v7972 = vadd.f32 %v6602, %v7909
        %v7973 = vadd.f32 %v6603, %v7913
        %v7974 = vadd.f32 %v6604, %v7915
        %v7975 = vadd.f32 %v6605, %v7917
        %v7976 = vadd.f32 %v6606, %v7919
        %v7977 = vadd.f32 %v6607, %v7923
        %v7978 = vadd.f32 %v6608, %v7925
        %v7979 = vadd.f32 %v6609, %v7927
        %v7980 = vadd.f32 %v6610, %v7929
        %v7981 = vadd.f32 %v6611, %v7933
        %v7982 = vadd.f32 %v6612, %v7935
        %v7983 = vadd.f32 %v6613, %v7937
        %v7984 = vadd.f32 %v6614, %v7939
        %v7985 = vadd.f32 %v6615, %v7943
        %v7986 = vadd.f32 %v6616, %v7945
        %v7987 = vadd.f32 %v6617, %v7947
        %v7988 = vadd.f32 %v6618, %v7949
        %v7989 = vadd.f32 %v6619, %v7953
        %v7990 = vadd.f32 %v6620, %v7955
        %v7991 = vadd.f32 %v6621, %v7957
        %v7992 = vadd.f32 %v6622, %v7959
        %v7993 = vld [vmem:[%s717 + $0x20] sm:$0xff]
        %v7994 = vld [vmem:[%s717 + $0x28] sm:$0xff]
        %v7995 = vld [vmem:[%s717 + $0x60] sm:$0xff]
        %v7996 = vld [vmem:[%s717 + $0x68] sm:$0xff]
        %v7997 = vld [vmem:[%s717 + $0xa0] sm:$0xff]
        %v7998 = vld [vmem:[%s717 + $0xa8] sm:$0xff]
        %v7999 = vld [vmem:[%s717 + $0xe0] sm:$0xff]
        %v8000 = vld [vmem:[%s717 + $0xe8] sm:$0xff]
        %v8001 = vld [vmem:[%s717 + $0x120] sm:$0xff]
        %v8002 = vld [vmem:[%s717 + $0x128] sm:$0xff]
        %v8003 = vld [vmem:[%s717 + $0x160] sm:$0xff]
        %v8004 = vld [vmem:[%s717 + $0x168] sm:$0xff]
        %v8005 = vld [vmem:[%s717 + $0x1a0] sm:$0xff]
        %v8006 = vld [vmem:[%s717 + $0x1a8] sm:$0xff]
        %v8007 = vld [vmem:[%s717 + $0x1e0] sm:$0xff]
        %v8008 = vld [vmem:[%s717 + $0x1e8] sm:$0xff]
        %v8009 = vld [vmem:[%s717 + $0x220] sm:$0xff]
        %v8010 = vld [vmem:[%s717 + $0x228] sm:$0xff]
        %v8011 = vld [vmem:[%s717 + $0x260] sm:$0xff]
        %v8012 = vld [vmem:[%s717 + $0x268] sm:$0xff]
        %v8013 = vld [vmem:[%s717 + $0x2a0] sm:$0xff]
        %v8014 = vld [vmem:[%s717 + $0x2a8] sm:$0xff]
        %v8015 = vld [vmem:[%s717 + $0x2e0] sm:$0xff]
        %v8016 = vld [vmem:[%s717 + $0x2e8] sm:$0xff]
        %v8017 = vld [vmem:[%s717 + $0x320] sm:$0xff]
        %v8018 = vld [vmem:[%s717 + $0x328] sm:$0xff]
        %v8019 = vld [vmem:[%s717 + $0x360] sm:$0xff]
        %v8020 = vld [vmem:[%s717 + $0x368] sm:$0xff]
        %v8021 = vld [vmem:[%s717 + $0x3a0] sm:$0xff]
        %v8022 = vld [vmem:[%s717 + $0x3a8] sm:$0xff]
        %v8023 = vld [vmem:[%s717 + $0x3e0] sm:$0xff]
        %v8024 = vld [vmem:[%s717 + $0x3e8] sm:$0xff]
        %v8025 = vld [vmem:[%s717 + $0x420] sm:$0xff]
        %v8026 = vld [vmem:[%s717 + $0x428] sm:$0xff]
        %v8027 = vld [vmem:[%s717 + $0x460] sm:$0xff]
        %v8028 = vld [vmem:[%s717 + $0x468] sm:$0xff]
        %v8029 = vld [vmem:[%s717 + $0x4a0] sm:$0xff]
        %v8030 = vld [vmem:[%s717 + $0x4a8] sm:$0xff]
        %v8031 = vld [vmem:[%s717 + $0x4e0] sm:$0xff]
        %v8032 = vld [vmem:[%s717 + $0x4e8] sm:$0xff]
        %v8033 = vld [vmem:[%s717 + $0x520] sm:$0xff]
        %v8034 = vld [vmem:[%s717 + $0x528] sm:$0xff]
        %v8035 = vld [vmem:[%s717 + $0x560] sm:$0xff]
        %v8036 = vld [vmem:[%s717 + $0x568] sm:$0xff]
        %v8037 = vld [vmem:[%s717 + $0x5a0] sm:$0xff]
        %v8038 = vld [vmem:[%s717 + $0x5a8] sm:$0xff]
        %v8039 = vld [vmem:[%s717 + $0x5e0] sm:$0xff]
        %v8040 = vld [vmem:[%s717 + $0x5e8] sm:$0xff]
        %v8041 = vld [vmem:[%s717 + $0x620] sm:$0xff]
        %v8042 = vld [vmem:[%s717 + $0x628] sm:$0xff]
        %v8043 = vld [vmem:[%s717 + $0x660] sm:$0xff]
        %v8044 = vld [vmem:[%s717 + $0x668] sm:$0xff]
        %v8045 = vld [vmem:[%s717 + $0x6a0] sm:$0xff]
        %v8046 = vld [vmem:[%s717 + $0x6a8] sm:$0xff]
        %v8047 = vld [vmem:[%s717 + $0x6e0] sm:$0xff]
        %v8048 = vld [vmem:[%s717 + $0x6e8] sm:$0xff]
        %v8049 = vld [vmem:[%s717 + $0x720] sm:$0xff]
        %v8050 = vld [vmem:[%s717 + $0x728] sm:$0xff]
        %v8051 = vld [vmem:[%s717 + $0x760] sm:$0xff]
        %v8052 = vld [vmem:[%s717 + $0x768] sm:$0xff]
        %v8053 = vld [vmem:[%s717 + $0x7a0] sm:$0xff]
        %v8054 = vld [vmem:[%s717 + $0x7a8] sm:$0xff]
        %v8055 = vld [vmem:[%s717 + $0x7e0] sm:$0xff]
        %v8056 = vld [vmem:[%s717 + $0x7e8] sm:$0xff]
        %v8057 = vld [vmem:[%s726 + $0x8] sm:$0xf]
        %v8059 = vlaneseq
        %v8060 = vshrl.u32 %v8059, 7
        %v8061 = vsub.s32 0, %v8060
        %v8062 = vrot.slane %v8057, %v8061
        %v8063 = vlaneseq
        %v8064 = vshrl.u32 %v8063, 7
        %v8065 = vsub.s32 1, %v8064
        %v8066 = vrot.slane %v8057, %v8065
        %v8067 = vlaneseq
        %v8068 = vshrl.u32 %v8067, 7
        %v8069 = vsub.s32 2, %v8068
        %v8070 = vrot.slane %v8057, %v8069
        %v8071 = vlaneseq
        %v8072 = vshrl.u32 %v8071, 7
        %v8073 = vsub.s32 3, %v8072
        %v8074 = vrot.slane %v8057, %v8073
        %v8143 = vunpack.c.l.b16 %v7993
        %v8144 = vunpack.c.h.b16 %v7993
        %v8145 = vunpack.c.l.b16 %v7994
        %v8146 = vunpack.c.h.b16 %v7994
        %v8147 = vunpack.c.l.b16 %v7995
        %v8148 = vunpack.c.h.b16 %v7995
        %v8149 = vunpack.c.l.b16 %v7996
        %v8150 = vunpack.c.h.b16 %v7996
        %v8151 = vunpack.c.l.b16 %v7997
        %v8152 = vunpack.c.h.b16 %v7997
        %v8153 = vunpack.c.l.b16 %v7998
        %v8154 = vunpack.c.h.b16 %v7998
        %v8155 = vunpack.c.l.b16 %v7999
        %v8156 = vunpack.c.h.b16 %v7999
        %v8157 = vunpack.c.l.b16 %v8000
        %v8158 = vunpack.c.h.b16 %v8000
        %v8159 = vunpack.c.l.b16 %v8001
        %v8160 = vunpack.c.h.b16 %v8001
        %v8161 = vunpack.c.l.b16 %v8002
        %v8162 = vunpack.c.h.b16 %v8002
        %v8163 = vunpack.c.l.b16 %v8003
        %v8164 = vunpack.c.h.b16 %v8003
        %v8165 = vunpack.c.l.b16 %v8004
        %v8166 = vunpack.c.h.b16 %v8004
        %v8167 = vunpack.c.l.b16 %v8005
        %v8168 = vunpack.c.h.b16 %v8005
        %v8169 = vunpack.c.l.b16 %v8006
        %v8170 = vunpack.c.h.b16 %v8006
        %v8171 = vunpack.c.l.b16 %v8007
        %v8172 = vunpack.c.h.b16 %v8007
        %v8173 = vunpack.c.l.b16 %v8008
        %v8174 = vunpack.c.h.b16 %v8008
        %v8175 = vunpack.c.l.b16 %v8009
        %v8176 = vunpack.c.h.b16 %v8009
        %v8177 = vunpack.c.l.b16 %v8010
        %v8178 = vunpack.c.h.b16 %v8010
        %v8179 = vunpack.c.l.b16 %v8011
        %v8180 = vunpack.c.h.b16 %v8011
        %v8181 = vunpack.c.l.b16 %v8012
        %v8182 = vunpack.c.h.b16 %v8012
        %v8183 = vunpack.c.l.b16 %v8013
        %v8184 = vunpack.c.h.b16 %v8013
        %v8185 = vunpack.c.l.b16 %v8014
        %v8186 = vunpack.c.h.b16 %v8014
        %v8187 = vunpack.c.l.b16 %v8015
        %v8188 = vunpack.c.h.b16 %v8015
        %v8189 = vunpack.c.l.b16 %v8016
        %v8190 = vunpack.c.h.b16 %v8016
        %v8191 = vunpack.c.l.b16 %v8017
        %v8192 = vunpack.c.h.b16 %v8017
        %v8193 = vunpack.c.l.b16 %v8018
        %v8194 = vunpack.c.h.b16 %v8018
        %v8195 = vunpack.c.l.b16 %v8019
        %v8196 = vunpack.c.h.b16 %v8019
        %v8197 = vunpack.c.l.b16 %v8020
        %v8198 = vunpack.c.h.b16 %v8020
        %v8199 = vunpack.c.l.b16 %v8021
        %v8200 = vunpack.c.h.b16 %v8021
        %v8201 = vunpack.c.l.b16 %v8022
        %v8202 = vunpack.c.h.b16 %v8022
        %v8203 = vunpack.c.l.b16 %v8023
        %v8204 = vunpack.c.h.b16 %v8023
        %v8205 = vunpack.c.l.b16 %v8024
        %v8206 = vunpack.c.h.b16 %v8024
        %v8207 = vunpack.c.l.b16 %v8025
        %v8208 = vunpack.c.h.b16 %v8025
        %v8209 = vunpack.c.l.b16 %v8026
        %v8210 = vunpack.c.h.b16 %v8026
        %v8211 = vunpack.c.l.b16 %v8027
        %v8212 = vunpack.c.h.b16 %v8027
        %v8213 = vunpack.c.l.b16 %v8028
        %v8214 = vunpack.c.h.b16 %v8028
        %v8215 = vunpack.c.l.b16 %v8029
        %v8216 = vunpack.c.h.b16 %v8029
        %v8217 = vunpack.c.l.b16 %v8030
        %v8218 = vunpack.c.h.b16 %v8030
        %v8219 = vunpack.c.l.b16 %v8031
        %v8220 = vunpack.c.h.b16 %v8031
        %v8221 = vunpack.c.l.b16 %v8032
        %v8222 = vunpack.c.h.b16 %v8032
        %v8223 = vunpack.c.l.b16 %v8033
        %v8224 = vunpack.c.h.b16 %v8033
        %v8225 = vunpack.c.l.b16 %v8034
        %v8226 = vunpack.c.h.b16 %v8034
        %v8227 = vunpack.c.l.b16 %v8035
        %v8228 = vunpack.c.h.b16 %v8035
        %v8229 = vunpack.c.l.b16 %v8036
        %v8230 = vunpack.c.h.b16 %v8036
        %v8231 = vunpack.c.l.b16 %v8037
        %v8232 = vunpack.c.h.b16 %v8037
        %v8233 = vunpack.c.l.b16 %v8038
        %v8234 = vunpack.c.h.b16 %v8038
        %v8235 = vunpack.c.l.b16 %v8039
        %v8236 = vunpack.c.h.b16 %v8039
        %v8237 = vunpack.c.l.b16 %v8040
        %v8238 = vunpack.c.h.b16 %v8040
        %v8239 = vunpack.c.l.b16 %v8041
        %v8240 = vunpack.c.h.b16 %v8041
        %v8241 = vunpack.c.l.b16 %v8042
        %v8242 = vunpack.c.h.b16 %v8042
        %v8243 = vunpack.c.l.b16 %v8043
        %v8244 = vunpack.c.h.b16 %v8043
        %v8245 = vunpack.c.l.b16 %v8044
        %v8246 = vunpack.c.h.b16 %v8044
        %v8247 = vunpack.c.l.b16 %v8045
        %v8248 = vunpack.c.h.b16 %v8045
        %v8249 = vunpack.c.l.b16 %v8046
        %v8250 = vunpack.c.h.b16 %v8046
        %v8251 = vunpack.c.l.b16 %v8047
        %v8252 = vunpack.c.h.b16 %v8047
        %v8253 = vunpack.c.l.b16 %v8048
        %v8254 = vunpack.c.h.b16 %v8048
        %v8255 = vunpack.c.l.b16 %v8049
        %v8256 = vunpack.c.h.b16 %v8049
        %v8257 = vunpack.c.l.b16 %v8050
        %v8258 = vunpack.c.h.b16 %v8050
        %v8259 = vunpack.c.l.b16 %v8051
        %v8260 = vunpack.c.h.b16 %v8051
        %v8261 = vunpack.c.l.b16 %v8052
        %v8262 = vunpack.c.h.b16 %v8052
        %v8263 = vunpack.c.l.b16 %v8053
        %v8264 = vunpack.c.h.b16 %v8053
        %v8265 = vunpack.c.l.b16 %v8054
        %v8266 = vunpack.c.h.b16 %v8054
        %v8267 = vunpack.c.l.b16 %v8055
        %v8268 = vunpack.c.h.b16 %v8055
        %v8269 = vunpack.c.l.b16 %v8056
        %v8270 = vunpack.c.h.b16 %v8056
        %v8271 = vpack.c.b16 %v8147, %v8143
        %v8272 = vpack.c.b16 %v8148, %v8144
        %v8273 = vpack.c.b16 %v8149, %v8145
        %v8274 = vpack.c.b16 %v8150, %v8146
        %v8275 = vpack.c.b16 %v8155, %v8151
        %v8276 = vpack.c.b16 %v8156, %v8152
        %v8277 = vpack.c.b16 %v8157, %v8153
        %v8278 = vpack.c.b16 %v8158, %v8154
        %v8279 = vpack.c.b16 %v8163, %v8159
        %v8280 = vpack.c.b16 %v8164, %v8160
        %v8281 = vpack.c.b16 %v8165, %v8161
        %v8282 = vpack.c.b16 %v8166, %v8162
        %v8283 = vpack.c.b16 %v8171, %v8167
        %v8284 = vpack.c.b16 %v8172, %v8168
        %v8285 = vpack.c.b16 %v8173, %v8169
        %v8286 = vpack.c.b16 %v8174, %v8170
        %v8287 = vpack.c.b16 %v8179, %v8175
        %v8288 = vpack.c.b16 %v8180, %v8176
        %v8289 = vpack.c.b16 %v8181, %v8177
        %v8290 = vpack.c.b16 %v8182, %v8178
        %v8291 = vpack.c.b16 %v8187, %v8183
        %v8292 = vpack.c.b16 %v8188, %v8184
        %v8293 = vpack.c.b16 %v8189, %v8185
        %v8294 = vpack.c.b16 %v8190, %v8186
        %v8295 = vpack.c.b16 %v8195, %v8191
        %v8296 = vpack.c.b16 %v8196, %v8192
        %v8297 = vpack.c.b16 %v8197, %v8193
        %v8298 = vpack.c.b16 %v8198, %v8194
        %v8299 = vpack.c.b16 %v8203, %v8199
        %v8300 = vpack.c.b16 %v8204, %v8200
        %v8301 = vpack.c.b16 %v8205, %v8201
        %v8302 = vpack.c.b16 %v8206, %v8202
        %v8303 = vpack.c.b16 %v8211, %v8207
        %v8304 = vpack.c.b16 %v8212, %v8208
        %v8305 = vpack.c.b16 %v8213, %v8209
        %v8306 = vpack.c.b16 %v8214, %v8210
        %v8307 = vpack.c.b16 %v8219, %v8215
        %v8308 = vpack.c.b16 %v8220, %v8216
        %v8309 = vpack.c.b16 %v8221, %v8217
        %v8310 = vpack.c.b16 %v8222, %v8218
        %v8311 = vpack.c.b16 %v8227, %v8223
        %v8312 = vpack.c.b16 %v8228, %v8224
        %v8313 = vpack.c.b16 %v8229, %v8225
        %v8314 = vpack.c.b16 %v8230, %v8226
        %v8315 = vpack.c.b16 %v8235, %v8231
        %v8316 = vpack.c.b16 %v8236, %v8232
        %v8317 = vpack.c.b16 %v8237, %v8233
        %v8318 = vpack.c.b16 %v8238, %v8234
        %v8319 = vpack.c.b16 %v8243, %v8239
        %v8320 = vpack.c.b16 %v8244, %v8240
        %v8321 = vpack.c.b16 %v8245, %v8241
        %v8322 = vpack.c.b16 %v8246, %v8242
        %v8323 = vpack.c.b16 %v8251, %v8247
        %v8324 = vpack.c.b16 %v8252, %v8248
        %v8325 = vpack.c.b16 %v8253, %v8249
        %v8326 = vpack.c.b16 %v8254, %v8250
        %v8327 = vpack.c.b16 %v8259, %v8255
        %v8328 = vpack.c.b16 %v8260, %v8256
        %v8329 = vpack.c.b16 %v8261, %v8257
        %v8330 = vpack.c.b16 %v8262, %v8258
        %v8331 = vpack.c.b16 %v8267, %v8263
        %v8332 = vpack.c.b16 %v8268, %v8264
        %v8333 = vpack.c.b16 %v8269, %v8265
        %v8334 = vpack.c.b16 %v8270, %v8266
        %8399 = vmatprep.subr.bf16.mxu0 %v8300
        %8400 = vmatpush1.bf16.msra.mxu0 %v8299
        %8401 = vmatprep.subr.bf16.mxu0 %v8296
        %8402 = vmatpush1.bf16.msra.mxu0 %v8295
        %8403 = vmatprep.subr.bf16.mxu0 %v8292
        %8404 = vmatpush1.bf16.msra.mxu0 %v8291
        %8405 = vmatprep.subr.bf16.mxu0 %v8288
        %8406 = vmatpush1.bf16.msra.mxu0 %v8287
        %8407 = vmatprep.subr.bf16.mxu0 %v8284
        %8408 = vmatpush1.bf16.msra.mxu0 %v8283
        %8409 = vmatprep.subr.bf16.mxu0 %v8280
        %8410 = vmatpush1.bf16.msra.mxu0 %v8279
        %8411 = vmatprep.subr.bf16.mxu0 %v8276
        %8412 = vmatpush1.bf16.msra.mxu0 %v8275
        %8413 = vmatprep.subr.bf16.mxu0 %v8272
        %8414 = vmatpush1.bf16.msra.mxu0 %v8271
        %8415 = vmatprep.subr.bf16.mxu0 %v8332
        %8416 = vmatpush2.bf16.msra.mxu0 %v8331
        %8417 = vmatprep.subr.bf16.mxu0 %v8328
        %8418 = vmatpush2.bf16.msra.mxu0 %v8327
        %8419 = vmatprep.subr.bf16.mxu0 %v8324
        %8420 = vmatpush2.bf16.msra.mxu0 %v8323
        %8421 = vmatprep.subr.bf16.mxu0 %v8320
        %8422 = vmatpush2.bf16.msra.mxu0 %v8319
        %8423 = vmatprep.subr.bf16.mxu0 %v8316
        %8424 = vmatpush2.bf16.msra.mxu0 %v8315
        %8425 = vmatprep.subr.bf16.mxu0 %v8312
        %8426 = vmatpush2.bf16.msra.mxu0 %v8311
        %8427 = vmatprep.subr.bf16.mxu0 %v8308
        %8428 = vmatpush2.bf16.msra.mxu0 %v8307
        %8429 = vmatprep.subr.bf16.mxu0 %v8304
        %8430 = vmatpush2.bf16.msra.mxu0 %v8303
        %8431 = vmatprep.mubr.bf16.mxu0 %v5194
        %8432 = vmatmul.mubr.bf16.gmra.mxu0 %v5193
        %v8433 = vpop.f32.mrf.mxu0
        %v8434 = vadd.f32 %v8062, %v8433
        %v8435 = vpop.f32.mrf.mxu0
        %v8436 = vadd.f32 %v8066, %v8435
        %v8437 = vpop.f32.mrf.mxu0
        %v8438 = vadd.f32 %v8062, %v8437
        %v8439 = vpop.f32.mrf.mxu0
        %v8440 = vadd.f32 %v8066, %v8439
        %8441 = vmatprep.mubr.bf16.mxu0 %v5196
        %8442 = vmatmul.mubr.bf16.gmra.mxu0 %v5195
        %v8443 = vpop.f32.mrf.mxu0
        %v8444 = vadd.f32 %v8062, %v8443
        %v8445 = vpop.f32.mrf.mxu0
        %v8446 = vadd.f32 %v8066, %v8445
        %v8447 = vpop.f32.mrf.mxu0
        %v8448 = vadd.f32 %v8062, %v8447
        %v8449 = vpop.f32.mrf.mxu0
        %v8450 = vadd.f32 %v8066, %v8449
        %8451 = vmatprep.mubr.bf16.mxu0 %v5198
        %8452 = vmatmul.mubr.bf16.gmra.mxu0 %v5197
        %v8453 = vpop.f32.mrf.mxu0
        %v8454 = vadd.f32 %v8062, %v8453
        %v8455 = vpop.f32.mrf.mxu0
        %v8456 = vadd.f32 %v8066, %v8455
        %v8457 = vpop.f32.mrf.mxu0
        %v8458 = vadd.f32 %v8062, %v8457
        %v8459 = vpop.f32.mrf.mxu0
        %v8460 = vadd.f32 %v8066, %v8459
        %8461 = vmatprep.mubr.bf16.mxu0 %v5200
        %8462 = vmatmul.mubr.bf16.gmra.mxu0 %v5199
        %v8463 = vpop.f32.mrf.mxu0
        %v8464 = vadd.f32 %v8062, %v8463
        %v8465 = vpop.f32.mrf.mxu0
        %v8466 = vadd.f32 %v8066, %v8465
        %v8467 = vpop.f32.mrf.mxu0
        %v8468 = vadd.f32 %v8062, %v8467
        %v8469 = vpop.f32.mrf.mxu0
        %v8470 = vadd.f32 %v8066, %v8469
        %8471 = vmatprep.mubr.bf16.mxu0 %v5202
        %8472 = vmatmul.mubr.bf16.gmra.mxu0 %v5201
        %v8473 = vpop.f32.mrf.mxu0
        %v8474 = vadd.f32 %v8062, %v8473
        %v8475 = vpop.f32.mrf.mxu0
        %v8476 = vadd.f32 %v8066, %v8475
        %v8477 = vpop.f32.mrf.mxu0
        %v8478 = vadd.f32 %v8062, %v8477
        %v8479 = vpop.f32.mrf.mxu0
        %v8480 = vadd.f32 %v8066, %v8479
        %8481 = vmatprep.mubr.bf16.mxu0 %v5204
        %8482 = vmatmul.mubr.bf16.gmra.mxu0 %v5203
        %v8483 = vpop.f32.mrf.mxu0
        %v8484 = vadd.f32 %v8062, %v8483
        %v8485 = vpop.f32.mrf.mxu0
        %v8486 = vadd.f32 %v8066, %v8485
        %v8487 = vpop.f32.mrf.mxu0
        %v8488 = vadd.f32 %v8062, %v8487
        %v8489 = vpop.f32.mrf.mxu0
        %v8490 = vadd.f32 %v8066, %v8489
        %8491 = vmatprep.mubr.bf16.mxu0 %v5206
        %8492 = vmatmul.mubr.bf16.gmra.mxu0 %v5205
        %v8493 = vpop.f32.mrf.mxu0
        %v8494 = vadd.f32 %v8062, %v8493
        %v8495 = vpop.f32.mrf.mxu0
        %v8496 = vadd.f32 %v8066, %v8495
        %v8497 = vpop.f32.mrf.mxu0
        %v8498 = vadd.f32 %v8062, %v8497
        %v8499 = vpop.f32.mrf.mxu0
        %v8500 = vadd.f32 %v8066, %v8499
        %8501 = vmatprep.mubr.bf16.mxu0 %v5208
        %8502 = vmatmul.mubr.bf16.gmra.mxu0 %v5207
        %v8503 = vpop.f32.mrf.mxu0
        %v8504 = vadd.f32 %v8062, %v8503
        %v8505 = vpop.f32.mrf.mxu0
        %v8506 = vadd.f32 %v8066, %v8505
        %v8507 = vpop.f32.mrf.mxu0
        %v8508 = vadd.f32 %v8062, %v8507
        %v8509 = vpop.f32.mrf.mxu0
        %v8510 = vadd.f32 %v8066, %v8509
        %8511 = vdwg.mxu0
        %8512 = vmatprep.subr.bf16.mxu0 %v8302
        %8513 = vmatpush1.bf16.msra.mxu0 %v8301
        %8514 = vmatprep.subr.bf16.mxu0 %v8298
        %8515 = vmatpush1.bf16.msra.mxu0 %v8297
        %8516 = vmatprep.subr.bf16.mxu0 %v8294
        %8517 = vmatpush1.bf16.msra.mxu0 %v8293
        %8518 = vmatprep.subr.bf16.mxu0 %v8290
        %8519 = vmatpush1.bf16.msra.mxu0 %v8289
        %8520 = vmatprep.subr.bf16.mxu0 %v8286
        %8521 = vmatpush1.bf16.msra.mxu0 %v8285
        %8522 = vmatprep.subr.bf16.mxu0 %v8282
        %8523 = vmatpush1.bf16.msra.mxu0 %v8281
        %8524 = vmatprep.subr.bf16.mxu0 %v8278
        %8525 = vmatpush1.bf16.msra.mxu0 %v8277
        %8526 = vmatprep.subr.bf16.mxu0 %v8274
        %8527 = vmatpush1.bf16.msra.mxu0 %v8273
        %8528 = vmatprep.subr.bf16.mxu0 %v8334
        %8529 = vmatpush2.bf16.msra.mxu0 %v8333
        %8530 = vmatprep.subr.bf16.mxu0 %v8330
        %8531 = vmatpush2.bf16.msra.mxu0 %v8329
        %8532 = vmatprep.subr.bf16.mxu0 %v8326
        %8533 = vmatpush2.bf16.msra.mxu0 %v8325
        %8534 = vmatprep.subr.bf16.mxu0 %v8322
        %8535 = vmatpush2.bf16.msra.mxu0 %v8321
        %8536 = vmatprep.subr.bf16.mxu0 %v8318
        %8537 = vmatpush2.bf16.msra.mxu0 %v8317
        %8538 = vmatprep.subr.bf16.mxu0 %v8314
        %8539 = vmatpush2.bf16.msra.mxu0 %v8313
        %8540 = vmatprep.subr.bf16.mxu0 %v8310
        %8541 = vmatpush2.bf16.msra.mxu0 %v8309
        %8542 = vmatprep.subr.bf16.mxu0 %v8306
        %8543 = vmatpush2.bf16.msra.mxu0 %v8305
        %8544 = vmatprep.mubr.bf16.mxu0 %v5194
        %8545 = vmatmul.mubr.bf16.gmra.mxu0 %v5193
        %v8546 = vpop.f32.mrf.mxu0
        %v8547 = vadd.f32 %v8070, %v8546
        %v8548 = vpop.f32.mrf.mxu0
        %v8549 = vadd.f32 %v8074, %v8548
        %v8550 = vpop.f32.mrf.mxu0
        %v8551 = vadd.f32 %v8070, %v8550
        %v8552 = vpop.f32.mrf.mxu0
        %v8553 = vadd.f32 %v8074, %v8552
        %8554 = vmatprep.mubr.bf16.mxu0 %v5196
        %8555 = vmatmul.mubr.bf16.gmra.mxu0 %v5195
        %v8556 = vpop.f32.mrf.mxu0
        %v8557 = vadd.f32 %v8070, %v8556
        %v8558 = vpop.f32.mrf.mxu0
        %v8559 = vadd.f32 %v8074, %v8558
        %v8560 = vpop.f32.mrf.mxu0
        %v8561 = vadd.f32 %v8070, %v8560
        %v8562 = vpop.f32.mrf.mxu0
        %v8563 = vadd.f32 %v8074, %v8562
        %8564 = vmatprep.mubr.bf16.mxu0 %v5198
        %8565 = vmatmul.mubr.bf16.gmra.mxu0 %v5197
        %v8566 = vpop.f32.mrf.mxu0
        %v8567 = vadd.f32 %v8070, %v8566
        %v8568 = vpop.f32.mrf.mxu0
        %v8569 = vadd.f32 %v8074, %v8568
        %v8570 = vpop.f32.mrf.mxu0
        %v8571 = vadd.f32 %v8070, %v8570
        %v8572 = vpop.f32.mrf.mxu0
        %v8573 = vadd.f32 %v8074, %v8572
        %8574 = vmatprep.mubr.bf16.mxu0 %v5200
        %8575 = vmatmul.mubr.bf16.gmra.mxu0 %v5199
        %v8576 = vpop.f32.mrf.mxu0
        %v8577 = vadd.f32 %v8070, %v8576
        %v8578 = vpop.f32.mrf.mxu0
        %v8579 = vadd.f32 %v8074, %v8578
        %v8580 = vpop.f32.mrf.mxu0
        %v8581 = vadd.f32 %v8070, %v8580
        %v8582 = vpop.f32.mrf.mxu0
        %v8583 = vadd.f32 %v8074, %v8582
        %8584 = vmatprep.mubr.bf16.mxu0 %v5202
        %8585 = vmatmul.mubr.bf16.gmra.mxu0 %v5201
        %v8586 = vpop.f32.mrf.mxu0
        %v8587 = vadd.f32 %v8070, %v8586
        %v8588 = vpop.f32.mrf.mxu0
        %v8589 = vadd.f32 %v8074, %v8588
        %v8590 = vpop.f32.mrf.mxu0
        %v8591 = vadd.f32 %v8070, %v8590
        %v8592 = vpop.f32.mrf.mxu0
        %v8593 = vadd.f32 %v8074, %v8592
        %8594 = vmatprep.mubr.bf16.mxu0 %v5204
        %8595 = vmatmul.mubr.bf16.gmra.mxu0 %v5203
        %v8596 = vpop.f32.mrf.mxu0
        %v8597 = vadd.f32 %v8070, %v8596
        %v8598 = vpop.f32.mrf.mxu0
        %v8599 = vadd.f32 %v8074, %v8598
        %v8600 = vpop.f32.mrf.mxu0
        %v8601 = vadd.f32 %v8070, %v8600
        %v8602 = vpop.f32.mrf.mxu0
        %v8603 = vadd.f32 %v8074, %v8602
        %8604 = vmatprep.mubr.bf16.mxu0 %v5206
        %8605 = vmatmul.mubr.bf16.gmra.mxu0 %v5205
        %v8606 = vpop.f32.mrf.mxu0
        %v8607 = vadd.f32 %v8070, %v8606
        %v8608 = vpop.f32.mrf.mxu0
        %v8609 = vadd.f32 %v8074, %v8608
        %v8610 = vpop.f32.mrf.mxu0
        %v8611 = vadd.f32 %v8070, %v8610
        %v8612 = vpop.f32.mrf.mxu0
        %v8613 = vadd.f32 %v8074, %v8612
        %8614 = vmatprep.mubr.bf16.mxu0 %v5208
        %8615 = vmatmul.mubr.bf16.gmra.mxu0 %v5207
        %v8616 = vpop.f32.mrf.mxu0
        %v8617 = vadd.f32 %v8070, %v8616
        %v8618 = vpop.f32.mrf.mxu0
        %v8619 = vadd.f32 %v8074, %v8618
        %v8620 = vpop.f32.mrf.mxu0
        %v8621 = vadd.f32 %v8070, %v8620
        %v8622 = vpop.f32.mrf.mxu0
        %v8623 = vadd.f32 %v8074, %v8622
        %8624 = vdwg.mxu0
        %v8625 = vmax.f32 %v8434, 0.0
        %v8626 = vmax.f32 %v8436, 0.0
        %v8627 = vmax.f32 %v8547, 0.0
        %v8628 = vmax.f32 %v8549, 0.0
        %v8629 = vmax.f32 %v8438, 0.0
        %v8630 = vmax.f32 %v8440, 0.0
        %v8631 = vmax.f32 %v8551, 0.0
        %v8632 = vmax.f32 %v8553, 0.0
        %v8633 = vmax.f32 %v8444, 0.0
        %v8634 = vmax.f32 %v8446, 0.0
        %v8635 = vmax.f32 %v8557, 0.0
        %v8636 = vmax.f32 %v8559, 0.0
        %v8637 = vmax.f32 %v8448, 0.0
        %v8638 = vmax.f32 %v8450, 0.0
        %v8639 = vmax.f32 %v8561, 0.0
        %v8640 = vmax.f32 %v8563, 0.0
        %v8641 = vmax.f32 %v8454, 0.0
        %v8642 = vmax.f32 %v8456, 0.0
        %v8643 = vmax.f32 %v8567, 0.0
        %v8644 = vmax.f32 %v8569, 0.0
        %v8645 = vmax.f32 %v8458, 0.0
        %v8646 = vmax.f32 %v8460, 0.0
        %v8647 = vmax.f32 %v8571, 0.0
        %v8648 = vmax.f32 %v8573, 0.0
        %v8649 = vmax.f32 %v8464, 0.0
        %v8650 = vmax.f32 %v8466, 0.0
        %v8651 = vmax.f32 %v8577, 0.0
        %v8652 = vmax.f32 %v8579, 0.0
        %v8653 = vmax.f32 %v8468, 0.0
        %v8654 = vmax.f32 %v8470, 0.0
        %v8655 = vmax.f32 %v8581, 0.0
        %v8656 = vmax.f32 %v8583, 0.0
        %v8657 = vmax.f32 %v8474, 0.0
        %v8658 = vmax.f32 %v8476, 0.0
        %v8659 = vmax.f32 %v8587, 0.0
        %v8660 = vmax.f32 %v8589, 0.0
        %v8661 = vmax.f32 %v8478, 0.0
        %v8662 = vmax.f32 %v8480, 0.0
        %v8663 = vmax.f32 %v8591, 0.0
        %v8664 = vmax.f32 %v8593, 0.0
        %v8665 = vmax.f32 %v8484, 0.0
        %v8666 = vmax.f32 %v8486, 0.0
        %v8667 = vmax.f32 %v8597, 0.0
        %v8668 = vmax.f32 %v8599, 0.0
        %v8669 = vmax.f32 %v8488, 0.0
        %v8670 = vmax.f32 %v8490, 0.0
        %v8671 = vmax.f32 %v8601, 0.0
        %v8672 = vmax.f32 %v8603, 0.0
        %v8673 = vmax.f32 %v8494, 0.0
        %v8674 = vmax.f32 %v8496, 0.0
        %v8675 = vmax.f32 %v8607, 0.0
        %v8676 = vmax.f32 %v8609, 0.0
        %v8677 = vmax.f32 %v8498, 0.0
        %v8678 = vmax.f32 %v8500, 0.0
        %v8679 = vmax.f32 %v8611, 0.0
        %v8680 = vmax.f32 %v8613, 0.0
        %v8681 = vmax.f32 %v8504, 0.0
        %v8682 = vmax.f32 %v8506, 0.0
        %v8683 = vmax.f32 %v8617, 0.0
        %v8684 = vmax.f32 %v8619, 0.0
        %v8685 = vmax.f32 %v8508, 0.0
        %v8686 = vmax.f32 %v8510, 0.0
        %v8687 = vmax.f32 %v8621, 0.0
        %v8688 = vmax.f32 %v8623, 0.0
        %v8689 = vpack.c.bf16 %v8629, %v8625
        %v8690 = vpack.c.bf16 %v8630, %v8626
        %v8691 = vpack.c.bf16 %v8631, %v8627
        %v8692 = vpack.c.bf16 %v8632, %v8628
        %v8693 = vpack.c.bf16 %v8637, %v8633
        %v8694 = vpack.c.bf16 %v8638, %v8634
        %v8695 = vpack.c.bf16 %v8639, %v8635
        %v8696 = vpack.c.bf16 %v8640, %v8636
        %v8697 = vpack.c.bf16 %v8645, %v8641
        %v8698 = vpack.c.bf16 %v8646, %v8642
        %v8699 = vpack.c.bf16 %v8647, %v8643
        %v8700 = vpack.c.bf16 %v8648, %v8644
        %v8701 = vpack.c.bf16 %v8653, %v8649
        %v8702 = vpack.c.bf16 %v8654, %v8650
        %v8703 = vpack.c.bf16 %v8655, %v8651
        %v8704 = vpack.c.bf16 %v8656, %v8652
        %v8705 = vpack.c.bf16 %v8661, %v8657
        %v8706 = vpack.c.bf16 %v8662, %v8658
        %v8707 = vpack.c.bf16 %v8663, %v8659
        %v8708 = vpack.c.bf16 %v8664, %v8660
        %v8709 = vpack.c.bf16 %v8669, %v8665
        %v8710 = vpack.c.bf16 %v8670, %v8666
        %v8711 = vpack.c.bf16 %v8671, %v8667
        %v8712 = vpack.c.bf16 %v8672, %v8668
        %v8713 = vpack.c.bf16 %v8677, %v8673
        %v8714 = vpack.c.bf16 %v8678, %v8674
        %v8715 = vpack.c.bf16 %v8679, %v8675
        %v8716 = vpack.c.bf16 %v8680, %v8676
        %v8717 = vpack.c.bf16 %v8685, %v8681
        %v8718 = vpack.c.bf16 %v8686, %v8682
        %v8719 = vpack.c.bf16 %v8687, %v8683
        %v8720 = vpack.c.bf16 %v8688, %v8684
        %v8721 = vld [vmem:[%s735 + $0x400] sm:$0xff]
        %v8722 = vld [vmem:[%s735 + $0x408] sm:$0xff]
        %v8723 = vld [vmem:[%s735 + $0x410] sm:$0xff]
        %v8724 = vld [vmem:[%s735 + $0x418] sm:$0xff]
        %v8725 = vld [vmem:[%s735 + $0x420] sm:$0xff]
        %v8726 = vld [vmem:[%s735 + $0x428] sm:$0xff]
        %v8727 = vld [vmem:[%s735 + $0x430] sm:$0xff]
        %v8728 = vld [vmem:[%s735 + $0x438] sm:$0xff]
        %v8729 = vld [vmem:[%s735 + $0x440] sm:$0xff]
        %v8730 = vld [vmem:[%s735 + $0x448] sm:$0xff]
        %v8731 = vld [vmem:[%s735 + $0x450] sm:$0xff]
        %v8732 = vld [vmem:[%s735 + $0x458] sm:$0xff]
        %v8733 = vld [vmem:[%s735 + $0x460] sm:$0xff]
        %v8734 = vld [vmem:[%s735 + $0x468] sm:$0xff]
        %v8735 = vld [vmem:[%s735 + $0x470] sm:$0xff]
        %v8736 = vld [vmem:[%s735 + $0x478] sm:$0xff]
        %v8737 = vld [vmem:[%s735 + $0x480] sm:$0xff]
        %v8738 = vld [vmem:[%s735 + $0x488] sm:$0xff]
        %v8739 = vld [vmem:[%s735 + $0x490] sm:$0xff]
        %v8740 = vld [vmem:[%s735 + $0x498] sm:$0xff]
        %v8741 = vld [vmem:[%s735 + $0x4a0] sm:$0xff]
        %v8742 = vld [vmem:[%s735 + $0x4a8] sm:$0xff]
        %v8743 = vld [vmem:[%s735 + $0x4b0] sm:$0xff]
        %v8744 = vld [vmem:[%s735 + $0x4b8] sm:$0xff]
        %v8745 = vld [vmem:[%s735 + $0x4c0] sm:$0xff]
        %v8746 = vld [vmem:[%s735 + $0x4c8] sm:$0xff]
        %v8747 = vld [vmem:[%s735 + $0x4d0] sm:$0xff]
        %v8748 = vld [vmem:[%s735 + $0x4d8] sm:$0xff]
        %v8749 = vld [vmem:[%s735 + $0x4e0] sm:$0xff]
        %v8750 = vld [vmem:[%s735 + $0x4e8] sm:$0xff]
        %v8751 = vld [vmem:[%s735 + $0x4f0] sm:$0xff]
        %v8752 = vld [vmem:[%s735 + $0x4f8] sm:$0xff]
        %v8753 = vld [vmem:[%s735 + $0x500] sm:$0xff]
        %v8754 = vld [vmem:[%s735 + $0x508] sm:$0xff]
        %v8755 = vld [vmem:[%s735 + $0x510] sm:$0xff]
        %v8756 = vld [vmem:[%s735 + $0x518] sm:$0xff]
        %v8757 = vld [vmem:[%s735 + $0x520] sm:$0xff]
        %v8758 = vld [vmem:[%s735 + $0x528] sm:$0xff]
        %v8759 = vld [vmem:[%s735 + $0x530] sm:$0xff]
        %v8760 = vld [vmem:[%s735 + $0x538] sm:$0xff]
        %v8761 = vld [vmem:[%s735 + $0x540] sm:$0xff]
        %v8762 = vld [vmem:[%s735 + $0x548] sm:$0xff]
        %v8763 = vld [vmem:[%s735 + $0x550] sm:$0xff]
        %v8764 = vld [vmem:[%s735 + $0x558] sm:$0xff]
        %v8765 = vld [vmem:[%s735 + $0x560] sm:$0xff]
        %v8766 = vld [vmem:[%s735 + $0x568] sm:$0xff]
        %v8767 = vld [vmem:[%s735 + $0x570] sm:$0xff]
        %v8768 = vld [vmem:[%s735 + $0x578] sm:$0xff]
        %v8769 = vld [vmem:[%s735 + $0x580] sm:$0xff]
        %v8770 = vld [vmem:[%s735 + $0x588] sm:$0xff]
        %v8771 = vld [vmem:[%s735 + $0x590] sm:$0xff]
        %v8772 = vld [vmem:[%s735 + $0x598] sm:$0xff]
        %v8773 = vld [vmem:[%s735 + $0x5a0] sm:$0xff]
        %v8774 = vld [vmem:[%s735 + $0x5a8] sm:$0xff]
        %v8775 = vld [vmem:[%s735 + $0x5b0] sm:$0xff]
        %v8776 = vld [vmem:[%s735 + $0x5b8] sm:$0xff]
        %v8777 = vld [vmem:[%s735 + $0x5c0] sm:$0xff]
        %v8778 = vld [vmem:[%s735 + $0x5c8] sm:$0xff]
        %v8779 = vld [vmem:[%s735 + $0x5d0] sm:$0xff]
        %v8780 = vld [vmem:[%s735 + $0x5d8] sm:$0xff]
        %v8781 = vld [vmem:[%s735 + $0x5e0] sm:$0xff]
        %v8782 = vld [vmem:[%s735 + $0x5e8] sm:$0xff]
        %v8783 = vld [vmem:[%s735 + $0x5f0] sm:$0xff]
        %v8784 = vld [vmem:[%s735 + $0x5f8] sm:$0xff]
        %v8849 = vunpack.c.l.b16 %v8721
        %v8850 = vunpack.c.h.b16 %v8721
        %v8851 = vunpack.c.l.b16 %v8722
        %v8852 = vunpack.c.h.b16 %v8722
        %v8853 = vunpack.c.l.b16 %v8723
        %v8854 = vunpack.c.h.b16 %v8723
        %v8855 = vunpack.c.l.b16 %v8724
        %v8856 = vunpack.c.h.b16 %v8724
        %v8857 = vunpack.c.l.b16 %v8725
        %v8858 = vunpack.c.h.b16 %v8725
        %v8859 = vunpack.c.l.b16 %v8726
        %v8860 = vunpack.c.h.b16 %v8726
        %v8861 = vunpack.c.l.b16 %v8727
        %v8862 = vunpack.c.h.b16 %v8727
        %v8863 = vunpack.c.l.b16 %v8728
        %v8864 = vunpack.c.h.b16 %v8728
        %v8865 = vunpack.c.l.b16 %v8729
        %v8866 = vunpack.c.h.b16 %v8729
        %v8867 = vunpack.c.l.b16 %v8730
        %v8868 = vunpack.c.h.b16 %v8730
        %v8869 = vunpack.c.l.b16 %v8731
        %v8870 = vunpack.c.h.b16 %v8731
        %v8871 = vunpack.c.l.b16 %v8732
        %v8872 = vunpack.c.h.b16 %v8732
        %v8873 = vunpack.c.l.b16 %v8733
        %v8874 = vunpack.c.h.b16 %v8733
        %v8875 = vunpack.c.l.b16 %v8734
        %v8876 = vunpack.c.h.b16 %v8734
        %v8877 = vunpack.c.l.b16 %v8735
        %v8878 = vunpack.c.h.b16 %v8735
        %v8879 = vunpack.c.l.b16 %v8736
        %v8880 = vunpack.c.h.b16 %v8736
        %v8881 = vunpack.c.l.b16 %v8737
        %v8882 = vunpack.c.h.b16 %v8737
        %v8883 = vunpack.c.l.b16 %v8738
        %v8884 = vunpack.c.h.b16 %v8738
        %v8885 = vunpack.c.l.b16 %v8739
        %v8886 = vunpack.c.h.b16 %v8739
        %v8887 = vunpack.c.l.b16 %v8740
        %v8888 = vunpack.c.h.b16 %v8740
        %v8889 = vunpack.c.l.b16 %v8741
        %v8890 = vunpack.c.h.b16 %v8741
        %v8891 = vunpack.c.l.b16 %v8742
        %v8892 = vunpack.c.h.b16 %v8742
        %v8893 = vunpack.c.l.b16 %v8743
        %v8894 = vunpack.c.h.b16 %v8743
        %v8895 = vunpack.c.l.b16 %v8744
        %v8896 = vunpack.c.h.b16 %v8744
        %v8897 = vunpack.c.l.b16 %v8745
        %v8898 = vunpack.c.h.b16 %v8745
        %v8899 = vunpack.c.l.b16 %v8746
        %v8900 = vunpack.c.h.b16 %v8746
        %v8901 = vunpack.c.l.b16 %v8747
        %v8902 = vunpack.c.h.b16 %v8747
        %v8903 = vunpack.c.l.b16 %v8748
        %v8904 = vunpack.c.h.b16 %v8748
        %v8905 = vunpack.c.l.b16 %v8749
        %v8906 = vunpack.c.h.b16 %v8749
        %v8907 = vunpack.c.l.b16 %v8750
        %v8908 = vunpack.c.h.b16 %v8750
        %v8909 = vunpack.c.l.b16 %v8751
        %v8910 = vunpack.c.h.b16 %v8751
        %v8911 = vunpack.c.l.b16 %v8752
        %v8912 = vunpack.c.h.b16 %v8752
        %v8913 = vunpack.c.l.b16 %v8753
        %v8914 = vunpack.c.h.b16 %v8753
        %v8915 = vunpack.c.l.b16 %v8754
        %v8916 = vunpack.c.h.b16 %v8754
        %v8917 = vunpack.c.l.b16 %v8755
        %v8918 = vunpack.c.h.b16 %v8755
        %v8919 = vunpack.c.l.b16 %v8756
        %v8920 = vunpack.c.h.b16 %v8756
        %v8921 = vunpack.c.l.b16 %v8757
        %v8922 = vunpack.c.h.b16 %v8757
        %v8923 = vunpack.c.l.b16 %v8758
        %v8924 = vunpack.c.h.b16 %v8758
        %v8925 = vunpack.c.l.b16 %v8759
        %v8926 = vunpack.c.h.b16 %v8759
        %v8927 = vunpack.c.l.b16 %v8760
        %v8928 = vunpack.c.h.b16 %v8760
        %v8929 = vunpack.c.l.b16 %v8761
        %v8930 = vunpack.c.h.b16 %v8761
        %v8931 = vunpack.c.l.b16 %v8762
        %v8932 = vunpack.c.h.b16 %v8762
        %v8933 = vunpack.c.l.b16 %v8763
        %v8934 = vunpack.c.h.b16 %v8763
        %v8935 = vunpack.c.l.b16 %v8764
        %v8936 = vunpack.c.h.b16 %v8764
        %v8937 = vunpack.c.l.b16 %v8765
        %v8938 = vunpack.c.h.b16 %v8765
        %v8939 = vunpack.c.l.b16 %v8766
        %v8940 = vunpack.c.h.b16 %v8766
        %v8941 = vunpack.c.l.b16 %v8767
        %v8942 = vunpack.c.h.b16 %v8767
        %v8943 = vunpack.c.l.b16 %v8768
        %v8944 = vunpack.c.h.b16 %v8768
        %v8945 = vunpack.c.l.b16 %v8769
        %v8946 = vunpack.c.h.b16 %v8769
        %v8947 = vunpack.c.l.b16 %v8770
        %v8948 = vunpack.c.h.b16 %v8770
        %v8949 = vunpack.c.l.b16 %v8771
        %v8950 = vunpack.c.h.b16 %v8771
        %v8951 = vunpack.c.l.b16 %v8772
        %v8952 = vunpack.c.h.b16 %v8772
        %v8953 = vunpack.c.l.b16 %v8773
        %v8954 = vunpack.c.h.b16 %v8773
        %v8955 = vunpack.c.l.b16 %v8774
        %v8956 = vunpack.c.h.b16 %v8774
        %v8957 = vunpack.c.l.b16 %v8775
        %v8958 = vunpack.c.h.b16 %v8775
        %v8959 = vunpack.c.l.b16 %v8776
        %v8960 = vunpack.c.h.b16 %v8776
        %v8961 = vunpack.c.l.b16 %v8777
        %v8962 = vunpack.c.h.b16 %v8777
        %v8963 = vunpack.c.l.b16 %v8778
        %v8964 = vunpack.c.h.b16 %v8778
        %v8965 = vunpack.c.l.b16 %v8779
        %v8966 = vunpack.c.h.b16 %v8779
        %v8967 = vunpack.c.l.b16 %v8780
        %v8968 = vunpack.c.h.b16 %v8780
        %v8969 = vunpack.c.l.b16 %v8781
        %v8970 = vunpack.c.h.b16 %v8781
        %v8971 = vunpack.c.l.b16 %v8782
        %v8972 = vunpack.c.h.b16 %v8782
        %v8973 = vunpack.c.l.b16 %v8783
        %v8974 = vunpack.c.h.b16 %v8783
        %v8975 = vunpack.c.l.b16 %v8784
        %v8976 = vunpack.c.h.b16 %v8784
        %v8977 = vpack.c.b16 %v8851, %v8849
        %v8978 = vpack.c.b16 %v8852, %v8850
        %v8979 = vpack.c.b16 %v8855, %v8853
        %v8980 = vpack.c.b16 %v8856, %v8854
        %v8981 = vpack.c.b16 %v8859, %v8857
        %v8982 = vpack.c.b16 %v8860, %v8858
        %v8983 = vpack.c.b16 %v8863, %v8861
        %v8984 = vpack.c.b16 %v8864, %v8862
        %v8985 = vpack.c.b16 %v8867, %v8865
        %v8986 = vpack.c.b16 %v8868, %v8866
        %v8987 = vpack.c.b16 %v8871, %v8869
        %v8988 = vpack.c.b16 %v8872, %v8870
        %v8989 = vpack.c.b16 %v8875, %v8873
        %v8990 = vpack.c.b16 %v8876, %v8874
        %v8991 = vpack.c.b16 %v8879, %v8877
        %v8992 = vpack.c.b16 %v8880, %v8878
        %v8993 = vpack.c.b16 %v8883, %v8881
        %v8994 = vpack.c.b16 %v8884, %v8882
        %v8995 = vpack.c.b16 %v8887, %v8885
        %v8996 = vpack.c.b16 %v8888, %v8886
        %v8997 = vpack.c.b16 %v8891, %v8889
        %v8998 = vpack.c.b16 %v8892, %v8890
        %v8999 = vpack.c.b16 %v8895, %v8893
        %v9000 = vpack.c.b16 %v8896, %v8894
        %v9001 = vpack.c.b16 %v8899, %v8897
        %v9002 = vpack.c.b16 %v8900, %v8898
        %v9003 = vpack.c.b16 %v8903, %v8901
        %v9004 = vpack.c.b16 %v8904, %v8902
        %v9005 = vpack.c.b16 %v8907, %v8905
        %v9006 = vpack.c.b16 %v8908, %v8906
        %v9007 = vpack.c.b16 %v8911, %v8909
        %v9008 = vpack.c.b16 %v8912, %v8910
        %v9009 = vpack.c.b16 %v8915, %v8913
        %v9010 = vpack.c.b16 %v8916, %v8914
        %v9011 = vpack.c.b16 %v8919, %v8917
        %v9012 = vpack.c.b16 %v8920, %v8918
        %v9013 = vpack.c.b16 %v8923, %v8921
        %v9014 = vpack.c.b16 %v8924, %v8922
        %v9015 = vpack.c.b16 %v8927, %v8925
        %v9016 = vpack.c.b16 %v8928, %v8926
        %v9017 = vpack.c.b16 %v8931, %v8929
        %v9018 = vpack.c.b16 %v8932, %v8930
        %v9019 = vpack.c.b16 %v8935, %v8933
        %v9020 = vpack.c.b16 %v8936, %v8934
        %v9021 = vpack.c.b16 %v8939, %v8937
        %v9022 = vpack.c.b16 %v8940, %v8938
        %v9023 = vpack.c.b16 %v8943, %v8941
        %v9024 = vpack.c.b16 %v8944, %v8942
        %v9025 = vpack.c.b16 %v8947, %v8945
        %v9026 = vpack.c.b16 %v8948, %v8946
        %v9027 = vpack.c.b16 %v8951, %v8949
        %v9028 = vpack.c.b16 %v8952, %v8950
        %v9029 = vpack.c.b16 %v8955, %v8953
        %v9030 = vpack.c.b16 %v8956, %v8954
        %v9031 = vpack.c.b16 %v8959, %v8957
        %v9032 = vpack.c.b16 %v8960, %v8958
        %v9033 = vpack.c.b16 %v8963, %v8961
        %v9034 = vpack.c.b16 %v8964, %v8962
        %v9035 = vpack.c.b16 %v8967, %v8965
        %v9036 = vpack.c.b16 %v8968, %v8966
        %v9037 = vpack.c.b16 %v8971, %v8969
        %v9038 = vpack.c.b16 %v8972, %v8970
        %v9039 = vpack.c.b16 %v8975, %v8973
        %v9040 = vpack.c.b16 %v8976, %v8974
        %9105 = vmatprep.subr.bf16.mxu0 %v8992
        %9106 = vmatpush1.bf16.msra.mxu0 %v8991
        %9107 = vmatprep.subr.bf16.mxu0 %v8990
        %9108 = vmatpush1.bf16.msra.mxu0 %v8989
        %9109 = vmatprep.subr.bf16.mxu0 %v8988
        %9110 = vmatpush1.bf16.msra.mxu0 %v8987
        %9111 = vmatprep.subr.bf16.mxu0 %v8986
        %9112 = vmatpush1.bf16.msra.mxu0 %v8985
        %9113 = vmatprep.subr.bf16.mxu0 %v8984
        %9114 = vmatpush1.bf16.msra.mxu0 %v8983
        %9115 = vmatprep.subr.bf16.mxu0 %v8982
        %9116 = vmatpush1.bf16.msra.mxu0 %v8981
        %9117 = vmatprep.subr.bf16.mxu0 %v8980
        %9118 = vmatpush1.bf16.msra.mxu0 %v8979
        %9119 = vmatprep.subr.bf16.mxu0 %v8978
        %9120 = vmatpush1.bf16.msra.mxu0 %v8977
        %9121 = vmatprep.subr.bf16.mxu0 %v9008
        %9122 = vmatpush2.bf16.msra.mxu0 %v9007
        %9123 = vmatprep.subr.bf16.mxu0 %v9006
        %9124 = vmatpush2.bf16.msra.mxu0 %v9005
        %9125 = vmatprep.subr.bf16.mxu0 %v9004
        %9126 = vmatpush2.bf16.msra.mxu0 %v9003
        %9127 = vmatprep.subr.bf16.mxu0 %v9002
        %9128 = vmatpush2.bf16.msra.mxu0 %v9001
        %9129 = vmatprep.subr.bf16.mxu0 %v9000
        %9130 = vmatpush2.bf16.msra.mxu0 %v8999
        %9131 = vmatprep.subr.bf16.mxu0 %v8998
        %9132 = vmatpush2.bf16.msra.mxu0 %v8997
        %9133 = vmatprep.subr.bf16.mxu0 %v8996
        %9134 = vmatpush2.bf16.msra.mxu0 %v8995
        %9135 = vmatprep.subr.bf16.mxu0 %v8994
        %9136 = vmatpush2.bf16.msra.mxu0 %v8993
        %9137 = vmatprep.mubr.bf16.mxu0 %v8690
        %9138 = vmatmul.mubr.bf16.gmra.mxu0 %v8689
        %v9139 = vpop.f32.mrf.mxu0
        %v9140 = vadd.f32 0.0, %v9139
        %v9141 = vpop.f32.mrf.mxu0
        %v9142 = vadd.f32 0.0, %v9141
        %v9143 = vpop.f32.mrf.mxu0
        %v9144 = vadd.f32 0.0, %v9143
        %v9145 = vpop.f32.mrf.mxu0
        %v9146 = vadd.f32 0.0, %v9145
        %9147 = vmatprep.mubr.bf16.mxu0 %v8694
        %9148 = vmatmul.mubr.bf16.gmra.mxu0 %v8693
        %v9149 = vpop.f32.mrf.mxu0
        %v9150 = vadd.f32 0.0, %v9149
        %v9151 = vpop.f32.mrf.mxu0
        %v9152 = vadd.f32 0.0, %v9151
        %v9153 = vpop.f32.mrf.mxu0
        %v9154 = vadd.f32 0.0, %v9153
        %v9155 = vpop.f32.mrf.mxu0
        %v9156 = vadd.f32 0.0, %v9155
        %9157 = vmatprep.mubr.bf16.mxu0 %v8698
        %9158 = vmatmul.mubr.bf16.gmra.mxu0 %v8697
        %v9159 = vpop.f32.mrf.mxu0
        %v9160 = vadd.f32 0.0, %v9159
        %v9161 = vpop.f32.mrf.mxu0
        %v9162 = vadd.f32 0.0, %v9161
        %v9163 = vpop.f32.mrf.mxu0
        %v9164 = vadd.f32 0.0, %v9163
        %v9165 = vpop.f32.mrf.mxu0
        %v9166 = vadd.f32 0.0, %v9165
        %9167 = vmatprep.mubr.bf16.mxu0 %v8702
        %9168 = vmatmul.mubr.bf16.gmra.mxu0 %v8701
        %v9169 = vpop.f32.mrf.mxu0
        %v9170 = vadd.f32 0.0, %v9169
        %v9171 = vpop.f32.mrf.mxu0
        %v9172 = vadd.f32 0.0, %v9171
        %v9173 = vpop.f32.mrf.mxu0
        %v9174 = vadd.f32 0.0, %v9173
        %v9175 = vpop.f32.mrf.mxu0
        %v9176 = vadd.f32 0.0, %v9175
        %9177 = vmatprep.mubr.bf16.mxu0 %v8706
        %9178 = vmatmul.mubr.bf16.gmra.mxu0 %v8705
        %v9179 = vpop.f32.mrf.mxu0
        %v9180 = vadd.f32 0.0, %v9179
        %v9181 = vpop.f32.mrf.mxu0
        %v9182 = vadd.f32 0.0, %v9181
        %v9183 = vpop.f32.mrf.mxu0
        %v9184 = vadd.f32 0.0, %v9183
        %v9185 = vpop.f32.mrf.mxu0
        %v9186 = vadd.f32 0.0, %v9185
        %9187 = vmatprep.mubr.bf16.mxu0 %v8710
        %9188 = vmatmul.mubr.bf16.gmra.mxu0 %v8709
        %v9189 = vpop.f32.mrf.mxu0
        %v9190 = vadd.f32 0.0, %v9189
        %v9191 = vpop.f32.mrf.mxu0
        %v9192 = vadd.f32 0.0, %v9191
        %v9193 = vpop.f32.mrf.mxu0
        %v9194 = vadd.f32 0.0, %v9193
        %v9195 = vpop.f32.mrf.mxu0
        %v9196 = vadd.f32 0.0, %v9195
        %9197 = vmatprep.mubr.bf16.mxu0 %v8714
        %9198 = vmatmul.mubr.bf16.gmra.mxu0 %v8713
        %v9199 = vpop.f32.mrf.mxu0
        %v9200 = vadd.f32 0.0, %v9199
        %v9201 = vpop.f32.mrf.mxu0
        %v9202 = vadd.f32 0.0, %v9201
        %v9203 = vpop.f32.mrf.mxu0
        %v9204 = vadd.f32 0.0, %v9203
        %v9205 = vpop.f32.mrf.mxu0
        %v9206 = vadd.f32 0.0, %v9205
        %9207 = vmatprep.mubr.bf16.mxu0 %v8718
        %9208 = vmatmul.mubr.bf16.gmra.mxu0 %v8717
        %v9209 = vpop.f32.mrf.mxu0
        %v9210 = vadd.f32 0.0, %v9209
        %v9211 = vpop.f32.mrf.mxu0
        %v9212 = vadd.f32 0.0, %v9211
        %v9213 = vpop.f32.mrf.mxu0
        %v9214 = vadd.f32 0.0, %v9213
        %v9215 = vpop.f32.mrf.mxu0
        %v9216 = vadd.f32 0.0, %v9215
        %9217 = vdwg.mxu0
        %9218 = vmatprep.subr.bf16.mxu0 %v9024
        %9219 = vmatpush1.bf16.msra.mxu0 %v9023
        %9220 = vmatprep.subr.bf16.mxu0 %v9022
        %9221 = vmatpush1.bf16.msra.mxu0 %v9021
        %9222 = vmatprep.subr.bf16.mxu0 %v9020
        %9223 = vmatpush1.bf16.msra.mxu0 %v9019
        %9224 = vmatprep.subr.bf16.mxu0 %v9018
        %9225 = vmatpush1.bf16.msra.mxu0 %v9017
        %9226 = vmatprep.subr.bf16.mxu0 %v9016
        %9227 = vmatpush1.bf16.msra.mxu0 %v9015
        %9228 = vmatprep.subr.bf16.mxu0 %v9014
        %9229 = vmatpush1.bf16.msra.mxu0 %v9013
        %9230 = vmatprep.subr.bf16.mxu0 %v9012
        %9231 = vmatpush1.bf16.msra.mxu0 %v9011
        %9232 = vmatprep.subr.bf16.mxu0 %v9010
        %9233 = vmatpush1.bf16.msra.mxu0 %v9009
        %9234 = vmatprep.subr.bf16.mxu0 %v9040
        %9235 = vmatpush2.bf16.msra.mxu0 %v9039
        %9236 = vmatprep.subr.bf16.mxu0 %v9038
        %9237 = vmatpush2.bf16.msra.mxu0 %v9037
        %9238 = vmatprep.subr.bf16.mxu0 %v9036
        %9239 = vmatpush2.bf16.msra.mxu0 %v9035
        %9240 = vmatprep.subr.bf16.mxu0 %v9034
        %9241 = vmatpush2.bf16.msra.mxu0 %v9033
        %9242 = vmatprep.subr.bf16.mxu0 %v9032
        %9243 = vmatpush2.bf16.msra.mxu0 %v9031
        %9244 = vmatprep.subr.bf16.mxu0 %v9030
        %9245 = vmatpush2.bf16.msra.mxu0 %v9029
        %9246 = vmatprep.subr.bf16.mxu0 %v9028
        %9247 = vmatpush2.bf16.msra.mxu0 %v9027
        %9248 = vmatprep.subr.bf16.mxu0 %v9026
        %9249 = vmatpush2.bf16.msra.mxu0 %v9025
        %9250 = vmatprep.mubr.bf16.mxu0 %v8692
        %9251 = vmatmul.mubr.bf16.gmra.mxu0 %v8691
        %v9252 = vpop.f32.mrf.mxu0
        %v9253 = vadd.f32 %v9140, %v9252
        %v9254 = vpop.f32.mrf.mxu0
        %v9255 = vadd.f32 %v9142, %v9254
        %v9256 = vpop.f32.mrf.mxu0
        %v9257 = vadd.f32 %v9144, %v9256
        %v9258 = vpop.f32.mrf.mxu0
        %v9259 = vadd.f32 %v9146, %v9258
        %9260 = vmatprep.mubr.bf16.mxu0 %v8696
        %9261 = vmatmul.mubr.bf16.gmra.mxu0 %v8695
        %v9262 = vpop.f32.mrf.mxu0
        %v9263 = vadd.f32 %v9150, %v9262
        %v9264 = vpop.f32.mrf.mxu0
        %v9265 = vadd.f32 %v9152, %v9264
        %v9266 = vpop.f32.mrf.mxu0
        %v9267 = vadd.f32 %v9154, %v9266
        %v9268 = vpop.f32.mrf.mxu0
        %v9269 = vadd.f32 %v9156, %v9268
        %9270 = vmatprep.mubr.bf16.mxu0 %v8700
        %9271 = vmatmul.mubr.bf16.gmra.mxu0 %v8699
        %v9272 = vpop.f32.mrf.mxu0
        %v9273 = vadd.f32 %v9160, %v9272
        %v9274 = vpop.f32.mrf.mxu0
        %v9275 = vadd.f32 %v9162, %v9274
        %v9276 = vpop.f32.mrf.mxu0
        %v9277 = vadd.f32 %v9164, %v9276
        %v9278 = vpop.f32.mrf.mxu0
        %v9279 = vadd.f32 %v9166, %v9278
        %9280 = vmatprep.mubr.bf16.mxu0 %v8704
        %9281 = vmatmul.mubr.bf16.gmra.mxu0 %v8703
        %v9282 = vpop.f32.mrf.mxu0
        %v9283 = vadd.f32 %v9170, %v9282
        %v9284 = vpop.f32.mrf.mxu0
        %v9285 = vadd.f32 %v9172, %v9284
        %v9286 = vpop.f32.mrf.mxu0
        %v9287 = vadd.f32 %v9174, %v9286
        %v9288 = vpop.f32.mrf.mxu0
        %v9289 = vadd.f32 %v9176, %v9288
        %9290 = vmatprep.mubr.bf16.mxu0 %v8708
        %9291 = vmatmul.mubr.bf16.gmra.mxu0 %v8707
        %v9292 = vpop.f32.mrf.mxu0
        %v9293 = vadd.f32 %v9180, %v9292
        %v9294 = vpop.f32.mrf.mxu0
        %v9295 = vadd.f32 %v9182, %v9294
        %v9296 = vpop.f32.mrf.mxu0
        %v9297 = vadd.f32 %v9184, %v9296
        %v9298 = vpop.f32.mrf.mxu0
        %v9299 = vadd.f32 %v9186, %v9298
        %9300 = vmatprep.mubr.bf16.mxu0 %v8712
        %9301 = vmatmul.mubr.bf16.gmra.mxu0 %v8711
        %v9302 = vpop.f32.mrf.mxu0
        %v9303 = vadd.f32 %v9190, %v9302
        %v9304 = vpop.f32.mrf.mxu0
        %v9305 = vadd.f32 %v9192, %v9304
        %v9306 = vpop.f32.mrf.mxu0
        %v9307 = vadd.f32 %v9194, %v9306
        %v9308 = vpop.f32.mrf.mxu0
        %v9309 = vadd.f32 %v9196, %v9308
        %9310 = vmatprep.mubr.bf16.mxu0 %v8716
        %9311 = vmatmul.mubr.bf16.gmra.mxu0 %v8715
        %v9312 = vpop.f32.mrf.mxu0
        %v9313 = vadd.f32 %v9200, %v9312
        %v9314 = vpop.f32.mrf.mxu0
        %v9315 = vadd.f32 %v9202, %v9314
        %v9316 = vpop.f32.mrf.mxu0
        %v9317 = vadd.f32 %v9204, %v9316
        %v9318 = vpop.f32.mrf.mxu0
        %v9319 = vadd.f32 %v9206, %v9318
        %9320 = vmatprep.mubr.bf16.mxu0 %v8720
        %9321 = vmatmul.mubr.bf16.gmra.mxu0 %v8719
        %v9322 = vpop.f32.mrf.mxu0
        %v9323 = vadd.f32 %v9210, %v9322
        %v9324 = vpop.f32.mrf.mxu0
        %v9325 = vadd.f32 %v9212, %v9324
        %v9326 = vpop.f32.mrf.mxu0
        %v9327 = vadd.f32 %v9214, %v9326
        %v9328 = vpop.f32.mrf.mxu0
        %v9329 = vadd.f32 %v9216, %v9328
        %9330 = vdwg.mxu0
        %v9331 = vadd.f32 %v7961, %v9253
        %v9332 = vadd.f32 %v7962, %v9255
        %v9333 = vadd.f32 %v7963, %v9257
        %v9334 = vadd.f32 %v7964, %v9259
        %v9335 = vadd.f32 %v7965, %v9263
        %v9336 = vadd.f32 %v7966, %v9265
        %v9337 = vadd.f32 %v7967, %v9267
        %v9338 = vadd.f32 %v7968, %v9269
        %v9339 = vadd.f32 %v7969, %v9273
        %v9340 = vadd.f32 %v7970, %v9275
        %v9341 = vadd.f32 %v7971, %v9277
        %v9342 = vadd.f32 %v7972, %v9279
        %v9343 = vadd.f32 %v7973, %v9283
        %v9344 = vadd.f32 %v7974, %v9285
        %v9345 = vadd.f32 %v7975, %v9287
        %v9346 = vadd.f32 %v7976, %v9289
        %v9347 = vadd.f32 %v7977, %v9293
        %v9348 = vadd.f32 %v7978, %v9295
        %v9349 = vadd.f32 %v7979, %v9297
        %v9350 = vadd.f32 %v7980, %v9299
        %v9351 = vadd.f32 %v7981, %v9303
        %v9352 = vadd.f32 %v7982, %v9305
        %v9353 = vadd.f32 %v7983, %v9307
        %v9354 = vadd.f32 %v7984, %v9309
        %v9355 = vadd.f32 %v7985, %v9313
        %v9356 = vadd.f32 %v7986, %v9315
        %v9357 = vadd.f32 %v7987, %v9317
        %v9358 = vadd.f32 %v7988, %v9319
        %v9359 = vadd.f32 %v7989, %v9323
        %v9360 = vadd.f32 %v7990, %v9325
        %v9361 = vadd.f32 %v7991, %v9327
        %v9362 = vadd.f32 %v7992, %v9329
        %v9363 = vld [vmem:[%s717 + $0x30] sm:$0xff]
        %v9364 = vld [vmem:[%s717 + $0x38] sm:$0xff]
        %v9365 = vld [vmem:[%s717 + $0x70] sm:$0xff]
        %v9366 = vld [vmem:[%s717 + $0x78] sm:$0xff]
        %v9367 = vld [vmem:[%s717 + $0xb0] sm:$0xff]
        %v9368 = vld [vmem:[%s717 + $0xb8] sm:$0xff]
        %v9369 = vld [vmem:[%s717 + $0xf0] sm:$0xff]
        %v9370 = vld [vmem:[%s717 + $0xf8] sm:$0xff]
        %v9371 = vld [vmem:[%s717 + $0x130] sm:$0xff]
        %v9372 = vld [vmem:[%s717 + $0x138] sm:$0xff]
        %v9373 = vld [vmem:[%s717 + $0x170] sm:$0xff]
        %v9374 = vld [vmem:[%s717 + $0x178] sm:$0xff]
        %v9375 = vld [vmem:[%s717 + $0x1b0] sm:$0xff]
        %v9376 = vld [vmem:[%s717 + $0x1b8] sm:$0xff]
        %v9377 = vld [vmem:[%s717 + $0x1f0] sm:$0xff]
        %v9378 = vld [vmem:[%s717 + $0x1f8] sm:$0xff]
        %v9379 = vld [vmem:[%s717 + $0x230] sm:$0xff]
        %v9380 = vld [vmem:[%s717 + $0x238] sm:$0xff]
        %v9381 = vld [vmem:[%s717 + $0x270] sm:$0xff]
        %v9382 = vld [vmem:[%s717 + $0x278] sm:$0xff]
        %v9383 = vld [vmem:[%s717 + $0x2b0] sm:$0xff]
        %v9384 = vld [vmem:[%s717 + $0x2b8] sm:$0xff]
        %v9385 = vld [vmem:[%s717 + $0x2f0] sm:$0xff]
        %v9386 = vld [vmem:[%s717 + $0x2f8] sm:$0xff]
        %v9387 = vld [vmem:[%s717 + $0x330] sm:$0xff]
        %v9388 = vld [vmem:[%s717 + $0x338] sm:$0xff]
        %v9389 = vld [vmem:[%s717 + $0x370] sm:$0xff]
        %v9390 = vld [vmem:[%s717 + $0x378] sm:$0xff]
        %v9391 = vld [vmem:[%s717 + $0x3b0] sm:$0xff]
        %v9392 = vld [vmem:[%s717 + $0x3b8] sm:$0xff]
        %v9393 = vld [vmem:[%s717 + $0x3f0] sm:$0xff]
        %v9394 = vld [vmem:[%s717 + $0x3f8] sm:$0xff]
        %v9395 = vld [vmem:[%s717 + $0x430] sm:$0xff]
        %v9396 = vld [vmem:[%s717 + $0x438] sm:$0xff]
        %v9397 = vld [vmem:[%s717 + $0x470] sm:$0xff]
        %v9398 = vld [vmem:[%s717 + $0x478] sm:$0xff]
        %v9399 = vld [vmem:[%s717 + $0x4b0] sm:$0xff]
        %v9400 = vld [vmem:[%s717 + $0x4b8] sm:$0xff]
        %v9401 = vld [vmem:[%s717 + $0x4f0] sm:$0xff]
        %v9402 = vld [vmem:[%s717 + $0x4f8] sm:$0xff]
        %v9403 = vld [vmem:[%s717 + $0x530] sm:$0xff]
        %v9404 = vld [vmem:[%s717 + $0x538] sm:$0xff]
        %v9405 = vld [vmem:[%s717 + $0x570] sm:$0xff]
        %v9406 = vld [vmem:[%s717 + $0x578] sm:$0xff]
        %v9407 = vld [vmem:[%s717 + $0x5b0] sm:$0xff]
        %v9408 = vld [vmem:[%s717 + $0x5b8] sm:$0xff]
        %v9409 = vld [vmem:[%s717 + $0x5f0] sm:$0xff]
        %v9410 = vld [vmem:[%s717 + $0x5f8] sm:$0xff]
        %v9411 = vld [vmem:[%s717 + $0x630] sm:$0xff]
        %v9412 = vld [vmem:[%s717 + $0x638] sm:$0xff]
        %v9413 = vld [vmem:[%s717 + $0x670] sm:$0xff]
        %v9414 = vld [vmem:[%s717 + $0x678] sm:$0xff]
        %v9415 = vld [vmem:[%s717 + $0x6b0] sm:$0xff]
        %v9416 = vld [vmem:[%s717 + $0x6b8] sm:$0xff]
        %v9417 = vld [vmem:[%s717 + $0x6f0] sm:$0xff]
        %v9418 = vld [vmem:[%s717 + $0x6f8] sm:$0xff]
        %v9419 = vld [vmem:[%s717 + $0x730] sm:$0xff]
        %v9420 = vld [vmem:[%s717 + $0x738] sm:$0xff]
        %v9421 = vld [vmem:[%s717 + $0x770] sm:$0xff]
        %v9422 = vld [vmem:[%s717 + $0x778] sm:$0xff]
        %v9423 = vld [vmem:[%s717 + $0x7b0] sm:$0xff]
        %v9424 = vld [vmem:[%s717 + $0x7b8] sm:$0xff]
        %v9425 = vld [vmem:[%s717 + $0x7f0] sm:$0xff]
        %v9426 = vld [vmem:[%s717 + $0x7f8] sm:$0xff]
        %v9427 = vld [vmem:[%s726 + $0xc] sm:$0xf]
        %v9429 = vlaneseq
        %v9430 = vshrl.u32 %v9429, 7
        %v9431 = vsub.s32 0, %v9430
        %v9432 = vrot.slane %v9427, %v9431
        %v9433 = vlaneseq
        %v9434 = vshrl.u32 %v9433, 7
        %v9435 = vsub.s32 1, %v9434
        %v9436 = vrot.slane %v9427, %v9435
        %v9437 = vlaneseq
        %v9438 = vshrl.u32 %v9437, 7
        %v9439 = vsub.s32 2, %v9438
        %v9440 = vrot.slane %v9427, %v9439
        %v9441 = vlaneseq
        %v9442 = vshrl.u32 %v9441, 7
        %v9443 = vsub.s32 3, %v9442
        %v9444 = vrot.slane %v9427, %v9443
        %v9513 = vunpack.c.l.b16 %v9363
        %v9514 = vunpack.c.h.b16 %v9363
        %v9515 = vunpack.c.l.b16 %v9364
        %v9516 = vunpack.c.h.b16 %v9364
        %v9517 = vunpack.c.l.b16 %v9365
        %v9518 = vunpack.c.h.b16 %v9365
        %v9519 = vunpack.c.l.b16 %v9366
        %v9520 = vunpack.c.h.b16 %v9366
        %v9521 = vunpack.c.l.b16 %v9367
        %v9522 = vunpack.c.h.b16 %v9367
        %v9523 = vunpack.c.l.b16 %v9368
        %v9524 = vunpack.c.h.b16 %v9368
        %v9525 = vunpack.c.l.b16 %v9369
        %v9526 = vunpack.c.h.b16 %v9369
        %v9527 = vunpack.c.l.b16 %v9370
        %v9528 = vunpack.c.h.b16 %v9370
        %v9529 = vunpack.c.l.b16 %v9371
        %v9530 = vunpack.c.h.b16 %v9371
        %v9531 = vunpack.c.l.b16 %v9372
        %v9532 = vunpack.c.h.b16 %v9372
        %v9533 = vunpack.c.l.b16 %v9373
        %v9534 = vunpack.c.h.b16 %v9373
        %v9535 = vunpack.c.l.b16 %v9374
        %v9536 = vunpack.c.h.b16 %v9374
        %v9537 = vunpack.c.l.b16 %v9375
        %v9538 = vunpack.c.h.b16 %v9375
        %v9539 = vunpack.c.l.b16 %v9376
        %v9540 = vunpack.c.h.b16 %v9376
        %v9541 = vunpack.c.l.b16 %v9377
        %v9542 = vunpack.c.h.b16 %v9377
        %v9543 = vunpack.c.l.b16 %v9378
        %v9544 = vunpack.c.h.b16 %v9378
        %v9545 = vunpack.c.l.b16 %v9379
        %v9546 = vunpack.c.h.b16 %v9379
        %v9547 = vunpack.c.l.b16 %v9380
        %v9548 = vunpack.c.h.b16 %v9380
        %v9549 = vunpack.c.l.b16 %v9381
        %v9550 = vunpack.c.h.b16 %v9381
        %v9551 = vunpack.c.l.b16 %v9382
        %v9552 = vunpack.c.h.b16 %v9382
        %v9553 = vunpack.c.l.b16 %v9383
        %v9554 = vunpack.c.h.b16 %v9383
        %v9555 = vunpack.c.l.b16 %v9384
        %v9556 = vunpack.c.h.b16 %v9384
        %v9557 = vunpack.c.l.b16 %v9385
        %v9558 = vunpack.c.h.b16 %v9385
        %v9559 = vunpack.c.l.b16 %v9386
        %v9560 = vunpack.c.h.b16 %v9386
        %v9561 = vunpack.c.l.b16 %v9387
        %v9562 = vunpack.c.h.b16 %v9387
        %v9563 = vunpack.c.l.b16 %v9388
        %v9564 = vunpack.c.h.b16 %v9388
        %v9565 = vunpack.c.l.b16 %v9389
        %v9566 = vunpack.c.h.b16 %v9389
        %v9567 = vunpack.c.l.b16 %v9390
        %v9568 = vunpack.c.h.b16 %v9390
        %v9569 = vunpack.c.l.b16 %v9391
        %v9570 = vunpack.c.h.b16 %v9391
        %v9571 = vunpack.c.l.b16 %v9392
        %v9572 = vunpack.c.h.b16 %v9392
        %v9573 = vunpack.c.l.b16 %v9393
        %v9574 = vunpack.c.h.b16 %v9393
        %v9575 = vunpack.c.l.b16 %v9394
        %v9576 = vunpack.c.h.b16 %v9394
        %v9577 = vunpack.c.l.b16 %v9395
        %v9578 = vunpack.c.h.b16 %v9395
        %v9579 = vunpack.c.l.b16 %v9396
        %v9580 = vunpack.c.h.b16 %v9396
        %v9581 = vunpack.c.l.b16 %v9397
        %v9582 = vunpack.c.h.b16 %v9397
        %v9583 = vunpack.c.l.b16 %v9398
        %v9584 = vunpack.c.h.b16 %v9398
        %v9585 = vunpack.c.l.b16 %v9399
        %v9586 = vunpack.c.h.b16 %v9399
        %v9587 = vunpack.c.l.b16 %v9400
        %v9588 = vunpack.c.h.b16 %v9400
        %v9589 = vunpack.c.l.b16 %v9401
        %v9590 = vunpack.c.h.b16 %v9401
        %v9591 = vunpack.c.l.b16 %v9402
        %v9592 = vunpack.c.h.b16 %v9402
        %v9593 = vunpack.c.l.b16 %v9403
        %v9594 = vunpack.c.h.b16 %v9403
        %v9595 = vunpack.c.l.b16 %v9404
        %v9596 = vunpack.c.h.b16 %v9404
        %v9597 = vunpack.c.l.b16 %v9405
        %v9598 = vunpack.c.h.b16 %v9405
        %v9599 = vunpack.c.l.b16 %v9406
        %v9600 = vunpack.c.h.b16 %v9406
        %v9601 = vunpack.c.l.b16 %v9407
        %v9602 = vunpack.c.h.b16 %v9407
        %v9603 = vunpack.c.l.b16 %v9408
        %v9604 = vunpack.c.h.b16 %v9408
        %v9605 = vunpack.c.l.b16 %v9409
        %v9606 = vunpack.c.h.b16 %v9409
        %v9607 = vunpack.c.l.b16 %v9410
        %v9608 = vunpack.c.h.b16 %v9410
        %v9609 = vunpack.c.l.b16 %v9411
        %v9610 = vunpack.c.h.b16 %v9411
        %v9611 = vunpack.c.l.b16 %v9412
        %v9612 = vunpack.c.h.b16 %v9412
        %v9613 = vunpack.c.l.b16 %v9413
        %v9614 = vunpack.c.h.b16 %v9413
        %v9615 = vunpack.c.l.b16 %v9414
        %v9616 = vunpack.c.h.b16 %v9414
        %v9617 = vunpack.c.l.b16 %v9415
        %v9618 = vunpack.c.h.b16 %v9415
        %v9619 = vunpack.c.l.b16 %v9416
        %v9620 = vunpack.c.h.b16 %v9416
        %v9621 = vunpack.c.l.b16 %v9417
        %v9622 = vunpack.c.h.b16 %v9417
        %v9623 = vunpack.c.l.b16 %v9418
        %v9624 = vunpack.c.h.b16 %v9418
        %v9625 = vunpack.c.l.b16 %v9419
        %v9626 = vunpack.c.h.b16 %v9419
        %v9627 = vunpack.c.l.b16 %v9420
        %v9628 = vunpack.c.h.b16 %v9420
        %v9629 = vunpack.c.l.b16 %v9421
        %v9630 = vunpack.c.h.b16 %v9421
        %v9631 = vunpack.c.l.b16 %v9422
        %v9632 = vunpack.c.h.b16 %v9422
        %v9633 = vunpack.c.l.b16 %v9423
        %v9634 = vunpack.c.h.b16 %v9423
        %v9635 = vunpack.c.l.b16 %v9424
        %v9636 = vunpack.c.h.b16 %v9424
        %v9637 = vunpack.c.l.b16 %v9425
        %v9638 = vunpack.c.h.b16 %v9425
        %v9639 = vunpack.c.l.b16 %v9426
        %v9640 = vunpack.c.h.b16 %v9426
        %v9641 = vpack.c.b16 %v9517, %v9513
        %v9642 = vpack.c.b16 %v9518, %v9514
        %v9643 = vpack.c.b16 %v9519, %v9515
        %v9644 = vpack.c.b16 %v9520, %v9516
        %v9645 = vpack.c.b16 %v9525, %v9521
        %v9646 = vpack.c.b16 %v9526, %v9522
        %v9647 = vpack.c.b16 %v9527, %v9523
        %v9648 = vpack.c.b16 %v9528, %v9524
        %v9649 = vpack.c.b16 %v9533, %v9529
        %v9650 = vpack.c.b16 %v9534, %v9530
        %v9651 = vpack.c.b16 %v9535, %v9531
        %v9652 = vpack.c.b16 %v9536, %v9532
        %v9653 = vpack.c.b16 %v9541, %v9537
        %v9654 = vpack.c.b16 %v9542, %v9538
        %v9655 = vpack.c.b16 %v9543, %v9539
        %v9656 = vpack.c.b16 %v9544, %v9540
        %v9657 = vpack.c.b16 %v9549, %v9545
        %v9658 = vpack.c.b16 %v9550, %v9546
        %v9659 = vpack.c.b16 %v9551, %v9547
        %v9660 = vpack.c.b16 %v9552, %v9548
        %v9661 = vpack.c.b16 %v9557, %v9553
        %v9662 = vpack.c.b16 %v9558, %v9554
        %v9663 = vpack.c.b16 %v9559, %v9555
        %v9664 = vpack.c.b16 %v9560, %v9556
        %v9665 = vpack.c.b16 %v9565, %v9561
        %v9666 = vpack.c.b16 %v9566, %v9562
        %v9667 = vpack.c.b16 %v9567, %v9563
        %v9668 = vpack.c.b16 %v9568, %v9564
        %v9669 = vpack.c.b16 %v9573, %v9569
        %v9670 = vpack.c.b16 %v9574, %v9570
        %v9671 = vpack.c.b16 %v9575, %v9571
        %v9672 = vpack.c.b16 %v9576, %v9572
        %v9673 = vpack.c.b16 %v9581, %v9577
        %v9674 = vpack.c.b16 %v9582, %v9578
        %v9675 = vpack.c.b16 %v9583, %v9579
        %v9676 = vpack.c.b16 %v9584, %v9580
        %v9677 = vpack.c.b16 %v9589, %v9585
        %v9678 = vpack.c.b16 %v9590, %v9586
        %v9679 = vpack.c.b16 %v9591, %v9587
        %v9680 = vpack.c.b16 %v9592, %v9588
        %v9681 = vpack.c.b16 %v9597, %v9593
        %v9682 = vpack.c.b16 %v9598, %v9594
        %v9683 = vpack.c.b16 %v9599, %v9595
        %v9684 = vpack.c.b16 %v9600, %v9596
        %v9685 = vpack.c.b16 %v9605, %v9601
        %v9686 = vpack.c.b16 %v9606, %v9602
        %v9687 = vpack.c.b16 %v9607, %v9603
        %v9688 = vpack.c.b16 %v9608, %v9604
        %v9689 = vpack.c.b16 %v9613, %v9609
        %v9690 = vpack.c.b16 %v9614, %v9610
        %v9691 = vpack.c.b16 %v9615, %v9611
        %v9692 = vpack.c.b16 %v9616, %v9612
        %v9693 = vpack.c.b16 %v9621, %v9617
        %v9694 = vpack.c.b16 %v9622, %v9618
        %v9695 = vpack.c.b16 %v9623, %v9619
        %v9696 = vpack.c.b16 %v9624, %v9620
        %v9697 = vpack.c.b16 %v9629, %v9625
        %v9698 = vpack.c.b16 %v9630, %v9626
        %v9699 = vpack.c.b16 %v9631, %v9627
        %v9700 = vpack.c.b16 %v9632, %v9628
        %v9701 = vpack.c.b16 %v9637, %v9633
        %v9702 = vpack.c.b16 %v9638, %v9634
        %v9703 = vpack.c.b16 %v9639, %v9635
        %v9704 = vpack.c.b16 %v9640, %v9636
        %9769 = vmatprep.subr.bf16.mxu0 %v9670
        %9770 = vmatpush1.bf16.msra.mxu0 %v9669
        %9771 = vmatprep.subr.bf16.mxu0 %v9666
        %9772 = vmatpush1.bf16.msra.mxu0 %v9665
        %9773 = vmatprep.subr.bf16.mxu0 %v9662
        %9774 = vmatpush1.bf16.msra.mxu0 %v9661
        %9775 = vmatprep.subr.bf16.mxu0 %v9658
        %9776 = vmatpush1.bf16.msra.mxu0 %v9657
        %9777 = vmatprep.subr.bf16.mxu0 %v9654
        %9778 = vmatpush1.bf16.msra.mxu0 %v9653
        %9779 = vmatprep.subr.bf16.mxu0 %v9650
        %9780 = vmatpush1.bf16.msra.mxu0 %v9649
        %9781 = vmatprep.subr.bf16.mxu0 %v9646
        %9782 = vmatpush1.bf16.msra.mxu0 %v9645
        %9783 = vmatprep.subr.bf16.mxu0 %v9642
        %9784 = vmatpush1.bf16.msra.mxu0 %v9641
        %9785 = vmatprep.subr.bf16.mxu0 %v9702
        %9786 = vmatpush2.bf16.msra.mxu0 %v9701
        %9787 = vmatprep.subr.bf16.mxu0 %v9698
        %9788 = vmatpush2.bf16.msra.mxu0 %v9697
        %9789 = vmatprep.subr.bf16.mxu0 %v9694
        %9790 = vmatpush2.bf16.msra.mxu0 %v9693
        %9791 = vmatprep.subr.bf16.mxu0 %v9690
        %9792 = vmatpush2.bf16.msra.mxu0 %v9689
        %9793 = vmatprep.subr.bf16.mxu0 %v9686
        %9794 = vmatpush2.bf16.msra.mxu0 %v9685
        %9795 = vmatprep.subr.bf16.mxu0 %v9682
        %9796 = vmatpush2.bf16.msra.mxu0 %v9681
        %9797 = vmatprep.subr.bf16.mxu0 %v9678
        %9798 = vmatpush2.bf16.msra.mxu0 %v9677
        %9799 = vmatprep.subr.bf16.mxu0 %v9674
        %9800 = vmatpush2.bf16.msra.mxu0 %v9673
        %9801 = vmatprep.mubr.bf16.mxu0 %v5194
        %9802 = vmatmul.mubr.bf16.gmra.mxu0 %v5193
        %v9803 = vpop.f32.mrf.mxu0
        %v9804 = vadd.f32 %v9432, %v9803
        %v9805 = vpop.f32.mrf.mxu0
        %v9806 = vadd.f32 %v9436, %v9805
        %v9807 = vpop.f32.mrf.mxu0
        %v9808 = vadd.f32 %v9432, %v9807
        %v9809 = vpop.f32.mrf.mxu0
        %v9810 = vadd.f32 %v9436, %v9809
        %9811 = vmatprep.mubr.bf16.mxu0 %v5196
        %9812 = vmatmul.mubr.bf16.gmra.mxu0 %v5195
        %v9813 = vpop.f32.mrf.mxu0
        %v9814 = vadd.f32 %v9432, %v9813
        %v9815 = vpop.f32.mrf.mxu0
        %v9816 = vadd.f32 %v9436, %v9815
        %v9817 = vpop.f32.mrf.mxu0
        %v9818 = vadd.f32 %v9432, %v9817
        %v9819 = vpop.f32.mrf.mxu0
        %v9820 = vadd.f32 %v9436, %v9819
        %9821 = vmatprep.mubr.bf16.mxu0 %v5198
        %9822 = vmatmul.mubr.bf16.gmra.mxu0 %v5197
        %v9823 = vpop.f32.mrf.mxu0
        %v9824 = vadd.f32 %v9432, %v9823
        %v9825 = vpop.f32.mrf.mxu0
        %v9826 = vadd.f32 %v9436, %v9825
        %v9827 = vpop.f32.mrf.mxu0
        %v9828 = vadd.f32 %v9432, %v9827
        %v9829 = vpop.f32.mrf.mxu0
        %v9830 = vadd.f32 %v9436, %v9829
        %9831 = vmatprep.mubr.bf16.mxu0 %v5200
        %9832 = vmatmul.mubr.bf16.gmra.mxu0 %v5199
        %v9833 = vpop.f32.mrf.mxu0
        %v9834 = vadd.f32 %v9432, %v9833
        %v9835 = vpop.f32.mrf.mxu0
        %v9836 = vadd.f32 %v9436, %v9835
        %v9837 = vpop.f32.mrf.mxu0
        %v9838 = vadd.f32 %v9432, %v9837
        %v9839 = vpop.f32.mrf.mxu0
        %v9840 = vadd.f32 %v9436, %v9839
        %9841 = vmatprep.mubr.bf16.mxu0 %v5202
        %9842 = vmatmul.mubr.bf16.gmra.mxu0 %v5201
        %v9843 = vpop.f32.mrf.mxu0
        %v9844 = vadd.f32 %v9432, %v9843
        %v9845 = vpop.f32.mrf.mxu0
        %v9846 = vadd.f32 %v9436, %v9845
        %v9847 = vpop.f32.mrf.mxu0
        %v9848 = vadd.f32 %v9432, %v9847
        %v9849 = vpop.f32.mrf.mxu0
        %v9850 = vadd.f32 %v9436, %v9849
        %9851 = vmatprep.mubr.bf16.mxu0 %v5204
        %9852 = vmatmul.mubr.bf16.gmra.mxu0 %v5203
        %v9853 = vpop.f32.mrf.mxu0
        %v9854 = vadd.f32 %v9432, %v9853
        %v9855 = vpop.f32.mrf.mxu0
        %v9856 = vadd.f32 %v9436, %v9855
        %v9857 = vpop.f32.mrf.mxu0
        %v9858 = vadd.f32 %v9432, %v9857
        %v9859 = vpop.f32.mrf.mxu0
        %v9860 = vadd.f32 %v9436, %v9859
        %9861 = vmatprep.mubr.bf16.mxu0 %v5206
        %9862 = vmatmul.mubr.bf16.gmra.mxu0 %v5205
        %v9863 = vpop.f32.mrf.mxu0
        %v9864 = vadd.f32 %v9432, %v9863
        %v9865 = vpop.f32.mrf.mxu0
        %v9866 = vadd.f32 %v9436, %v9865
        %v9867 = vpop.f32.mrf.mxu0
        %v9868 = vadd.f32 %v9432, %v9867
        %v9869 = vpop.f32.mrf.mxu0
        %v9870 = vadd.f32 %v9436, %v9869
        %9871 = vmatprep.mubr.bf16.mxu0 %v5208
        %9872 = vmatmul.mubr.bf16.gmra.mxu0 %v5207
        %v9873 = vpop.f32.mrf.mxu0
        %v9874 = vadd.f32 %v9432, %v9873
        %v9875 = vpop.f32.mrf.mxu0
        %v9876 = vadd.f32 %v9436, %v9875
        %v9877 = vpop.f32.mrf.mxu0
        %v9878 = vadd.f32 %v9432, %v9877
        %v9879 = vpop.f32.mrf.mxu0
        %v9880 = vadd.f32 %v9436, %v9879
        %9881 = vdwg.mxu0
        %9882 = vmatprep.subr.bf16.mxu0 %v9672
        %9883 = vmatpush1.bf16.msra.mxu0 %v9671
        %9884 = vmatprep.subr.bf16.mxu0 %v9668
        %9885 = vmatpush1.bf16.msra.mxu0 %v9667
        %9886 = vmatprep.subr.bf16.mxu0 %v9664
        %9887 = vmatpush1.bf16.msra.mxu0 %v9663
        %9888 = vmatprep.subr.bf16.mxu0 %v9660
        %9889 = vmatpush1.bf16.msra.mxu0 %v9659
        %9890 = vmatprep.subr.bf16.mxu0 %v9656
        %9891 = vmatpush1.bf16.msra.mxu0 %v9655
        %9892 = vmatprep.subr.bf16.mxu0 %v9652
        %9893 = vmatpush1.bf16.msra.mxu0 %v9651
        %9894 = vmatprep.subr.bf16.mxu0 %v9648
        %9895 = vmatpush1.bf16.msra.mxu0 %v9647
        %9896 = vmatprep.subr.bf16.mxu0 %v9644
        %9897 = vmatpush1.bf16.msra.mxu0 %v9643
        %9898 = vmatprep.subr.bf16.mxu0 %v9704
        %9899 = vmatpush2.bf16.msra.mxu0 %v9703
        %9900 = vmatprep.subr.bf16.mxu0 %v9700
        %9901 = vmatpush2.bf16.msra.mxu0 %v9699
        %9902 = vmatprep.subr.bf16.mxu0 %v9696
        %9903 = vmatpush2.bf16.msra.mxu0 %v9695
        %9904 = vmatprep.subr.bf16.mxu0 %v9692
        %9905 = vmatpush2.bf16.msra.mxu0 %v9691
        %9906 = vmatprep.subr.bf16.mxu0 %v9688
        %9907 = vmatpush2.bf16.msra.mxu0 %v9687
        %9908 = vmatprep.subr.bf16.mxu0 %v9684
        %9909 = vmatpush2.bf16.msra.mxu0 %v9683
        %9910 = vmatprep.subr.bf16.mxu0 %v9680
        %9911 = vmatpush2.bf16.msra.mxu0 %v9679
        %9912 = vmatprep.subr.bf16.mxu0 %v9676
        %9913 = vmatpush2.bf16.msra.mxu0 %v9675
        %9914 = vmatprep.mubr.bf16.mxu0 %v5194
        %9915 = vmatmul.mubr.bf16.gmra.mxu0 %v5193
        %v9916 = vpop.f32.mrf.mxu0
        %v9917 = vadd.f32 %v9440, %v9916
        %v9918 = vpop.f32.mrf.mxu0
        %v9919 = vadd.f32 %v9444, %v9918
        %v9920 = vpop.f32.mrf.mxu0
        %v9921 = vadd.f32 %v9440, %v9920
        %v9922 = vpop.f32.mrf.mxu0
        %v9923 = vadd.f32 %v9444, %v9922
        %9924 = vmatprep.mubr.bf16.mxu0 %v5196
        %9925 = vmatmul.mubr.bf16.gmra.mxu0 %v5195
        %v9926 = vpop.f32.mrf.mxu0
        %v9927 = vadd.f32 %v9440, %v9926
        %v9928 = vpop.f32.mrf.mxu0
        %v9929 = vadd.f32 %v9444, %v9928
        %v9930 = vpop.f32.mrf.mxu0
        %v9931 = vadd.f32 %v9440, %v9930
        %v9932 = vpop.f32.mrf.mxu0
        %v9933 = vadd.f32 %v9444, %v9932
        %9934 = vmatprep.mubr.bf16.mxu0 %v5198
        %9935 = vmatmul.mubr.bf16.gmra.mxu0 %v5197
        %v9936 = vpop.f32.mrf.mxu0
        %v9937 = vadd.f32 %v9440, %v9936
        %v9938 = vpop.f32.mrf.mxu0
        %v9939 = vadd.f32 %v9444, %v9938
        %v9940 = vpop.f32.mrf.mxu0
        %v9941 = vadd.f32 %v9440, %v9940
        %v9942 = vpop.f32.mrf.mxu0
        %v9943 = vadd.f32 %v9444, %v9942
        %9944 = vmatprep.mubr.bf16.mxu0 %v5200
        %9945 = vmatmul.mubr.bf16.gmra.mxu0 %v5199
        %v9946 = vpop.f32.mrf.mxu0
        %v9947 = vadd.f32 %v9440, %v9946
        %v9948 = vpop.f32.mrf.mxu0
        %v9949 = vadd.f32 %v9444, %v9948
        %v9950 = vpop.f32.mrf.mxu0
        %v9951 = vadd.f32 %v9440, %v9950
        %v9952 = vpop.f32.mrf.mxu0
        %v9953 = vadd.f32 %v9444, %v9952
        %9954 = vmatprep.mubr.bf16.mxu0 %v5202
        %9955 = vmatmul.mubr.bf16.gmra.mxu0 %v5201
        %v9956 = vpop.f32.mrf.mxu0
        %v9957 = vadd.f32 %v9440, %v9956
        %v9958 = vpop.f32.mrf.mxu0
        %v9959 = vadd.f32 %v9444, %v9958
        %v9960 = vpop.f32.mrf.mxu0
        %v9961 = vadd.f32 %v9440, %v9960
        %v9962 = vpop.f32.mrf.mxu0
        %v9963 = vadd.f32 %v9444, %v9962
        %9964 = vmatprep.mubr.bf16.mxu0 %v5204
        %9965 = vmatmul.mubr.bf16.gmra.mxu0 %v5203
        %v9966 = vpop.f32.mrf.mxu0
        %v9967 = vadd.f32 %v9440, %v9966
        %v9968 = vpop.f32.mrf.mxu0
        %v9969 = vadd.f32 %v9444, %v9968
        %v9970 = vpop.f32.mrf.mxu0
        %v9971 = vadd.f32 %v9440, %v9970
        %v9972 = vpop.f32.mrf.mxu0
        %v9973 = vadd.f32 %v9444, %v9972
        %9974 = vmatprep.mubr.bf16.mxu0 %v5206
        %9975 = vmatmul.mubr.bf16.gmra.mxu0 %v5205
        %v9976 = vpop.f32.mrf.mxu0
        %v9977 = vadd.f32 %v9440, %v9976
        %v9978 = vpop.f32.mrf.mxu0
        %v9979 = vadd.f32 %v9444, %v9978
        %v9980 = vpop.f32.mrf.mxu0
        %v9981 = vadd.f32 %v9440, %v9980
        %v9982 = vpop.f32.mrf.mxu0
        %v9983 = vadd.f32 %v9444, %v9982
        %9984 = vmatprep.mubr.bf16.mxu0 %v5208
        %9985 = vmatmul.mubr.bf16.gmra.mxu0 %v5207
        %v9986 = vpop.f32.mrf.mxu0
        %v9987 = vadd.f32 %v9440, %v9986
        %v9988 = vpop.f32.mrf.mxu0
        %v9989 = vadd.f32 %v9444, %v9988
        %v9990 = vpop.f32.mrf.mxu0
        %v9991 = vadd.f32 %v9440, %v9990
        %v9992 = vpop.f32.mrf.mxu0
        %v9993 = vadd.f32 %v9444, %v9992
        %9994 = vdwg.mxu0
        %v9995 = vmax.f32 %v9804, 0.0
        %v9996 = vmax.f32 %v9806, 0.0
        %v9997 = vmax.f32 %v9917, 0.0
        %v9998 = vmax.f32 %v9919, 0.0
        %v9999 = vmax.f32 %v9808, 0.0
        %v10000 = vmax.f32 %v9810, 0.0
        %v10001 = vmax.f32 %v9921, 0.0
        %v10002 = vmax.f32 %v9923, 0.0
        %v10003 = vmax.f32 %v9814, 0.0
        %v10004 = vmax.f32 %v9816, 0.0
        %v10005 = vmax.f32 %v9927, 0.0
        %v10006 = vmax.f32 %v9929, 0.0
        %v10007 = vmax.f32 %v9818, 0.0
        %v10008 = vmax.f32 %v9820, 0.0
        %v10009 = vmax.f32 %v9931, 0.0
        %v10010 = vmax.f32 %v9933, 0.0
        %v10011 = vmax.f32 %v9824, 0.0
        %v10012 = vmax.f32 %v9826, 0.0
        %v10013 = vmax.f32 %v9937, 0.0
        %v10014 = vmax.f32 %v9939, 0.0
        %v10015 = vmax.f32 %v9828, 0.0
        %v10016 = vmax.f32 %v9830, 0.0
        %v10017 = vmax.f32 %v9941, 0.0
        %v10018 = vmax.f32 %v9943, 0.0
        %v10019 = vmax.f32 %v9834, 0.0
        %v10020 = vmax.f32 %v9836, 0.0
        %v10021 = vmax.f32 %v9947, 0.0
        %v10022 = vmax.f32 %v9949, 0.0
        %v10023 = vmax.f32 %v9838, 0.0
        %v10024 = vmax.f32 %v9840, 0.0
        %v10025 = vmax.f32 %v9951, 0.0
        %v10026 = vmax.f32 %v9953, 0.0
        %v10027 = vmax.f32 %v9844, 0.0
        %v10028 = vmax.f32 %v9846, 0.0
        %v10029 = vmax.f32 %v9957, 0.0
        %v10030 = vmax.f32 %v9959, 0.0
        %v10031 = vmax.f32 %v9848, 0.0
        %v10032 = vmax.f32 %v9850, 0.0
        %v10033 = vmax.f32 %v9961, 0.0
        %v10034 = vmax.f32 %v9963, 0.0
        %v10035 = vmax.f32 %v9854, 0.0
        %v10036 = vmax.f32 %v9856, 0.0
        %v10037 = vmax.f32 %v9967, 0.0
        %v10038 = vmax.f32 %v9969, 0.0
        %v10039 = vmax.f32 %v9858, 0.0
        %v10040 = vmax.f32 %v9860, 0.0
        %v10041 = vmax.f32 %v9971, 0.0
        %v10042 = vmax.f32 %v9973, 0.0
        %v10043 = vmax.f32 %v9864, 0.0
        %v10044 = vmax.f32 %v9866, 0.0
        %v10045 = vmax.f32 %v9977, 0.0
        %v10046 = vmax.f32 %v9979, 0.0
        %v10047 = vmax.f32 %v9868, 0.0
        %v10048 = vmax.f32 %v9870, 0.0
        %v10049 = vmax.f32 %v9981, 0.0
        %v10050 = vmax.f32 %v9983, 0.0
        %v10051 = vmax.f32 %v9874, 0.0
        %v10052 = vmax.f32 %v9876, 0.0
        %v10053 = vmax.f32 %v9987, 0.0
        %v10054 = vmax.f32 %v9989, 0.0
        %v10055 = vmax.f32 %v9878, 0.0
        %v10056 = vmax.f32 %v9880, 0.0
        %v10057 = vmax.f32 %v9991, 0.0
        %v10058 = vmax.f32 %v9993, 0.0
        %v10059 = vpack.c.bf16 %v9999, %v9995
        %v10060 = vpack.c.bf16 %v10000, %v9996
        %v10061 = vpack.c.bf16 %v10001, %v9997
        %v10062 = vpack.c.bf16 %v10002, %v9998
        %v10063 = vpack.c.bf16 %v10007, %v10003
        %v10064 = vpack.c.bf16 %v10008, %v10004
        %v10065 = vpack.c.bf16 %v10009, %v10005
        %v10066 = vpack.c.bf16 %v10010, %v10006
        %v10067 = vpack.c.bf16 %v10015, %v10011
        %v10068 = vpack.c.bf16 %v10016, %v10012
        %v10069 = vpack.c.bf16 %v10017, %v10013
        %v10070 = vpack.c.bf16 %v10018, %v10014
        %v10071 = vpack.c.bf16 %v10023, %v10019
        %v10072 = vpack.c.bf16 %v10024, %v10020
        %v10073 = vpack.c.bf16 %v10025, %v10021
        %v10074 = vpack.c.bf16 %v10026, %v10022
        %v10075 = vpack.c.bf16 %v10031, %v10027
        %v10076 = vpack.c.bf16 %v10032, %v10028
        %v10077 = vpack.c.bf16 %v10033, %v10029
        %v10078 = vpack.c.bf16 %v10034, %v10030
        %v10079 = vpack.c.bf16 %v10039, %v10035
        %v10080 = vpack.c.bf16 %v10040, %v10036
        %v10081 = vpack.c.bf16 %v10041, %v10037
        %v10082 = vpack.c.bf16 %v10042, %v10038
        %v10083 = vpack.c.bf16 %v10047, %v10043
        %v10084 = vpack.c.bf16 %v10048, %v10044
        %v10085 = vpack.c.bf16 %v10049, %v10045
        %v10086 = vpack.c.bf16 %v10050, %v10046
        %v10087 = vpack.c.bf16 %v10055, %v10051
        %v10088 = vpack.c.bf16 %v10056, %v10052
        %v10089 = vpack.c.bf16 %v10057, %v10053
        %v10090 = vpack.c.bf16 %v10058, %v10054
        %v10091 = vld [vmem:[%s735 + $0x600] sm:$0xff]
        %v10092 = vld [vmem:[%s735 + $0x608] sm:$0xff]
        %v10093 = vld [vmem:[%s735 + $0x610] sm:$0xff]
        %v10094 = vld [vmem:[%s735 + $0x618] sm:$0xff]
        %v10095 = vld [vmem:[%s735 + $0x620] sm:$0xff]
        %v10096 = vld [vmem:[%s735 + $0x628] sm:$0xff]
        %v10097 = vld [vmem:[%s735 + $0x630] sm:$0xff]
        %v10098 = vld [vmem:[%s735 + $0x638] sm:$0xff]
        %v10099 = vld [vmem:[%s735 + $0x640] sm:$0xff]
        %v10100 = vld [vmem:[%s735 + $0x648] sm:$0xff]
        %v10101 = vld [vmem:[%s735 + $0x650] sm:$0xff]
        %v10102 = vld [vmem:[%s735 + $0x658] sm:$0xff]
        %v10103 = vld [vmem:[%s735 + $0x660] sm:$0xff]
        %v10104 = vld [vmem:[%s735 + $0x668] sm:$0xff]
        %v10105 = vld [vmem:[%s735 + $0x670] sm:$0xff]
        %v10106 = vld [vmem:[%s735 + $0x678] sm:$0xff]
        %v10107 = vld [vmem:[%s735 + $0x680] sm:$0xff]
        %v10108 = vld [vmem:[%s735 + $0x688] sm:$0xff]
        %v10109 = vld [vmem:[%s735 + $0x690] sm:$0xff]
        %v10110 = vld [vmem:[%s735 + $0x698] sm:$0xff]
        %v10111 = vld [vmem:[%s735 + $0x6a0] sm:$0xff]
        %v10112 = vld [vmem:[%s735 + $0x6a8] sm:$0xff]
        %v10113 = vld [vmem:[%s735 + $0x6b0] sm:$0xff]
        %v10114 = vld [vmem:[%s735 + $0x6b8] sm:$0xff]
        %v10115 = vld [vmem:[%s735 + $0x6c0] sm:$0xff]
        %v10116 = vld [vmem:[%s735 + $0x6c8] sm:$0xff]
        %v10117 = vld [vmem:[%s735 + $0x6d0] sm:$0xff]
        %v10118 = vld [vmem:[%s735 + $0x6d8] sm:$0xff]
        %v10119 = vld [vmem:[%s735 + $0x6e0] sm:$0xff]
        %v10120 = vld [vmem:[%s735 + $0x6e8] sm:$0xff]
        %v10121 = vld [vmem:[%s735 + $0x6f0] sm:$0xff]
        %v10122 = vld [vmem:[%s735 + $0x6f8] sm:$0xff]
        %v10123 = vld [vmem:[%s735 + $0x700] sm:$0xff]
        %v10124 = vld [vmem:[%s735 + $0x708] sm:$0xff]
        %v10125 = vld [vmem:[%s735 + $0x710] sm:$0xff]
        %v10126 = vld [vmem:[%s735 + $0x718] sm:$0xff]
        %v10127 = vld [vmem:[%s735 + $0x720] sm:$0xff]
        %v10128 = vld [vmem:[%s735 + $0x728] sm:$0xff]
        %v10129 = vld [vmem:[%s735 + $0x730] sm:$0xff]
        %v10130 = vld [vmem:[%s735 + $0x738] sm:$0xff]
        %v10131 = vld [vmem:[%s735 + $0x740] sm:$0xff]
        %v10132 = vld [vmem:[%s735 + $0x748] sm:$0xff]
        %v10133 = vld [vmem:[%s735 + $0x750] sm:$0xff]
        %v10134 = vld [vmem:[%s735 + $0x758] sm:$0xff]
        %v10135 = vld [vmem:[%s735 + $0x760] sm:$0xff]
        %v10136 = vld [vmem:[%s735 + $0x768] sm:$0xff]
        %v10137 = vld [vmem:[%s735 + $0x770] sm:$0xff]
        %v10138 = vld [vmem:[%s735 + $0x778] sm:$0xff]
        %v10139 = vld [vmem:[%s735 + $0x780] sm:$0xff]
        %v10140 = vld [vmem:[%s735 + $0x788] sm:$0xff]
        %v10141 = vld [vmem:[%s735 + $0x790] sm:$0xff]
        %v10142 = vld [vmem:[%s735 + $0x798] sm:$0xff]
        %v10143 = vld [vmem:[%s735 + $0x7a0] sm:$0xff]
        %v10144 = vld [vmem:[%s735 + $0x7a8] sm:$0xff]
        %v10145 = vld [vmem:[%s735 + $0x7b0] sm:$0xff]
        %v10146 = vld [vmem:[%s735 + $0x7b8] sm:$0xff]
        %v10147 = vld [vmem:[%s735 + $0x7c0] sm:$0xff]
        %v10148 = vld [vmem:[%s735 + $0x7c8] sm:$0xff]
        %v10149 = vld [vmem:[%s735 + $0x7d0] sm:$0xff]
        %v10150 = vld [vmem:[%s735 + $0x7d8] sm:$0xff]
        %v10151 = vld [vmem:[%s735 + $0x7e0] sm:$0xff]
        %v10152 = vld [vmem:[%s735 + $0x7e8] sm:$0xff]
        %v10153 = vld [vmem:[%s735 + $0x7f0] sm:$0xff]
        %v10154 = vld [vmem:[%s735 + $0x7f8] sm:$0xff]
        %v10219 = vunpack.c.l.b16 %v10091
        %v10220 = vunpack.c.h.b16 %v10091
        %v10221 = vunpack.c.l.b16 %v10092
        %v10222 = vunpack.c.h.b16 %v10092
        %v10223 = vunpack.c.l.b16 %v10093
        %v10224 = vunpack.c.h.b16 %v10093
        %v10225 = vunpack.c.l.b16 %v10094
        %v10226 = vunpack.c.h.b16 %v10094
        %v10227 = vunpack.c.l.b16 %v10095
        %v10228 = vunpack.c.h.b16 %v10095
        %v10229 = vunpack.c.l.b16 %v10096
        %v10230 = vunpack.c.h.b16 %v10096
        %v10231 = vunpack.c.l.b16 %v10097
        %v10232 = vunpack.c.h.b16 %v10097
        %v10233 = vunpack.c.l.b16 %v10098
        %v10234 = vunpack.c.h.b16 %v10098
        %v10235 = vunpack.c.l.b16 %v10099
        %v10236 = vunpack.c.h.b16 %v10099
        %v10237 = vunpack.c.l.b16 %v10100
        %v10238 = vunpack.c.h.b16 %v10100
        %v10239 = vunpack.c.l.b16 %v10101
        %v10240 = vunpack.c.h.b16 %v10101
        %v10241 = vunpack.c.l.b16 %v10102
        %v10242 = vunpack.c.h.b16 %v10102
        %v10243 = vunpack.c.l.b16 %v10103
        %v10244 = vunpack.c.h.b16 %v10103
        %v10245 = vunpack.c.l.b16 %v10104
        %v10246 = vunpack.c.h.b16 %v10104
        %v10247 = vunpack.c.l.b16 %v10105
        %v10248 = vunpack.c.h.b16 %v10105
        %v10249 = vunpack.c.l.b16 %v10106
        %v10250 = vunpack.c.h.b16 %v10106
        %v10251 = vunpack.c.l.b16 %v10107
        %v10252 = vunpack.c.h.b16 %v10107
        %v10253 = vunpack.c.l.b16 %v10108
        %v10254 = vunpack.c.h.b16 %v10108
        %v10255 = vunpack.c.l.b16 %v10109
        %v10256 = vunpack.c.h.b16 %v10109
        %v10257 = vunpack.c.l.b16 %v10110
        %v10258 = vunpack.c.h.b16 %v10110
        %v10259 = vunpack.c.l.b16 %v10111
        %v10260 = vunpack.c.h.b16 %v10111
        %v10261 = vunpack.c.l.b16 %v10112
        %v10262 = vunpack.c.h.b16 %v10112
        %v10263 = vunpack.c.l.b16 %v10113
        %v10264 = vunpack.c.h.b16 %v10113
        %v10265 = vunpack.c.l.b16 %v10114
        %v10266 = vunpack.c.h.b16 %v10114
        %v10267 = vunpack.c.l.b16 %v10115
        %v10268 = vunpack.c.h.b16 %v10115
        %v10269 = vunpack.c.l.b16 %v10116
        %v10270 = vunpack.c.h.b16 %v10116
        %v10271 = vunpack.c.l.b16 %v10117
        %v10272 = vunpack.c.h.b16 %v10117
        %v10273 = vunpack.c.l.b16 %v10118
        %v10274 = vunpack.c.h.b16 %v10118
        %v10275 = vunpack.c.l.b16 %v10119
        %v10276 = vunpack.c.h.b16 %v10119
        %v10277 = vunpack.c.l.b16 %v10120
        %v10278 = vunpack.c.h.b16 %v10120
        %v10279 = vunpack.c.l.b16 %v10121
        %v10280 = vunpack.c.h.b16 %v10121
        %v10281 = vunpack.c.l.b16 %v10122
        %v10282 = vunpack.c.h.b16 %v10122
        %v10283 = vunpack.c.l.b16 %v10123
        %v10284 = vunpack.c.h.b16 %v10123
        %v10285 = vunpack.c.l.b16 %v10124
        %v10286 = vunpack.c.h.b16 %v10124
        %v10287 = vunpack.c.l.b16 %v10125
        %v10288 = vunpack.c.h.b16 %v10125
        %v10289 = vunpack.c.l.b16 %v10126
        %v10290 = vunpack.c.h.b16 %v10126
        %v10291 = vunpack.c.l.b16 %v10127
        %v10292 = vunpack.c.h.b16 %v10127
        %v10293 = vunpack.c.l.b16 %v10128
        %v10294 = vunpack.c.h.b16 %v10128
        %v10295 = vunpack.c.l.b16 %v10129
        %v10296 = vunpack.c.h.b16 %v10129
        %v10297 = vunpack.c.l.b16 %v10130
        %v10298 = vunpack.c.h.b16 %v10130
        %v10299 = vunpack.c.l.b16 %v10131
        %v10300 = vunpack.c.h.b16 %v10131
        %v10301 = vunpack.c.l.b16 %v10132
        %v10302 = vunpack.c.h.b16 %v10132
        %v10303 = vunpack.c.l.b16 %v10133
        %v10304 = vunpack.c.h.b16 %v10133
        %v10305 = vunpack.c.l.b16 %v10134
        %v10306 = vunpack.c.h.b16 %v10134
        %v10307 = vunpack.c.l.b16 %v10135
        %v10308 = vunpack.c.h.b16 %v10135
        %v10309 = vunpack.c.l.b16 %v10136
        %v10310 = vunpack.c.h.b16 %v10136
        %v10311 = vunpack.c.l.b16 %v10137
        %v10312 = vunpack.c.h.b16 %v10137
        %v10313 = vunpack.c.l.b16 %v10138
        %v10314 = vunpack.c.h.b16 %v10138
        %v10315 = vunpack.c.l.b16 %v10139
        %v10316 = vunpack.c.h.b16 %v10139
        %v10317 = vunpack.c.l.b16 %v10140
        %v10318 = vunpack.c.h.b16 %v10140
        %v10319 = vunpack.c.l.b16 %v10141
        %v10320 = vunpack.c.h.b16 %v10141
        %v10321 = vunpack.c.l.b16 %v10142
        %v10322 = vunpack.c.h.b16 %v10142
        %v10323 = vunpack.c.l.b16 %v10143
        %v10324 = vunpack.c.h.b16 %v10143
        %v10325 = vunpack.c.l.b16 %v10144
        %v10326 = vunpack.c.h.b16 %v10144
        %v10327 = vunpack.c.l.b16 %v10145
        %v10328 = vunpack.c.h.b16 %v10145
        %v10329 = vunpack.c.l.b16 %v10146
        %v10330 = vunpack.c.h.b16 %v10146
        %v10331 = vunpack.c.l.b16 %v10147
        %v10332 = vunpack.c.h.b16 %v10147
        %v10333 = vunpack.c.l.b16 %v10148
        %v10334 = vunpack.c.h.b16 %v10148
        %v10335 = vunpack.c.l.b16 %v10149
        %v10336 = vunpack.c.h.b16 %v10149
        %v10337 = vunpack.c.l.b16 %v10150
        %v10338 = vunpack.c.h.b16 %v10150
        %v10339 = vunpack.c.l.b16 %v10151
        %v10340 = vunpack.c.h.b16 %v10151
        %v10341 = vunpack.c.l.b16 %v10152
        %v10342 = vunpack.c.h.b16 %v10152
        %v10343 = vunpack.c.l.b16 %v10153
        %v10344 = vunpack.c.h.b16 %v10153
        %v10345 = vunpack.c.l.b16 %v10154
        %v10346 = vunpack.c.h.b16 %v10154
        %v10347 = vpack.c.b16 %v10221, %v10219
        %v10348 = vpack.c.b16 %v10222, %v10220
        %v10349 = vpack.c.b16 %v10225, %v10223
        %v10350 = vpack.c.b16 %v10226, %v10224
        %v10351 = vpack.c.b16 %v10229, %v10227
        %v10352 = vpack.c.b16 %v10230, %v10228
        %v10353 = vpack.c.b16 %v10233, %v10231
        %v10354 = vpack.c.b16 %v10234, %v10232
        %v10355 = vpack.c.b16 %v10237, %v10235
        %v10356 = vpack.c.b16 %v10238, %v10236
        %v10357 = vpack.c.b16 %v10241, %v10239
        %v10358 = vpack.c.b16 %v10242, %v10240
        %v10359 = vpack.c.b16 %v10245, %v10243
        %v10360 = vpack.c.b16 %v10246, %v10244
        %v10361 = vpack.c.b16 %v10249, %v10247
        %v10362 = vpack.c.b16 %v10250, %v10248
        %v10363 = vpack.c.b16 %v10253, %v10251
        %v10364 = vpack.c.b16 %v10254, %v10252
        %v10365 = vpack.c.b16 %v10257, %v10255
        %v10366 = vpack.c.b16 %v10258, %v10256
        %v10367 = vpack.c.b16 %v10261, %v10259
        %v10368 = vpack.c.b16 %v10262, %v10260
        %v10369 = vpack.c.b16 %v10265, %v10263
        %v10370 = vpack.c.b16 %v10266, %v10264
        %v10371 = vpack.c.b16 %v10269, %v10267
        %v10372 = vpack.c.b16 %v10270, %v10268
        %v10373 = vpack.c.b16 %v10273, %v10271
        %v10374 = vpack.c.b16 %v10274, %v10272
        %v10375 = vpack.c.b16 %v10277, %v10275
        %v10376 = vpack.c.b16 %v10278, %v10276
        %v10377 = vpack.c.b16 %v10281, %v10279
        %v10378 = vpack.c.b16 %v10282, %v10280
        %v10379 = vpack.c.b16 %v10285, %v10283
        %v10380 = vpack.c.b16 %v10286, %v10284
        %v10381 = vpack.c.b16 %v10289, %v10287
        %v10382 = vpack.c.b16 %v10290, %v10288
        %v10383 = vpack.c.b16 %v10293, %v10291
        %v10384 = vpack.c.b16 %v10294, %v10292
        %v10385 = vpack.c.b16 %v10297, %v10295
        %v10386 = vpack.c.b16 %v10298, %v10296
        %v10387 = vpack.c.b16 %v10301, %v10299
        %v10388 = vpack.c.b16 %v10302, %v10300
        %v10389 = vpack.c.b16 %v10305, %v10303
        %v10390 = vpack.c.b16 %v10306, %v10304
        %v10391 = vpack.c.b16 %v10309, %v10307
        %v10392 = vpack.c.b16 %v10310, %v10308
        %v10393 = vpack.c.b16 %v10313, %v10311
        %v10394 = vpack.c.b16 %v10314, %v10312
        %v10395 = vpack.c.b16 %v10317, %v10315
        %v10396 = vpack.c.b16 %v10318, %v10316
        %v10397 = vpack.c.b16 %v10321, %v10319
        %v10398 = vpack.c.b16 %v10322, %v10320
        %v10399 = vpack.c.b16 %v10325, %v10323
        %v10400 = vpack.c.b16 %v10326, %v10324
        %v10401 = vpack.c.b16 %v10329, %v10327
        %v10402 = vpack.c.b16 %v10330, %v10328
        %v10403 = vpack.c.b16 %v10333, %v10331
        %v10404 = vpack.c.b16 %v10334, %v10332
        %v10405 = vpack.c.b16 %v10337, %v10335
        %v10406 = vpack.c.b16 %v10338, %v10336
        %v10407 = vpack.c.b16 %v10341, %v10339
        %v10408 = vpack.c.b16 %v10342, %v10340
        %v10409 = vpack.c.b16 %v10345, %v10343
        %v10410 = vpack.c.b16 %v10346, %v10344
        %10475 = vmatprep.subr.bf16.mxu0 %v10362
        %10476 = vmatpush1.bf16.msra.mxu0 %v10361
        %10477 = vmatprep.subr.bf16.mxu0 %v10360
        %10478 = vmatpush1.bf16.msra.mxu0 %v10359
        %10479 = vmatprep.subr.bf16.mxu0 %v10358
        %10480 = vmatpush1.bf16.msra.mxu0 %v10357
        %10481 = vmatprep.subr.bf16.mxu0 %v10356
        %10482 = vmatpush1.bf16.msra.mxu0 %v10355
        %10483 = vmatprep.subr.bf16.mxu0 %v10354
        %10484 = vmatpush1.bf16.msra.mxu0 %v10353
        %10485 = vmatprep.subr.bf16.mxu0 %v10352
        %10486 = vmatpush1.bf16.msra.mxu0 %v10351
        %10487 = vmatprep.subr.bf16.mxu0 %v10350
        %10488 = vmatpush1.bf16.msra.mxu0 %v10349
        %10489 = vmatprep.subr.bf16.mxu0 %v10348
        %10490 = vmatpush1.bf16.msra.mxu0 %v10347
        %10491 = vmatprep.subr.bf16.mxu0 %v10378
        %10492 = vmatpush2.bf16.msra.mxu0 %v10377
        %10493 = vmatprep.subr.bf16.mxu0 %v10376
        %10494 = vmatpush2.bf16.msra.mxu0 %v10375
        %10495 = vmatprep.subr.bf16.mxu0 %v10374
        %10496 = vmatpush2.bf16.msra.mxu0 %v10373
        %10497 = vmatprep.subr.bf16.mxu0 %v10372
        %10498 = vmatpush2.bf16.msra.mxu0 %v10371
        %10499 = vmatprep.subr.bf16.mxu0 %v10370
        %10500 = vmatpush2.bf16.msra.mxu0 %v10369
        %10501 = vmatprep.subr.bf16.mxu0 %v10368
        %10502 = vmatpush2.bf16.msra.mxu0 %v10367
        %10503 = vmatprep.subr.bf16.mxu0 %v10366
        %10504 = vmatpush2.bf16.msra.mxu0 %v10365
        %10505 = vmatprep.subr.bf16.mxu0 %v10364
        %10506 = vmatpush2.bf16.msra.mxu0 %v10363
        %10507 = vmatprep.mubr.bf16.mxu0 %v10060
        %10508 = vmatmul.mubr.bf16.gmra.mxu0 %v10059
        %v10509 = vpop.f32.mrf.mxu0
        %v10510 = vadd.f32 0.0, %v10509
        %v10511 = vpop.f32.mrf.mxu0
        %v10512 = vadd.f32 0.0, %v10511
        %v10513 = vpop.f32.mrf.mxu0
        %v10514 = vadd.f32 0.0, %v10513
        %v10515 = vpop.f32.mrf.mxu0
        %v10516 = vadd.f32 0.0, %v10515
        %10517 = vmatprep.mubr.bf16.mxu0 %v10064
        %10518 = vmatmul.mubr.bf16.gmra.mxu0 %v10063
        %v10519 = vpop.f32.mrf.mxu0
        %v10520 = vadd.f32 0.0, %v10519
        %v10521 = vpop.f32.mrf.mxu0
        %v10522 = vadd.f32 0.0, %v10521
        %v10523 = vpop.f32.mrf.mxu0
        %v10524 = vadd.f32 0.0, %v10523
        %v10525 = vpop.f32.mrf.mxu0
        %v10526 = vadd.f32 0.0, %v10525
        %10527 = vmatprep.mubr.bf16.mxu0 %v10068
        %10528 = vmatmul.mubr.bf16.gmra.mxu0 %v10067
        %v10529 = vpop.f32.mrf.mxu0
        %v10530 = vadd.f32 0.0, %v10529
        %v10531 = vpop.f32.mrf.mxu0
        %v10532 = vadd.f32 0.0, %v10531
        %v10533 = vpop.f32.mrf.mxu0
        %v10534 = vadd.f32 0.0, %v10533
        %v10535 = vpop.f32.mrf.mxu0
        %v10536 = vadd.f32 0.0, %v10535
        %10537 = vmatprep.mubr.bf16.mxu0 %v10072
        %10538 = vmatmul.mubr.bf16.gmra.mxu0 %v10071
        %v10539 = vpop.f32.mrf.mxu0
        %v10540 = vadd.f32 0.0, %v10539
        %v10541 = vpop.f32.mrf.mxu0
        %v10542 = vadd.f32 0.0, %v10541
        %v10543 = vpop.f32.mrf.mxu0
        %v10544 = vadd.f32 0.0, %v10543
        %v10545 = vpop.f32.mrf.mxu0
        %v10546 = vadd.f32 0.0, %v10545
        %10547 = vmatprep.mubr.bf16.mxu0 %v10076
        %10548 = vmatmul.mubr.bf16.gmra.mxu0 %v10075
        %v10549 = vpop.f32.mrf.mxu0
        %v10550 = vadd.f32 0.0, %v10549
        %v10551 = vpop.f32.mrf.mxu0
        %v10552 = vadd.f32 0.0, %v10551
        %v10553 = vpop.f32.mrf.mxu0
        %v10554 = vadd.f32 0.0, %v10553
        %v10555 = vpop.f32.mrf.mxu0
        %v10556 = vadd.f32 0.0, %v10555
        %10557 = vmatprep.mubr.bf16.mxu0 %v10080
        %10558 = vmatmul.mubr.bf16.gmra.mxu0 %v10079
        %v10559 = vpop.f32.mrf.mxu0
        %v10560 = vadd.f32 0.0, %v10559
        %v10561 = vpop.f32.mrf.mxu0
        %v10562 = vadd.f32 0.0, %v10561
        %v10563 = vpop.f32.mrf.mxu0
        %v10564 = vadd.f32 0.0, %v10563
        %v10565 = vpop.f32.mrf.mxu0
        %v10566 = vadd.f32 0.0, %v10565
        %10567 = vmatprep.mubr.bf16.mxu0 %v10084
        %10568 = vmatmul.mubr.bf16.gmra.mxu0 %v10083
        %v10569 = vpop.f32.mrf.mxu0
        %v10570 = vadd.f32 0.0, %v10569
        %v10571 = vpop.f32.mrf.mxu0
        %v10572 = vadd.f32 0.0, %v10571
        %v10573 = vpop.f32.mrf.mxu0
        %v10574 = vadd.f32 0.0, %v10573
        %v10575 = vpop.f32.mrf.mxu0
        %v10576 = vadd.f32 0.0, %v10575
        %10577 = vmatprep.mubr.bf16.mxu0 %v10088
        %10578 = vmatmul.mubr.bf16.gmra.mxu0 %v10087
        %v10579 = vpop.f32.mrf.mxu0
        %v10580 = vadd.f32 0.0, %v10579
        %v10581 = vpop.f32.mrf.mxu0
        %v10582 = vadd.f32 0.0, %v10581
        %v10583 = vpop.f32.mrf.mxu0
        %v10584 = vadd.f32 0.0, %v10583
        %v10585 = vpop.f32.mrf.mxu0
        %v10586 = vadd.f32 0.0, %v10585
        %10587 = vdwg.mxu0
        %10588 = vmatprep.subr.bf16.mxu0 %v10394
        %10589 = vmatpush1.bf16.msra.mxu0 %v10393
        %10590 = vmatprep.subr.bf16.mxu0 %v10392
        %10591 = vmatpush1.bf16.msra.mxu0 %v10391
        %10592 = vmatprep.subr.bf16.mxu0 %v10390
        %10593 = vmatpush1.bf16.msra.mxu0 %v10389
        %10594 = vmatprep.subr.bf16.mxu0 %v10388
        %10595 = vmatpush1.bf16.msra.mxu0 %v10387
        %10596 = vmatprep.subr.bf16.mxu0 %v10386
        %10597 = vmatpush1.bf16.msra.mxu0 %v10385
        %10598 = vmatprep.subr.bf16.mxu0 %v10384
        %10599 = vmatpush1.bf16.msra.mxu0 %v10383
        %10600 = vmatprep.subr.bf16.mxu0 %v10382
        %10601 = vmatpush1.bf16.msra.mxu0 %v10381
        %10602 = vmatprep.subr.bf16.mxu0 %v10380
        %10603 = vmatpush1.bf16.msra.mxu0 %v10379
        %10604 = vmatprep.subr.bf16.mxu0 %v10410
        %10605 = vmatpush2.bf16.msra.mxu0 %v10409
        %10606 = vmatprep.subr.bf16.mxu0 %v10408
        %10607 = vmatpush2.bf16.msra.mxu0 %v10407
        %10608 = vmatprep.subr.bf16.mxu0 %v10406
        %10609 = vmatpush2.bf16.msra.mxu0 %v10405
        %10610 = vmatprep.subr.bf16.mxu0 %v10404
        %10611 = vmatpush2.bf16.msra.mxu0 %v10403
        %10612 = vmatprep.subr.bf16.mxu0 %v10402
        %10613 = vmatpush2.bf16.msra.mxu0 %v10401
        %10614 = vmatprep.subr.bf16.mxu0 %v10400
        %10615 = vmatpush2.bf16.msra.mxu0 %v10399
        %10616 = vmatprep.subr.bf16.mxu0 %v10398
        %10617 = vmatpush2.bf16.msra.mxu0 %v10397
        %10618 = vmatprep.subr.bf16.mxu0 %v10396
        %10619 = vmatpush2.bf16.msra.mxu0 %v10395
        %10620 = vmatprep.mubr.bf16.mxu0 %v10062
        %10621 = vmatmul.mubr.bf16.gmra.mxu0 %v10061
        %v10622 = vpop.f32.mrf.mxu0
        %v10623 = vadd.f32 %v10510, %v10622
        %v10624 = vpop.f32.mrf.mxu0
        %v10625 = vadd.f32 %v10512, %v10624
        %v10626 = vpop.f32.mrf.mxu0
        %v10627 = vadd.f32 %v10514, %v10626
        %v10628 = vpop.f32.mrf.mxu0
        %v10629 = vadd.f32 %v10516, %v10628
        %10630 = vmatprep.mubr.bf16.mxu0 %v10066
        %10631 = vmatmul.mubr.bf16.gmra.mxu0 %v10065
        %v10632 = vpop.f32.mrf.mxu0
        %v10633 = vadd.f32 %v10520, %v10632
        %v10634 = vpop.f32.mrf.mxu0
        %v10635 = vadd.f32 %v10522, %v10634
        %v10636 = vpop.f32.mrf.mxu0
        %v10637 = vadd.f32 %v10524, %v10636
        %v10638 = vpop.f32.mrf.mxu0
        %v10639 = vadd.f32 %v10526, %v10638
        %10640 = vmatprep.mubr.bf16.mxu0 %v10070
        %10641 = vmatmul.mubr.bf16.gmra.mxu0 %v10069
        %v10642 = vpop.f32.mrf.mxu0
        %v10643 = vadd.f32 %v10530, %v10642
        %v10644 = vpop.f32.mrf.mxu0
        %v10645 = vadd.f32 %v10532, %v10644
        %v10646 = vpop.f32.mrf.mxu0
        %v10647 = vadd.f32 %v10534, %v10646
        %v10648 = vpop.f32.mrf.mxu0
        %v10649 = vadd.f32 %v10536, %v10648
        %10650 = vmatprep.mubr.bf16.mxu0 %v10074
        %10651 = vmatmul.mubr.bf16.gmra.mxu0 %v10073
        %v10652 = vpop.f32.mrf.mxu0
        %v10653 = vadd.f32 %v10540, %v10652
        %v10654 = vpop.f32.mrf.mxu0
        %v10655 = vadd.f32 %v10542, %v10654
        %v10656 = vpop.f32.mrf.mxu0
        %v10657 = vadd.f32 %v10544, %v10656
        %v10658 = vpop.f32.mrf.mxu0
        %v10659 = vadd.f32 %v10546, %v10658
        %10660 = vmatprep.mubr.bf16.mxu0 %v10078
        %10661 = vmatmul.mubr.bf16.gmra.mxu0 %v10077
        %v10662 = vpop.f32.mrf.mxu0
        %v10663 = vadd.f32 %v10550, %v10662
        %v10664 = vpop.f32.mrf.mxu0
        %v10665 = vadd.f32 %v10552, %v10664
        %v10666 = vpop.f32.mrf.mxu0
        %v10667 = vadd.f32 %v10554, %v10666
        %v10668 = vpop.f32.mrf.mxu0
        %v10669 = vadd.f32 %v10556, %v10668
        %10670 = vmatprep.mubr.bf16.mxu0 %v10082
        %10671 = vmatmul.mubr.bf16.gmra.mxu0 %v10081
        %v10672 = vpop.f32.mrf.mxu0
        %v10673 = vadd.f32 %v10560, %v10672
        %v10674 = vpop.f32.mrf.mxu0
        %v10675 = vadd.f32 %v10562, %v10674
        %v10676 = vpop.f32.mrf.mxu0
        %v10677 = vadd.f32 %v10564, %v10676
        %v10678 = vpop.f32.mrf.mxu0
        %v10679 = vadd.f32 %v10566, %v10678
        %10680 = vmatprep.mubr.bf16.mxu0 %v10086
        %10681 = vmatmul.mubr.bf16.gmra.mxu0 %v10085
        %v10682 = vpop.f32.mrf.mxu0
        %v10683 = vadd.f32 %v10570, %v10682
        %v10684 = vpop.f32.mrf.mxu0
        %v10685 = vadd.f32 %v10572, %v10684
        %v10686 = vpop.f32.mrf.mxu0
        %v10687 = vadd.f32 %v10574, %v10686
        %v10688 = vpop.f32.mrf.mxu0
        %v10689 = vadd.f32 %v10576, %v10688
        %10690 = vmatprep.mubr.bf16.mxu0 %v10090
        %10691 = vmatmul.mubr.bf16.gmra.mxu0 %v10089
        %v10692 = vpop.f32.mrf.mxu0
        %v10693 = vadd.f32 %v10580, %v10692
        %v10694 = vpop.f32.mrf.mxu0
        %v10695 = vadd.f32 %v10582, %v10694
        %v10696 = vpop.f32.mrf.mxu0
        %v10697 = vadd.f32 %v10584, %v10696
        %v10698 = vpop.f32.mrf.mxu0
        %v10699 = vadd.f32 %v10586, %v10698
        %10700 = vdwg.mxu0
        %v10701 = vadd.f32 %v9331, %v10623
        %v10702 = vadd.f32 %v9332, %v10625
        %v10703 = vadd.f32 %v9333, %v10627
        %v10704 = vadd.f32 %v9334, %v10629
        %v10705 = vadd.f32 %v9335, %v10633
        %v10706 = vadd.f32 %v9336, %v10635
        %v10707 = vadd.f32 %v9337, %v10637
        %v10708 = vadd.f32 %v9338, %v10639
        %v10709 = vadd.f32 %v9339, %v10643
        %v10710 = vadd.f32 %v9340, %v10645
        %v10711 = vadd.f32 %v9341, %v10647
        %v10712 = vadd.f32 %v9342, %v10649
        %v10713 = vadd.f32 %v9343, %v10653
        %v10714 = vadd.f32 %v9344, %v10655
        %v10715 = vadd.f32 %v9345, %v10657
        %v10716 = vadd.f32 %v9346, %v10659
        %v10717 = vadd.f32 %v9347, %v10663
        %v10718 = vadd.f32 %v9348, %v10665
        %v10719 = vadd.f32 %v9349, %v10667
        %v10720 = vadd.f32 %v9350, %v10669
        %v10721 = vadd.f32 %v9351, %v10673
        %v10722 = vadd.f32 %v9352, %v10675
        %v10723 = vadd.f32 %v9353, %v10677
        %v10724 = vadd.f32 %v9354, %v10679
        %v10725 = vadd.f32 %v9355, %v10683
        %v10726 = vadd.f32 %v9356, %v10685
        %v10727 = vadd.f32 %v9357, %v10687
        %v10728 = vadd.f32 %v9358, %v10689
        %v10729 = vadd.f32 %v9359, %v10693
        %v10730 = vadd.f32 %v9360, %v10695
        %v10731 = vadd.f32 %v9361, %v10697
        %v10732 = vadd.f32 %v9362, %v10699
        %v10733 = vld [vmem:[%s753] sm:$0x3]
        %v10734 = vld [vmem:[%s762] sm:$0x3]
        %v10735 = vadd.f32 %v10701, %v10702
        %10736 = vadd.xlane.f32.xlu0 %v10735
        %v10737 = vpop.xlane.xlu0 %10736
        %v10738 = vadd.f32 %v10703, %v10704
        %10739 = vadd.xlane.f32.xlu0 %v10738
        %v10740 = vpop.xlane.xlu0 %10739
        %v10741 = vadd.f32 %v10705, %v10706
        %10742 = vadd.xlane.f32.xlu0 %v10741
        %v10743 = vpop.xlane.xlu0 %10742
        %v10744 = vadd.f32 %v10707, %v10708
        %10745 = vadd.xlane.f32.xlu0 %v10744
        %v10746 = vpop.xlane.xlu0 %10745
        %v10747 = vadd.f32 %v10709, %v10710
        %10748 = vadd.xlane.f32.xlu0 %v10747
        %v10749 = vpop.xlane.xlu0 %10748
        %v10750 = vadd.f32 %v10711, %v10712
        %10751 = vadd.xlane.f32.xlu0 %v10750
        %v10752 = vpop.xlane.xlu0 %10751
        %v10753 = vadd.f32 %v10713, %v10714
        %10754 = vadd.xlane.f32.xlu0 %v10753
        %v10755 = vpop.xlane.xlu0 %10754
        %v10756 = vadd.f32 %v10715, %v10716
        %10757 = vadd.xlane.f32.xlu0 %v10756
        %v10758 = vpop.xlane.xlu0 %10757
        %v10759 = vadd.f32 %v10717, %v10718
        %10760 = vadd.xlane.f32.xlu0 %v10759
        %v10761 = vpop.xlane.xlu0 %10760
        %v10762 = vadd.f32 %v10719, %v10720
        %10763 = vadd.xlane.f32.xlu0 %v10762
        %v10764 = vpop.xlane.xlu0 %10763
        %v10765 = vadd.f32 %v10721, %v10722
        %10766 = vadd.xlane.f32.xlu0 %v10765
        %v10767 = vpop.xlane.xlu0 %10766
        %v10768 = vadd.f32 %v10723, %v10724
        %10769 = vadd.xlane.f32.xlu0 %v10768
        %v10770 = vpop.xlane.xlu0 %10769
        %v10771 = vadd.f32 %v10725, %v10726
        %10772 = vadd.xlane.f32.xlu0 %v10771
        %v10773 = vpop.xlane.xlu0 %10772
        %v10774 = vadd.f32 %v10727, %v10728
        %10775 = vadd.xlane.f32.xlu0 %v10774
        %v10776 = vpop.xlane.xlu0 %10775
        %v10777 = vadd.f32 %v10729, %v10730
        %10778 = vadd.xlane.f32.xlu0 %v10777
        %v10779 = vpop.xlane.xlu0 %10778
        %v10780 = vadd.f32 %v10731, %v10732
        %10781 = vadd.xlane.f32.xlu0 %v10780
        %v10782 = vpop.xlane.xlu0 %10781
        %v10783 = vmul.f32 %v10737, %v4898
        %v10784 = vmul.f32 %v10740, %v4898
        %v10785 = vmul.f32 %v10743, %v4898
        %v10786 = vmul.f32 %v10746, %v4898
        %v10787 = vmul.f32 %v10749, %v4898
        %v10788 = vmul.f32 %v10752, %v4898
        %v10789 = vmul.f32 %v10755, %v4898
        %v10790 = vmul.f32 %v10758, %v4898
        %v10791 = vmul.f32 %v10761, %v4898
        %v10792 = vmul.f32 %v10764, %v4898
        %v10793 = vmul.f32 %v10767, %v4898
        %v10794 = vmul.f32 %v10770, %v4898
        %v10795 = vmul.f32 %v10773, %v4898
        %v10796 = vmul.f32 %v10776, %v4898
        %v10797 = vmul.f32 %v10779, %v4898
        %v10798 = vmul.f32 %v10782, %v4898
        %v10799 = vsub.f32 %v10701, %v10783
        %v10800 = vsub.f32 %v10702, %v10783
        %v10801 = vsub.f32 %v10703, %v10784
        %v10802 = vsub.f32 %v10704, %v10784
        %v10803 = vsub.f32 %v10705, %v10785
        %v10804 = vsub.f32 %v10706, %v10785
        %v10805 = vsub.f32 %v10707, %v10786
        %v10806 = vsub.f32 %v10708, %v10786
        %v10807 = vsub.f32 %v10709, %v10787
        %v10808 = vsub.f32 %v10710, %v10787
        %v10809 = vsub.f32 %v10711, %v10788
        %v10810 = vsub.f32 %v10712, %v10788
        %v10811 = vsub.f32 %v10713, %v10789
        %v10812 = vsub.f32 %v10714, %v10789
        %v10813 = vsub.f32 %v10715, %v10790
        %v10814 = vsub.f32 %v10716, %v10790
        %v10815 = vsub.f32 %v10717, %v10791
        %v10816 = vsub.f32 %v10718, %v10791
        %v10817 = vsub.f32 %v10719, %v10792
        %v10818 = vsub.f32 %v10720, %v10792
        %v10819 = vsub.f32 %v10721, %v10793
        %v10820 = vsub.f32 %v10722, %v10793
        %v10821 = vsub.f32 %v10723, %v10794
        %v10822 = vsub.f32 %v10724, %v10794
        %v10823 = vsub.f32 %v10725, %v10795
        %v10824 = vsub.f32 %v10726, %v10795
        %v10825 = vsub.f32 %v10727, %v10796
        %v10826 = vsub.f32 %v10728, %v10796
        %v10827 = vsub.f32 %v10729, %v10797
        %v10828 = vsub.f32 %v10730, %v10797
        %v10829 = vsub.f32 %v10731, %v10798
        %v10830 = vsub.f32 %v10732, %v10798
        %v10831 = vmul.f32 %v10799, %v10799
        %v10832 = vmul.f32 %v10800, %v10800
        %v10833 = vmul.f32 %v10801, %v10801
        %v10834 = vmul.f32 %v10802, %v10802
        %v10835 = vmul.f32 %v10803, %v10803
        %v10836 = vmul.f32 %v10804, %v10804
        %v10837 = vmul.f32 %v10805, %v10805
        %v10838 = vmul.f32 %v10806, %v10806
        %v10839 = vmul.f32 %v10807, %v10807
        %v10840 = vmul.f32 %v10808, %v10808
        %v10841 = vmul.f32 %v10809, %v10809
        %v10842 = vmul.f32 %v10810, %v10810
        %v10843 = vmul.f32 %v10811, %v10811
        %v10844 = vmul.f32 %v10812, %v10812
        %v10845 = vmul.f32 %v10813, %v10813
        %v10846 = vmul.f32 %v10814, %v10814
        %v10847 = vmul.f32 %v10815, %v10815
        %v10848 = vmul.f32 %v10816, %v10816
        %v10849 = vmul.f32 %v10817, %v10817
        %v10850 = vmul.f32 %v10818, %v10818
        %v10851 = vmul.f32 %v10819, %v10819
        %v10852 = vmul.f32 %v10820, %v10820
        %v10853 = vmul.f32 %v10821, %v10821
        %v10854 = vmul.f32 %v10822, %v10822
        %v10855 = vmul.f32 %v10823, %v10823
        %v10856 = vmul.f32 %v10824, %v10824
        %v10857 = vmul.f32 %v10825, %v10825
        %v10858 = vmul.f32 %v10826, %v10826
        %v10859 = vmul.f32 %v10827, %v10827
        %v10860 = vmul.f32 %v10828, %v10828
        %v10861 = vmul.f32 %v10829, %v10829
        %v10862 = vmul.f32 %v10830, %v10830
        %v10863 = vadd.f32 %v10831, %v10832
        %10864 = vadd.xlane.f32.xlu0 %v10863
        %v10865 = vpop.xlane.xlu0 %10864
        %v10866 = vadd.f32 %v10833, %v10834
        %10867 = vadd.xlane.f32.xlu0 %v10866
        %v10868 = vpop.xlane.xlu0 %10867
        %v10869 = vadd.f32 %v10835, %v10836
        %10870 = vadd.xlane.f32.xlu0 %v10869
        %v10871 = vpop.xlane.xlu0 %10870
        %v10872 = vadd.f32 %v10837, %v10838
        %10873 = vadd.xlane.f32.xlu0 %v10872
        %v10874 = vpop.xlane.xlu0 %10873
        %v10875 = vadd.f32 %v10839, %v10840
        %10876 = vadd.xlane.f32.xlu0 %v10875
        %v10877 = vpop.xlane.xlu0 %10876
        %v10878 = vadd.f32 %v10841, %v10842
        %10879 = vadd.xlane.f32.xlu0 %v10878
        %v10880 = vpop.xlane.xlu0 %10879
        %v10881 = vadd.f32 %v10843, %v10844
        %10882 = vadd.xlane.f32.xlu0 %v10881
        %v10883 = vpop.xlane.xlu0 %10882
        %v10884 = vadd.f32 %v10845, %v10846
        %10885 = vadd.xlane.f32.xlu0 %v10884
        %v10886 = vpop.xlane.xlu0 %10885
        %v10887 = vadd.f32 %v10847, %v10848
        %10888 = vadd.xlane.f32.xlu0 %v10887
        %v10889 = vpop.xlane.xlu0 %10888
        %v10890 = vadd.f32 %v10849, %v10850
        %10891 = vadd.xlane.f32.xlu0 %v10890
        %v10892 = vpop.xlane.xlu0 %10891
        %v10893 = vadd.f32 %v10851, %v10852
        %10894 = vadd.xlane.f32.xlu0 %v10893
        %v10895 = vpop.xlane.xlu0 %10894
        %v10896 = vadd.f32 %v10853, %v10854
        %10897 = vadd.xlane.f32.xlu0 %v10896
        %v10898 = vpop.xlane.xlu0 %10897
        %v10899 = vadd.f32 %v10855, %v10856
        %10900 = vadd.xlane.f32.xlu0 %v10899
        %v10901 = vpop.xlane.xlu0 %10900
        %v10902 = vadd.f32 %v10857, %v10858
        %10903 = vadd.xlane.f32.xlu0 %v10902
        %v10904 = vpop.xlane.xlu0 %10903
        %v10905 = vadd.f32 %v10859, %v10860
        %10906 = vadd.xlane.f32.xlu0 %v10905
        %v10907 = vpop.xlane.xlu0 %10906
        %v10908 = vadd.f32 %v10861, %v10862
        %10909 = vadd.xlane.f32.xlu0 %v10908
        %v10910 = vpop.xlane.xlu0 %10909
        %v10911 = vmul.f32 %v10865, %v4898
        %v10912 = vmul.f32 %v10868, %v4898
        %v10913 = vmul.f32 %v10871, %v4898
        %v10914 = vmul.f32 %v10874, %v4898
        %v10915 = vmul.f32 %v10877, %v4898
        %v10916 = vmul.f32 %v10880, %v4898
        %v10917 = vmul.f32 %v10883, %v4898
        %v10918 = vmul.f32 %v10886, %v4898
        %v10919 = vmul.f32 %v10889, %v4898
        %v10920 = vmul.f32 %v10892, %v4898
        %v10921 = vmul.f32 %v10895, %v4898
        %v10922 = vmul.f32 %v10898, %v4898
        %v10923 = vmul.f32 %v10901, %v4898
        %v10924 = vmul.f32 %v10904, %v4898
        %v10925 = vmul.f32 %v10907, %v4898
        %v10926 = vmul.f32 %v10910, %v4898
        %v10927 = vadd.f32 %v10911, 1e-05
        %v10928 = vadd.f32 %v10912, 1e-05
        %v10929 = vadd.f32 %v10913, 1e-05
        %v10930 = vadd.f32 %v10914, 1e-05
        %v10931 = vadd.f32 %v10915, 1e-05
        %v10932 = vadd.f32 %v10916, 1e-05
        %v10933 = vadd.f32 %v10917, 1e-05
        %v10934 = vadd.f32 %v10918, 1e-05
        %v10935 = vadd.f32 %v10919, 1e-05
        %v10936 = vadd.f32 %v10920, 1e-05
        %v10937 = vadd.f32 %v10921, 1e-05
        %v10938 = vadd.f32 %v10922, 1e-05
        %v10939 = vadd.f32 %v10923, 1e-05
        %v10940 = vadd.f32 %v10924, 1e-05
        %v10941 = vadd.f32 %v10925, 1e-05
        %v10942 = vadd.f32 %v10926, 1e-05
        %v10943 = vrsqrt.pop %v10927
        %v10944 = vrsqrt.pop %v10928
        %v10945 = vrsqrt.pop %v10929
        %v10946 = vrsqrt.pop %v10930
        %v10947 = vrsqrt.pop %v10931
        %v10948 = vrsqrt.pop %v10932
        %v10949 = vrsqrt.pop %v10933
        %v10950 = vrsqrt.pop %v10934
        %v10951 = vrsqrt.pop %v10935
        %v10952 = vrsqrt.pop %v10936
        %v10953 = vrsqrt.pop %v10937
        %v10954 = vrsqrt.pop %v10938
        %v10955 = vrsqrt.pop %v10939
        %v10956 = vrsqrt.pop %v10940
        %v10957 = vrsqrt.pop %v10941
        %v10958 = vrsqrt.pop %v10942
        %v10959 = vmul.f32 %v10799, %v10943
        %v10960 = vmul.f32 %v10800, %v10943
        %v10961 = vmul.f32 %v10801, %v10944
        %v10962 = vmul.f32 %v10802, %v10944
        %v10963 = vmul.f32 %v10803, %v10945
        %v10964 = vmul.f32 %v10804, %v10945
        %v10965 = vmul.f32 %v10805, %v10946
        %v10966 = vmul.f32 %v10806, %v10946
        %v10967 = vmul.f32 %v10807, %v10947
        %v10968 = vmul.f32 %v10808, %v10947
        %v10969 = vmul.f32 %v10809, %v10948
        %v10970 = vmul.f32 %v10810, %v10948
        %v10971 = vmul.f32 %v10811, %v10949
        %v10972 = vmul.f32 %v10812, %v10949
        %v10973 = vmul.f32 %v10813, %v10950
        %v10974 = vmul.f32 %v10814, %v10950
        %v10975 = vmul.f32 %v10815, %v10951
        %v10976 = vmul.f32 %v10816, %v10951
        %v10977 = vmul.f32 %v10817, %v10952
        %v10978 = vmul.f32 %v10818, %v10952
        %v10979 = vmul.f32 %v10819, %v10953
        %v10980 = vmul.f32 %v10820, %v10953
        %v10981 = vmul.f32 %v10821, %v10954
        %v10982 = vmul.f32 %v10822, %v10954
        %v10983 = vmul.f32 %v10823, %v10955
        %v10984 = vmul.f32 %v10824, %v10955
        %v10985 = vmul.f32 %v10825, %v10956
        %v10986 = vmul.f32 %v10826, %v10956
        %v10987 = vmul.f32 %v10827, %v10957
        %v10988 = vmul.f32 %v10828, %v10957
        %v10989 = vmul.f32 %v10829, %v10958
        %v10990 = vmul.f32 %v10830, %v10958
        %v10992 = vlaneseq
        %v10993 = vshrl.u32 %v10992, 7
        %v10994 = vsub.s32 0, %v10993
        %v10995 = vrot.slane %v10733, %v10994
        %v10996 = vlaneseq
        %v10997 = vshrl.u32 %v10996, 7
        %v10998 = vsub.s32 1, %v10997
        %v10999 = vrot.slane %v10733, %v10998
        %v11002 = vmul.f32 %v10959, %v10995
        %v11003 = vmul.f32 %v10960, %v10999
        %v11004 = vmul.f32 %v10961, %v10995
        %v11005 = vmul.f32 %v10962, %v10999
        %v11006 = vmul.f32 %v10963, %v10995
        %v11007 = vmul.f32 %v10964, %v10999
        %v11008 = vmul.f32 %v10965, %v10995
        %v11009 = vmul.f32 %v10966, %v10999
        %v11010 = vmul.f32 %v10967, %v10995
        %v11011 = vmul.f32 %v10968, %v10999
        %v11012 = vmul.f32 %v10969, %v10995
        %v11013 = vmul.f32 %v10970, %v10999
        %v11014 = vmul.f32 %v10971, %v10995
        %v11015 = vmul.f32 %v10972, %v10999
        %v11016 = vmul.f32 %v10973, %v10995
        %v11017 = vmul.f32 %v10974, %v10999
        %v11018 = vmul.f32 %v10975, %v10995
        %v11019 = vmul.f32 %v10976, %v10999
        %v11020 = vmul.f32 %v10977, %v10995
        %v11021 = vmul.f32 %v10978, %v10999
        %v11022 = vmul.f32 %v10979, %v10995
        %v11023 = vmul.f32 %v10980, %v10999
        %v11024 = vmul.f32 %v10981, %v10995
        %v11025 = vmul.f32 %v10982, %v10999
        %v11026 = vmul.f32 %v10983, %v10995
        %v11027 = vmul.f32 %v10984, %v10999
        %v11028 = vmul.f32 %v10985, %v10995
        %v11029 = vmul.f32 %v10986, %v10999
        %v11030 = vmul.f32 %v10987, %v10995
        %v11031 = vmul.f32 %v10988, %v10999
        %v11032 = vmul.f32 %v10989, %v10995
        %v11033 = vmul.f32 %v10990, %v10999
        %v11035 = vlaneseq
        %v11036 = vshrl.u32 %v11035, 7
        %v11037 = vsub.s32 0, %v11036
        %v11038 = vrot.slane %v10734, %v11037
        %v11039 = vlaneseq
        %v11040 = vshrl.u32 %v11039, 7
        %v11041 = vsub.s32 1, %v11040
        %v11042 = vrot.slane %v10734, %v11041
        %v11045 = vadd.f32 %v11002, %v11038
        %v11046 = vadd.f32 %v11003, %v11042
        %v11047 = vadd.f32 %v11004, %v11038
        %v11048 = vadd.f32 %v11005, %v11042
        %v11049 = vadd.f32 %v11006, %v11038
        %v11050 = vadd.f32 %v11007, %v11042
        %v11051 = vadd.f32 %v11008, %v11038
        %v11052 = vadd.f32 %v11009, %v11042
        %v11053 = vadd.f32 %v11010, %v11038
        %v11054 = vadd.f32 %v11011, %v11042
        %v11055 = vadd.f32 %v11012, %v11038
        %v11056 = vadd.f32 %v11013, %v11042
        %v11057 = vadd.f32 %v11014, %v11038
        %v11058 = vadd.f32 %v11015, %v11042
        %v11059 = vadd.f32 %v11016, %v11038
        %v11060 = vadd.f32 %v11017, %v11042
        %v11061 = vadd.f32 %v11018, %v11038
        %v11062 = vadd.f32 %v11019, %v11042
        %v11063 = vadd.f32 %v11020, %v11038
        %v11064 = vadd.f32 %v11021, %v11042
        %v11065 = vadd.f32 %v11022, %v11038
        %v11066 = vadd.f32 %v11023, %v11042
        %v11067 = vadd.f32 %v11024, %v11038
        %v11068 = vadd.f32 %v11025, %v11042
        %v11069 = vadd.f32 %v11026, %v11038
        %v11070 = vadd.f32 %v11027, %v11042
        %v11071 = vadd.f32 %v11028, %v11038
        %v11072 = vadd.f32 %v11029, %v11042
        %v11073 = vadd.f32 %v11030, %v11038
        %v11074 = vadd.f32 %v11031, %v11042
        %v11075 = vadd.f32 %v11032, %v11038
        %v11076 = vadd.f32 %v11033, %v11042
        %11077 = vst [vmem:[%s13] sm:$0xff] %v11045
        %11078 = vst [vmem:[%s13 + $0x8] sm:$0xff] %v11046
        %11079 = vst [vmem:[%s13 + $0x10] sm:$0xff] %v11047
        %11080 = vst [vmem:[%s13 + $0x18] sm:$0xff] %v11048
        %11081 = vst [vmem:[%s13 + $0x20] sm:$0xff] %v11049
        %11082 = vst [vmem:[%s13 + $0x28] sm:$0xff] %v11050
        %11083 = vst [vmem:[%s13 + $0x30] sm:$0xff] %v11051
        %11084 = vst [vmem:[%s13 + $0x38] sm:$0xff] %v11052
        %11085 = vst [vmem:[%s13 + $0x40] sm:$0xff] %v11053
        %11086 = vst [vmem:[%s13 + $0x48] sm:$0xff] %v11054
        %11087 = vst [vmem:[%s13 + $0x50] sm:$0xff] %v11055
        %11088 = vst [vmem:[%s13 + $0x58] sm:$0xff] %v11056
        %11089 = vst [vmem:[%s13 + $0x60] sm:$0xff] %v11057
        %11090 = vst [vmem:[%s13 + $0x68] sm:$0xff] %v11058
        %11091 = vst [vmem:[%s13 + $0x70] sm:$0xff] %v11059
        %11092 = vst [vmem:[%s13 + $0x78] sm:$0xff] %v11060
        %11093 = vst [vmem:[%s13 + $0x80] sm:$0xff] %v11061
        %11094 = vst [vmem:[%s13 + $0x88] sm:$0xff] %v11062
        %11095 = vst [vmem:[%s13 + $0x90] sm:$0xff] %v11063
        %11096 = vst [vmem:[%s13 + $0x98] sm:$0xff] %v11064
        %11097 = vst [vmem:[%s13 + $0xa0] sm:$0xff] %v11065
        %11098 = vst [vmem:[%s13 + $0xa8] sm:$0xff] %v11066
        %11099 = vst [vmem:[%s13 + $0xb0] sm:$0xff] %v11067
        %11100 = vst [vmem:[%s13 + $0xb8] sm:$0xff] %v11068
        %11101 = vst [vmem:[%s13 + $0xc0] sm:$0xff] %v11069
        %11102 = vst [vmem:[%s13 + $0xc8] sm:$0xff] %v11070
        %11103 = vst [vmem:[%s13 + $0xd0] sm:$0xff] %v11071
        %11104 = vst [vmem:[%s13 + $0xd8] sm:$0xff] %v11072
        %11105 = vst [vmem:[%s13 + $0xe0] sm:$0xff] %v11073
        %11106 = vst [vmem:[%s13 + $0xe8] sm:$0xff] %v11074
        %11107 = vst [vmem:[%s13 + $0xf0] sm:$0xff] %v11075
        %11108 = vst [vmem:[%s13 + $0xf8] sm:$0xff] %v11076
        // Predicated region
        $region125: #{transformer_encoder_forward.1} parent=71 // pred_check
          %p11109 = pneg %p391
        $region126: #{transformer_encoder_forward.1} parent=71 // pred_check_branch
          %11111 = sbr.rel (%p11109) target = $region128
        $region127: #{transformer_encoder_forward.1} parent=71 // pred_region
          _
        $region128: #{transformer_encoder_forward.1} parent=71 // pred_fallthru
          _
        // Predicated region
        $region129: #{transformer_encoder_forward.1} parent=71 // pred_check
          %p11112 = pneg %p391
        $region130: #{transformer_encoder_forward.1} parent=71 // pred_check_branch
          %11114 = sbr.rel (%p11112) target = $region132
        $region131: #{transformer_encoder_forward.1} parent=71 // pred_region
          _
        $region132: #{transformer_encoder_forward.1} parent=71 // pred_fallthru
          _
      $region72: #{transformer_encoder_forward.1} parent=5 // pred_fallthru
        _
      %p11115 = scmp.le.s32.totalorder 2, %s40
      // Predicated region
      $region133: #{transformer_encoder_forward.1} parent=5 // pred_check
        %p11116 = pneg %p11115
      $region134: #{transformer_encoder_forward.1} parent=5 // pred_check_branch
        %11118 = sbr.rel (%p11116) target = $region136
      $region135: #{transformer_encoder_forward.1} parent=5 // pred_region
        %s11119 = ssub.s32 %s40, 2
      $region136: #{transformer_encoder_forward.1} parent=5 // pred_fallthru
        _
    $region6: #{transformer_encoder_forward.1} parent=1 // loop_footer
      %s44 = sadd.s32 1, %s40
    $region7: #{transformer_encoder_forward.1} parent=1 // loop_footer_branch
      %39 = sbr.rel target = $region3
    $region8: #{transformer_encoder_forward.1} parent=1 // loop_exit
      _
    %11120 = vsyncpa [#allocation3], 1
    %s11121 = scalar_lea.sflag [#allocation3], 1
    %11122 = vsyncpa %s11121, 1
    %11123 = vsyncpa [#allocation5], 1
    %s11124 = scalar_lea.sflag [#allocation5], 1
    %11125 = vsyncpa %s11124, 1
    %11126 = vsyncpa [#allocation8], 1
    %s11127 = scalar_lea.sflag [#allocation8], 1
    %11128 = vsyncpa %s11127, 1
    %11129 = vsyncpa [#allocation11], 1
    %s11130 = scalar_lea.sflag [#allocation11], 1
    %11131 = vsyncpa %s11130, 1
    %11132 = vsyncpa [#allocation14], 1
    %s11133 = scalar_lea.sflag [#allocation14], 1
    %11134 = vsyncpa %s11133, 1
    %11135 = vsyncpa [#allocation17], 1
    %s11136 = scalar_lea.sflag [#allocation17], 1
    %11137 = vsyncpa %s11136, 1
    %11138 = vsyncpa [#allocation20], 1
    %s11139 = scalar_lea.sflag [#allocation20], 1
    %11140 = vsyncpa %s11139, 1

</llo_original>
